<compile_context>
chip_gen: v6e
topology: v6e:2x2x1
jax: 0.10.0
libtpu: 0.0.40
codegen_flags: <defaults>
</compile_context>

<pallas_src>
import functools
import math

import jax
import jax.numpy as jnp
from jax.experimental import pallas as pl
from jax.experimental.pallas import tpu as pltpu

# Model hyper-parameters (small shapes consistent with the PyTorch module).
INPUT_DIM = 16
HIDDEN = 32
NUM_HEADS = 2
HEAD_DIM = HIDDEN // NUM_HEADS          # 16
NUM_INDS = 4                            # PMA num_seeds
OUTPUT_DIM = 8
NUM_LAYERS = 2                          # SAB layers in encoder and in decoder
NUM_MABS = 2 * NUM_LAYERS + 1           # enc SABs + PMA + dec SABs
SEQ = 8                                 # set size
BATCH = 2
LN_EPS = 1e-5


def _set_transformer_kernel(batch,
                            x_ref, seeds_ref, emb_w_ref, emb_b_ref,
                            wqkv_ref, wsq_ref, mbias_ref,
                            sab_w_ref, sab_b_ref,
                            out_w_ref, out_b_ref,
                            out_ref):
    E = HIDDEN
    scale = 1.0 / math.sqrt(HEAD_DIM)

    def layernorm(a, g, b):
        # one-pass variance: E[x^2] - mu^2
        mu = jnp.mean(a, axis=-1, keepdims=True)
        var = jnp.mean(a * a, axis=-1, keepdims=True) - mu * mu
        return (a - mu) * jax.lax.rsqrt(var + LN_EPS) * g + b

    def mab_params(idx):
        wqkv = wqkv_ref[idx]              # (E, 3E) = [Wq | Wk | Wv]
        wo = wsq_ref[3 * idx + 0]         # (E, E)
        wf1 = wsq_ref[3 * idx + 1]        # (E, E)
        wf2 = wsq_ref[3 * idx + 2]        # (E, E)
        bb = mbias_ref[idx]               # (10, E)
        biases = dict(
            bq=bb[0:1], bk=bb[1:2], bv=bb[2:3], bo=bb[3:4],
            g1=bb[4:5], be1=bb[5:6], g2=bb[6:7], be2=bb[7:8],
            bf1=bb[8:9], bf2=bb[9:10])
        return wqkv, wo, wf1, wf2, biases

    def attend(q, k, v, wo, bo):
        # q: (Sq, E), k/v: (Sk, E); multi-head attention, head-concat folded
        # into per-head row-slices of the out-projection.
        attn = None
        for hd in range(NUM_HEADS):
            lo = hd * HEAD_DIM
            hi = lo + HEAD_DIM
            qh = q[:, lo:hi]
            kh = k[:, lo:hi]
            vh = v[:, lo:hi]
            # scores = qh @ kh^T without an explicit transpose
            s = jax.lax.dot_general(qh, kh, (((1,), (1,)), ((), ())),
                                    preferred_element_type=jnp.float32) * scale
            s = s - jnp.max(s, axis=-1, keepdims=True)
            e = jnp.exp(s)
            p = e / jnp.sum(e, axis=-1, keepdims=True)
            ah = jnp.dot(p, vh, preferred_element_type=jnp.float32)      # (Sq, Dh)
            oh = jnp.dot(ah, wo[lo:hi, :], preferred_element_type=jnp.float32)
            attn = oh if attn is None else attn + oh
        return attn + bo

    def ffn_residual(h, wf1, wf2, bi):
        hn = layernorm(h, bi["g2"], bi["be2"])
        f = jnp.maximum(
            jnp.dot(hn, wf1, preferred_element_type=jnp.float32) + bi["bf1"], 0.0)
        f = jnp.dot(f, wf2, preferred_element_type=jnp.float32) + bi["bf2"]
        return h + f

    def sab_batched(h, idx):
        """Self-attention MAB on (batch*SEQ, E); attention is block-diagonal
        per sample via 8-row-aligned slices."""
        wqkv, wo, wf1, wf2, bi = mab_params(idx)
        qn = layernorm(h, bi["g1"], bi["be1"])
        # fused q/k/v projection over the whole batch: one MXU push
        qkv = jnp.dot(qn, wqkv, preferred_element_type=jnp.float32)      # (B*S, 3E)
        q = qkv[:, 0:E] + bi["bq"]
        k = qkv[:, E:2 * E] + bi["bk"]
        v = qkv[:, 2 * E:3 * E] + bi["bv"]

        pieces = []
        for b in range(batch):
            r0, r1 = b * SEQ, (b + 1) * SEQ
            pieces.append(attend(q[r0:r1], k[r0:r1], v[r0:r1], wo, bi["bo"]))
        attn = pieces[0] if batch == 1 else jnp.concatenate(pieces, axis=0)
        h = h + attn
        return ffn_residual(h, wf1, wf2, bi)

    def mab_self_small(h_b, idx):
        """Self-attention MAB on one sample's pooled vectors (NUM_INDS, E)."""
        wqkv, wo, wf1, wf2, bi = mab_params(idx)
        qn = layernorm(h_b, bi["g1"], bi["be1"])
        qkv = jnp.dot(qn, wqkv, preferred_element_type=jnp.float32)
        q = qkv[:, 0:E] + bi["bq"]
        k = qkv[:, E:2 * E] + bi["bk"]
        v = qkv[:, 2 * E:3 * E] + bi["bv"]
        h_b = h_b + attend(q, k, v, wo, bi["bo"])
        return ffn_residual(h_b, wf1, wf2, bi)

    def pma(h_enc, idx):
        """Learned seeds attend to each sample's encoded set."""
        wqkv, wo, wf1, wf2, bi = mab_params(idx)
        seeds = seeds_ref[...]                                           # (NUM_INDS, E)
        qn = layernorm(seeds, bi["g1"], bi["be1"])
        # seed query projection is batch-independent: compute once
        q = (jnp.dot(qn, wqkv[:, 0:E], preferred_element_type=jnp.float32)
             + bi["bq"])
        outs = []
        for b in range(batch):
            r0, r1 = b * SEQ, (b + 1) * SEQ
            kn = layernorm(h_enc[r0:r1], bi["g1"], bi["be1"])
            kv = jnp.dot(kn, wqkv[:, E:3 * E], preferred_element_type=jnp.float32)
            k = kv[:, 0:E] + bi["bk"]
            v = kv[:, E:2 * E] + bi["bv"]
            h_b = seeds + attend(q, k, v, wo, bi["bo"])
            outs.append(ffn_residual(h_b, wf1, wf2, bi))
        return outs                                                      # list of (NUM_INDS, E)

    # ---- embedding (whole batch in one matmul) ----
    x = x_ref[...]                                                       # (B*SEQ, INPUT_DIM)
    h = jnp.dot(x, emb_w_ref[...], preferred_element_type=jnp.float32) + emb_b_ref[...]

    # ---- encoder: NUM_LAYERS SAB blocks (MAB(X, X) + Linear), batched ----
    for l in range(NUM_LAYERS):
        h = sab_batched(h, l)
        h = jnp.dot(h, sab_w_ref[l], preferred_element_type=jnp.float32) + sab_b_ref[l]

    # ---- PMA: seeds attend to the encoded set (per-sample keys/values) ----
    h_list = pma(h, NUM_LAYERS)

    # ---- decoder: NUM_LAYERS SAB blocks over the NUM_INDS pooled vectors ----
    for l in range(NUM_LAYERS):
        idx = NUM_LAYERS + 1 + l
        h_list = [mab_self_small(hb, idx) for hb in h_list]
        h_list = [jnp.dot(hb, sab_w_ref[NUM_LAYERS + l],
                          preferred_element_type=jnp.float32)
                  + sab_b_ref[NUM_LAYERS + l] for hb in h_list]

    # ---- flatten + fc_out as a per-seed accumulated matmul (no relayout) ----
    for b in range(batch):
        acc = out_b_ref[...]                                             # (1, OUTPUT_DIM)
        hb = h_list[b]
        for i in range(NUM_INDS):
            acc = acc + jnp.dot(hb[i:i + 1, :], out_w_ref[i],
                                preferred_element_type=jnp.float32)
        out_ref[b:b + 1, :] = acc


def set_transformer_forward(x, kp):
    batch = x.shape[0]
    x2d = x.reshape(batch * SEQ, INPUT_DIM)      # fold batch into sublane rows
    kernel = functools.partial(_set_transformer_kernel, batch)

    zero2 = lambda i: (0, 0)
    zero3 = lambda i: (0, 0, 0)
    in_specs = [
        pl.BlockSpec((batch * SEQ, INPUT_DIM), zero2),                   # x (rows)
        pl.BlockSpec((NUM_INDS, HIDDEN), zero2),                         # seeds
        pl.BlockSpec((INPUT_DIM, HIDDEN), zero2),                        # emb_w
        pl.BlockSpec((1, HIDDEN), zero2),                                # emb_b
        pl.BlockSpec((NUM_MABS, HIDDEN, 3 * HIDDEN), zero3),             # mab_wqkv
        pl.BlockSpec((3 * NUM_MABS, HIDDEN, HIDDEN), zero3),             # mab_wsq
        pl.BlockSpec((NUM_MABS, 10, HIDDEN), zero3),                     # mab_bias
        pl.BlockSpec((2 * NUM_LAYERS, HIDDEN, HIDDEN), zero3),           # sab_fc_w
        pl.BlockSpec((2 * NUM_LAYERS, 1, HIDDEN), zero3),                # sab_fc_b
        pl.BlockSpec((NUM_INDS, HIDDEN, OUTPUT_DIM), zero3),             # out_w
        pl.BlockSpec((1, OUTPUT_DIM), zero2),                            # out_b
    ]
    out = pl.pallas_call(
        kernel,
        out_shape=jax.ShapeDtypeStruct((batch, OUTPUT_DIM), jnp.float32),
        grid=(1,),
        in_specs=in_specs,
        out_specs=pl.BlockSpec((batch, OUTPUT_DIM), zero2),
        compiler_params=pltpu.CompilerParams(
            dimension_semantics=("arbitrary",)),
    )(x2d, kp["seeds"], kp["emb_w"], kp["emb_b"],
      kp["mab_wqkv"], kp["mab_wsq"], kp["mab_bias"],
      kp["sab_fc_w"], kp["sab_fc_b"],
      kp["out_w"], kp["out_b"])
    return out


def init_params(key, std=0.05):
    """Parameters mirroring the PyTorch modules; weights stored (in, out)."""
    keys = iter(jax.random.split(key, 128))

    def nrm(shape):
        return (std * jax.random.normal(next(keys), shape)).astype(jnp.float32)

    def make_mab():
        return {
            "wq": nrm((HIDDEN, HIDDEN)), "wk": nrm((HIDDEN, HIDDEN)), "wv": nrm((HIDDEN, HIDDEN)),
            "bq": nrm((1, HIDDEN)), "bk": nrm((1, HIDDEN)), "bv": nrm((1, HIDDEN)),
            "wo": nrm((HIDDEN, HIDDEN)), "bo": nrm((1, HIDDEN)),
            "ln1_g": 1.0 + nrm((1, HIDDEN)), "ln1_b": nrm((1, HIDDEN)),
            "ln2_g": 1.0 + nrm((1, HIDDEN)), "ln2_b": nrm((1, HIDDEN)),
            "wf1": nrm((HIDDEN, HIDDEN)), "bf1": nrm((1, HIDDEN)),
            "wf2": nrm((HIDDEN, HIDDEN)), "bf2": nrm((1, HIDDEN)),
        }

    return {
        "emb_w": nrm((INPUT_DIM, HIDDEN)), "emb_b": nrm((1, HIDDEN)),
        "mabs": [make_mab() for _ in range(NUM_MABS)],      # [enc0, enc1, pma, dec0, dec1]
        "sab_fc": [{"w": nrm((HIDDEN, HIDDEN)), "b": nrm((1, HIDDEN))}
                   for _ in range(2 * NUM_LAYERS)],          # [enc0, enc1, dec0, dec1]
        "seeds": jax.random.normal(next(keys), (NUM_INDS, HIDDEN)).astype(jnp.float32),
        "out_w": nrm((NUM_INDS * HIDDEN, OUTPUT_DIM)), "out_b": nrm((1, OUTPUT_DIM)),
    }


def pack_params(p):
    """Pack ~70 per-module arrays into a few slabs (fewer DMA descriptors)."""
    mabs = p["mabs"]
    return {
        "seeds": p["seeds"],
        "emb_w": p["emb_w"], "emb_b": p["emb_b"],
        "mab_wqkv": jnp.stack(
            [jnp.concatenate([m["wq"], m["wk"], m["wv"]], axis=1) for m in mabs]),
        "mab_wsq": jnp.stack(
            [w for m in mabs for w in (m["wo"], m["wf1"], m["wf2"])]),
        "mab_bias": jnp.stack(
            [jnp.concatenate([m["bq"], m["bk"], m["bv"], m["bo"],
                              m["ln1_g"], m["ln1_b"], m["ln2_g"], m["ln2_b"],
                              m["bf1"], m["bf2"]], axis=0) for m in mabs]),
        "sab_fc_w": jnp.stack([s["w"] for s in p["sab_fc"]]),
        "sab_fc_b": jnp.stack([s["b"] for s in p["sab_fc"]]),
        "out_w": p["out_w"].reshape(NUM_INDS, HIDDEN, OUTPUT_DIM),
        "out_b": p["out_b"],
    }


def reference_forward(x, p):
    """Plain-JAX reference mirroring the PyTorch forward (inference mode)."""
    def ln(a, g, b):
        mu = jnp.mean(a, axis=-1, keepdims=True)
        var = jnp.mean((a - mu) ** 2, axis=-1, keepdims=True)
        return (a - mu) / jnp.sqrt(var + LN_EPS) * g + b

    def mha(qn, kn, m):
        q = qn @ m["wq"] + m["bq"]
        k = kn @ m["wk"] + m["bk"]
        v = kn @ m["wv"] + m["bv"]
        B, Sq, _ = q.shape
        Sk = k.shape[1]
        qh = q.reshape(B, Sq, NUM_HEADS, HEAD_DIM).transpose(0, 2, 1, 3)
        kh = k.reshape(B, Sk, NUM_HEADS, HEAD_DIM).transpose(0, 2, 1, 3)
        vh = v.reshape(B, Sk, NUM_HEADS, HEAD_DIM).transpose(0, 2, 1, 3)
        s = jnp.einsum("bhqd,bhkd->bhqk", qh, kh) / math.sqrt(HEAD_DIM)
        w = jax.nn.softmax(s, axis=-1)
        a = jnp.einsum("bhqk,bhkd->bhqd", w, vh).transpose(0, 2, 1, 3).reshape(B, Sq, HIDDEN)
        return a @ m["wo"] + m["bo"]

    def mab(Q, K, m):
        A = mha(ln(Q, m["ln1_g"], m["ln1_b"]), ln(K, m["ln1_g"], m["ln1_b"]), m)
        H = Q + A
        Hn = ln(H, m["ln2_g"], m["ln2_b"])
        return H + (jnp.maximum(Hn @ m["wf1"] + m["bf1"], 0.0) @ m["wf2"] + m["bf2"])

    h = x @ p["emb_w"] + p["emb_b"]
    for l in range(NUM_LAYERS):
        h = mab(h, h, p["mabs"][l])
        h = h @ p["sab_fc"][l]["w"] + p["sab_fc"][l]["b"]
    S = jnp.broadcast_to(p["seeds"][None], (x.shape[0], NUM_INDS, HIDDEN))
    h = mab(S, h, p["mabs"][NUM_LAYERS])
    for l in range(NUM_LAYERS):
        h = mab(h, h, p["mabs"][NUM_LAYERS + 1 + l])
        h = h @ p["sab_fc"][NUM_LAYERS + l]["w"] + p["sab_fc"][NUM_LAYERS + l]["b"]
    flat = h.reshape(x.shape[0], NUM_INDS * HIDDEN)
    return flat @ p["out_w"] + p["out_b"]


if __name__ == "__main__":
    key = jax.random.PRNGKey(0)
    kx, kp = jax.random.split(key)
    x = jax.random.normal(kx, (BATCH, SEQ, INPUT_DIM), dtype=jnp.float32)

    params = init_params(kp)
    kparams = pack_params(params)

    out = jax.block_until_ready(set_transformer_forward(x, kparams))
    ref = jax.block_until_ready(reference_forward(x, params))

    assert out.shape == (BATCH, OUTPUT_DIM), out.shape
    assert jnp.allclose(out, ref, atol=1e-4, rtol=1e-4), (
        "kernel/reference mismatch, max abs err = %e"
        % float(jnp.max(jnp.abs(out - ref))))
    print("KERNEL_OK")
</pallas_src>

<mosaic_0001>
module attributes {stable_mosaic.version = 11 : i64} {
  func.func @_set_transformer_kernel(%arg0: i32, %arg1: memref<16x16xf32, #tpu.memory_space<vmem>>, %arg2: memref<4x32xf32, #tpu.memory_space<vmem>>, %arg3: memref<16x32xf32, #tpu.memory_space<vmem>>, %arg4: memref<1x32xf32, #tpu.memory_space<vmem>>, %arg5: memref<5x32x96xf32, #tpu.memory_space<vmem>>, %arg6: memref<15x32x32xf32, #tpu.memory_space<vmem>>, %arg7: memref<5x10x32xf32, #tpu.memory_space<vmem>>, %arg8: memref<4x32x32xf32, #tpu.memory_space<vmem>>, %arg9: memref<4x1x32xf32, #tpu.memory_space<vmem>>, %arg10: memref<4x32x8xf32, #tpu.memory_space<vmem>>, %arg11: memref<1x8xf32, #tpu.memory_space<vmem>>, %arg12: memref<2x8xf32, #tpu.memory_space<vmem>>) attributes {dimension_semantics = [#tpu.dimension_semantics<arbitrary>], iteration_bounds = array<i64: 1>, scalar_prefetch = 0 : i64, scratch_operands = 0 : i64, tpu.core_type = #tpu.core_type<tc>, window_params = [{pipeline_mode = #tpu.pipeline_mode<synchronous>, transform_indices = @transform_0, window_bounds = array<i64: 16, 16>}, {pipeline_mode = #tpu.pipeline_mode<synchronous>, transform_indices = @transform_1, window_bounds = array<i64: 4, 32>}, {pipeline_mode = #tpu.pipeline_mode<synchronous>, transform_indices = @transform_2, window_bounds = array<i64: 16, 32>}, {pipeline_mode = #tpu.pipeline_mode<synchronous>, transform_indices = @transform_3, window_bounds = array<i64: 1, 32>}, {pipeline_mode = #tpu.pipeline_mode<synchronous>, transform_indices = @transform_4, window_bounds = array<i64: 5, 32, 96>}, {pipeline_mode = #tpu.pipeline_mode<synchronous>, transform_indices = @transform_5, window_bounds = array<i64: 15, 32, 32>}, {pipeline_mode = #tpu.pipeline_mode<synchronous>, transform_indices = @transform_6, window_bounds = array<i64: 5, 10, 32>}, {pipeline_mode = #tpu.pipeline_mode<synchronous>, transform_indices = @transform_7, window_bounds = array<i64: 4, 32, 32>}, {pipeline_mode = #tpu.pipeline_mode<synchronous>, transform_indices = @transform_8, window_bounds = array<i64: 4, 1, 32>}, {pipeline_mode = #tpu.pipeline_mode<synchronous>, transform_indices = @transform_9, window_bounds = array<i64: 4, 32, 8>}, {pipeline_mode = #tpu.pipeline_mode<synchronous>, transform_indices = @transform_10, window_bounds = array<i64: 1, 8>}, {pipeline_mode = #tpu.pipeline_mode<synchronous>, transform_indices = @transform_11, window_bounds = array<i64: 2, 8>}]} {
    %c0 = arith.constant 0 : index
    %c0_0 = arith.constant 0 : index
    %0 = vector.load %arg1[%c0, %c0_0] : memref<16x16xf32, #tpu.memory_space<vmem>>, vector<16x16xf32>
    %c0_1 = arith.constant 0 : index
    %c0_2 = arith.constant 0 : index
    %1 = vector.load %arg3[%c0_1, %c0_2] : memref<16x32xf32, #tpu.memory_space<vmem>>, vector<16x32xf32>
    %cst = arith.constant dense<0.000000e+00> : vector<16x32xf32>
    %2 = tpu.matmul %0, %1, %cst {dimension_numbers = #tpu.dot_dimension_numbers<[1], [0], [0], [1], [0, 0, 1, 1], [], []>} : vector<16x16xf32>, vector<16x32xf32>, vector<16x32xf32> -> vector<16x32xf32>
    %c0_3 = arith.constant 0 : index
    %c0_4 = arith.constant 0 : index
    %3 = vector.load %arg4[%c0_3, %c0_4] : memref<1x32xf32, #tpu.memory_space<vmem>>, vector<1x32xf32>
    %4 = vector.broadcast %3 : vector<1x32xf32> to vector<16x32xf32>
    %5 = arith.addf %2, %4 : vector<16x32xf32>
    %c0_5 = arith.constant 0 : index
    %c0_6 = arith.constant 0 : index
    %c0_7 = arith.constant 0 : index
    %6 = vector.load %arg5[%c0_5, %c0_6, %c0_7] : memref<5x32x96xf32, #tpu.memory_space<vmem>>, vector<1x32x96xf32>
    %7 = vector.shape_cast %6 : vector<1x32x96xf32> to vector<32x96xf32>
    %c0_8 = arith.constant 0 : index
    %c0_9 = arith.constant 0 : index
    %c0_10 = arith.constant 0 : index
    %8 = vector.load %arg6[%c0_8, %c0_9, %c0_10] : memref<15x32x32xf32, #tpu.memory_space<vmem>>, vector<1x32x32xf32>
    %9 = vector.shape_cast %8 : vector<1x32x32xf32> to vector<32x32xf32>
    %c1 = arith.constant 1 : index
    %c0_11 = arith.constant 0 : index
    %c0_12 = arith.constant 0 : index
    %10 = vector.load %arg6[%c1, %c0_11, %c0_12] : memref<15x32x32xf32, #tpu.memory_space<vmem>>, vector<1x32x32xf32>
    %11 = vector.shape_cast %10 : vector<1x32x32xf32> to vector<32x32xf32>
    %c2 = arith.constant 2 : index
    %c0_13 = arith.constant 0 : index
    %c0_14 = arith.constant 0 : index
    %12 = vector.load %arg6[%c2, %c0_13, %c0_14] : memref<15x32x32xf32, #tpu.memory_space<vmem>>, vector<1x32x32xf32>
    %13 = vector.shape_cast %12 : vector<1x32x32xf32> to vector<32x32xf32>
    %c0_15 = arith.constant 0 : index
    %c0_16 = arith.constant 0 : index
    %c0_17 = arith.constant 0 : index
    %14 = vector.load %arg7[%c0_15, %c0_16, %c0_17] : memref<5x10x32xf32, #tpu.memory_space<vmem>>, vector<1x10x32xf32>
    %15 = vector.shape_cast %14 : vector<1x10x32xf32> to vector<10x32xf32>
    %16 = vector.extract_strided_slice %15 {offsets = [0, 0], sizes = [1, 32], strides = [1, 1]} : vector<10x32xf32> to vector<1x32xf32>
    %17 = vector.extract_strided_slice %15 {offsets = [1, 0], sizes = [1, 32], strides = [1, 1]} : vector<10x32xf32> to vector<1x32xf32>
    %18 = vector.extract_strided_slice %15 {offsets = [2, 0], sizes = [1, 32], strides = [1, 1]} : vector<10x32xf32> to vector<1x32xf32>
    %19 = vector.extract_strided_slice %15 {offsets = [3, 0], sizes = [1, 32], strides = [1, 1]} : vector<10x32xf32> to vector<1x32xf32>
    %20 = vector.extract_strided_slice %15 {offsets = [4, 0], sizes = [1, 32], strides = [1, 1]} : vector<10x32xf32> to vector<1x32xf32>
    %21 = vector.extract_strided_slice %15 {offsets = [5, 0], sizes = [1, 32], strides = [1, 1]} : vector<10x32xf32> to vector<1x32xf32>
    %22 = vector.extract_strided_slice %15 {offsets = [6, 0], sizes = [1, 32], strides = [1, 1]} : vector<10x32xf32> to vector<1x32xf32>
    %23 = vector.extract_strided_slice %15 {offsets = [7, 0], sizes = [1, 32], strides = [1, 1]} : vector<10x32xf32> to vector<1x32xf32>
    %24 = vector.extract_strided_slice %15 {offsets = [8, 0], sizes = [1, 32], strides = [1, 1]} : vector<10x32xf32> to vector<1x32xf32>
    %25 = vector.extract_strided_slice %15 {offsets = [9, 0], sizes = [1, 32], strides = [1, 1]} : vector<10x32xf32> to vector<1x32xf32>
    %cst_18 = arith.constant dense<0.000000e+00> : vector<16xf32>
    %26 = vector.multi_reduction <add>, %5, %cst_18 [1] : vector<16x32xf32> to vector<16xf32>
    %27 = vector.shape_cast %26 : vector<16xf32> to vector<16x1xf32>
    %cst_19 = arith.constant 3.200000e+01 : f32
    %28 = vector.broadcast %cst_19 : f32 to vector<16x1xf32>
    %29 = arith.divf %27, %28 : vector<16x1xf32>
    %30 = arith.mulf %5, %5 : vector<16x32xf32>
    %cst_20 = arith.constant dense<0.000000e+00> : vector<16xf32>
    %31 = vector.multi_reduction <add>, %30, %cst_20 [1] : vector<16x32xf32> to vector<16xf32>
    %32 = vector.shape_cast %31 : vector<16xf32> to vector<16x1xf32>
    %cst_21 = arith.constant 3.200000e+01 : f32
    %33 = vector.broadcast %cst_21 : f32 to vector<16x1xf32>
    %34 = arith.divf %32, %33 : vector<16x1xf32>
    %35 = arith.mulf %29, %29 : vector<16x1xf32>
    %36 = arith.subf %34, %35 : vector<16x1xf32>
    %37 = vector.broadcast %29 : vector<16x1xf32> to vector<16x32xf32>
    %38 = arith.subf %5, %37 : vector<16x32xf32>
    %cst_22 = arith.constant 9.99999974E-6 : f32
    %39 = vector.broadcast %cst_22 : f32 to vector<16x1xf32>
    %40 = arith.addf %36, %39 : vector<16x1xf32>
    %41 = math.rsqrt %40 : vector<16x1xf32>
    %42 = vector.broadcast %41 : vector<16x1xf32> to vector<16x32xf32>
    %43 = arith.mulf %38, %42 : vector<16x32xf32>
    %44 = vector.broadcast %20 : vector<1x32xf32> to vector<16x32xf32>
    %45 = arith.mulf %43, %44 : vector<16x32xf32>
    %46 = vector.broadcast %21 : vector<1x32xf32> to vector<16x32xf32>
    %47 = arith.addf %45, %46 : vector<16x32xf32>
    %cst_23 = arith.constant dense<0.000000e+00> : vector<16x96xf32>
    %48 = tpu.matmul %47, %7, %cst_23 {dimension_numbers = #tpu.dot_dimension_numbers<[1], [0], [0], [1], [0, 0, 1, 1], [], []>} : vector<16x32xf32>, vector<32x96xf32>, vector<16x96xf32> -> vector<16x96xf32>
    %49 = vector.extract_strided_slice %48 {offsets = [0, 0], sizes = [16, 32], strides = [1, 1]} : vector<16x96xf32> to vector<16x32xf32>
    %50 = vector.broadcast %16 : vector<1x32xf32> to vector<16x32xf32>
    %51 = arith.addf %49, %50 : vector<16x32xf32>
    %52 = vector.extract_strided_slice %48 {offsets = [0, 32], sizes = [16, 32], strides = [1, 1]} : vector<16x96xf32> to vector<16x32xf32>
    %53 = vector.broadcast %17 : vector<1x32xf32> to vector<16x32xf32>
    %54 = arith.addf %52, %53 : vector<16x32xf32>
    %55 = vector.extract_strided_slice %48 {offsets = [0, 64], sizes = [16, 32], strides = [1, 1]} : vector<16x96xf32> to vector<16x32xf32>
    %56 = vector.broadcast %18 : vector<1x32xf32> to vector<16x32xf32>
    %57 = arith.addf %55, %56 : vector<16x32xf32>
    %58 = vector.extract_strided_slice %51 {offsets = [0, 0], sizes = [8, 32], strides = [1, 1]} : vector<16x32xf32> to vector<8x32xf32>
    %59 = vector.extract_strided_slice %54 {offsets = [0, 0], sizes = [8, 32], strides = [1, 1]} : vector<16x32xf32> to vector<8x32xf32>
    %60 = vector.extract_strided_slice %57 {offsets = [0, 0], sizes = [8, 32], strides = [1, 1]} : vector<16x32xf32> to vector<8x32xf32>
    %61 = vector.extract_strided_slice %58 {offsets = [0, 0], sizes = [8, 16], strides = [1, 1]} : vector<8x32xf32> to vector<8x16xf32>
    %62 = vector.extract_strided_slice %59 {offsets = [0, 0], sizes = [8, 16], strides = [1, 1]} : vector<8x32xf32> to vector<8x16xf32>
    %63 = vector.extract_strided_slice %60 {offsets = [0, 0], sizes = [8, 16], strides = [1, 1]} : vector<8x32xf32> to vector<8x16xf32>
    %cst_24 = arith.constant dense<0.000000e+00> : vector<8x8xf32>
    %64 = tpu.matmul %61, %62, %cst_24 {dimension_numbers = #tpu.dot_dimension_numbers<[1], [1], [0], [0], [0, 0, 1, 0], [], []>} : vector<8x16xf32>, vector<8x16xf32>, vector<8x8xf32> -> vector<8x8xf32>
    %cst_25 = arith.constant 2.500000e-01 : f32
    %65 = vector.broadcast %cst_25 : f32 to vector<8x8xf32>
    %66 = arith.mulf %64, %65 : vector<8x8xf32>
    %cst_26 = arith.constant dense<0xFF800000> : vector<8xf32>
    %67 = vector.multi_reduction <maximumf>, %66, %cst_26 [1] : vector<8x8xf32> to vector<8xf32>
    %68 = vector.shape_cast %67 : vector<8xf32> to vector<8x1xf32>
    %69 = vector.broadcast %68 : vector<8x1xf32> to vector<8x8xf32>
    %70 = arith.subf %66, %69 : vector<8x8xf32>
    %71 = math.exp %70 : vector<8x8xf32>
    %cst_27 = arith.constant dense<0.000000e+00> : vector<8xf32>
    %72 = vector.multi_reduction <add>, %71, %cst_27 [1] : vector<8x8xf32> to vector<8xf32>
    %73 = vector.shape_cast %72 : vector<8xf32> to vector<8x1xf32>
    %74 = vector.broadcast %73 : vector<8x1xf32> to vector<8x8xf32>
    %75 = arith.divf %71, %74 : vector<8x8xf32>
    %cst_28 = arith.constant dense<0.000000e+00> : vector<8x16xf32>
    %76 = tpu.matmul %75, %63, %cst_28 {dimension_numbers = #tpu.dot_dimension_numbers<[1], [0], [0], [1], [0, 0, 1, 1], [], []>} : vector<8x8xf32>, vector<8x16xf32>, vector<8x16xf32> -> vector<8x16xf32>
    %77 = vector.extract_strided_slice %9 {offsets = [0, 0], sizes = [16, 32], strides = [1, 1]} : vector<32x32xf32> to vector<16x32xf32>
    %cst_29 = arith.constant dense<0.000000e+00> : vector<8x32xf32>
    %78 = tpu.matmul %76, %77, %cst_29 {dimension_numbers = #tpu.dot_dimension_numbers<[1], [0], [0], [1], [0, 0, 1, 1], [], []>} : vector<8x16xf32>, vector<16x32xf32>, vector<8x32xf32> -> vector<8x32xf32>
    %79 = vector.extract_strided_slice %58 {offsets = [0, 16], sizes = [8, 16], strides = [1, 1]} : vector<8x32xf32> to vector<8x16xf32>
    %80 = vector.extract_strided_slice %59 {offsets = [0, 16], sizes = [8, 16], strides = [1, 1]} : vector<8x32xf32> to vector<8x16xf32>
    %81 = vector.extract_strided_slice %60 {offsets = [0, 16], sizes = [8, 16], strides = [1, 1]} : vector<8x32xf32> to vector<8x16xf32>
    %cst_30 = arith.constant dense<0.000000e+00> : vector<8x8xf32>
    %82 = tpu.matmul %79, %80, %cst_30 {dimension_numbers = #tpu.dot_dimension_numbers<[1], [1], [0], [0], [0, 0, 1, 0], [], []>} : vector<8x16xf32>, vector<8x16xf32>, vector<8x8xf32> -> vector<8x8xf32>
    %cst_31 = arith.constant 2.500000e-01 : f32
    %83 = vector.broadcast %cst_31 : f32 to vector<8x8xf32>
    %84 = arith.mulf %82, %83 : vector<8x8xf32>
    %cst_32 = arith.constant dense<0xFF800000> : vector<8xf32>
    %85 = vector.multi_reduction <maximumf>, %84, %cst_32 [1] : vector<8x8xf32> to vector<8xf32>
    %86 = vector.shape_cast %85 : vector<8xf32> to vector<8x1xf32>
    %87 = vector.broadcast %86 : vector<8x1xf32> to vector<8x8xf32>
    %88 = arith.subf %84, %87 : vector<8x8xf32>
    %89 = math.exp %88 : vector<8x8xf32>
    %cst_33 = arith.constant dense<0.000000e+00> : vector<8xf32>
    %90 = vector.multi_reduction <add>, %89, %cst_33 [1] : vector<8x8xf32> to vector<8xf32>
    %91 = vector.shape_cast %90 : vector<8xf32> to vector<8x1xf32>
    %92 = vector.broadcast %91 : vector<8x1xf32> to vector<8x8xf32>
    %93 = arith.divf %89, %92 : vector<8x8xf32>
    %cst_34 = arith.constant dense<0.000000e+00> : vector<8x16xf32>
    %94 = tpu.matmul %93, %81, %cst_34 {dimension_numbers = #tpu.dot_dimension_numbers<[1], [0], [0], [1], [0, 0, 1, 1], [], []>} : vector<8x8xf32>, vector<8x16xf32>, vector<8x16xf32> -> vector<8x16xf32>
    %95 = vector.extract_strided_slice %9 {offsets = [16, 0], sizes = [16, 32], strides = [1, 1]} : vector<32x32xf32> to vector<16x32xf32>
    %cst_35 = arith.constant dense<0.000000e+00> : vector<8x32xf32>
    %96 = tpu.matmul %94, %95, %cst_35 {dimension_numbers = #tpu.dot_dimension_numbers<[1], [0], [0], [1], [0, 0, 1, 1], [], []>} : vector<8x16xf32>, vector<16x32xf32>, vector<8x32xf32> -> vector<8x32xf32>
    %97 = arith.addf %78, %96 : vector<8x32xf32>
    %98 = vector.broadcast %19 : vector<1x32xf32> to vector<8x32xf32>
    %99 = arith.addf %97, %98 : vector<8x32xf32>
    %100 = vector.extract_strided_slice %51 {offsets = [8, 0], sizes = [8, 32], strides = [1, 1]} : vector<16x32xf32> to vector<8x32xf32>
    %101 = vector.extract_strided_slice %54 {offsets = [8, 0], sizes = [8, 32], strides = [1, 1]} : vector<16x32xf32> to vector<8x32xf32>
    %102 = vector.extract_strided_slice %57 {offsets = [8, 0], sizes = [8, 32], strides = [1, 1]} : vector<16x32xf32> to vector<8x32xf32>
    %103 = vector.extract_strided_slice %100 {offsets = [0, 0], sizes = [8, 16], strides = [1, 1]} : vector<8x32xf32> to vector<8x16xf32>
    %104 = vector.extract_strided_slice %101 {offsets = [0, 0], sizes = [8, 16], strides = [1, 1]} : vector<8x32xf32> to vector<8x16xf32>
    %105 = vector.extract_strided_slice %102 {offsets = [0, 0], sizes = [8, 16], strides = [1, 1]} : vector<8x32xf32> to vector<8x16xf32>
    %cst_36 = arith.constant dense<0.000000e+00> : vector<8x8xf32>
    %106 = tpu.matmul %103, %104, %cst_36 {dimension_numbers = #tpu.dot_dimension_numbers<[1], [1], [0], [0], [0, 0, 1, 0], [], []>} : vector<8x16xf32>, vector<8x16xf32>, vector<8x8xf32> -> vector<8x8xf32>
    %cst_37 = arith.constant 2.500000e-01 : f32
    %107 = vector.broadcast %cst_37 : f32 to vector<8x8xf32>
    %108 = arith.mulf %106, %107 : vector<8x8xf32>
    %cst_38 = arith.constant dense<0xFF800000> : vector<8xf32>
    %109 = vector.multi_reduction <maximumf>, %108, %cst_38 [1] : vector<8x8xf32> to vector<8xf32>
    %110 = vector.shape_cast %109 : vector<8xf32> to vector<8x1xf32>
    %111 = vector.broadcast %110 : vector<8x1xf32> to vector<8x8xf32>
    %112 = arith.subf %108, %111 : vector<8x8xf32>
    %113 = math.exp %112 : vector<8x8xf32>
    %cst_39 = arith.constant dense<0.000000e+00> : vector<8xf32>
    %114 = vector.multi_reduction <add>, %113, %cst_39 [1] : vector<8x8xf32> to vector<8xf32>
    %115 = vector.shape_cast %114 : vector<8xf32> to vector<8x1xf32>
    %116 = vector.broadcast %115 : vector<8x1xf32> to vector<8x8xf32>
    %117 = arith.divf %113, %116 : vector<8x8xf32>
    %cst_40 = arith.constant dense<0.000000e+00> : vector<8x16xf32>
    %118 = tpu.matmul %117, %105, %cst_40 {dimension_numbers = #tpu.dot_dimension_numbers<[1], [0], [0], [1], [0, 0, 1, 1], [], []>} : vector<8x8xf32>, vector<8x16xf32>, vector<8x16xf32> -> vector<8x16xf32>
    %119 = vector.extract_strided_slice %9 {offsets = [0, 0], sizes = [16, 32], strides = [1, 1]} : vector<32x32xf32> to vector<16x32xf32>
    %cst_41 = arith.constant dense<0.000000e+00> : vector<8x32xf32>
    %120 = tpu.matmul %118, %119, %cst_41 {dimension_numbers = #tpu.dot_dimension_numbers<[1], [0], [0], [1], [0, 0, 1, 1], [], []>} : vector<8x16xf32>, vector<16x32xf32>, vector<8x32xf32> -> vector<8x32xf32>
    %121 = vector.extract_strided_slice %100 {offsets = [0, 16], sizes = [8, 16], strides = [1, 1]} : vector<8x32xf32> to vector<8x16xf32>
    %122 = vector.extract_strided_slice %101 {offsets = [0, 16], sizes = [8, 16], strides = [1, 1]} : vector<8x32xf32> to vector<8x16xf32>
    %123 = vector.extract_strided_slice %102 {offsets = [0, 16], sizes = [8, 16], strides = [1, 1]} : vector<8x32xf32> to vector<8x16xf32>
    %cst_42 = arith.constant dense<0.000000e+00> : vector<8x8xf32>
    %124 = tpu.matmul %121, %122, %cst_42 {dimension_numbers = #tpu.dot_dimension_numbers<[1], [1], [0], [0], [0, 0, 1, 0], [], []>} : vector<8x16xf32>, vector<8x16xf32>, vector<8x8xf32> -> vector<8x8xf32>
    %cst_43 = arith.constant 2.500000e-01 : f32
    %125 = vector.broadcast %cst_43 : f32 to vector<8x8xf32>
    %126 = arith.mulf %124, %125 : vector<8x8xf32>
    %cst_44 = arith.constant dense<0xFF800000> : vector<8xf32>
    %127 = vector.multi_reduction <maximumf>, %126, %cst_44 [1] : vector<8x8xf32> to vector<8xf32>
    %128 = vector.shape_cast %127 : vector<8xf32> to vector<8x1xf32>
    %129 = vector.broadcast %128 : vector<8x1xf32> to vector<8x8xf32>
    %130 = arith.subf %126, %129 : vector<8x8xf32>
    %131 = math.exp %130 : vector<8x8xf32>
    %cst_45 = arith.constant dense<0.000000e+00> : vector<8xf32>
    %132 = vector.multi_reduction <add>, %131, %cst_45 [1] : vector<8x8xf32> to vector<8xf32>
    %133 = vector.shape_cast %132 : vector<8xf32> to vector<8x1xf32>
    %134 = vector.broadcast %133 : vector<8x1xf32> to vector<8x8xf32>
    %135 = arith.divf %131, %134 : vector<8x8xf32>
    %cst_46 = arith.constant dense<0.000000e+00> : vector<8x16xf32>
    %136 = tpu.matmul %135, %123, %cst_46 {dimension_numbers = #tpu.dot_dimension_numbers<[1], [0], [0], [1], [0, 0, 1, 1], [], []>} : vector<8x8xf32>, vector<8x16xf32>, vector<8x16xf32> -> vector<8x16xf32>
    %137 = vector.extract_strided_slice %9 {offsets = [16, 0], sizes = [16, 32], strides = [1, 1]} : vector<32x32xf32> to vector<16x32xf32>
    %cst_47 = arith.constant dense<0.000000e+00> : vector<8x32xf32>
    %138 = tpu.matmul %136, %137, %cst_47 {dimension_numbers = #tpu.dot_dimension_numbers<[1], [0], [0], [1], [0, 0, 1, 1], [], []>} : vector<8x16xf32>, vector<16x32xf32>, vector<8x32xf32> -> vector<8x32xf32>
    %139 = arith.addf %120, %138 : vector<8x32xf32>
    %140 = vector.broadcast %19 : vector<1x32xf32> to vector<8x32xf32>
    %141 = arith.addf %139, %140 : vector<8x32xf32>
    %142 = tpu.concatenate %99, %141 in 0 : vector<8x32xf32>, vector<8x32xf32> -> vector<16x32xf32>
    %143 = arith.addf %5, %142 : vector<16x32xf32>
    %cst_48 = arith.constant dense<0.000000e+00> : vector<16xf32>
    %144 = vector.multi_reduction <add>, %143, %cst_48 [1] : vector<16x32xf32> to vector<16xf32>
    %145 = vector.shape_cast %144 : vector<16xf32> to vector<16x1xf32>
    %cst_49 = arith.constant 3.200000e+01 : f32
    %146 = vector.broadcast %cst_49 : f32 to vector<16x1xf32>
    %147 = arith.divf %145, %146 : vector<16x1xf32>
    %148 = arith.mulf %143, %143 : vector<16x32xf32>
    %cst_50 = arith.constant dense<0.000000e+00> : vector<16xf32>
    %149 = vector.multi_reduction <add>, %148, %cst_50 [1] : vector<16x32xf32> to vector<16xf32>
    %150 = vector.shape_cast %149 : vector<16xf32> to vector<16x1xf32>
    %cst_51 = arith.constant 3.200000e+01 : f32
    %151 = vector.broadcast %cst_51 : f32 to vector<16x1xf32>
    %152 = arith.divf %150, %151 : vector<16x1xf32>
    %153 = arith.mulf %147, %147 : vector<16x1xf32>
    %154 = arith.subf %152, %153 : vector<16x1xf32>
    %155 = vector.broadcast %147 : vector<16x1xf32> to vector<16x32xf32>
    %156 = arith.subf %143, %155 : vector<16x32xf32>
    %cst_52 = arith.constant 9.99999974E-6 : f32
    %157 = vector.broadcast %cst_52 : f32 to vector<16x1xf32>
    %158 = arith.addf %154, %157 : vector<16x1xf32>
    %159 = math.rsqrt %158 : vector<16x1xf32>
    %160 = vector.broadcast %159 : vector<16x1xf32> to vector<16x32xf32>
    %161 = arith.mulf %156, %160 : vector<16x32xf32>
    %162 = vector.broadcast %22 : vector<1x32xf32> to vector<16x32xf32>
    %163 = arith.mulf %161, %162 : vector<16x32xf32>
    %164 = vector.broadcast %23 : vector<1x32xf32> to vector<16x32xf32>
    %165 = arith.addf %163, %164 : vector<16x32xf32>
    %cst_53 = arith.constant dense<0.000000e+00> : vector<16x32xf32>
    %166 = tpu.matmul %165, %11, %cst_53 {dimension_numbers = #tpu.dot_dimension_numbers<[1], [0], [0], [1], [0, 0, 1, 1], [], []>} : vector<16x32xf32>, vector<32x32xf32>, vector<16x32xf32> -> vector<16x32xf32>
    %167 = vector.broadcast %24 : vector<1x32xf32> to vector<16x32xf32>
    %168 = arith.addf %166, %167 : vector<16x32xf32>
    %cst_54 = arith.constant 0.000000e+00 : f32
    %169 = vector.broadcast %cst_54 : f32 to vector<16x32xf32>
    %170 = arith.maximumf %168, %169 : vector<16x32xf32>
    %cst_55 = arith.constant dense<0.000000e+00> : vector<16x32xf32>
    %171 = tpu.matmul %170, %13, %cst_55 {dimension_numbers = #tpu.dot_dimension_numbers<[1], [0], [0], [1], [0, 0, 1, 1], [], []>} : vector<16x32xf32>, vector<32x32xf32>, vector<16x32xf32> -> vector<16x32xf32>
    %172 = vector.broadcast %25 : vector<1x32xf32> to vector<16x32xf32>
    %173 = arith.addf %171, %172 : vector<16x32xf32>
    %174 = arith.addf %143, %173 : vector<16x32xf32>
    %c0_56 = arith.constant 0 : index
    %c0_57 = arith.constant 0 : index
    %c0_58 = arith.constant 0 : index
    %175 = vector.load %arg8[%c0_56, %c0_57, %c0_58] : memref<4x32x32xf32, #tpu.memory_space<vmem>>, vector<1x32x32xf32>
    %176 = vector.shape_cast %175 : vector<1x32x32xf32> to vector<32x32xf32>
    %cst_59 = arith.constant dense<0.000000e+00> : vector<16x32xf32>
    %177 = tpu.matmul %174, %176, %cst_59 {dimension_numbers = #tpu.dot_dimension_numbers<[1], [0], [0], [1], [0, 0, 1, 1], [], []>} : vector<16x32xf32>, vector<32x32xf32>, vector<16x32xf32> -> vector<16x32xf32>
    %c0_60 = arith.constant 0 : index
    %c0_61 = arith.constant 0 : index
    %c0_62 = arith.constant 0 : index
    %178 = vector.load %arg9[%c0_60, %c0_61, %c0_62] : memref<4x1x32xf32, #tpu.memory_space<vmem>>, vector<1x1x32xf32>
    %179 = vector.shape_cast %178 : vector<1x1x32xf32> to vector<1x32xf32>
    %180 = vector.broadcast %179 : vector<1x32xf32> to vector<16x32xf32>
    %181 = arith.addf %177, %180 : vector<16x32xf32>
    %c1_63 = arith.constant 1 : index
    %c0_64 = arith.constant 0 : index
    %c0_65 = arith.constant 0 : index
    %182 = vector.load %arg5[%c1_63, %c0_64, %c0_65] : memref<5x32x96xf32, #tpu.memory_space<vmem>>, vector<1x32x96xf32>
    %183 = vector.shape_cast %182 : vector<1x32x96xf32> to vector<32x96xf32>
    %c3 = arith.constant 3 : index
    %c0_66 = arith.constant 0 : index
    %c0_67 = arith.constant 0 : index
    %184 = vector.load %arg6[%c3, %c0_66, %c0_67] : memref<15x32x32xf32, #tpu.memory_space<vmem>>, vector<1x32x32xf32>
    %185 = vector.shape_cast %184 : vector<1x32x32xf32> to vector<32x32xf32>
    %c4 = arith.constant 4 : index
    %c0_68 = arith.constant 0 : index
    %c0_69 = arith.constant 0 : index
    %186 = vector.load %arg6[%c4, %c0_68, %c0_69] : memref<15x32x32xf32, #tpu.memory_space<vmem>>, vector<1x32x32xf32>
    %187 = vector.shape_cast %186 : vector<1x32x32xf32> to vector<32x32xf32>
    %c5 = arith.constant 5 : index
    %c0_70 = arith.constant 0 : index
    %c0_71 = arith.constant 0 : index
    %188 = vector.load %arg6[%c5, %c0_70, %c0_71] : memref<15x32x32xf32, #tpu.memory_space<vmem>>, vector<1x32x32xf32>
    %189 = vector.shape_cast %188 : vector<1x32x32xf32> to vector<32x32xf32>
    %c1_72 = arith.constant 1 : index
    %c0_73 = arith.constant 0 : index
    %c0_74 = arith.constant 0 : index
    %190 = vector.load %arg7[%c1_72, %c0_73, %c0_74] : memref<5x10x32xf32, #tpu.memory_space<vmem>>, vector<1x10x32xf32>
    %191 = vector.shape_cast %190 : vector<1x10x32xf32> to vector<10x32xf32>
    %192 = vector.extract_strided_slice %191 {offsets = [0, 0], sizes = [1, 32], strides = [1, 1]} : vector<10x32xf32> to vector<1x32xf32>
    %193 = vector.extract_strided_slice %191 {offsets = [1, 0], sizes = [1, 32], strides = [1, 1]} : vector<10x32xf32> to vector<1x32xf32>
    %194 = vector.extract_strided_slice %191 {offsets = [2, 0], sizes = [1, 32], strides = [1, 1]} : vector<10x32xf32> to vector<1x32xf32>
    %195 = vector.extract_strided_slice %191 {offsets = [3, 0], sizes = [1, 32], strides = [1, 1]} : vector<10x32xf32> to vector<1x32xf32>
    %196 = vector.extract_strided_slice %191 {offsets = [4, 0], sizes = [1, 32], strides = [1, 1]} : vector<10x32xf32> to vector<1x32xf32>
    %197 = vector.extract_strided_slice %191 {offsets = [5, 0], sizes = [1, 32], strides = [1, 1]} : vector<10x32xf32> to vector<1x32xf32>
    %198 = vector.extract_strided_slice %191 {offsets = [6, 0], sizes = [1, 32], strides = [1, 1]} : vector<10x32xf32> to vector<1x32xf32>
    %199 = vector.extract_strided_slice %191 {offsets = [7, 0], sizes = [1, 32], strides = [1, 1]} : vector<10x32xf32> to vector<1x32xf32>
    %200 = vector.extract_strided_slice %191 {offsets = [8, 0], sizes = [1, 32], strides = [1, 1]} : vector<10x32xf32> to vector<1x32xf32>
    %201 = vector.extract_strided_slice %191 {offsets = [9, 0], sizes = [1, 32], strides = [1, 1]} : vector<10x32xf32> to vector<1x32xf32>
    %cst_75 = arith.constant dense<0.000000e+00> : vector<16xf32>
    %202 = vector.multi_reduction <add>, %181, %cst_75 [1] : vector<16x32xf32> to vector<16xf32>
    %203 = vector.shape_cast %202 : vector<16xf32> to vector<16x1xf32>
    %cst_76 = arith.constant 3.200000e+01 : f32
    %204 = vector.broadcast %cst_76 : f32 to vector<16x1xf32>
    %205 = arith.divf %203, %204 : vector<16x1xf32>
    %206 = arith.mulf %181, %181 : vector<16x32xf32>
    %cst_77 = arith.constant dense<0.000000e+00> : vector<16xf32>
    %207 = vector.multi_reduction <add>, %206, %cst_77 [1] : vector<16x32xf32> to vector<16xf32>
    %208 = vector.shape_cast %207 : vector<16xf32> to vector<16x1xf32>
    %cst_78 = arith.constant 3.200000e+01 : f32
    %209 = vector.broadcast %cst_78 : f32 to vector<16x1xf32>
    %210 = arith.divf %208, %209 : vector<16x1xf32>
    %211 = arith.mulf %205, %205 : vector<16x1xf32>
    %212 = arith.subf %210, %211 : vector<16x1xf32>
    %213 = vector.broadcast %205 : vector<16x1xf32> to vector<16x32xf32>
    %214 = arith.subf %181, %213 : vector<16x32xf32>
    %cst_79 = arith.constant 9.99999974E-6 : f32
    %215 = vector.broadcast %cst_79 : f32 to vector<16x1xf32>
    %216 = arith.addf %212, %215 : vector<16x1xf32>
    %217 = math.rsqrt %216 : vector<16x1xf32>
    %218 = vector.broadcast %217 : vector<16x1xf32> to vector<16x32xf32>
    %219 = arith.mulf %214, %218 : vector<16x32xf32>
    %220 = vector.broadcast %196 : vector<1x32xf32> to vector<16x32xf32>
    %221 = arith.mulf %219, %220 : vector<16x32xf32>
    %222 = vector.broadcast %197 : vector<1x32xf32> to vector<16x32xf32>
    %223 = arith.addf %221, %222 : vector<16x32xf32>
    %cst_80 = arith.constant dense<0.000000e+00> : vector<16x96xf32>
    %224 = tpu.matmul %223, %183, %cst_80 {dimension_numbers = #tpu.dot_dimension_numbers<[1], [0], [0], [1], [0, 0, 1, 1], [], []>} : vector<16x32xf32>, vector<32x96xf32>, vector<16x96xf32> -> vector<16x96xf32>
    %225 = vector.extract_strided_slice %224 {offsets = [0, 0], sizes = [16, 32], strides = [1, 1]} : vector<16x96xf32> to vector<16x32xf32>
    %226 = vector.broadcast %192 : vector<1x32xf32> to vector<16x32xf32>
    %227 = arith.addf %225, %226 : vector<16x32xf32>
    %228 = vector.extract_strided_slice %224 {offsets = [0, 32], sizes = [16, 32], strides = [1, 1]} : vector<16x96xf32> to vector<16x32xf32>
    %229 = vector.broadcast %193 : vector<1x32xf32> to vector<16x32xf32>
    %230 = arith.addf %228, %229 : vector<16x32xf32>
    %231 = vector.extract_strided_slice %224 {offsets = [0, 64], sizes = [16, 32], strides = [1, 1]} : vector<16x96xf32> to vector<16x32xf32>
    %232 = vector.broadcast %194 : vector<1x32xf32> to vector<16x32xf32>
    %233 = arith.addf %231, %232 : vector<16x32xf32>
    %234 = vector.extract_strided_slice %227 {offsets = [0, 0], sizes = [8, 32], strides = [1, 1]} : vector<16x32xf32> to vector<8x32xf32>
    %235 = vector.extract_strided_slice %230 {offsets = [0, 0], sizes = [8, 32], strides = [1, 1]} : vector<16x32xf32> to vector<8x32xf32>
    %236 = vector.extract_strided_slice %233 {offsets = [0, 0], sizes = [8, 32], strides = [1, 1]} : vector<16x32xf32> to vector<8x32xf32>
    %237 = vector.extract_strided_slice %234 {offsets = [0, 0], sizes = [8, 16], strides = [1, 1]} : vector<8x32xf32> to vector<8x16xf32>
    %238 = vector.extract_strided_slice %235 {offsets = [0, 0], sizes = [8, 16], strides = [1, 1]} : vector<8x32xf32> to vector<8x16xf32>
    %239 = vector.extract_strided_slice %236 {offsets = [0, 0], sizes = [8, 16], strides = [1, 1]} : vector<8x32xf32> to vector<8x16xf32>
    %cst_81 = arith.constant dense<0.000000e+00> : vector<8x8xf32>
    %240 = tpu.matmul %237, %238, %cst_81 {dimension_numbers = #tpu.dot_dimension_numbers<[1], [1], [0], [0], [0, 0, 1, 0], [], []>} : vector<8x16xf32>, vector<8x16xf32>, vector<8x8xf32> -> vector<8x8xf32>
    %cst_82 = arith.constant 2.500000e-01 : f32
    %241 = vector.broadcast %cst_82 : f32 to vector<8x8xf32>
    %242 = arith.mulf %240, %241 : vector<8x8xf32>
    %cst_83 = arith.constant dense<0xFF800000> : vector<8xf32>
    %243 = vector.multi_reduction <maximumf>, %242, %cst_83 [1] : vector<8x8xf32> to vector<8xf32>
    %244 = vector.shape_cast %243 : vector<8xf32> to vector<8x1xf32>
    %245 = vector.broadcast %244 : vector<8x1xf32> to vector<8x8xf32>
    %246 = arith.subf %242, %245 : vector<8x8xf32>
    %247 = math.exp %246 : vector<8x8xf32>
    %cst_84 = arith.constant dense<0.000000e+00> : vector<8xf32>
    %248 = vector.multi_reduction <add>, %247, %cst_84 [1] : vector<8x8xf32> to vector<8xf32>
    %249 = vector.shape_cast %248 : vector<8xf32> to vector<8x1xf32>
    %250 = vector.broadcast %249 : vector<8x1xf32> to vector<8x8xf32>
    %251 = arith.divf %247, %250 : vector<8x8xf32>
    %cst_85 = arith.constant dense<0.000000e+00> : vector<8x16xf32>
    %252 = tpu.matmul %251, %239, %cst_85 {dimension_numbers = #tpu.dot_dimension_numbers<[1], [0], [0], [1], [0, 0, 1, 1], [], []>} : vector<8x8xf32>, vector<8x16xf32>, vector<8x16xf32> -> vector<8x16xf32>
    %253 = vector.extract_strided_slice %185 {offsets = [0, 0], sizes = [16, 32], strides = [1, 1]} : vector<32x32xf32> to vector<16x32xf32>
    %cst_86 = arith.constant dense<0.000000e+00> : vector<8x32xf32>
    %254 = tpu.matmul %252, %253, %cst_86 {dimension_numbers = #tpu.dot_dimension_numbers<[1], [0], [0], [1], [0, 0, 1, 1], [], []>} : vector<8x16xf32>, vector<16x32xf32>, vector<8x32xf32> -> vector<8x32xf32>
    %255 = vector.extract_strided_slice %234 {offsets = [0, 16], sizes = [8, 16], strides = [1, 1]} : vector<8x32xf32> to vector<8x16xf32>
    %256 = vector.extract_strided_slice %235 {offsets = [0, 16], sizes = [8, 16], strides = [1, 1]} : vector<8x32xf32> to vector<8x16xf32>
    %257 = vector.extract_strided_slice %236 {offsets = [0, 16], sizes = [8, 16], strides = [1, 1]} : vector<8x32xf32> to vector<8x16xf32>
    %cst_87 = arith.constant dense<0.000000e+00> : vector<8x8xf32>
    %258 = tpu.matmul %255, %256, %cst_87 {dimension_numbers = #tpu.dot_dimension_numbers<[1], [1], [0], [0], [0, 0, 1, 0], [], []>} : vector<8x16xf32>, vector<8x16xf32>, vector<8x8xf32> -> vector<8x8xf32>
    %cst_88 = arith.constant 2.500000e-01 : f32
    %259 = vector.broadcast %cst_88 : f32 to vector<8x8xf32>
    %260 = arith.mulf %258, %259 : vector<8x8xf32>
    %cst_89 = arith.constant dense<0xFF800000> : vector<8xf32>
    %261 = vector.multi_reduction <maximumf>, %260, %cst_89 [1] : vector<8x8xf32> to vector<8xf32>
    %262 = vector.shape_cast %261 : vector<8xf32> to vector<8x1xf32>
    %263 = vector.broadcast %262 : vector<8x1xf32> to vector<8x8xf32>
    %264 = arith.subf %260, %263 : vector<8x8xf32>
    %265 = math.exp %264 : vector<8x8xf32>
    %cst_90 = arith.constant dense<0.000000e+00> : vector<8xf32>
    %266 = vector.multi_reduction <add>, %265, %cst_90 [1] : vector<8x8xf32> to vector<8xf32>
    %267 = vector.shape_cast %266 : vector<8xf32> to vector<8x1xf32>
    %268 = vector.broadcast %267 : vector<8x1xf32> to vector<8x8xf32>
    %269 = arith.divf %265, %268 : vector<8x8xf32>
    %cst_91 = arith.constant dense<0.000000e+00> : vector<8x16xf32>
    %270 = tpu.matmul %269, %257, %cst_91 {dimension_numbers = #tpu.dot_dimension_numbers<[1], [0], [0], [1], [0, 0, 1, 1], [], []>} : vector<8x8xf32>, vector<8x16xf32>, vector<8x16xf32> -> vector<8x16xf32>
    %271 = vector.extract_strided_slice %185 {offsets = [16, 0], sizes = [16, 32], strides = [1, 1]} : vector<32x32xf32> to vector<16x32xf32>
    %cst_92 = arith.constant dense<0.000000e+00> : vector<8x32xf32>
    %272 = tpu.matmul %270, %271, %cst_92 {dimension_numbers = #tpu.dot_dimension_numbers<[1], [0], [0], [1], [0, 0, 1, 1], [], []>} : vector<8x16xf32>, vector<16x32xf32>, vector<8x32xf32> -> vector<8x32xf32>
    %273 = arith.addf %254, %272 : vector<8x32xf32>
    %274 = vector.broadcast %195 : vector<1x32xf32> to vector<8x32xf32>
    %275 = arith.addf %273, %274 : vector<8x32xf32>
    %276 = vector.extract_strided_slice %227 {offsets = [8, 0], sizes = [8, 32], strides = [1, 1]} : vector<16x32xf32> to vector<8x32xf32>
    %277 = vector.extract_strided_slice %230 {offsets = [8, 0], sizes = [8, 32], strides = [1, 1]} : vector<16x32xf32> to vector<8x32xf32>
    %278 = vector.extract_strided_slice %233 {offsets = [8, 0], sizes = [8, 32], strides = [1, 1]} : vector<16x32xf32> to vector<8x32xf32>
    %279 = vector.extract_strided_slice %276 {offsets = [0, 0], sizes = [8, 16], strides = [1, 1]} : vector<8x32xf32> to vector<8x16xf32>
    %280 = vector.extract_strided_slice %277 {offsets = [0, 0], sizes = [8, 16], strides = [1, 1]} : vector<8x32xf32> to vector<8x16xf32>
    %281 = vector.extract_strided_slice %278 {offsets = [0, 0], sizes = [8, 16], strides = [1, 1]} : vector<8x32xf32> to vector<8x16xf32>
    %cst_93 = arith.constant dense<0.000000e+00> : vector<8x8xf32>
    %282 = tpu.matmul %279, %280, %cst_93 {dimension_numbers = #tpu.dot_dimension_numbers<[1], [1], [0], [0], [0, 0, 1, 0], [], []>} : vector<8x16xf32>, vector<8x16xf32>, vector<8x8xf32> -> vector<8x8xf32>
    %cst_94 = arith.constant 2.500000e-01 : f32
    %283 = vector.broadcast %cst_94 : f32 to vector<8x8xf32>
    %284 = arith.mulf %282, %283 : vector<8x8xf32>
    %cst_95 = arith.constant dense<0xFF800000> : vector<8xf32>
    %285 = vector.multi_reduction <maximumf>, %284, %cst_95 [1] : vector<8x8xf32> to vector<8xf32>
    %286 = vector.shape_cast %285 : vector<8xf32> to vector<8x1xf32>
    %287 = vector.broadcast %286 : vector<8x1xf32> to vector<8x8xf32>
    %288 = arith.subf %284, %287 : vector<8x8xf32>
    %289 = math.exp %288 : vector<8x8xf32>
    %cst_96 = arith.constant dense<0.000000e+00> : vector<8xf32>
    %290 = vector.multi_reduction <add>, %289, %cst_96 [1] : vector<8x8xf32> to vector<8xf32>
    %291 = vector.shape_cast %290 : vector<8xf32> to vector<8x1xf32>
    %292 = vector.broadcast %291 : vector<8x1xf32> to vector<8x8xf32>
    %293 = arith.divf %289, %292 : vector<8x8xf32>
    %cst_97 = arith.constant dense<0.000000e+00> : vector<8x16xf32>
    %294 = tpu.matmul %293, %281, %cst_97 {dimension_numbers = #tpu.dot_dimension_numbers<[1], [0], [0], [1], [0, 0, 1, 1], [], []>} : vector<8x8xf32>, vector<8x16xf32>, vector<8x16xf32> -> vector<8x16xf32>
    %295 = vector.extract_strided_slice %185 {offsets = [0, 0], sizes = [16, 32], strides = [1, 1]} : vector<32x32xf32> to vector<16x32xf32>
    %cst_98 = arith.constant dense<0.000000e+00> : vector<8x32xf32>
    %296 = tpu.matmul %294, %295, %cst_98 {dimension_numbers = #tpu.dot_dimension_numbers<[1], [0], [0], [1], [0, 0, 1, 1], [], []>} : vector<8x16xf32>, vector<16x32xf32>, vector<8x32xf32> -> vector<8x32xf32>
    %297 = vector.extract_strided_slice %276 {offsets = [0, 16], sizes = [8, 16], strides = [1, 1]} : vector<8x32xf32> to vector<8x16xf32>
    %298 = vector.extract_strided_slice %277 {offsets = [0, 16], sizes = [8, 16], strides = [1, 1]} : vector<8x32xf32> to vector<8x16xf32>
    %299 = vector.extract_strided_slice %278 {offsets = [0, 16], sizes = [8, 16], strides = [1, 1]} : vector<8x32xf32> to vector<8x16xf32>
    %cst_99 = arith.constant dense<0.000000e+00> : vector<8x8xf32>
    %300 = tpu.matmul %297, %298, %cst_99 {dimension_numbers = #tpu.dot_dimension_numbers<[1], [1], [0], [0], [0, 0, 1, 0], [], []>} : vector<8x16xf32>, vector<8x16xf32>, vector<8x8xf32> -> vector<8x8xf32>
    %cst_100 = arith.constant 2.500000e-01 : f32
    %301 = vector.broadcast %cst_100 : f32 to vector<8x8xf32>
    %302 = arith.mulf %300, %301 : vector<8x8xf32>
    %cst_101 = arith.constant dense<0xFF800000> : vector<8xf32>
    %303 = vector.multi_reduction <maximumf>, %302, %cst_101 [1] : vector<8x8xf32> to vector<8xf32>
    %304 = vector.shape_cast %303 : vector<8xf32> to vector<8x1xf32>
    %305 = vector.broadcast %304 : vector<8x1xf32> to vector<8x8xf32>
    %306 = arith.subf %302, %305 : vector<8x8xf32>
    %307 = math.exp %306 : vector<8x8xf32>
    %cst_102 = arith.constant dense<0.000000e+00> : vector<8xf32>
    %308 = vector.multi_reduction <add>, %307, %cst_102 [1] : vector<8x8xf32> to vector<8xf32>
    %309 = vector.shape_cast %308 : vector<8xf32> to vector<8x1xf32>
    %310 = vector.broadcast %309 : vector<8x1xf32> to vector<8x8xf32>
    %311 = arith.divf %307, %310 : vector<8x8xf32>
    %cst_103 = arith.constant dense<0.000000e+00> : vector<8x16xf32>
    %312 = tpu.matmul %311, %299, %cst_103 {dimension_numbers = #tpu.dot_dimension_numbers<[1], [0], [0], [1], [0, 0, 1, 1], [], []>} : vector<8x8xf32>, vector<8x16xf32>, vector<8x16xf32> -> vector<8x16xf32>
    %313 = vector.extract_strided_slice %185 {offsets = [16, 0], sizes = [16, 32], strides = [1, 1]} : vector<32x32xf32> to vector<16x32xf32>
    %cst_104 = arith.constant dense<0.000000e+00> : vector<8x32xf32>
    %314 = tpu.matmul %312, %313, %cst_104 {dimension_numbers = #tpu.dot_dimension_numbers<[1], [0], [0], [1], [0, 0, 1, 1], [], []>} : vector<8x16xf32>, vector<16x32xf32>, vector<8x32xf32> -> vector<8x32xf32>
    %315 = arith.addf %296, %314 : vector<8x32xf32>
    %316 = vector.broadcast %195 : vector<1x32xf32> to vector<8x32xf32>
    %317 = arith.addf %315, %316 : vector<8x32xf32>
    %318 = tpu.concatenate %275, %317 in 0 : vector<8x32xf32>, vector<8x32xf32> -> vector<16x32xf32>
    %319 = arith.addf %181, %318 : vector<16x32xf32>
    %cst_105 = arith.constant dense<0.000000e+00> : vector<16xf32>
    %320 = vector.multi_reduction <add>, %319, %cst_105 [1] : vector<16x32xf32> to vector<16xf32>
    %321 = vector.shape_cast %320 : vector<16xf32> to vector<16x1xf32>
    %cst_106 = arith.constant 3.200000e+01 : f32
    %322 = vector.broadcast %cst_106 : f32 to vector<16x1xf32>
    %323 = arith.divf %321, %322 : vector<16x1xf32>
    %324 = arith.mulf %319, %319 : vector<16x32xf32>
    %cst_107 = arith.constant dense<0.000000e+00> : vector<16xf32>
    %325 = vector.multi_reduction <add>, %324, %cst_107 [1] : vector<16x32xf32> to vector<16xf32>
    %326 = vector.shape_cast %325 : vector<16xf32> to vector<16x1xf32>
    %cst_108 = arith.constant 3.200000e+01 : f32
    %327 = vector.broadcast %cst_108 : f32 to vector<16x1xf32>
    %328 = arith.divf %326, %327 : vector<16x1xf32>
    %329 = arith.mulf %323, %323 : vector<16x1xf32>
    %330 = arith.subf %328, %329 : vector<16x1xf32>
    %331 = vector.broadcast %323 : vector<16x1xf32> to vector<16x32xf32>
    %332 = arith.subf %319, %331 : vector<16x32xf32>
    %cst_109 = arith.constant 9.99999974E-6 : f32
    %333 = vector.broadcast %cst_109 : f32 to vector<16x1xf32>
    %334 = arith.addf %330, %333 : vector<16x1xf32>
    %335 = math.rsqrt %334 : vector<16x1xf32>
    %336 = vector.broadcast %335 : vector<16x1xf32> to vector<16x32xf32>
    %337 = arith.mulf %332, %336 : vector<16x32xf32>
    %338 = vector.broadcast %198 : vector<1x32xf32> to vector<16x32xf32>
    %339 = arith.mulf %337, %338 : vector<16x32xf32>
    %340 = vector.broadcast %199 : vector<1x32xf32> to vector<16x32xf32>
    %341 = arith.addf %339, %340 : vector<16x32xf32>
    %cst_110 = arith.constant dense<0.000000e+00> : vector<16x32xf32>
    %342 = tpu.matmul %341, %187, %cst_110 {dimension_numbers = #tpu.dot_dimension_numbers<[1], [0], [0], [1], [0, 0, 1, 1], [], []>} : vector<16x32xf32>, vector<32x32xf32>, vector<16x32xf32> -> vector<16x32xf32>
    %343 = vector.broadcast %200 : vector<1x32xf32> to vector<16x32xf32>
    %344 = arith.addf %342, %343 : vector<16x32xf32>
    %cst_111 = arith.constant 0.000000e+00 : f32
    %345 = vector.broadcast %cst_111 : f32 to vector<16x32xf32>
    %346 = arith.maximumf %344, %345 : vector<16x32xf32>
    %cst_112 = arith.constant dense<0.000000e+00> : vector<16x32xf32>
    %347 = tpu.matmul %346, %189, %cst_112 {dimension_numbers = #tpu.dot_dimension_numbers<[1], [0], [0], [1], [0, 0, 1, 1], [], []>} : vector<16x32xf32>, vector<32x32xf32>, vector<16x32xf32> -> vector<16x32xf32>
    %348 = vector.broadcast %201 : vector<1x32xf32> to vector<16x32xf32>
    %349 = arith.addf %347, %348 : vector<16x32xf32>
    %350 = arith.addf %319, %349 : vector<16x32xf32>
    %c1_113 = arith.constant 1 : index
    %c0_114 = arith.constant 0 : index
    %c0_115 = arith.constant 0 : index
    %351 = vector.load %arg8[%c1_113, %c0_114, %c0_115] : memref<4x32x32xf32, #tpu.memory_space<vmem>>, vector<1x32x32xf32>
    %352 = vector.shape_cast %351 : vector<1x32x32xf32> to vector<32x32xf32>
    %cst_116 = arith.constant dense<0.000000e+00> : vector<16x32xf32>
    %353 = tpu.matmul %350, %352, %cst_116 {dimension_numbers = #tpu.dot_dimension_numbers<[1], [0], [0], [1], [0, 0, 1, 1], [], []>} : vector<16x32xf32>, vector<32x32xf32>, vector<16x32xf32> -> vector<16x32xf32>
    %c1_117 = arith.constant 1 : index
    %c0_118 = arith.constant 0 : index
    %c0_119 = arith.constant 0 : index
    %354 = vector.load %arg9[%c1_117, %c0_118, %c0_119] : memref<4x1x32xf32, #tpu.memory_space<vmem>>, vector<1x1x32xf32>
    %355 = vector.shape_cast %354 : vector<1x1x32xf32> to vector<1x32xf32>
    %356 = vector.broadcast %355 : vector<1x32xf32> to vector<16x32xf32>
    %357 = arith.addf %353, %356 : vector<16x32xf32>
    %c2_120 = arith.constant 2 : index
    %c0_121 = arith.constant 0 : index
    %c0_122 = arith.constant 0 : index
    %358 = vector.load %arg5[%c2_120, %c0_121, %c0_122] : memref<5x32x96xf32, #tpu.memory_space<vmem>>, vector<1x32x96xf32>
    %359 = vector.shape_cast %358 : vector<1x32x96xf32> to vector<32x96xf32>
    %c6 = arith.constant 6 : index
    %c0_123 = arith.constant 0 : index
    %c0_124 = arith.constant 0 : index
    %360 = vector.load %arg6[%c6, %c0_123, %c0_124] : memref<15x32x32xf32, #tpu.memory_space<vmem>>, vector<1x32x32xf32>
    %361 = vector.shape_cast %360 : vector<1x32x32xf32> to vector<32x32xf32>
    %c7 = arith.constant 7 : index
    %c0_125 = arith.constant 0 : index
    %c0_126 = arith.constant 0 : index
    %362 = vector.load %arg6[%c7, %c0_125, %c0_126] : memref<15x32x32xf32, #tpu.memory_space<vmem>>, vector<1x32x32xf32>
    %363 = vector.shape_cast %362 : vector<1x32x32xf32> to vector<32x32xf32>
    %c8 = arith.constant 8 : index
    %c0_127 = arith.constant 0 : index
    %c0_128 = arith.constant 0 : index
    %364 = vector.load %arg6[%c8, %c0_127, %c0_128] : memref<15x32x32xf32, #tpu.memory_space<vmem>>, vector<1x32x32xf32>
    %365 = vector.shape_cast %364 : vector<1x32x32xf32> to vector<32x32xf32>
    %c2_129 = arith.constant 2 : index
    %c0_130 = arith.constant 0 : index
    %c0_131 = arith.constant 0 : index
    %366 = vector.load %arg7[%c2_129, %c0_130, %c0_131] : memref<5x10x32xf32, #tpu.memory_space<vmem>>, vector<1x10x32xf32>
    %367 = vector.shape_cast %366 : vector<1x10x32xf32> to vector<10x32xf32>
    %368 = vector.extract_strided_slice %367 {offsets = [0, 0], sizes = [1, 32], strides = [1, 1]} : vector<10x32xf32> to vector<1x32xf32>
    %369 = vector.extract_strided_slice %367 {offsets = [1, 0], sizes = [1, 32], strides = [1, 1]} : vector<10x32xf32> to vector<1x32xf32>
    %370 = vector.extract_strided_slice %367 {offsets = [2, 0], sizes = [1, 32], strides = [1, 1]} : vector<10x32xf32> to vector<1x32xf32>
    %371 = vector.extract_strided_slice %367 {offsets = [3, 0], sizes = [1, 32], strides = [1, 1]} : vector<10x32xf32> to vector<1x32xf32>
    %372 = vector.extract_strided_slice %367 {offsets = [4, 0], sizes = [1, 32], strides = [1, 1]} : vector<10x32xf32> to vector<1x32xf32>
    %373 = vector.extract_strided_slice %367 {offsets = [5, 0], sizes = [1, 32], strides = [1, 1]} : vector<10x32xf32> to vector<1x32xf32>
    %374 = vector.extract_strided_slice %367 {offsets = [6, 0], sizes = [1, 32], strides = [1, 1]} : vector<10x32xf32> to vector<1x32xf32>
    %375 = vector.extract_strided_slice %367 {offsets = [7, 0], sizes = [1, 32], strides = [1, 1]} : vector<10x32xf32> to vector<1x32xf32>
    %376 = vector.extract_strided_slice %367 {offsets = [8, 0], sizes = [1, 32], strides = [1, 1]} : vector<10x32xf32> to vector<1x32xf32>
    %377 = vector.extract_strided_slice %367 {offsets = [9, 0], sizes = [1, 32], strides = [1, 1]} : vector<10x32xf32> to vector<1x32xf32>
    %c0_132 = arith.constant 0 : index
    %c0_133 = arith.constant 0 : index
    %378 = vector.load %arg2[%c0_132, %c0_133] : memref<4x32xf32, #tpu.memory_space<vmem>>, vector<4x32xf32>
    %cst_134 = arith.constant dense<0.000000e+00> : vector<4xf32>
    %379 = vector.multi_reduction <add>, %378, %cst_134 [1] : vector<4x32xf32> to vector<4xf32>
    %380 = vector.shape_cast %379 : vector<4xf32> to vector<4x1xf32>
    %cst_135 = arith.constant 3.200000e+01 : f32
    %381 = vector.broadcast %cst_135 : f32 to vector<4x1xf32>
    %382 = arith.divf %380, %381 : vector<4x1xf32>
    %383 = arith.mulf %378, %378 : vector<4x32xf32>
    %cst_136 = arith.constant dense<0.000000e+00> : vector<4xf32>
    %384 = vector.multi_reduction <add>, %383, %cst_136 [1] : vector<4x32xf32> to vector<4xf32>
    %385 = vector.shape_cast %384 : vector<4xf32> to vector<4x1xf32>
    %cst_137 = arith.constant 3.200000e+01 : f32
    %386 = vector.broadcast %cst_137 : f32 to vector<4x1xf32>
    %387 = arith.divf %385, %386 : vector<4x1xf32>
    %388 = arith.mulf %382, %382 : vector<4x1xf32>
    %389 = arith.subf %387, %388 : vector<4x1xf32>
    %390 = vector.broadcast %382 : vector<4x1xf32> to vector<4x32xf32>
    %391 = arith.subf %378, %390 : vector<4x32xf32>
    %cst_138 = arith.constant 9.99999974E-6 : f32
    %392 = vector.broadcast %cst_138 : f32 to vector<4x1xf32>
    %393 = arith.addf %389, %392 : vector<4x1xf32>
    %394 = math.rsqrt %393 : vector<4x1xf32>
    %395 = vector.broadcast %394 : vector<4x1xf32> to vector<4x32xf32>
    %396 = arith.mulf %391, %395 : vector<4x32xf32>
    %397 = vector.broadcast %372 : vector<1x32xf32> to vector<4x32xf32>
    %398 = arith.mulf %396, %397 : vector<4x32xf32>
    %399 = vector.broadcast %373 : vector<1x32xf32> to vector<4x32xf32>
    %400 = arith.addf %398, %399 : vector<4x32xf32>
    %401 = vector.extract_strided_slice %359 {offsets = [0, 0], sizes = [32, 32], strides = [1, 1]} : vector<32x96xf32> to vector<32x32xf32>
    %cst_139 = arith.constant dense<0.000000e+00> : vector<4x32xf32>
    %402 = tpu.matmul %400, %401, %cst_139 {dimension_numbers = #tpu.dot_dimension_numbers<[1], [0], [0], [1], [0, 0, 1, 1], [], []>} : vector<4x32xf32>, vector<32x32xf32>, vector<4x32xf32> -> vector<4x32xf32>
    %403 = vector.broadcast %368 : vector<1x32xf32> to vector<4x32xf32>
    %404 = arith.addf %402, %403 : vector<4x32xf32>
    %405 = vector.extract_strided_slice %357 {offsets = [0, 0], sizes = [8, 32], strides = [1, 1]} : vector<16x32xf32> to vector<8x32xf32>
    %cst_140 = arith.constant dense<0.000000e+00> : vector<8xf32>
    %406 = vector.multi_reduction <add>, %405, %cst_140 [1] : vector<8x32xf32> to vector<8xf32>
    %407 = vector.shape_cast %406 : vector<8xf32> to vector<8x1xf32>
    %cst_141 = arith.constant 3.200000e+01 : f32
    %408 = vector.broadcast %cst_141 : f32 to vector<8x1xf32>
    %409 = arith.divf %407, %408 : vector<8x1xf32>
    %410 = arith.mulf %405, %405 : vector<8x32xf32>
    %cst_142 = arith.constant dense<0.000000e+00> : vector<8xf32>
    %411 = vector.multi_reduction <add>, %410, %cst_142 [1] : vector<8x32xf32> to vector<8xf32>
    %412 = vector.shape_cast %411 : vector<8xf32> to vector<8x1xf32>
    %cst_143 = arith.constant 3.200000e+01 : f32
    %413 = vector.broadcast %cst_143 : f32 to vector<8x1xf32>
    %414 = arith.divf %412, %413 : vector<8x1xf32>
    %415 = arith.mulf %409, %409 : vector<8x1xf32>
    %416 = arith.subf %414, %415 : vector<8x1xf32>
    %417 = vector.broadcast %409 : vector<8x1xf32> to vector<8x32xf32>
    %418 = arith.subf %405, %417 : vector<8x32xf32>
    %cst_144 = arith.constant 9.99999974E-6 : f32
    %419 = vector.broadcast %cst_144 : f32 to vector<8x1xf32>
    %420 = arith.addf %416, %419 : vector<8x1xf32>
    %421 = math.rsqrt %420 : vector<8x1xf32>
    %422 = vector.broadcast %421 : vector<8x1xf32> to vector<8x32xf32>
    %423 = arith.mulf %418, %422 : vector<8x32xf32>
    %424 = vector.broadcast %372 : vector<1x32xf32> to vector<8x32xf32>
    %425 = arith.mulf %423, %424 : vector<8x32xf32>
    %426 = vector.broadcast %373 : vector<1x32xf32> to vector<8x32xf32>
    %427 = arith.addf %425, %426 : vector<8x32xf32>
    %428 = vector.extract_strided_slice %359 {offsets = [0, 32], sizes = [32, 64], strides = [1, 1]} : vector<32x96xf32> to vector<32x64xf32>
    %cst_145 = arith.constant dense<0.000000e+00> : vector<8x64xf32>
    %429 = tpu.matmul %427, %428, %cst_145 {dimension_numbers = #tpu.dot_dimension_numbers<[1], [0], [0], [1], [0, 0, 1, 1], [], []>} : vector<8x32xf32>, vector<32x64xf32>, vector<8x64xf32> -> vector<8x64xf32>
    %430 = vector.extract_strided_slice %429 {offsets = [0, 0], sizes = [8, 32], strides = [1, 1]} : vector<8x64xf32> to vector<8x32xf32>
    %431 = vector.broadcast %369 : vector<1x32xf32> to vector<8x32xf32>
    %432 = arith.addf %430, %431 : vector<8x32xf32>
    %433 = vector.extract_strided_slice %429 {offsets = [0, 32], sizes = [8, 32], strides = [1, 1]} : vector<8x64xf32> to vector<8x32xf32>
    %434 = vector.broadcast %370 : vector<1x32xf32> to vector<8x32xf32>
    %435 = arith.addf %433, %434 : vector<8x32xf32>
    %436 = vector.extract_strided_slice %404 {offsets = [0, 0], sizes = [4, 16], strides = [1, 1]} : vector<4x32xf32> to vector<4x16xf32>
    %437 = vector.extract_strided_slice %432 {offsets = [0, 0], sizes = [8, 16], strides = [1, 1]} : vector<8x32xf32> to vector<8x16xf32>
    %438 = vector.extract_strided_slice %435 {offsets = [0, 0], sizes = [8, 16], strides = [1, 1]} : vector<8x32xf32> to vector<8x16xf32>
    %cst_146 = arith.constant dense<0.000000e+00> : vector<4x8xf32>
    %439 = tpu.matmul %436, %437, %cst_146 {dimension_numbers = #tpu.dot_dimension_numbers<[1], [1], [0], [0], [0, 0, 1, 0], [], []>} : vector<4x16xf32>, vector<8x16xf32>, vector<4x8xf32> -> vector<4x8xf32>
    %cst_147 = arith.constant 2.500000e-01 : f32
    %440 = vector.broadcast %cst_147 : f32 to vector<4x8xf32>
    %441 = arith.mulf %439, %440 : vector<4x8xf32>
    %cst_148 = arith.constant dense<0xFF800000> : vector<4xf32>
    %442 = vector.multi_reduction <maximumf>, %441, %cst_148 [1] : vector<4x8xf32> to vector<4xf32>
    %443 = vector.shape_cast %442 : vector<4xf32> to vector<4x1xf32>
    %444 = vector.broadcast %443 : vector<4x1xf32> to vector<4x8xf32>
    %445 = arith.subf %441, %444 : vector<4x8xf32>
    %446 = math.exp %445 : vector<4x8xf32>
    %cst_149 = arith.constant dense<0.000000e+00> : vector<4xf32>
    %447 = vector.multi_reduction <add>, %446, %cst_149 [1] : vector<4x8xf32> to vector<4xf32>
    %448 = vector.shape_cast %447 : vector<4xf32> to vector<4x1xf32>
    %449 = vector.broadcast %448 : vector<4x1xf32> to vector<4x8xf32>
    %450 = arith.divf %446, %449 : vector<4x8xf32>
    %cst_150 = arith.constant dense<0.000000e+00> : vector<4x16xf32>
    %451 = tpu.matmul %450, %438, %cst_150 {dimension_numbers = #tpu.dot_dimension_numbers<[1], [0], [0], [1], [0, 0, 1, 1], [], []>} : vector<4x8xf32>, vector<8x16xf32>, vector<4x16xf32> -> vector<4x16xf32>
    %452 = vector.extract_strided_slice %361 {offsets = [0, 0], sizes = [16, 32], strides = [1, 1]} : vector<32x32xf32> to vector<16x32xf32>
    %cst_151 = arith.constant dense<0.000000e+00> : vector<4x32xf32>
    %453 = tpu.matmul %451, %452, %cst_151 {dimension_numbers = #tpu.dot_dimension_numbers<[1], [0], [0], [1], [0, 0, 1, 1], [], []>} : vector<4x16xf32>, vector<16x32xf32>, vector<4x32xf32> -> vector<4x32xf32>
    %454 = vector.extract_strided_slice %404 {offsets = [0, 16], sizes = [4, 16], strides = [1, 1]} : vector<4x32xf32> to vector<4x16xf32>
    %455 = vector.extract_strided_slice %432 {offsets = [0, 16], sizes = [8, 16], strides = [1, 1]} : vector<8x32xf32> to vector<8x16xf32>
    %456 = vector.extract_strided_slice %435 {offsets = [0, 16], sizes = [8, 16], strides = [1, 1]} : vector<8x32xf32> to vector<8x16xf32>
    %cst_152 = arith.constant dense<0.000000e+00> : vector<4x8xf32>
    %457 = tpu.matmul %454, %455, %cst_152 {dimension_numbers = #tpu.dot_dimension_numbers<[1], [1], [0], [0], [0, 0, 1, 0], [], []>} : vector<4x16xf32>, vector<8x16xf32>, vector<4x8xf32> -> vector<4x8xf32>
    %cst_153 = arith.constant 2.500000e-01 : f32
    %458 = vector.broadcast %cst_153 : f32 to vector<4x8xf32>
    %459 = arith.mulf %457, %458 : vector<4x8xf32>
    %cst_154 = arith.constant dense<0xFF800000> : vector<4xf32>
    %460 = vector.multi_reduction <maximumf>, %459, %cst_154 [1] : vector<4x8xf32> to vector<4xf32>
    %461 = vector.shape_cast %460 : vector<4xf32> to vector<4x1xf32>
    %462 = vector.broadcast %461 : vector<4x1xf32> to vector<4x8xf32>
    %463 = arith.subf %459, %462 : vector<4x8xf32>
    %464 = math.exp %463 : vector<4x8xf32>
    %cst_155 = arith.constant dense<0.000000e+00> : vector<4xf32>
    %465 = vector.multi_reduction <add>, %464, %cst_155 [1] : vector<4x8xf32> to vector<4xf32>
    %466 = vector.shape_cast %465 : vector<4xf32> to vector<4x1xf32>
    %467 = vector.broadcast %466 : vector<4x1xf32> to vector<4x8xf32>
    %468 = arith.divf %464, %467 : vector<4x8xf32>
    %cst_156 = arith.constant dense<0.000000e+00> : vector<4x16xf32>
    %469 = tpu.matmul %468, %456, %cst_156 {dimension_numbers = #tpu.dot_dimension_numbers<[1], [0], [0], [1], [0, 0, 1, 1], [], []>} : vector<4x8xf32>, vector<8x16xf32>, vector<4x16xf32> -> vector<4x16xf32>
    %470 = vector.extract_strided_slice %361 {offsets = [16, 0], sizes = [16, 32], strides = [1, 1]} : vector<32x32xf32> to vector<16x32xf32>
    %cst_157 = arith.constant dense<0.000000e+00> : vector<4x32xf32>
    %471 = tpu.matmul %469, %470, %cst_157 {dimension_numbers = #tpu.dot_dimension_numbers<[1], [0], [0], [1], [0, 0, 1, 1], [], []>} : vector<4x16xf32>, vector<16x32xf32>, vector<4x32xf32> -> vector<4x32xf32>
    %472 = arith.addf %453, %471 : vector<4x32xf32>
    %473 = vector.broadcast %371 : vector<1x32xf32> to vector<4x32xf32>
    %474 = arith.addf %472, %473 : vector<4x32xf32>
    %475 = arith.addf %378, %474 : vector<4x32xf32>
    %cst_158 = arith.constant dense<0.000000e+00> : vector<4xf32>
    %476 = vector.multi_reduction <add>, %475, %cst_158 [1] : vector<4x32xf32> to vector<4xf32>
    %477 = vector.shape_cast %476 : vector<4xf32> to vector<4x1xf32>
    %cst_159 = arith.constant 3.200000e+01 : f32
    %478 = vector.broadcast %cst_159 : f32 to vector<4x1xf32>
    %479 = arith.divf %477, %478 : vector<4x1xf32>
    %480 = arith.mulf %475, %475 : vector<4x32xf32>
    %cst_160 = arith.constant dense<0.000000e+00> : vector<4xf32>
    %481 = vector.multi_reduction <add>, %480, %cst_160 [1] : vector<4x32xf32> to vector<4xf32>
    %482 = vector.shape_cast %481 : vector<4xf32> to vector<4x1xf32>
    %cst_161 = arith.constant 3.200000e+01 : f32
    %483 = vector.broadcast %cst_161 : f32 to vector<4x1xf32>
    %484 = arith.divf %482, %483 : vector<4x1xf32>
    %485 = arith.mulf %479, %479 : vector<4x1xf32>
    %486 = arith.subf %484, %485 : vector<4x1xf32>
    %487 = vector.broadcast %479 : vector<4x1xf32> to vector<4x32xf32>
    %488 = arith.subf %475, %487 : vector<4x32xf32>
    %cst_162 = arith.constant 9.99999974E-6 : f32
    %489 = vector.broadcast %cst_162 : f32 to vector<4x1xf32>
    %490 = arith.addf %486, %489 : vector<4x1xf32>
    %491 = math.rsqrt %490 : vector<4x1xf32>
    %492 = vector.broadcast %491 : vector<4x1xf32> to vector<4x32xf32>
    %493 = arith.mulf %488, %492 : vector<4x32xf32>
    %494 = vector.broadcast %374 : vector<1x32xf32> to vector<4x32xf32>
    %495 = arith.mulf %493, %494 : vector<4x32xf32>
    %496 = vector.broadcast %375 : vector<1x32xf32> to vector<4x32xf32>
    %497 = arith.addf %495, %496 : vector<4x32xf32>
    %cst_163 = arith.constant dense<0.000000e+00> : vector<4x32xf32>
    %498 = tpu.matmul %497, %363, %cst_163 {dimension_numbers = #tpu.dot_dimension_numbers<[1], [0], [0], [1], [0, 0, 1, 1], [], []>} : vector<4x32xf32>, vector<32x32xf32>, vector<4x32xf32> -> vector<4x32xf32>
    %499 = vector.broadcast %376 : vector<1x32xf32> to vector<4x32xf32>
    %500 = arith.addf %498, %499 : vector<4x32xf32>
    %cst_164 = arith.constant 0.000000e+00 : f32
    %501 = vector.broadcast %cst_164 : f32 to vector<4x32xf32>
    %502 = arith.maximumf %500, %501 : vector<4x32xf32>
    %cst_165 = arith.constant dense<0.000000e+00> : vector<4x32xf32>
    %503 = tpu.matmul %502, %365, %cst_165 {dimension_numbers = #tpu.dot_dimension_numbers<[1], [0], [0], [1], [0, 0, 1, 1], [], []>} : vector<4x32xf32>, vector<32x32xf32>, vector<4x32xf32> -> vector<4x32xf32>
    %504 = vector.broadcast %377 : vector<1x32xf32> to vector<4x32xf32>
    %505 = arith.addf %503, %504 : vector<4x32xf32>
    %506 = arith.addf %475, %505 : vector<4x32xf32>
    %507 = vector.extract_strided_slice %357 {offsets = [8, 0], sizes = [8, 32], strides = [1, 1]} : vector<16x32xf32> to vector<8x32xf32>
    %cst_166 = arith.constant dense<0.000000e+00> : vector<8xf32>
    %508 = vector.multi_reduction <add>, %507, %cst_166 [1] : vector<8x32xf32> to vector<8xf32>
    %509 = vector.shape_cast %508 : vector<8xf32> to vector<8x1xf32>
    %cst_167 = arith.constant 3.200000e+01 : f32
    %510 = vector.broadcast %cst_167 : f32 to vector<8x1xf32>
    %511 = arith.divf %509, %510 : vector<8x1xf32>
    %512 = arith.mulf %507, %507 : vector<8x32xf32>
    %cst_168 = arith.constant dense<0.000000e+00> : vector<8xf32>
    %513 = vector.multi_reduction <add>, %512, %cst_168 [1] : vector<8x32xf32> to vector<8xf32>
    %514 = vector.shape_cast %513 : vector<8xf32> to vector<8x1xf32>
    %cst_169 = arith.constant 3.200000e+01 : f32
    %515 = vector.broadcast %cst_169 : f32 to vector<8x1xf32>
    %516 = arith.divf %514, %515 : vector<8x1xf32>
    %517 = arith.mulf %511, %511 : vector<8x1xf32>
    %518 = arith.subf %516, %517 : vector<8x1xf32>
    %519 = vector.broadcast %511 : vector<8x1xf32> to vector<8x32xf32>
    %520 = arith.subf %507, %519 : vector<8x32xf32>
    %cst_170 = arith.constant 9.99999974E-6 : f32
    %521 = vector.broadcast %cst_170 : f32 to vector<8x1xf32>
    %522 = arith.addf %518, %521 : vector<8x1xf32>
    %523 = math.rsqrt %522 : vector<8x1xf32>
    %524 = vector.broadcast %523 : vector<8x1xf32> to vector<8x32xf32>
    %525 = arith.mulf %520, %524 : vector<8x32xf32>
    %526 = vector.broadcast %372 : vector<1x32xf32> to vector<8x32xf32>
    %527 = arith.mulf %525, %526 : vector<8x32xf32>
    %528 = vector.broadcast %373 : vector<1x32xf32> to vector<8x32xf32>
    %529 = arith.addf %527, %528 : vector<8x32xf32>
    %530 = vector.extract_strided_slice %359 {offsets = [0, 32], sizes = [32, 64], strides = [1, 1]} : vector<32x96xf32> to vector<32x64xf32>
    %cst_171 = arith.constant dense<0.000000e+00> : vector<8x64xf32>
    %531 = tpu.matmul %529, %530, %cst_171 {dimension_numbers = #tpu.dot_dimension_numbers<[1], [0], [0], [1], [0, 0, 1, 1], [], []>} : vector<8x32xf32>, vector<32x64xf32>, vector<8x64xf32> -> vector<8x64xf32>
    %532 = vector.extract_strided_slice %531 {offsets = [0, 0], sizes = [8, 32], strides = [1, 1]} : vector<8x64xf32> to vector<8x32xf32>
    %533 = vector.broadcast %369 : vector<1x32xf32> to vector<8x32xf32>
    %534 = arith.addf %532, %533 : vector<8x32xf32>
    %535 = vector.extract_strided_slice %531 {offsets = [0, 32], sizes = [8, 32], strides = [1, 1]} : vector<8x64xf32> to vector<8x32xf32>
    %536 = vector.broadcast %370 : vector<1x32xf32> to vector<8x32xf32>
    %537 = arith.addf %535, %536 : vector<8x32xf32>
    %538 = vector.extract_strided_slice %404 {offsets = [0, 0], sizes = [4, 16], strides = [1, 1]} : vector<4x32xf32> to vector<4x16xf32>
    %539 = vector.extract_strided_slice %534 {offsets = [0, 0], sizes = [8, 16], strides = [1, 1]} : vector<8x32xf32> to vector<8x16xf32>
    %540 = vector.extract_strided_slice %537 {offsets = [0, 0], sizes = [8, 16], strides = [1, 1]} : vector<8x32xf32> to vector<8x16xf32>
    %cst_172 = arith.constant dense<0.000000e+00> : vector<4x8xf32>
    %541 = tpu.matmul %538, %539, %cst_172 {dimension_numbers = #tpu.dot_dimension_numbers<[1], [1], [0], [0], [0, 0, 1, 0], [], []>} : vector<4x16xf32>, vector<8x16xf32>, vector<4x8xf32> -> vector<4x8xf32>
    %cst_173 = arith.constant 2.500000e-01 : f32
    %542 = vector.broadcast %cst_173 : f32 to vector<4x8xf32>
    %543 = arith.mulf %541, %542 : vector<4x8xf32>
    %cst_174 = arith.constant dense<0xFF800000> : vector<4xf32>
    %544 = vector.multi_reduction <maximumf>, %543, %cst_174 [1] : vector<4x8xf32> to vector<4xf32>
    %545 = vector.shape_cast %544 : vector<4xf32> to vector<4x1xf32>
    %546 = vector.broadcast %545 : vector<4x1xf32> to vector<4x8xf32>
    %547 = arith.subf %543, %546 : vector<4x8xf32>
    %548 = math.exp %547 : vector<4x8xf32>
    %cst_175 = arith.constant dense<0.000000e+00> : vector<4xf32>
    %549 = vector.multi_reduction <add>, %548, %cst_175 [1] : vector<4x8xf32> to vector<4xf32>
    %550 = vector.shape_cast %549 : vector<4xf32> to vector<4x1xf32>
    %551 = vector.broadcast %550 : vector<4x1xf32> to vector<4x8xf32>
    %552 = arith.divf %548, %551 : vector<4x8xf32>
    %cst_176 = arith.constant dense<0.000000e+00> : vector<4x16xf32>
    %553 = tpu.matmul %552, %540, %cst_176 {dimension_numbers = #tpu.dot_dimension_numbers<[1], [0], [0], [1], [0, 0, 1, 1], [], []>} : vector<4x8xf32>, vector<8x16xf32>, vector<4x16xf32> -> vector<4x16xf32>
    %554 = vector.extract_strided_slice %361 {offsets = [0, 0], sizes = [16, 32], strides = [1, 1]} : vector<32x32xf32> to vector<16x32xf32>
    %cst_177 = arith.constant dense<0.000000e+00> : vector<4x32xf32>
    %555 = tpu.matmul %553, %554, %cst_177 {dimension_numbers = #tpu.dot_dimension_numbers<[1], [0], [0], [1], [0, 0, 1, 1], [], []>} : vector<4x16xf32>, vector<16x32xf32>, vector<4x32xf32> -> vector<4x32xf32>
    %556 = vector.extract_strided_slice %404 {offsets = [0, 16], sizes = [4, 16], strides = [1, 1]} : vector<4x32xf32> to vector<4x16xf32>
    %557 = vector.extract_strided_slice %534 {offsets = [0, 16], sizes = [8, 16], strides = [1, 1]} : vector<8x32xf32> to vector<8x16xf32>
    %558 = vector.extract_strided_slice %537 {offsets = [0, 16], sizes = [8, 16], strides = [1, 1]} : vector<8x32xf32> to vector<8x16xf32>
    %cst_178 = arith.constant dense<0.000000e+00> : vector<4x8xf32>
    %559 = tpu.matmul %556, %557, %cst_178 {dimension_numbers = #tpu.dot_dimension_numbers<[1], [1], [0], [0], [0, 0, 1, 0], [], []>} : vector<4x16xf32>, vector<8x16xf32>, vector<4x8xf32> -> vector<4x8xf32>
    %cst_179 = arith.constant 2.500000e-01 : f32
    %560 = vector.broadcast %cst_179 : f32 to vector<4x8xf32>
    %561 = arith.mulf %559, %560 : vector<4x8xf32>
    %cst_180 = arith.constant dense<0xFF800000> : vector<4xf32>
    %562 = vector.multi_reduction <maximumf>, %561, %cst_180 [1] : vector<4x8xf32> to vector<4xf32>
    %563 = vector.shape_cast %562 : vector<4xf32> to vector<4x1xf32>
    %564 = vector.broadcast %563 : vector<4x1xf32> to vector<4x8xf32>
    %565 = arith.subf %561, %564 : vector<4x8xf32>
    %566 = math.exp %565 : vector<4x8xf32>
    %cst_181 = arith.constant dense<0.000000e+00> : vector<4xf32>
    %567 = vector.multi_reduction <add>, %566, %cst_181 [1] : vector<4x8xf32> to vector<4xf32>
    %568 = vector.shape_cast %567 : vector<4xf32> to vector<4x1xf32>
    %569 = vector.broadcast %568 : vector<4x1xf32> to vector<4x8xf32>
    %570 = arith.divf %566, %569 : vector<4x8xf32>
    %cst_182 = arith.constant dense<0.000000e+00> : vector<4x16xf32>
    %571 = tpu.matmul %570, %558, %cst_182 {dimension_numbers = #tpu.dot_dimension_numbers<[1], [0], [0], [1], [0, 0, 1, 1], [], []>} : vector<4x8xf32>, vector<8x16xf32>, vector<4x16xf32> -> vector<4x16xf32>
    %572 = vector.extract_strided_slice %361 {offsets = [16, 0], sizes = [16, 32], strides = [1, 1]} : vector<32x32xf32> to vector<16x32xf32>
    %cst_183 = arith.constant dense<0.000000e+00> : vector<4x32xf32>
    %573 = tpu.matmul %571, %572, %cst_183 {dimension_numbers = #tpu.dot_dimension_numbers<[1], [0], [0], [1], [0, 0, 1, 1], [], []>} : vector<4x16xf32>, vector<16x32xf32>, vector<4x32xf32> -> vector<4x32xf32>
    %574 = arith.addf %555, %573 : vector<4x32xf32>
    %575 = vector.broadcast %371 : vector<1x32xf32> to vector<4x32xf32>
    %576 = arith.addf %574, %575 : vector<4x32xf32>
    %577 = arith.addf %378, %576 : vector<4x32xf32>
    %cst_184 = arith.constant dense<0.000000e+00> : vector<4xf32>
    %578 = vector.multi_reduction <add>, %577, %cst_184 [1] : vector<4x32xf32> to vector<4xf32>
    %579 = vector.shape_cast %578 : vector<4xf32> to vector<4x1xf32>
    %cst_185 = arith.constant 3.200000e+01 : f32
    %580 = vector.broadcast %cst_185 : f32 to vector<4x1xf32>
    %581 = arith.divf %579, %580 : vector<4x1xf32>
    %582 = arith.mulf %577, %577 : vector<4x32xf32>
    %cst_186 = arith.constant dense<0.000000e+00> : vector<4xf32>
    %583 = vector.multi_reduction <add>, %582, %cst_186 [1] : vector<4x32xf32> to vector<4xf32>
    %584 = vector.shape_cast %583 : vector<4xf32> to vector<4x1xf32>
    %cst_187 = arith.constant 3.200000e+01 : f32
    %585 = vector.broadcast %cst_187 : f32 to vector<4x1xf32>
    %586 = arith.divf %584, %585 : vector<4x1xf32>
    %587 = arith.mulf %581, %581 : vector<4x1xf32>
    %588 = arith.subf %586, %587 : vector<4x1xf32>
    %589 = vector.broadcast %581 : vector<4x1xf32> to vector<4x32xf32>
    %590 = arith.subf %577, %589 : vector<4x32xf32>
    %cst_188 = arith.constant 9.99999974E-6 : f32
    %591 = vector.broadcast %cst_188 : f32 to vector<4x1xf32>
    %592 = arith.addf %588, %591 : vector<4x1xf32>
    %593 = math.rsqrt %592 : vector<4x1xf32>
    %594 = vector.broadcast %593 : vector<4x1xf32> to vector<4x32xf32>
    %595 = arith.mulf %590, %594 : vector<4x32xf32>
    %596 = vector.broadcast %374 : vector<1x32xf32> to vector<4x32xf32>
    %597 = arith.mulf %595, %596 : vector<4x32xf32>
    %598 = vector.broadcast %375 : vector<1x32xf32> to vector<4x32xf32>
    %599 = arith.addf %597, %598 : vector<4x32xf32>
    %cst_189 = arith.constant dense<0.000000e+00> : vector<4x32xf32>
    %600 = tpu.matmul %599, %363, %cst_189 {dimension_numbers = #tpu.dot_dimension_numbers<[1], [0], [0], [1], [0, 0, 1, 1], [], []>} : vector<4x32xf32>, vector<32x32xf32>, vector<4x32xf32> -> vector<4x32xf32>
    %601 = vector.broadcast %376 : vector<1x32xf32> to vector<4x32xf32>
    %602 = arith.addf %600, %601 : vector<4x32xf32>
    %cst_190 = arith.constant 0.000000e+00 : f32
    %603 = vector.broadcast %cst_190 : f32 to vector<4x32xf32>
    %604 = arith.maximumf %602, %603 : vector<4x32xf32>
    %cst_191 = arith.constant dense<0.000000e+00> : vector<4x32xf32>
    %605 = tpu.matmul %604, %365, %cst_191 {dimension_numbers = #tpu.dot_dimension_numbers<[1], [0], [0], [1], [0, 0, 1, 1], [], []>} : vector<4x32xf32>, vector<32x32xf32>, vector<4x32xf32> -> vector<4x32xf32>
    %606 = vector.broadcast %377 : vector<1x32xf32> to vector<4x32xf32>
    %607 = arith.addf %605, %606 : vector<4x32xf32>
    %608 = arith.addf %577, %607 : vector<4x32xf32>
    %c3_192 = arith.constant 3 : index
    %c0_193 = arith.constant 0 : index
    %c0_194 = arith.constant 0 : index
    %609 = vector.load %arg5[%c3_192, %c0_193, %c0_194] : memref<5x32x96xf32, #tpu.memory_space<vmem>>, vector<1x32x96xf32>
    %610 = vector.shape_cast %609 : vector<1x32x96xf32> to vector<32x96xf32>
    %c9 = arith.constant 9 : index
    %c0_195 = arith.constant 0 : index
    %c0_196 = arith.constant 0 : index
    %611 = vector.load %arg6[%c9, %c0_195, %c0_196] : memref<15x32x32xf32, #tpu.memory_space<vmem>>, vector<1x32x32xf32>
    %612 = vector.shape_cast %611 : vector<1x32x32xf32> to vector<32x32xf32>
    %c10 = arith.constant 10 : index
    %c0_197 = arith.constant 0 : index
    %c0_198 = arith.constant 0 : index
    %613 = vector.load %arg6[%c10, %c0_197, %c0_198] : memref<15x32x32xf32, #tpu.memory_space<vmem>>, vector<1x32x32xf32>
    %614 = vector.shape_cast %613 : vector<1x32x32xf32> to vector<32x32xf32>
    %c11 = arith.constant 11 : index
    %c0_199 = arith.constant 0 : index
    %c0_200 = arith.constant 0 : index
    %615 = vector.load %arg6[%c11, %c0_199, %c0_200] : memref<15x32x32xf32, #tpu.memory_space<vmem>>, vector<1x32x32xf32>
    %616 = vector.shape_cast %615 : vector<1x32x32xf32> to vector<32x32xf32>
    %c3_201 = arith.constant 3 : index
    %c0_202 = arith.constant 0 : index
    %c0_203 = arith.constant 0 : index
    %617 = vector.load %arg7[%c3_201, %c0_202, %c0_203] : memref<5x10x32xf32, #tpu.memory_space<vmem>>, vector<1x10x32xf32>
    %618 = vector.shape_cast %617 : vector<1x10x32xf32> to vector<10x32xf32>
    %619 = vector.extract_strided_slice %618 {offsets = [0, 0], sizes = [1, 32], strides = [1, 1]} : vector<10x32xf32> to vector<1x32xf32>
    %620 = vector.extract_strided_slice %618 {offsets = [1, 0], sizes = [1, 32], strides = [1, 1]} : vector<10x32xf32> to vector<1x32xf32>
    %621 = vector.extract_strided_slice %618 {offsets = [2, 0], sizes = [1, 32], strides = [1, 1]} : vector<10x32xf32> to vector<1x32xf32>
    %622 = vector.extract_strided_slice %618 {offsets = [3, 0], sizes = [1, 32], strides = [1, 1]} : vector<10x32xf32> to vector<1x32xf32>
    %623 = vector.extract_strided_slice %618 {offsets = [4, 0], sizes = [1, 32], strides = [1, 1]} : vector<10x32xf32> to vector<1x32xf32>
    %624 = vector.extract_strided_slice %618 {offsets = [5, 0], sizes = [1, 32], strides = [1, 1]} : vector<10x32xf32> to vector<1x32xf32>
    %625 = vector.extract_strided_slice %618 {offsets = [6, 0], sizes = [1, 32], strides = [1, 1]} : vector<10x32xf32> to vector<1x32xf32>
    %626 = vector.extract_strided_slice %618 {offsets = [7, 0], sizes = [1, 32], strides = [1, 1]} : vector<10x32xf32> to vector<1x32xf32>
    %627 = vector.extract_strided_slice %618 {offsets = [8, 0], sizes = [1, 32], strides = [1, 1]} : vector<10x32xf32> to vector<1x32xf32>
    %628 = vector.extract_strided_slice %618 {offsets = [9, 0], sizes = [1, 32], strides = [1, 1]} : vector<10x32xf32> to vector<1x32xf32>
    %cst_204 = arith.constant dense<0.000000e+00> : vector<4xf32>
    %629 = vector.multi_reduction <add>, %506, %cst_204 [1] : vector<4x32xf32> to vector<4xf32>
    %630 = vector.shape_cast %629 : vector<4xf32> to vector<4x1xf32>
    %cst_205 = arith.constant 3.200000e+01 : f32
    %631 = vector.broadcast %cst_205 : f32 to vector<4x1xf32>
    %632 = arith.divf %630, %631 : vector<4x1xf32>
    %633 = arith.mulf %506, %506 : vector<4x32xf32>
    %cst_206 = arith.constant dense<0.000000e+00> : vector<4xf32>
    %634 = vector.multi_reduction <add>, %633, %cst_206 [1] : vector<4x32xf32> to vector<4xf32>
    %635 = vector.shape_cast %634 : vector<4xf32> to vector<4x1xf32>
    %cst_207 = arith.constant 3.200000e+01 : f32
    %636 = vector.broadcast %cst_207 : f32 to vector<4x1xf32>
    %637 = arith.divf %635, %636 : vector<4x1xf32>
    %638 = arith.mulf %632, %632 : vector<4x1xf32>
    %639 = arith.subf %637, %638 : vector<4x1xf32>
    %640 = vector.broadcast %632 : vector<4x1xf32> to vector<4x32xf32>
    %641 = arith.subf %506, %640 : vector<4x32xf32>
    %cst_208 = arith.constant 9.99999974E-6 : f32
    %642 = vector.broadcast %cst_208 : f32 to vector<4x1xf32>
    %643 = arith.addf %639, %642 : vector<4x1xf32>
    %644 = math.rsqrt %643 : vector<4x1xf32>
    %645 = vector.broadcast %644 : vector<4x1xf32> to vector<4x32xf32>
    %646 = arith.mulf %641, %645 : vector<4x32xf32>
    %647 = vector.broadcast %623 : vector<1x32xf32> to vector<4x32xf32>
    %648 = arith.mulf %646, %647 : vector<4x32xf32>
    %649 = vector.broadcast %624 : vector<1x32xf32> to vector<4x32xf32>
    %650 = arith.addf %648, %649 : vector<4x32xf32>
    %cst_209 = arith.constant dense<0.000000e+00> : vector<4x96xf32>
    %651 = tpu.matmul %650, %610, %cst_209 {dimension_numbers = #tpu.dot_dimension_numbers<[1], [0], [0], [1], [0, 0, 1, 1], [], []>} : vector<4x32xf32>, vector<32x96xf32>, vector<4x96xf32> -> vector<4x96xf32>
    %652 = vector.extract_strided_slice %651 {offsets = [0, 0], sizes = [4, 32], strides = [1, 1]} : vector<4x96xf32> to vector<4x32xf32>
    %653 = vector.broadcast %619 : vector<1x32xf32> to vector<4x32xf32>
    %654 = arith.addf %652, %653 : vector<4x32xf32>
    %655 = vector.extract_strided_slice %651 {offsets = [0, 32], sizes = [4, 32], strides = [1, 1]} : vector<4x96xf32> to vector<4x32xf32>
    %656 = vector.broadcast %620 : vector<1x32xf32> to vector<4x32xf32>
    %657 = arith.addf %655, %656 : vector<4x32xf32>
    %658 = vector.extract_strided_slice %651 {offsets = [0, 64], sizes = [4, 32], strides = [1, 1]} : vector<4x96xf32> to vector<4x32xf32>
    %659 = vector.broadcast %621 : vector<1x32xf32> to vector<4x32xf32>
    %660 = arith.addf %658, %659 : vector<4x32xf32>
    %661 = vector.extract_strided_slice %654 {offsets = [0, 0], sizes = [4, 16], strides = [1, 1]} : vector<4x32xf32> to vector<4x16xf32>
    %662 = vector.extract_strided_slice %657 {offsets = [0, 0], sizes = [4, 16], strides = [1, 1]} : vector<4x32xf32> to vector<4x16xf32>
    %663 = vector.extract_strided_slice %660 {offsets = [0, 0], sizes = [4, 16], strides = [1, 1]} : vector<4x32xf32> to vector<4x16xf32>
    %cst_210 = arith.constant dense<0.000000e+00> : vector<4x4xf32>
    %664 = tpu.matmul %661, %662, %cst_210 {dimension_numbers = #tpu.dot_dimension_numbers<[1], [1], [0], [0], [0, 0, 1, 0], [], []>} : vector<4x16xf32>, vector<4x16xf32>, vector<4x4xf32> -> vector<4x4xf32>
    %cst_211 = arith.constant 2.500000e-01 : f32
    %665 = vector.broadcast %cst_211 : f32 to vector<4x4xf32>
    %666 = arith.mulf %664, %665 : vector<4x4xf32>
    %cst_212 = arith.constant dense<0xFF800000> : vector<4xf32>
    %667 = vector.multi_reduction <maximumf>, %666, %cst_212 [1] : vector<4x4xf32> to vector<4xf32>
    %668 = vector.shape_cast %667 : vector<4xf32> to vector<4x1xf32>
    %669 = vector.broadcast %668 : vector<4x1xf32> to vector<4x4xf32>
    %670 = arith.subf %666, %669 : vector<4x4xf32>
    %671 = math.exp %670 : vector<4x4xf32>
    %cst_213 = arith.constant dense<0.000000e+00> : vector<4xf32>
    %672 = vector.multi_reduction <add>, %671, %cst_213 [1] : vector<4x4xf32> to vector<4xf32>
    %673 = vector.shape_cast %672 : vector<4xf32> to vector<4x1xf32>
    %674 = vector.broadcast %673 : vector<4x1xf32> to vector<4x4xf32>
    %675 = arith.divf %671, %674 : vector<4x4xf32>
    %cst_214 = arith.constant dense<0.000000e+00> : vector<4x16xf32>
    %676 = tpu.matmul %675, %663, %cst_214 {dimension_numbers = #tpu.dot_dimension_numbers<[1], [0], [0], [1], [0, 0, 1, 1], [], []>} : vector<4x4xf32>, vector<4x16xf32>, vector<4x16xf32> -> vector<4x16xf32>
    %677 = vector.extract_strided_slice %612 {offsets = [0, 0], sizes = [16, 32], strides = [1, 1]} : vector<32x32xf32> to vector<16x32xf32>
    %cst_215 = arith.constant dense<0.000000e+00> : vector<4x32xf32>
    %678 = tpu.matmul %676, %677, %cst_215 {dimension_numbers = #tpu.dot_dimension_numbers<[1], [0], [0], [1], [0, 0, 1, 1], [], []>} : vector<4x16xf32>, vector<16x32xf32>, vector<4x32xf32> -> vector<4x32xf32>
    %679 = vector.extract_strided_slice %654 {offsets = [0, 16], sizes = [4, 16], strides = [1, 1]} : vector<4x32xf32> to vector<4x16xf32>
    %680 = vector.extract_strided_slice %657 {offsets = [0, 16], sizes = [4, 16], strides = [1, 1]} : vector<4x32xf32> to vector<4x16xf32>
    %681 = vector.extract_strided_slice %660 {offsets = [0, 16], sizes = [4, 16], strides = [1, 1]} : vector<4x32xf32> to vector<4x16xf32>
    %cst_216 = arith.constant dense<0.000000e+00> : vector<4x4xf32>
    %682 = tpu.matmul %679, %680, %cst_216 {dimension_numbers = #tpu.dot_dimension_numbers<[1], [1], [0], [0], [0, 0, 1, 0], [], []>} : vector<4x16xf32>, vector<4x16xf32>, vector<4x4xf32> -> vector<4x4xf32>
    %cst_217 = arith.constant 2.500000e-01 : f32
    %683 = vector.broadcast %cst_217 : f32 to vector<4x4xf32>
    %684 = arith.mulf %682, %683 : vector<4x4xf32>
    %cst_218 = arith.constant dense<0xFF800000> : vector<4xf32>
    %685 = vector.multi_reduction <maximumf>, %684, %cst_218 [1] : vector<4x4xf32> to vector<4xf32>
    %686 = vector.shape_cast %685 : vector<4xf32> to vector<4x1xf32>
    %687 = vector.broadcast %686 : vector<4x1xf32> to vector<4x4xf32>
    %688 = arith.subf %684, %687 : vector<4x4xf32>
    %689 = math.exp %688 : vector<4x4xf32>
    %cst_219 = arith.constant dense<0.000000e+00> : vector<4xf32>
    %690 = vector.multi_reduction <add>, %689, %cst_219 [1] : vector<4x4xf32> to vector<4xf32>
    %691 = vector.shape_cast %690 : vector<4xf32> to vector<4x1xf32>
    %692 = vector.broadcast %691 : vector<4x1xf32> to vector<4x4xf32>
    %693 = arith.divf %689, %692 : vector<4x4xf32>
    %cst_220 = arith.constant dense<0.000000e+00> : vector<4x16xf32>
    %694 = tpu.matmul %693, %681, %cst_220 {dimension_numbers = #tpu.dot_dimension_numbers<[1], [0], [0], [1], [0, 0, 1, 1], [], []>} : vector<4x4xf32>, vector<4x16xf32>, vector<4x16xf32> -> vector<4x16xf32>
    %695 = vector.extract_strided_slice %612 {offsets = [16, 0], sizes = [16, 32], strides = [1, 1]} : vector<32x32xf32> to vector<16x32xf32>
    %cst_221 = arith.constant dense<0.000000e+00> : vector<4x32xf32>
    %696 = tpu.matmul %694, %695, %cst_221 {dimension_numbers = #tpu.dot_dimension_numbers<[1], [0], [0], [1], [0, 0, 1, 1], [], []>} : vector<4x16xf32>, vector<16x32xf32>, vector<4x32xf32> -> vector<4x32xf32>
    %697 = arith.addf %678, %696 : vector<4x32xf32>
    %698 = vector.broadcast %622 : vector<1x32xf32> to vector<4x32xf32>
    %699 = arith.addf %697, %698 : vector<4x32xf32>
    %700 = arith.addf %506, %699 : vector<4x32xf32>
    %cst_222 = arith.constant dense<0.000000e+00> : vector<4xf32>
    %701 = vector.multi_reduction <add>, %700, %cst_222 [1] : vector<4x32xf32> to vector<4xf32>
    %702 = vector.shape_cast %701 : vector<4xf32> to vector<4x1xf32>
    %cst_223 = arith.constant 3.200000e+01 : f32
    %703 = vector.broadcast %cst_223 : f32 to vector<4x1xf32>
    %704 = arith.divf %702, %703 : vector<4x1xf32>
    %705 = arith.mulf %700, %700 : vector<4x32xf32>
    %cst_224 = arith.constant dense<0.000000e+00> : vector<4xf32>
    %706 = vector.multi_reduction <add>, %705, %cst_224 [1] : vector<4x32xf32> to vector<4xf32>
    %707 = vector.shape_cast %706 : vector<4xf32> to vector<4x1xf32>
    %cst_225 = arith.constant 3.200000e+01 : f32
    %708 = vector.broadcast %cst_225 : f32 to vector<4x1xf32>
    %709 = arith.divf %707, %708 : vector<4x1xf32>
    %710 = arith.mulf %704, %704 : vector<4x1xf32>
    %711 = arith.subf %709, %710 : vector<4x1xf32>
    %712 = vector.broadcast %704 : vector<4x1xf32> to vector<4x32xf32>
    %713 = arith.subf %700, %712 : vector<4x32xf32>
    %cst_226 = arith.constant 9.99999974E-6 : f32
    %714 = vector.broadcast %cst_226 : f32 to vector<4x1xf32>
    %715 = arith.addf %711, %714 : vector<4x1xf32>
    %716 = math.rsqrt %715 : vector<4x1xf32>
    %717 = vector.broadcast %716 : vector<4x1xf32> to vector<4x32xf32>
    %718 = arith.mulf %713, %717 : vector<4x32xf32>
    %719 = vector.broadcast %625 : vector<1x32xf32> to vector<4x32xf32>
    %720 = arith.mulf %718, %719 : vector<4x32xf32>
    %721 = vector.broadcast %626 : vector<1x32xf32> to vector<4x32xf32>
    %722 = arith.addf %720, %721 : vector<4x32xf32>
    %cst_227 = arith.constant dense<0.000000e+00> : vector<4x32xf32>
    %723 = tpu.matmul %722, %614, %cst_227 {dimension_numbers = #tpu.dot_dimension_numbers<[1], [0], [0], [1], [0, 0, 1, 1], [], []>} : vector<4x32xf32>, vector<32x32xf32>, vector<4x32xf32> -> vector<4x32xf32>
    %724 = vector.broadcast %627 : vector<1x32xf32> to vector<4x32xf32>
    %725 = arith.addf %723, %724 : vector<4x32xf32>
    %cst_228 = arith.constant 0.000000e+00 : f32
    %726 = vector.broadcast %cst_228 : f32 to vector<4x32xf32>
    %727 = arith.maximumf %725, %726 : vector<4x32xf32>
    %cst_229 = arith.constant dense<0.000000e+00> : vector<4x32xf32>
    %728 = tpu.matmul %727, %616, %cst_229 {dimension_numbers = #tpu.dot_dimension_numbers<[1], [0], [0], [1], [0, 0, 1, 1], [], []>} : vector<4x32xf32>, vector<32x32xf32>, vector<4x32xf32> -> vector<4x32xf32>
    %729 = vector.broadcast %628 : vector<1x32xf32> to vector<4x32xf32>
    %730 = arith.addf %728, %729 : vector<4x32xf32>
    %731 = arith.addf %700, %730 : vector<4x32xf32>
    %c3_230 = arith.constant 3 : index
    %c0_231 = arith.constant 0 : index
    %c0_232 = arith.constant 0 : index
    %732 = vector.load %arg5[%c3_230, %c0_231, %c0_232] : memref<5x32x96xf32, #tpu.memory_space<vmem>>, vector<1x32x96xf32>
    %733 = vector.shape_cast %732 : vector<1x32x96xf32> to vector<32x96xf32>
    %c9_233 = arith.constant 9 : index
    %c0_234 = arith.constant 0 : index
    %c0_235 = arith.constant 0 : index
    %734 = vector.load %arg6[%c9_233, %c0_234, %c0_235] : memref<15x32x32xf32, #tpu.memory_space<vmem>>, vector<1x32x32xf32>
    %735 = vector.shape_cast %734 : vector<1x32x32xf32> to vector<32x32xf32>
    %c10_236 = arith.constant 10 : index
    %c0_237 = arith.constant 0 : index
    %c0_238 = arith.constant 0 : index
    %736 = vector.load %arg6[%c10_236, %c0_237, %c0_238] : memref<15x32x32xf32, #tpu.memory_space<vmem>>, vector<1x32x32xf32>
    %737 = vector.shape_cast %736 : vector<1x32x32xf32> to vector<32x32xf32>
    %c11_239 = arith.constant 11 : index
    %c0_240 = arith.constant 0 : index
    %c0_241 = arith.constant 0 : index
    %738 = vector.load %arg6[%c11_239, %c0_240, %c0_241] : memref<15x32x32xf32, #tpu.memory_space<vmem>>, vector<1x32x32xf32>
    %739 = vector.shape_cast %738 : vector<1x32x32xf32> to vector<32x32xf32>
    %c3_242 = arith.constant 3 : index
    %c0_243 = arith.constant 0 : index
    %c0_244 = arith.constant 0 : index
    %740 = vector.load %arg7[%c3_242, %c0_243, %c0_244] : memref<5x10x32xf32, #tpu.memory_space<vmem>>, vector<1x10x32xf32>
    %741 = vector.shape_cast %740 : vector<1x10x32xf32> to vector<10x32xf32>
    %742 = vector.extract_strided_slice %741 {offsets = [0, 0], sizes = [1, 32], strides = [1, 1]} : vector<10x32xf32> to vector<1x32xf32>
    %743 = vector.extract_strided_slice %741 {offsets = [1, 0], sizes = [1, 32], strides = [1, 1]} : vector<10x32xf32> to vector<1x32xf32>
    %744 = vector.extract_strided_slice %741 {offsets = [2, 0], sizes = [1, 32], strides = [1, 1]} : vector<10x32xf32> to vector<1x32xf32>
    %745 = vector.extract_strided_slice %741 {offsets = [3, 0], sizes = [1, 32], strides = [1, 1]} : vector<10x32xf32> to vector<1x32xf32>
    %746 = vector.extract_strided_slice %741 {offsets = [4, 0], sizes = [1, 32], strides = [1, 1]} : vector<10x32xf32> to vector<1x32xf32>
    %747 = vector.extract_strided_slice %741 {offsets = [5, 0], sizes = [1, 32], strides = [1, 1]} : vector<10x32xf32> to vector<1x32xf32>
    %748 = vector.extract_strided_slice %741 {offsets = [6, 0], sizes = [1, 32], strides = [1, 1]} : vector<10x32xf32> to vector<1x32xf32>
    %749 = vector.extract_strided_slice %741 {offsets = [7, 0], sizes = [1, 32], strides = [1, 1]} : vector<10x32xf32> to vector<1x32xf32>
    %750 = vector.extract_strided_slice %741 {offsets = [8, 0], sizes = [1, 32], strides = [1, 1]} : vector<10x32xf32> to vector<1x32xf32>
    %751 = vector.extract_strided_slice %741 {offsets = [9, 0], sizes = [1, 32], strides = [1, 1]} : vector<10x32xf32> to vector<1x32xf32>
    %cst_245 = arith.constant dense<0.000000e+00> : vector<4xf32>
    %752 = vector.multi_reduction <add>, %608, %cst_245 [1] : vector<4x32xf32> to vector<4xf32>
    %753 = vector.shape_cast %752 : vector<4xf32> to vector<4x1xf32>
    %cst_246 = arith.constant 3.200000e+01 : f32
    %754 = vector.broadcast %cst_246 : f32 to vector<4x1xf32>
    %755 = arith.divf %753, %754 : vector<4x1xf32>
    %756 = arith.mulf %608, %608 : vector<4x32xf32>
    %cst_247 = arith.constant dense<0.000000e+00> : vector<4xf32>
    %757 = vector.multi_reduction <add>, %756, %cst_247 [1] : vector<4x32xf32> to vector<4xf32>
    %758 = vector.shape_cast %757 : vector<4xf32> to vector<4x1xf32>
    %cst_248 = arith.constant 3.200000e+01 : f32
    %759 = vector.broadcast %cst_248 : f32 to vector<4x1xf32>
    %760 = arith.divf %758, %759 : vector<4x1xf32>
    %761 = arith.mulf %755, %755 : vector<4x1xf32>
    %762 = arith.subf %760, %761 : vector<4x1xf32>
    %763 = vector.broadcast %755 : vector<4x1xf32> to vector<4x32xf32>
    %764 = arith.subf %608, %763 : vector<4x32xf32>
    %cst_249 = arith.constant 9.99999974E-6 : f32
    %765 = vector.broadcast %cst_249 : f32 to vector<4x1xf32>
    %766 = arith.addf %762, %765 : vector<4x1xf32>
    %767 = math.rsqrt %766 : vector<4x1xf32>
    %768 = vector.broadcast %767 : vector<4x1xf32> to vector<4x32xf32>
    %769 = arith.mulf %764, %768 : vector<4x32xf32>
    %770 = vector.broadcast %746 : vector<1x32xf32> to vector<4x32xf32>
    %771 = arith.mulf %769, %770 : vector<4x32xf32>
    %772 = vector.broadcast %747 : vector<1x32xf32> to vector<4x32xf32>
    %773 = arith.addf %771, %772 : vector<4x32xf32>
    %cst_250 = arith.constant dense<0.000000e+00> : vector<4x96xf32>
    %774 = tpu.matmul %773, %733, %cst_250 {dimension_numbers = #tpu.dot_dimension_numbers<[1], [0], [0], [1], [0, 0, 1, 1], [], []>} : vector<4x32xf32>, vector<32x96xf32>, vector<4x96xf32> -> vector<4x96xf32>
    %775 = vector.extract_strided_slice %774 {offsets = [0, 0], sizes = [4, 32], strides = [1, 1]} : vector<4x96xf32> to vector<4x32xf32>
    %776 = vector.broadcast %742 : vector<1x32xf32> to vector<4x32xf32>
    %777 = arith.addf %775, %776 : vector<4x32xf32>
    %778 = vector.extract_strided_slice %774 {offsets = [0, 32], sizes = [4, 32], strides = [1, 1]} : vector<4x96xf32> to vector<4x32xf32>
    %779 = vector.broadcast %743 : vector<1x32xf32> to vector<4x32xf32>
    %780 = arith.addf %778, %779 : vector<4x32xf32>
    %781 = vector.extract_strided_slice %774 {offsets = [0, 64], sizes = [4, 32], strides = [1, 1]} : vector<4x96xf32> to vector<4x32xf32>
    %782 = vector.broadcast %744 : vector<1x32xf32> to vector<4x32xf32>
    %783 = arith.addf %781, %782 : vector<4x32xf32>
    %784 = vector.extract_strided_slice %777 {offsets = [0, 0], sizes = [4, 16], strides = [1, 1]} : vector<4x32xf32> to vector<4x16xf32>
    %785 = vector.extract_strided_slice %780 {offsets = [0, 0], sizes = [4, 16], strides = [1, 1]} : vector<4x32xf32> to vector<4x16xf32>
    %786 = vector.extract_strided_slice %783 {offsets = [0, 0], sizes = [4, 16], strides = [1, 1]} : vector<4x32xf32> to vector<4x16xf32>
    %cst_251 = arith.constant dense<0.000000e+00> : vector<4x4xf32>
    %787 = tpu.matmul %784, %785, %cst_251 {dimension_numbers = #tpu.dot_dimension_numbers<[1], [1], [0], [0], [0, 0, 1, 0], [], []>} : vector<4x16xf32>, vector<4x16xf32>, vector<4x4xf32> -> vector<4x4xf32>
    %cst_252 = arith.constant 2.500000e-01 : f32
    %788 = vector.broadcast %cst_252 : f32 to vector<4x4xf32>
    %789 = arith.mulf %787, %788 : vector<4x4xf32>
    %cst_253 = arith.constant dense<0xFF800000> : vector<4xf32>
    %790 = vector.multi_reduction <maximumf>, %789, %cst_253 [1] : vector<4x4xf32> to vector<4xf32>
    %791 = vector.shape_cast %790 : vector<4xf32> to vector<4x1xf32>
    %792 = vector.broadcast %791 : vector<4x1xf32> to vector<4x4xf32>
    %793 = arith.subf %789, %792 : vector<4x4xf32>
    %794 = math.exp %793 : vector<4x4xf32>
    %cst_254 = arith.constant dense<0.000000e+00> : vector<4xf32>
    %795 = vector.multi_reduction <add>, %794, %cst_254 [1] : vector<4x4xf32> to vector<4xf32>
    %796 = vector.shape_cast %795 : vector<4xf32> to vector<4x1xf32>
    %797 = vector.broadcast %796 : vector<4x1xf32> to vector<4x4xf32>
    %798 = arith.divf %794, %797 : vector<4x4xf32>
    %cst_255 = arith.constant dense<0.000000e+00> : vector<4x16xf32>
    %799 = tpu.matmul %798, %786, %cst_255 {dimension_numbers = #tpu.dot_dimension_numbers<[1], [0], [0], [1], [0, 0, 1, 1], [], []>} : vector<4x4xf32>, vector<4x16xf32>, vector<4x16xf32> -> vector<4x16xf32>
    %800 = vector.extract_strided_slice %735 {offsets = [0, 0], sizes = [16, 32], strides = [1, 1]} : vector<32x32xf32> to vector<16x32xf32>
    %cst_256 = arith.constant dense<0.000000e+00> : vector<4x32xf32>
    %801 = tpu.matmul %799, %800, %cst_256 {dimension_numbers = #tpu.dot_dimension_numbers<[1], [0], [0], [1], [0, 0, 1, 1], [], []>} : vector<4x16xf32>, vector<16x32xf32>, vector<4x32xf32> -> vector<4x32xf32>
    %802 = vector.extract_strided_slice %777 {offsets = [0, 16], sizes = [4, 16], strides = [1, 1]} : vector<4x32xf32> to vector<4x16xf32>
    %803 = vector.extract_strided_slice %780 {offsets = [0, 16], sizes = [4, 16], strides = [1, 1]} : vector<4x32xf32> to vector<4x16xf32>
    %804 = vector.extract_strided_slice %783 {offsets = [0, 16], sizes = [4, 16], strides = [1, 1]} : vector<4x32xf32> to vector<4x16xf32>
    %cst_257 = arith.constant dense<0.000000e+00> : vector<4x4xf32>
    %805 = tpu.matmul %802, %803, %cst_257 {dimension_numbers = #tpu.dot_dimension_numbers<[1], [1], [0], [0], [0, 0, 1, 0], [], []>} : vector<4x16xf32>, vector<4x16xf32>, vector<4x4xf32> -> vector<4x4xf32>
    %cst_258 = arith.constant 2.500000e-01 : f32
    %806 = vector.broadcast %cst_258 : f32 to vector<4x4xf32>
    %807 = arith.mulf %805, %806 : vector<4x4xf32>
    %cst_259 = arith.constant dense<0xFF800000> : vector<4xf32>
    %808 = vector.multi_reduction <maximumf>, %807, %cst_259 [1] : vector<4x4xf32> to vector<4xf32>
    %809 = vector.shape_cast %808 : vector<4xf32> to vector<4x1xf32>
    %810 = vector.broadcast %809 : vector<4x1xf32> to vector<4x4xf32>
    %811 = arith.subf %807, %810 : vector<4x4xf32>
    %812 = math.exp %811 : vector<4x4xf32>
    %cst_260 = arith.constant dense<0.000000e+00> : vector<4xf32>
    %813 = vector.multi_reduction <add>, %812, %cst_260 [1] : vector<4x4xf32> to vector<4xf32>
    %814 = vector.shape_cast %813 : vector<4xf32> to vector<4x1xf32>
    %815 = vector.broadcast %814 : vector<4x1xf32> to vector<4x4xf32>
    %816 = arith.divf %812, %815 : vector<4x4xf32>
    %cst_261 = arith.constant dense<0.000000e+00> : vector<4x16xf32>
    %817 = tpu.matmul %816, %804, %cst_261 {dimension_numbers = #tpu.dot_dimension_numbers<[1], [0], [0], [1], [0, 0, 1, 1], [], []>} : vector<4x4xf32>, vector<4x16xf32>, vector<4x16xf32> -> vector<4x16xf32>
    %818 = vector.extract_strided_slice %735 {offsets = [16, 0], sizes = [16, 32], strides = [1, 1]} : vector<32x32xf32> to vector<16x32xf32>
    %cst_262 = arith.constant dense<0.000000e+00> : vector<4x32xf32>
    %819 = tpu.matmul %817, %818, %cst_262 {dimension_numbers = #tpu.dot_dimension_numbers<[1], [0], [0], [1], [0, 0, 1, 1], [], []>} : vector<4x16xf32>, vector<16x32xf32>, vector<4x32xf32> -> vector<4x32xf32>
    %820 = arith.addf %801, %819 : vector<4x32xf32>
    %821 = vector.broadcast %745 : vector<1x32xf32> to vector<4x32xf32>
    %822 = arith.addf %820, %821 : vector<4x32xf32>
    %823 = arith.addf %608, %822 : vector<4x32xf32>
    %cst_263 = arith.constant dense<0.000000e+00> : vector<4xf32>
    %824 = vector.multi_reduction <add>, %823, %cst_263 [1] : vector<4x32xf32> to vector<4xf32>
    %825 = vector.shape_cast %824 : vector<4xf32> to vector<4x1xf32>
    %cst_264 = arith.constant 3.200000e+01 : f32
    %826 = vector.broadcast %cst_264 : f32 to vector<4x1xf32>
    %827 = arith.divf %825, %826 : vector<4x1xf32>
    %828 = arith.mulf %823, %823 : vector<4x32xf32>
    %cst_265 = arith.constant dense<0.000000e+00> : vector<4xf32>
    %829 = vector.multi_reduction <add>, %828, %cst_265 [1] : vector<4x32xf32> to vector<4xf32>
    %830 = vector.shape_cast %829 : vector<4xf32> to vector<4x1xf32>
    %cst_266 = arith.constant 3.200000e+01 : f32
    %831 = vector.broadcast %cst_266 : f32 to vector<4x1xf32>
    %832 = arith.divf %830, %831 : vector<4x1xf32>
    %833 = arith.mulf %827, %827 : vector<4x1xf32>
    %834 = arith.subf %832, %833 : vector<4x1xf32>
    %835 = vector.broadcast %827 : vector<4x1xf32> to vector<4x32xf32>
    %836 = arith.subf %823, %835 : vector<4x32xf32>
    %cst_267 = arith.constant 9.99999974E-6 : f32
    %837 = vector.broadcast %cst_267 : f32 to vector<4x1xf32>
    %838 = arith.addf %834, %837 : vector<4x1xf32>
    %839 = math.rsqrt %838 : vector<4x1xf32>
    %840 = vector.broadcast %839 : vector<4x1xf32> to vector<4x32xf32>
    %841 = arith.mulf %836, %840 : vector<4x32xf32>
    %842 = vector.broadcast %748 : vector<1x32xf32> to vector<4x32xf32>
    %843 = arith.mulf %841, %842 : vector<4x32xf32>
    %844 = vector.broadcast %749 : vector<1x32xf32> to vector<4x32xf32>
    %845 = arith.addf %843, %844 : vector<4x32xf32>
    %cst_268 = arith.constant dense<0.000000e+00> : vector<4x32xf32>
    %846 = tpu.matmul %845, %737, %cst_268 {dimension_numbers = #tpu.dot_dimension_numbers<[1], [0], [0], [1], [0, 0, 1, 1], [], []>} : vector<4x32xf32>, vector<32x32xf32>, vector<4x32xf32> -> vector<4x32xf32>
    %847 = vector.broadcast %750 : vector<1x32xf32> to vector<4x32xf32>
    %848 = arith.addf %846, %847 : vector<4x32xf32>
    %cst_269 = arith.constant 0.000000e+00 : f32
    %849 = vector.broadcast %cst_269 : f32 to vector<4x32xf32>
    %850 = arith.maximumf %848, %849 : vector<4x32xf32>
    %cst_270 = arith.constant dense<0.000000e+00> : vector<4x32xf32>
    %851 = tpu.matmul %850, %739, %cst_270 {dimension_numbers = #tpu.dot_dimension_numbers<[1], [0], [0], [1], [0, 0, 1, 1], [], []>} : vector<4x32xf32>, vector<32x32xf32>, vector<4x32xf32> -> vector<4x32xf32>
    %852 = vector.broadcast %751 : vector<1x32xf32> to vector<4x32xf32>
    %853 = arith.addf %851, %852 : vector<4x32xf32>
    %854 = arith.addf %823, %853 : vector<4x32xf32>
    %c2_271 = arith.constant 2 : index
    %c0_272 = arith.constant 0 : index
    %c0_273 = arith.constant 0 : index
    %855 = vector.load %arg8[%c2_271, %c0_272, %c0_273] : memref<4x32x32xf32, #tpu.memory_space<vmem>>, vector<1x32x32xf32>
    %856 = vector.shape_cast %855 : vector<1x32x32xf32> to vector<32x32xf32>
    %cst_274 = arith.constant dense<0.000000e+00> : vector<4x32xf32>
    %857 = tpu.matmul %731, %856, %cst_274 {dimension_numbers = #tpu.dot_dimension_numbers<[1], [0], [0], [1], [0, 0, 1, 1], [], []>} : vector<4x32xf32>, vector<32x32xf32>, vector<4x32xf32> -> vector<4x32xf32>
    %c2_275 = arith.constant 2 : index
    %c0_276 = arith.constant 0 : index
    %c0_277 = arith.constant 0 : index
    %858 = vector.load %arg9[%c2_275, %c0_276, %c0_277] : memref<4x1x32xf32, #tpu.memory_space<vmem>>, vector<1x1x32xf32>
    %859 = vector.shape_cast %858 : vector<1x1x32xf32> to vector<1x32xf32>
    %860 = vector.broadcast %859 : vector<1x32xf32> to vector<4x32xf32>
    %861 = arith.addf %857, %860 : vector<4x32xf32>
    %c2_278 = arith.constant 2 : index
    %c0_279 = arith.constant 0 : index
    %c0_280 = arith.constant 0 : index
    %862 = vector.load %arg8[%c2_278, %c0_279, %c0_280] : memref<4x32x32xf32, #tpu.memory_space<vmem>>, vector<1x32x32xf32>
    %863 = vector.shape_cast %862 : vector<1x32x32xf32> to vector<32x32xf32>
    %cst_281 = arith.constant dense<0.000000e+00> : vector<4x32xf32>
    %864 = tpu.matmul %854, %863, %cst_281 {dimension_numbers = #tpu.dot_dimension_numbers<[1], [0], [0], [1], [0, 0, 1, 1], [], []>} : vector<4x32xf32>, vector<32x32xf32>, vector<4x32xf32> -> vector<4x32xf32>
    %c2_282 = arith.constant 2 : index
    %c0_283 = arith.constant 0 : index
    %c0_284 = arith.constant 0 : index
    %865 = vector.load %arg9[%c2_282, %c0_283, %c0_284] : memref<4x1x32xf32, #tpu.memory_space<vmem>>, vector<1x1x32xf32>
    %866 = vector.shape_cast %865 : vector<1x1x32xf32> to vector<1x32xf32>
    %867 = vector.broadcast %866 : vector<1x32xf32> to vector<4x32xf32>
    %868 = arith.addf %864, %867 : vector<4x32xf32>
    %c4_285 = arith.constant 4 : index
    %c0_286 = arith.constant 0 : index
    %c0_287 = arith.constant 0 : index
    %869 = vector.load %arg5[%c4_285, %c0_286, %c0_287] : memref<5x32x96xf32, #tpu.memory_space<vmem>>, vector<1x32x96xf32>
    %870 = vector.shape_cast %869 : vector<1x32x96xf32> to vector<32x96xf32>
    %c12 = arith.constant 12 : index
    %c0_288 = arith.constant 0 : index
    %c0_289 = arith.constant 0 : index
    %871 = vector.load %arg6[%c12, %c0_288, %c0_289] : memref<15x32x32xf32, #tpu.memory_space<vmem>>, vector<1x32x32xf32>
    %872 = vector.shape_cast %871 : vector<1x32x32xf32> to vector<32x32xf32>
    %c13 = arith.constant 13 : index
    %c0_290 = arith.constant 0 : index
    %c0_291 = arith.constant 0 : index
    %873 = vector.load %arg6[%c13, %c0_290, %c0_291] : memref<15x32x32xf32, #tpu.memory_space<vmem>>, vector<1x32x32xf32>
    %874 = vector.shape_cast %873 : vector<1x32x32xf32> to vector<32x32xf32>
    %c14 = arith.constant 14 : index
    %c0_292 = arith.constant 0 : index
    %c0_293 = arith.constant 0 : index
    %875 = vector.load %arg6[%c14, %c0_292, %c0_293] : memref<15x32x32xf32, #tpu.memory_space<vmem>>, vector<1x32x32xf32>
    %876 = vector.shape_cast %875 : vector<1x32x32xf32> to vector<32x32xf32>
    %c4_294 = arith.constant 4 : index
    %c0_295 = arith.constant 0 : index
    %c0_296 = arith.constant 0 : index
    %877 = vector.load %arg7[%c4_294, %c0_295, %c0_296] : memref<5x10x32xf32, #tpu.memory_space<vmem>>, vector<1x10x32xf32>
    %878 = vector.shape_cast %877 : vector<1x10x32xf32> to vector<10x32xf32>
    %879 = vector.extract_strided_slice %878 {offsets = [0, 0], sizes = [1, 32], strides = [1, 1]} : vector<10x32xf32> to vector<1x32xf32>
    %880 = vector.extract_strided_slice %878 {offsets = [1, 0], sizes = [1, 32], strides = [1, 1]} : vector<10x32xf32> to vector<1x32xf32>
    %881 = vector.extract_strided_slice %878 {offsets = [2, 0], sizes = [1, 32], strides = [1, 1]} : vector<10x32xf32> to vector<1x32xf32>
    %882 = vector.extract_strided_slice %878 {offsets = [3, 0], sizes = [1, 32], strides = [1, 1]} : vector<10x32xf32> to vector<1x32xf32>
    %883 = vector.extract_strided_slice %878 {offsets = [4, 0], sizes = [1, 32], strides = [1, 1]} : vector<10x32xf32> to vector<1x32xf32>
    %884 = vector.extract_strided_slice %878 {offsets = [5, 0], sizes = [1, 32], strides = [1, 1]} : vector<10x32xf32> to vector<1x32xf32>
    %885 = vector.extract_strided_slice %878 {offsets = [6, 0], sizes = [1, 32], strides = [1, 1]} : vector<10x32xf32> to vector<1x32xf32>
    %886 = vector.extract_strided_slice %878 {offsets = [7, 0], sizes = [1, 32], strides = [1, 1]} : vector<10x32xf32> to vector<1x32xf32>
    %887 = vector.extract_strided_slice %878 {offsets = [8, 0], sizes = [1, 32], strides = [1, 1]} : vector<10x32xf32> to vector<1x32xf32>
    %888 = vector.extract_strided_slice %878 {offsets = [9, 0], sizes = [1, 32], strides = [1, 1]} : vector<10x32xf32> to vector<1x32xf32>
    %cst_297 = arith.constant dense<0.000000e+00> : vector<4xf32>
    %889 = vector.multi_reduction <add>, %861, %cst_297 [1] : vector<4x32xf32> to vector<4xf32>
    %890 = vector.shape_cast %889 : vector<4xf32> to vector<4x1xf32>
    %cst_298 = arith.constant 3.200000e+01 : f32
    %891 = vector.broadcast %cst_298 : f32 to vector<4x1xf32>
    %892 = arith.divf %890, %891 : vector<4x1xf32>
    %893 = arith.mulf %861, %861 : vector<4x32xf32>
    %cst_299 = arith.constant dense<0.000000e+00> : vector<4xf32>
    %894 = vector.multi_reduction <add>, %893, %cst_299 [1] : vector<4x32xf32> to vector<4xf32>
    %895 = vector.shape_cast %894 : vector<4xf32> to vector<4x1xf32>
    %cst_300 = arith.constant 3.200000e+01 : f32
    %896 = vector.broadcast %cst_300 : f32 to vector<4x1xf32>
    %897 = arith.divf %895, %896 : vector<4x1xf32>
    %898 = arith.mulf %892, %892 : vector<4x1xf32>
    %899 = arith.subf %897, %898 : vector<4x1xf32>
    %900 = vector.broadcast %892 : vector<4x1xf32> to vector<4x32xf32>
    %901 = arith.subf %861, %900 : vector<4x32xf32>
    %cst_301 = arith.constant 9.99999974E-6 : f32
    %902 = vector.broadcast %cst_301 : f32 to vector<4x1xf32>
    %903 = arith.addf %899, %902 : vector<4x1xf32>
    %904 = math.rsqrt %903 : vector<4x1xf32>
    %905 = vector.broadcast %904 : vector<4x1xf32> to vector<4x32xf32>
    %906 = arith.mulf %901, %905 : vector<4x32xf32>
    %907 = vector.broadcast %883 : vector<1x32xf32> to vector<4x32xf32>
    %908 = arith.mulf %906, %907 : vector<4x32xf32>
    %909 = vector.broadcast %884 : vector<1x32xf32> to vector<4x32xf32>
    %910 = arith.addf %908, %909 : vector<4x32xf32>
    %cst_302 = arith.constant dense<0.000000e+00> : vector<4x96xf32>
    %911 = tpu.matmul %910, %870, %cst_302 {dimension_numbers = #tpu.dot_dimension_numbers<[1], [0], [0], [1], [0, 0, 1, 1], [], []>} : vector<4x32xf32>, vector<32x96xf32>, vector<4x96xf32> -> vector<4x96xf32>
    %912 = vector.extract_strided_slice %911 {offsets = [0, 0], sizes = [4, 32], strides = [1, 1]} : vector<4x96xf32> to vector<4x32xf32>
    %913 = vector.broadcast %879 : vector<1x32xf32> to vector<4x32xf32>
    %914 = arith.addf %912, %913 : vector<4x32xf32>
    %915 = vector.extract_strided_slice %911 {offsets = [0, 32], sizes = [4, 32], strides = [1, 1]} : vector<4x96xf32> to vector<4x32xf32>
    %916 = vector.broadcast %880 : vector<1x32xf32> to vector<4x32xf32>
    %917 = arith.addf %915, %916 : vector<4x32xf32>
    %918 = vector.extract_strided_slice %911 {offsets = [0, 64], sizes = [4, 32], strides = [1, 1]} : vector<4x96xf32> to vector<4x32xf32>
    %919 = vector.broadcast %881 : vector<1x32xf32> to vector<4x32xf32>
    %920 = arith.addf %918, %919 : vector<4x32xf32>
    %921 = vector.extract_strided_slice %914 {offsets = [0, 0], sizes = [4, 16], strides = [1, 1]} : vector<4x32xf32> to vector<4x16xf32>
    %922 = vector.extract_strided_slice %917 {offsets = [0, 0], sizes = [4, 16], strides = [1, 1]} : vector<4x32xf32> to vector<4x16xf32>
    %923 = vector.extract_strided_slice %920 {offsets = [0, 0], sizes = [4, 16], strides = [1, 1]} : vector<4x32xf32> to vector<4x16xf32>
    %cst_303 = arith.constant dense<0.000000e+00> : vector<4x4xf32>
    %924 = tpu.matmul %921, %922, %cst_303 {dimension_numbers = #tpu.dot_dimension_numbers<[1], [1], [0], [0], [0, 0, 1, 0], [], []>} : vector<4x16xf32>, vector<4x16xf32>, vector<4x4xf32> -> vector<4x4xf32>
    %cst_304 = arith.constant 2.500000e-01 : f32
    %925 = vector.broadcast %cst_304 : f32 to vector<4x4xf32>
    %926 = arith.mulf %924, %925 : vector<4x4xf32>
    %cst_305 = arith.constant dense<0xFF800000> : vector<4xf32>
    %927 = vector.multi_reduction <maximumf>, %926, %cst_305 [1] : vector<4x4xf32> to vector<4xf32>
    %928 = vector.shape_cast %927 : vector<4xf32> to vector<4x1xf32>
    %929 = vector.broadcast %928 : vector<4x1xf32> to vector<4x4xf32>
    %930 = arith.subf %926, %929 : vector<4x4xf32>
    %931 = math.exp %930 : vector<4x4xf32>
    %cst_306 = arith.constant dense<0.000000e+00> : vector<4xf32>
    %932 = vector.multi_reduction <add>, %931, %cst_306 [1] : vector<4x4xf32> to vector<4xf32>
    %933 = vector.shape_cast %932 : vector<4xf32> to vector<4x1xf32>
    %934 = vector.broadcast %933 : vector<4x1xf32> to vector<4x4xf32>
    %935 = arith.divf %931, %934 : vector<4x4xf32>
    %cst_307 = arith.constant dense<0.000000e+00> : vector<4x16xf32>
    %936 = tpu.matmul %935, %923, %cst_307 {dimension_numbers = #tpu.dot_dimension_numbers<[1], [0], [0], [1], [0, 0, 1, 1], [], []>} : vector<4x4xf32>, vector<4x16xf32>, vector<4x16xf32> -> vector<4x16xf32>
    %937 = vector.extract_strided_slice %872 {offsets = [0, 0], sizes = [16, 32], strides = [1, 1]} : vector<32x32xf32> to vector<16x32xf32>
    %cst_308 = arith.constant dense<0.000000e+00> : vector<4x32xf32>
    %938 = tpu.matmul %936, %937, %cst_308 {dimension_numbers = #tpu.dot_dimension_numbers<[1], [0], [0], [1], [0, 0, 1, 1], [], []>} : vector<4x16xf32>, vector<16x32xf32>, vector<4x32xf32> -> vector<4x32xf32>
    %939 = vector.extract_strided_slice %914 {offsets = [0, 16], sizes = [4, 16], strides = [1, 1]} : vector<4x32xf32> to vector<4x16xf32>
    %940 = vector.extract_strided_slice %917 {offsets = [0, 16], sizes = [4, 16], strides = [1, 1]} : vector<4x32xf32> to vector<4x16xf32>
    %941 = vector.extract_strided_slice %920 {offsets = [0, 16], sizes = [4, 16], strides = [1, 1]} : vector<4x32xf32> to vector<4x16xf32>
    %cst_309 = arith.constant dense<0.000000e+00> : vector<4x4xf32>
    %942 = tpu.matmul %939, %940, %cst_309 {dimension_numbers = #tpu.dot_dimension_numbers<[1], [1], [0], [0], [0, 0, 1, 0], [], []>} : vector<4x16xf32>, vector<4x16xf32>, vector<4x4xf32> -> vector<4x4xf32>
    %cst_310 = arith.constant 2.500000e-01 : f32
    %943 = vector.broadcast %cst_310 : f32 to vector<4x4xf32>
    %944 = arith.mulf %942, %943 : vector<4x4xf32>
    %cst_311 = arith.constant dense<0xFF800000> : vector<4xf32>
    %945 = vector.multi_reduction <maximumf>, %944, %cst_311 [1] : vector<4x4xf32> to vector<4xf32>
    %946 = vector.shape_cast %945 : vector<4xf32> to vector<4x1xf32>
    %947 = vector.broadcast %946 : vector<4x1xf32> to vector<4x4xf32>
    %948 = arith.subf %944, %947 : vector<4x4xf32>
    %949 = math.exp %948 : vector<4x4xf32>
    %cst_312 = arith.constant dense<0.000000e+00> : vector<4xf32>
    %950 = vector.multi_reduction <add>, %949, %cst_312 [1] : vector<4x4xf32> to vector<4xf32>
    %951 = vector.shape_cast %950 : vector<4xf32> to vector<4x1xf32>
    %952 = vector.broadcast %951 : vector<4x1xf32> to vector<4x4xf32>
    %953 = arith.divf %949, %952 : vector<4x4xf32>
    %cst_313 = arith.constant dense<0.000000e+00> : vector<4x16xf32>
    %954 = tpu.matmul %953, %941, %cst_313 {dimension_numbers = #tpu.dot_dimension_numbers<[1], [0], [0], [1], [0, 0, 1, 1], [], []>} : vector<4x4xf32>, vector<4x16xf32>, vector<4x16xf32> -> vector<4x16xf32>
    %955 = vector.extract_strided_slice %872 {offsets = [16, 0], sizes = [16, 32], strides = [1, 1]} : vector<32x32xf32> to vector<16x32xf32>
    %cst_314 = arith.constant dense<0.000000e+00> : vector<4x32xf32>
    %956 = tpu.matmul %954, %955, %cst_314 {dimension_numbers = #tpu.dot_dimension_numbers<[1], [0], [0], [1], [0, 0, 1, 1], [], []>} : vector<4x16xf32>, vector<16x32xf32>, vector<4x32xf32> -> vector<4x32xf32>
    %957 = arith.addf %938, %956 : vector<4x32xf32>
    %958 = vector.broadcast %882 : vector<1x32xf32> to vector<4x32xf32>
    %959 = arith.addf %957, %958 : vector<4x32xf32>
    %960 = arith.addf %861, %959 : vector<4x32xf32>
    %cst_315 = arith.constant dense<0.000000e+00> : vector<4xf32>
    %961 = vector.multi_reduction <add>, %960, %cst_315 [1] : vector<4x32xf32> to vector<4xf32>
    %962 = vector.shape_cast %961 : vector<4xf32> to vector<4x1xf32>
    %cst_316 = arith.constant 3.200000e+01 : f32
    %963 = vector.broadcast %cst_316 : f32 to vector<4x1xf32>
    %964 = arith.divf %962, %963 : vector<4x1xf32>
    %965 = arith.mulf %960, %960 : vector<4x32xf32>
    %cst_317 = arith.constant dense<0.000000e+00> : vector<4xf32>
    %966 = vector.multi_reduction <add>, %965, %cst_317 [1] : vector<4x32xf32> to vector<4xf32>
    %967 = vector.shape_cast %966 : vector<4xf32> to vector<4x1xf32>
    %cst_318 = arith.constant 3.200000e+01 : f32
    %968 = vector.broadcast %cst_318 : f32 to vector<4x1xf32>
    %969 = arith.divf %967, %968 : vector<4x1xf32>
    %970 = arith.mulf %964, %964 : vector<4x1xf32>
    %971 = arith.subf %969, %970 : vector<4x1xf32>
    %972 = vector.broadcast %964 : vector<4x1xf32> to vector<4x32xf32>
    %973 = arith.subf %960, %972 : vector<4x32xf32>
    %cst_319 = arith.constant 9.99999974E-6 : f32
    %974 = vector.broadcast %cst_319 : f32 to vector<4x1xf32>
    %975 = arith.addf %971, %974 : vector<4x1xf32>
    %976 = math.rsqrt %975 : vector<4x1xf32>
    %977 = vector.broadcast %976 : vector<4x1xf32> to vector<4x32xf32>
    %978 = arith.mulf %973, %977 : vector<4x32xf32>
    %979 = vector.broadcast %885 : vector<1x32xf32> to vector<4x32xf32>
    %980 = arith.mulf %978, %979 : vector<4x32xf32>
    %981 = vector.broadcast %886 : vector<1x32xf32> to vector<4x32xf32>
    %982 = arith.addf %980, %981 : vector<4x32xf32>
    %cst_320 = arith.constant dense<0.000000e+00> : vector<4x32xf32>
    %983 = tpu.matmul %982, %874, %cst_320 {dimension_numbers = #tpu.dot_dimension_numbers<[1], [0], [0], [1], [0, 0, 1, 1], [], []>} : vector<4x32xf32>, vector<32x32xf32>, vector<4x32xf32> -> vector<4x32xf32>
    %984 = vector.broadcast %887 : vector<1x32xf32> to vector<4x32xf32>
    %985 = arith.addf %983, %984 : vector<4x32xf32>
    %cst_321 = arith.constant 0.000000e+00 : f32
    %986 = vector.broadcast %cst_321 : f32 to vector<4x32xf32>
    %987 = arith.maximumf %985, %986 : vector<4x32xf32>
    %cst_322 = arith.constant dense<0.000000e+00> : vector<4x32xf32>
    %988 = tpu.matmul %987, %876, %cst_322 {dimension_numbers = #tpu.dot_dimension_numbers<[1], [0], [0], [1], [0, 0, 1, 1], [], []>} : vector<4x32xf32>, vector<32x32xf32>, vector<4x32xf32> -> vector<4x32xf32>
    %989 = vector.broadcast %888 : vector<1x32xf32> to vector<4x32xf32>
    %990 = arith.addf %988, %989 : vector<4x32xf32>
    %991 = arith.addf %960, %990 : vector<4x32xf32>
    %c4_323 = arith.constant 4 : index
    %c0_324 = arith.constant 0 : index
    %c0_325 = arith.constant 0 : index
    %992 = vector.load %arg5[%c4_323, %c0_324, %c0_325] : memref<5x32x96xf32, #tpu.memory_space<vmem>>, vector<1x32x96xf32>
    %993 = vector.shape_cast %992 : vector<1x32x96xf32> to vector<32x96xf32>
    %c12_326 = arith.constant 12 : index
    %c0_327 = arith.constant 0 : index
    %c0_328 = arith.constant 0 : index
    %994 = vector.load %arg6[%c12_326, %c0_327, %c0_328] : memref<15x32x32xf32, #tpu.memory_space<vmem>>, vector<1x32x32xf32>
    %995 = vector.shape_cast %994 : vector<1x32x32xf32> to vector<32x32xf32>
    %c13_329 = arith.constant 13 : index
    %c0_330 = arith.constant 0 : index
    %c0_331 = arith.constant 0 : index
    %996 = vector.load %arg6[%c13_329, %c0_330, %c0_331] : memref<15x32x32xf32, #tpu.memory_space<vmem>>, vector<1x32x32xf32>
    %997 = vector.shape_cast %996 : vector<1x32x32xf32> to vector<32x32xf32>
    %c14_332 = arith.constant 14 : index
    %c0_333 = arith.constant 0 : index
    %c0_334 = arith.constant 0 : index
    %998 = vector.load %arg6[%c14_332, %c0_333, %c0_334] : memref<15x32x32xf32, #tpu.memory_space<vmem>>, vector<1x32x32xf32>
    %999 = vector.shape_cast %998 : vector<1x32x32xf32> to vector<32x32xf32>
    %c4_335 = arith.constant 4 : index
    %c0_336 = arith.constant 0 : index
    %c0_337 = arith.constant 0 : index
    %1000 = vector.load %arg7[%c4_335, %c0_336, %c0_337] : memref<5x10x32xf32, #tpu.memory_space<vmem>>, vector<1x10x32xf32>
    %1001 = vector.shape_cast %1000 : vector<1x10x32xf32> to vector<10x32xf32>
    %1002 = vector.extract_strided_slice %1001 {offsets = [0, 0], sizes = [1, 32], strides = [1, 1]} : vector<10x32xf32> to vector<1x32xf32>
    %1003 = vector.extract_strided_slice %1001 {offsets = [1, 0], sizes = [1, 32], strides = [1, 1]} : vector<10x32xf32> to vector<1x32xf32>
    %1004 = vector.extract_strided_slice %1001 {offsets = [2, 0], sizes = [1, 32], strides = [1, 1]} : vector<10x32xf32> to vector<1x32xf32>
    %1005 = vector.extract_strided_slice %1001 {offsets = [3, 0], sizes = [1, 32], strides = [1, 1]} : vector<10x32xf32> to vector<1x32xf32>
    %1006 = vector.extract_strided_slice %1001 {offsets = [4, 0], sizes = [1, 32], strides = [1, 1]} : vector<10x32xf32> to vector<1x32xf32>
    %1007 = vector.extract_strided_slice %1001 {offsets = [5, 0], sizes = [1, 32], strides = [1, 1]} : vector<10x32xf32> to vector<1x32xf32>
    %1008 = vector.extract_strided_slice %1001 {offsets = [6, 0], sizes = [1, 32], strides = [1, 1]} : vector<10x32xf32> to vector<1x32xf32>
    %1009 = vector.extract_strided_slice %1001 {offsets = [7, 0], sizes = [1, 32], strides = [1, 1]} : vector<10x32xf32> to vector<1x32xf32>
    %1010 = vector.extract_strided_slice %1001 {offsets = [8, 0], sizes = [1, 32], strides = [1, 1]} : vector<10x32xf32> to vector<1x32xf32>
    %1011 = vector.extract_strided_slice %1001 {offsets = [9, 0], sizes = [1, 32], strides = [1, 1]} : vector<10x32xf32> to vector<1x32xf32>
    %cst_338 = arith.constant dense<0.000000e+00> : vector<4xf32>
    %1012 = vector.multi_reduction <add>, %868, %cst_338 [1] : vector<4x32xf32> to vector<4xf32>
    %1013 = vector.shape_cast %1012 : vector<4xf32> to vector<4x1xf32>
    %cst_339 = arith.constant 3.200000e+01 : f32
    %1014 = vector.broadcast %cst_339 : f32 to vector<4x1xf32>
    %1015 = arith.divf %1013, %1014 : vector<4x1xf32>
    %1016 = arith.mulf %868, %868 : vector<4x32xf32>
    %cst_340 = arith.constant dense<0.000000e+00> : vector<4xf32>
    %1017 = vector.multi_reduction <add>, %1016, %cst_340 [1] : vector<4x32xf32> to vector<4xf32>
    %1018 = vector.shape_cast %1017 : vector<4xf32> to vector<4x1xf32>
    %cst_341 = arith.constant 3.200000e+01 : f32
    %1019 = vector.broadcast %cst_341 : f32 to vector<4x1xf32>
    %1020 = arith.divf %1018, %1019 : vector<4x1xf32>
    %1021 = arith.mulf %1015, %1015 : vector<4x1xf32>
    %1022 = arith.subf %1020, %1021 : vector<4x1xf32>
    %1023 = vector.broadcast %1015 : vector<4x1xf32> to vector<4x32xf32>
    %1024 = arith.subf %868, %1023 : vector<4x32xf32>
    %cst_342 = arith.constant 9.99999974E-6 : f32
    %1025 = vector.broadcast %cst_342 : f32 to vector<4x1xf32>
    %1026 = arith.addf %1022, %1025 : vector<4x1xf32>
    %1027 = math.rsqrt %1026 : vector<4x1xf32>
    %1028 = vector.broadcast %1027 : vector<4x1xf32> to vector<4x32xf32>
    %1029 = arith.mulf %1024, %1028 : vector<4x32xf32>
    %1030 = vector.broadcast %1006 : vector<1x32xf32> to vector<4x32xf32>
    %1031 = arith.mulf %1029, %1030 : vector<4x32xf32>
    %1032 = vector.broadcast %1007 : vector<1x32xf32> to vector<4x32xf32>
    %1033 = arith.addf %1031, %1032 : vector<4x32xf32>
    %cst_343 = arith.constant dense<0.000000e+00> : vector<4x96xf32>
    %1034 = tpu.matmul %1033, %993, %cst_343 {dimension_numbers = #tpu.dot_dimension_numbers<[1], [0], [0], [1], [0, 0, 1, 1], [], []>} : vector<4x32xf32>, vector<32x96xf32>, vector<4x96xf32> -> vector<4x96xf32>
    %1035 = vector.extract_strided_slice %1034 {offsets = [0, 0], sizes = [4, 32], strides = [1, 1]} : vector<4x96xf32> to vector<4x32xf32>
    %1036 = vector.broadcast %1002 : vector<1x32xf32> to vector<4x32xf32>
    %1037 = arith.addf %1035, %1036 : vector<4x32xf32>
    %1038 = vector.extract_strided_slice %1034 {offsets = [0, 32], sizes = [4, 32], strides = [1, 1]} : vector<4x96xf32> to vector<4x32xf32>
    %1039 = vector.broadcast %1003 : vector<1x32xf32> to vector<4x32xf32>
    %1040 = arith.addf %1038, %1039 : vector<4x32xf32>
    %1041 = vector.extract_strided_slice %1034 {offsets = [0, 64], sizes = [4, 32], strides = [1, 1]} : vector<4x96xf32> to vector<4x32xf32>
    %1042 = vector.broadcast %1004 : vector<1x32xf32> to vector<4x32xf32>
    %1043 = arith.addf %1041, %1042 : vector<4x32xf32>
    %1044 = vector.extract_strided_slice %1037 {offsets = [0, 0], sizes = [4, 16], strides = [1, 1]} : vector<4x32xf32> to vector<4x16xf32>
    %1045 = vector.extract_strided_slice %1040 {offsets = [0, 0], sizes = [4, 16], strides = [1, 1]} : vector<4x32xf32> to vector<4x16xf32>
    %1046 = vector.extract_strided_slice %1043 {offsets = [0, 0], sizes = [4, 16], strides = [1, 1]} : vector<4x32xf32> to vector<4x16xf32>
    %cst_344 = arith.constant dense<0.000000e+00> : vector<4x4xf32>
    %1047 = tpu.matmul %1044, %1045, %cst_344 {dimension_numbers = #tpu.dot_dimension_numbers<[1], [1], [0], [0], [0, 0, 1, 0], [], []>} : vector<4x16xf32>, vector<4x16xf32>, vector<4x4xf32> -> vector<4x4xf32>
    %cst_345 = arith.constant 2.500000e-01 : f32
    %1048 = vector.broadcast %cst_345 : f32 to vector<4x4xf32>
    %1049 = arith.mulf %1047, %1048 : vector<4x4xf32>
    %cst_346 = arith.constant dense<0xFF800000> : vector<4xf32>
    %1050 = vector.multi_reduction <maximumf>, %1049, %cst_346 [1] : vector<4x4xf32> to vector<4xf32>
    %1051 = vector.shape_cast %1050 : vector<4xf32> to vector<4x1xf32>
    %1052 = vector.broadcast %1051 : vector<4x1xf32> to vector<4x4xf32>
    %1053 = arith.subf %1049, %1052 : vector<4x4xf32>
    %1054 = math.exp %1053 : vector<4x4xf32>
    %cst_347 = arith.constant dense<0.000000e+00> : vector<4xf32>
    %1055 = vector.multi_reduction <add>, %1054, %cst_347 [1] : vector<4x4xf32> to vector<4xf32>
    %1056 = vector.shape_cast %1055 : vector<4xf32> to vector<4x1xf32>
    %1057 = vector.broadcast %1056 : vector<4x1xf32> to vector<4x4xf32>
    %1058 = arith.divf %1054, %1057 : vector<4x4xf32>
    %cst_348 = arith.constant dense<0.000000e+00> : vector<4x16xf32>
    %1059 = tpu.matmul %1058, %1046, %cst_348 {dimension_numbers = #tpu.dot_dimension_numbers<[1], [0], [0], [1], [0, 0, 1, 1], [], []>} : vector<4x4xf32>, vector<4x16xf32>, vector<4x16xf32> -> vector<4x16xf32>
    %1060 = vector.extract_strided_slice %995 {offsets = [0, 0], sizes = [16, 32], strides = [1, 1]} : vector<32x32xf32> to vector<16x32xf32>
    %cst_349 = arith.constant dense<0.000000e+00> : vector<4x32xf32>
    %1061 = tpu.matmul %1059, %1060, %cst_349 {dimension_numbers = #tpu.dot_dimension_numbers<[1], [0], [0], [1], [0, 0, 1, 1], [], []>} : vector<4x16xf32>, vector<16x32xf32>, vector<4x32xf32> -> vector<4x32xf32>
    %1062 = vector.extract_strided_slice %1037 {offsets = [0, 16], sizes = [4, 16], strides = [1, 1]} : vector<4x32xf32> to vector<4x16xf32>
    %1063 = vector.extract_strided_slice %1040 {offsets = [0, 16], sizes = [4, 16], strides = [1, 1]} : vector<4x32xf32> to vector<4x16xf32>
    %1064 = vector.extract_strided_slice %1043 {offsets = [0, 16], sizes = [4, 16], strides = [1, 1]} : vector<4x32xf32> to vector<4x16xf32>
    %cst_350 = arith.constant dense<0.000000e+00> : vector<4x4xf32>
    %1065 = tpu.matmul %1062, %1063, %cst_350 {dimension_numbers = #tpu.dot_dimension_numbers<[1], [1], [0], [0], [0, 0, 1, 0], [], []>} : vector<4x16xf32>, vector<4x16xf32>, vector<4x4xf32> -> vector<4x4xf32>
    %cst_351 = arith.constant 2.500000e-01 : f32
    %1066 = vector.broadcast %cst_351 : f32 to vector<4x4xf32>
    %1067 = arith.mulf %1065, %1066 : vector<4x4xf32>
    %cst_352 = arith.constant dense<0xFF800000> : vector<4xf32>
    %1068 = vector.multi_reduction <maximumf>, %1067, %cst_352 [1] : vector<4x4xf32> to vector<4xf32>
    %1069 = vector.shape_cast %1068 : vector<4xf32> to vector<4x1xf32>
    %1070 = vector.broadcast %1069 : vector<4x1xf32> to vector<4x4xf32>
    %1071 = arith.subf %1067, %1070 : vector<4x4xf32>
    %1072 = math.exp %1071 : vector<4x4xf32>
    %cst_353 = arith.constant dense<0.000000e+00> : vector<4xf32>
    %1073 = vector.multi_reduction <add>, %1072, %cst_353 [1] : vector<4x4xf32> to vector<4xf32>
    %1074 = vector.shape_cast %1073 : vector<4xf32> to vector<4x1xf32>
    %1075 = vector.broadcast %1074 : vector<4x1xf32> to vector<4x4xf32>
    %1076 = arith.divf %1072, %1075 : vector<4x4xf32>
    %cst_354 = arith.constant dense<0.000000e+00> : vector<4x16xf32>
    %1077 = tpu.matmul %1076, %1064, %cst_354 {dimension_numbers = #tpu.dot_dimension_numbers<[1], [0], [0], [1], [0, 0, 1, 1], [], []>} : vector<4x4xf32>, vector<4x16xf32>, vector<4x16xf32> -> vector<4x16xf32>
    %1078 = vector.extract_strided_slice %995 {offsets = [16, 0], sizes = [16, 32], strides = [1, 1]} : vector<32x32xf32> to vector<16x32xf32>
    %cst_355 = arith.constant dense<0.000000e+00> : vector<4x32xf32>
    %1079 = tpu.matmul %1077, %1078, %cst_355 {dimension_numbers = #tpu.dot_dimension_numbers<[1], [0], [0], [1], [0, 0, 1, 1], [], []>} : vector<4x16xf32>, vector<16x32xf32>, vector<4x32xf32> -> vector<4x32xf32>
    %1080 = arith.addf %1061, %1079 : vector<4x32xf32>
    %1081 = vector.broadcast %1005 : vector<1x32xf32> to vector<4x32xf32>
    %1082 = arith.addf %1080, %1081 : vector<4x32xf32>
    %1083 = arith.addf %868, %1082 : vector<4x32xf32>
    %cst_356 = arith.constant dense<0.000000e+00> : vector<4xf32>
    %1084 = vector.multi_reduction <add>, %1083, %cst_356 [1] : vector<4x32xf32> to vector<4xf32>
    %1085 = vector.shape_cast %1084 : vector<4xf32> to vector<4x1xf32>
    %cst_357 = arith.constant 3.200000e+01 : f32
    %1086 = vector.broadcast %cst_357 : f32 to vector<4x1xf32>
    %1087 = arith.divf %1085, %1086 : vector<4x1xf32>
    %1088 = arith.mulf %1083, %1083 : vector<4x32xf32>
    %cst_358 = arith.constant dense<0.000000e+00> : vector<4xf32>
    %1089 = vector.multi_reduction <add>, %1088, %cst_358 [1] : vector<4x32xf32> to vector<4xf32>
    %1090 = vector.shape_cast %1089 : vector<4xf32> to vector<4x1xf32>
    %cst_359 = arith.constant 3.200000e+01 : f32
    %1091 = vector.broadcast %cst_359 : f32 to vector<4x1xf32>
    %1092 = arith.divf %1090, %1091 : vector<4x1xf32>
    %1093 = arith.mulf %1087, %1087 : vector<4x1xf32>
    %1094 = arith.subf %1092, %1093 : vector<4x1xf32>
    %1095 = vector.broadcast %1087 : vector<4x1xf32> to vector<4x32xf32>
    %1096 = arith.subf %1083, %1095 : vector<4x32xf32>
    %cst_360 = arith.constant 9.99999974E-6 : f32
    %1097 = vector.broadcast %cst_360 : f32 to vector<4x1xf32>
    %1098 = arith.addf %1094, %1097 : vector<4x1xf32>
    %1099 = math.rsqrt %1098 : vector<4x1xf32>
    %1100 = vector.broadcast %1099 : vector<4x1xf32> to vector<4x32xf32>
    %1101 = arith.mulf %1096, %1100 : vector<4x32xf32>
    %1102 = vector.broadcast %1008 : vector<1x32xf32> to vector<4x32xf32>
    %1103 = arith.mulf %1101, %1102 : vector<4x32xf32>
    %1104 = vector.broadcast %1009 : vector<1x32xf32> to vector<4x32xf32>
    %1105 = arith.addf %1103, %1104 : vector<4x32xf32>
    %cst_361 = arith.constant dense<0.000000e+00> : vector<4x32xf32>
    %1106 = tpu.matmul %1105, %997, %cst_361 {dimension_numbers = #tpu.dot_dimension_numbers<[1], [0], [0], [1], [0, 0, 1, 1], [], []>} : vector<4x32xf32>, vector<32x32xf32>, vector<4x32xf32> -> vector<4x32xf32>
    %1107 = vector.broadcast %1010 : vector<1x32xf32> to vector<4x32xf32>
    %1108 = arith.addf %1106, %1107 : vector<4x32xf32>
    %cst_362 = arith.constant 0.000000e+00 : f32
    %1109 = vector.broadcast %cst_362 : f32 to vector<4x32xf32>
    %1110 = arith.maximumf %1108, %1109 : vector<4x32xf32>
    %cst_363 = arith.constant dense<0.000000e+00> : vector<4x32xf32>
    %1111 = tpu.matmul %1110, %999, %cst_363 {dimension_numbers = #tpu.dot_dimension_numbers<[1], [0], [0], [1], [0, 0, 1, 1], [], []>} : vector<4x32xf32>, vector<32x32xf32>, vector<4x32xf32> -> vector<4x32xf32>
    %1112 = vector.broadcast %1011 : vector<1x32xf32> to vector<4x32xf32>
    %1113 = arith.addf %1111, %1112 : vector<4x32xf32>
    %1114 = arith.addf %1083, %1113 : vector<4x32xf32>
    %c3_364 = arith.constant 3 : index
    %c0_365 = arith.constant 0 : index
    %c0_366 = arith.constant 0 : index
    %1115 = vector.load %arg8[%c3_364, %c0_365, %c0_366] : memref<4x32x32xf32, #tpu.memory_space<vmem>>, vector<1x32x32xf32>
    %1116 = vector.shape_cast %1115 : vector<1x32x32xf32> to vector<32x32xf32>
    %cst_367 = arith.constant dense<0.000000e+00> : vector<4x32xf32>
    %1117 = tpu.matmul %991, %1116, %cst_367 {dimension_numbers = #tpu.dot_dimension_numbers<[1], [0], [0], [1], [0, 0, 1, 1], [], []>} : vector<4x32xf32>, vector<32x32xf32>, vector<4x32xf32> -> vector<4x32xf32>
    %c3_368 = arith.constant 3 : index
    %c0_369 = arith.constant 0 : index
    %c0_370 = arith.constant 0 : index
    %1118 = vector.load %arg9[%c3_368, %c0_369, %c0_370] : memref<4x1x32xf32, #tpu.memory_space<vmem>>, vector<1x1x32xf32>
    %1119 = vector.shape_cast %1118 : vector<1x1x32xf32> to vector<1x32xf32>
    %1120 = vector.broadcast %1119 : vector<1x32xf32> to vector<4x32xf32>
    %1121 = arith.addf %1117, %1120 : vector<4x32xf32>
    %c3_371 = arith.constant 3 : index
    %c0_372 = arith.constant 0 : index
    %c0_373 = arith.constant 0 : index
    %1122 = vector.load %arg8[%c3_371, %c0_372, %c0_373] : memref<4x32x32xf32, #tpu.memory_space<vmem>>, vector<1x32x32xf32>
    %1123 = vector.shape_cast %1122 : vector<1x32x32xf32> to vector<32x32xf32>
    %cst_374 = arith.constant dense<0.000000e+00> : vector<4x32xf32>
    %1124 = tpu.matmul %1114, %1123, %cst_374 {dimension_numbers = #tpu.dot_dimension_numbers<[1], [0], [0], [1], [0, 0, 1, 1], [], []>} : vector<4x32xf32>, vector<32x32xf32>, vector<4x32xf32> -> vector<4x32xf32>
    %c3_375 = arith.constant 3 : index
    %c0_376 = arith.constant 0 : index
    %c0_377 = arith.constant 0 : index
    %1125 = vector.load %arg9[%c3_375, %c0_376, %c0_377] : memref<4x1x32xf32, #tpu.memory_space<vmem>>, vector<1x1x32xf32>
    %1126 = vector.shape_cast %1125 : vector<1x1x32xf32> to vector<1x32xf32>
    %1127 = vector.broadcast %1126 : vector<1x32xf32> to vector<4x32xf32>
    %1128 = arith.addf %1124, %1127 : vector<4x32xf32>
    %c0_378 = arith.constant 0 : index
    %c0_379 = arith.constant 0 : index
    %1129 = vector.load %arg11[%c0_378, %c0_379] : memref<1x8xf32, #tpu.memory_space<vmem>>, vector<1x8xf32>
    %1130 = vector.extract_strided_slice %1121 {offsets = [0, 0], sizes = [1, 32], strides = [1, 1]} : vector<4x32xf32> to vector<1x32xf32>
    %c0_380 = arith.constant 0 : index
    %c0_381 = arith.constant 0 : index
    %c0_382 = arith.constant 0 : index
    %1131 = vector.load %arg10[%c0_380, %c0_381, %c0_382] : memref<4x32x8xf32, #tpu.memory_space<vmem>>, vector<1x32x8xf32>
    %1132 = vector.shape_cast %1131 : vector<1x32x8xf32> to vector<32x8xf32>
    %cst_383 = arith.constant dense<0.000000e+00> : vector<1x8xf32>
    %1133 = tpu.matmul %1130, %1132, %cst_383 {dimension_numbers = #tpu.dot_dimension_numbers<[1], [0], [0], [1], [0, 0, 1, 1], [], []>} : vector<1x32xf32>, vector<32x8xf32>, vector<1x8xf32> -> vector<1x8xf32>
    %1134 = arith.addf %1129, %1133 : vector<1x8xf32>
    %1135 = vector.extract_strided_slice %1121 {offsets = [1, 0], sizes = [1, 32], strides = [1, 1]} : vector<4x32xf32> to vector<1x32xf32>
    %c1_384 = arith.constant 1 : index
    %c0_385 = arith.constant 0 : index
    %c0_386 = arith.constant 0 : index
    %1136 = vector.load %arg10[%c1_384, %c0_385, %c0_386] : memref<4x32x8xf32, #tpu.memory_space<vmem>>, vector<1x32x8xf32>
    %1137 = vector.shape_cast %1136 : vector<1x32x8xf32> to vector<32x8xf32>
    %cst_387 = arith.constant dense<0.000000e+00> : vector<1x8xf32>
    %1138 = tpu.matmul %1135, %1137, %cst_387 {dimension_numbers = #tpu.dot_dimension_numbers<[1], [0], [0], [1], [0, 0, 1, 1], [], []>} : vector<1x32xf32>, vector<32x8xf32>, vector<1x8xf32> -> vector<1x8xf32>
    %1139 = arith.addf %1134, %1138 : vector<1x8xf32>
    %1140 = vector.extract_strided_slice %1121 {offsets = [2, 0], sizes = [1, 32], strides = [1, 1]} : vector<4x32xf32> to vector<1x32xf32>
    %c2_388 = arith.constant 2 : index
    %c0_389 = arith.constant 0 : index
    %c0_390 = arith.constant 0 : index
    %1141 = vector.load %arg10[%c2_388, %c0_389, %c0_390] : memref<4x32x8xf32, #tpu.memory_space<vmem>>, vector<1x32x8xf32>
    %1142 = vector.shape_cast %1141 : vector<1x32x8xf32> to vector<32x8xf32>
    %cst_391 = arith.constant dense<0.000000e+00> : vector<1x8xf32>
    %1143 = tpu.matmul %1140, %1142, %cst_391 {dimension_numbers = #tpu.dot_dimension_numbers<[1], [0], [0], [1], [0, 0, 1, 1], [], []>} : vector<1x32xf32>, vector<32x8xf32>, vector<1x8xf32> -> vector<1x8xf32>
    %1144 = arith.addf %1139, %1143 : vector<1x8xf32>
    %1145 = vector.extract_strided_slice %1121 {offsets = [3, 0], sizes = [1, 32], strides = [1, 1]} : vector<4x32xf32> to vector<1x32xf32>
    %c3_392 = arith.constant 3 : index
    %c0_393 = arith.constant 0 : index
    %c0_394 = arith.constant 0 : index
    %1146 = vector.load %arg10[%c3_392, %c0_393, %c0_394] : memref<4x32x8xf32, #tpu.memory_space<vmem>>, vector<1x32x8xf32>
    %1147 = vector.shape_cast %1146 : vector<1x32x8xf32> to vector<32x8xf32>
    %cst_395 = arith.constant dense<0.000000e+00> : vector<1x8xf32>
    %1148 = tpu.matmul %1145, %1147, %cst_395 {dimension_numbers = #tpu.dot_dimension_numbers<[1], [0], [0], [1], [0, 0, 1, 1], [], []>} : vector<1x32xf32>, vector<32x8xf32>, vector<1x8xf32> -> vector<1x8xf32>
    %1149 = arith.addf %1144, %1148 : vector<1x8xf32>
    %c0_396 = arith.constant 0 : index
    %c0_397 = arith.constant 0 : index
    %1150 = vector.load %arg12[%c0_396, %c0_397] : memref<2x8xf32, #tpu.memory_space<vmem>>, vector<1x8xf32>
    tpu.vector_store %arg12[%c0_396, %c0_397], %1149 {strides = array<i32>} : memref<2x8xf32, #tpu.memory_space<vmem>>, vector<1x8xf32>,
    %c0_398 = arith.constant 0 : index
    %c0_399 = arith.constant 0 : index
    %1151 = vector.load %arg11[%c0_398, %c0_399] : memref<1x8xf32, #tpu.memory_space<vmem>>, vector<1x8xf32>
    %1152 = vector.extract_strided_slice %1128 {offsets = [0, 0], sizes = [1, 32], strides = [1, 1]} : vector<4x32xf32> to vector<1x32xf32>
    %c0_400 = arith.constant 0 : index
    %c0_401 = arith.constant 0 : index
    %c0_402 = arith.constant 0 : index
    %1153 = vector.load %arg10[%c0_400, %c0_401, %c0_402] : memref<4x32x8xf32, #tpu.memory_space<vmem>>, vector<1x32x8xf32>
    %1154 = vector.shape_cast %1153 : vector<1x32x8xf32> to vector<32x8xf32>
    %cst_403 = arith.constant dense<0.000000e+00> : vector<1x8xf32>
    %1155 = tpu.matmul %1152, %1154, %cst_403 {dimension_numbers = #tpu.dot_dimension_numbers<[1], [0], [0], [1], [0, 0, 1, 1], [], []>} : vector<1x32xf32>, vector<32x8xf32>, vector<1x8xf32> -> vector<1x8xf32>
    %1156 = arith.addf %1151, %1155 : vector<1x8xf32>
    %1157 = vector.extract_strided_slice %1128 {offsets = [1, 0], sizes = [1, 32], strides = [1, 1]} : vector<4x32xf32> to vector<1x32xf32>
    %c1_404 = arith.constant 1 : index
    %c0_405 = arith.constant 0 : index
    %c0_406 = arith.constant 0 : index
    %1158 = vector.load %arg10[%c1_404, %c0_405, %c0_406] : memref<4x32x8xf32, #tpu.memory_space<vmem>>, vector<1x32x8xf32>
    %1159 = vector.shape_cast %1158 : vector<1x32x8xf32> to vector<32x8xf32>
    %cst_407 = arith.constant dense<0.000000e+00> : vector<1x8xf32>
    %1160 = tpu.matmul %1157, %1159, %cst_407 {dimension_numbers = #tpu.dot_dimension_numbers<[1], [0], [0], [1], [0, 0, 1, 1], [], []>} : vector<1x32xf32>, vector<32x8xf32>, vector<1x8xf32> -> vector<1x8xf32>
    %1161 = arith.addf %1156, %1160 : vector<1x8xf32>
    %1162 = vector.extract_strided_slice %1128 {offsets = [2, 0], sizes = [1, 32], strides = [1, 1]} : vector<4x32xf32> to vector<1x32xf32>
    %c2_408 = arith.constant 2 : index
    %c0_409 = arith.constant 0 : index
    %c0_410 = arith.constant 0 : index
    %1163 = vector.load %arg10[%c2_408, %c0_409, %c0_410] : memref<4x32x8xf32, #tpu.memory_space<vmem>>, vector<1x32x8xf32>
    %1164 = vector.shape_cast %1163 : vector<1x32x8xf32> to vector<32x8xf32>
    %cst_411 = arith.constant dense<0.000000e+00> : vector<1x8xf32>
    %1165 = tpu.matmul %1162, %1164, %cst_411 {dimension_numbers = #tpu.dot_dimension_numbers<[1], [0], [0], [1], [0, 0, 1, 1], [], []>} : vector<1x32xf32>, vector<32x8xf32>, vector<1x8xf32> -> vector<1x8xf32>
    %1166 = arith.addf %1161, %1165 : vector<1x8xf32>
    %1167 = vector.extract_strided_slice %1128 {offsets = [3, 0], sizes = [1, 32], strides = [1, 1]} : vector<4x32xf32> to vector<1x32xf32>
    %c3_412 = arith.constant 3 : index
    %c0_413 = arith.constant 0 : index
    %c0_414 = arith.constant 0 : index
    %1168 = vector.load %arg10[%c3_412, %c0_413, %c0_414] : memref<4x32x8xf32, #tpu.memory_space<vmem>>, vector<1x32x8xf32>
    %1169 = vector.shape_cast %1168 : vector<1x32x8xf32> to vector<32x8xf32>
    %cst_415 = arith.constant dense<0.000000e+00> : vector<1x8xf32>
    %1170 = tpu.matmul %1167, %1169, %cst_415 {dimension_numbers = #tpu.dot_dimension_numbers<[1], [0], [0], [1], [0, 0, 1, 1], [], []>} : vector<1x32xf32>, vector<32x8xf32>, vector<1x8xf32> -> vector<1x8xf32>
    %1171 = arith.addf %1166, %1170 : vector<1x8xf32>
    %c1_416 = arith.constant 1 : index
    %c0_417 = arith.constant 0 : index
    %1172 = vector.load %arg12[%c1_416, %c0_417] : memref<2x8xf32, #tpu.memory_space<vmem>>, vector<1x8xf32>
    tpu.vector_store %arg12[%c1_416, %c0_417], %1171 {strides = array<i32>} : memref<2x8xf32, #tpu.memory_space<vmem>>, vector<1x8xf32>,
    return
  }
  func.func @transform_0(%arg0: i32) -> (i32, i32) {
    %c0_i32 = arith.constant 0 : i32
    %c0_i32_0 = arith.constant 0 : i32
    %c0_i32_1 = arith.constant 0 : i32
    return %c0_i32, %c0_i32_0 : i32, i32
  }
  func.func @transform_1(%arg0: i32) -> (i32, i32) {
    %c0_i32 = arith.constant 0 : i32
    %c0_i32_0 = arith.constant 0 : i32
    %c0_i32_1 = arith.constant 0 : i32
    return %c0_i32, %c0_i32_0 : i32, i32
  }
  func.func @transform_2(%arg0: i32) -> (i32, i32) {
    %c0_i32 = arith.constant 0 : i32
    %c0_i32_0 = arith.constant 0 : i32
    %c0_i32_1 = arith.constant 0 : i32
    return %c0_i32, %c0_i32_0 : i32, i32
  }
  func.func @transform_3(%arg0: i32) -> (i32, i32) {
    %c0_i32 = arith.constant 0 : i32
    %c0_i32_0 = arith.constant 0 : i32
    %c0_i32_1 = arith.constant 0 : i32
    return %c0_i32, %c0_i32_0 : i32, i32
  }
  func.func @transform_4(%arg0: i32) -> (i32, i32, i32) {
    %c0_i32 = arith.constant 0 : i32
    %c0_i32_0 = arith.constant 0 : i32
    %c0_i32_1 = arith.constant 0 : i32
    %c0_i32_2 = arith.constant 0 : i32
    return %c0_i32, %c0_i32_0, %c0_i32_1 : i32, i32, i32
  }
  func.func @transform_5(%arg0: i32) -> (i32, i32, i32) {
    %c0_i32 = arith.constant 0 : i32
    %c0_i32_0 = arith.constant 0 : i32
    %c0_i32_1 = arith.constant 0 : i32
    %c0_i32_2 = arith.constant 0 : i32
    return %c0_i32, %c0_i32_0, %c0_i32_1 : i32, i32, i32
  }
  func.func @transform_6(%arg0: i32) -> (i32, i32, i32) {
    %c0_i32 = arith.constant 0 : i32
    %c0_i32_0 = arith.constant 0 : i32
    %c0_i32_1 = arith.constant 0 : i32
    %c0_i32_2 = arith.constant 0 : i32
    return %c0_i32, %c0_i32_0, %c0_i32_1 : i32, i32, i32
  }
  func.func @transform_7(%arg0: i32) -> (i32, i32, i32) {
    %c0_i32 = arith.constant 0 : i32
    %c0_i32_0 = arith.constant 0 : i32
    %c0_i32_1 = arith.constant 0 : i32
    %c0_i32_2 = arith.constant 0 : i32
    return %c0_i32, %c0_i32_0, %c0_i32_1 : i32, i32, i32
  }
  func.func @transform_8(%arg0: i32) -> (i32, i32, i32) {
    %c0_i32 = arith.constant 0 : i32
    %c0_i32_0 = arith.constant 0 : i32
    %c0_i32_1 = arith.constant 0 : i32
    %c0_i32_2 = arith.constant 0 : i32
    return %c0_i32, %c0_i32_0, %c0_i32_1 : i32, i32, i32
  }
  func.func @transform_9(%arg0: i32) -> (i32, i32, i32) {
    %c0_i32 = arith.constant 0 : i32
    %c0_i32_0 = arith.constant 0 : i32
    %c0_i32_1 = arith.constant 0 : i32
    %c0_i32_2 = arith.constant 0 : i32
    return %c0_i32, %c0_i32_0, %c0_i32_1 : i32, i32, i32
  }
  func.func @transform_10(%arg0: i32) -> (i32, i32) {
    %c0_i32 = arith.constant 0 : i32
    %c0_i32_0 = arith.constant 0 : i32
    %c0_i32_1 = arith.constant 0 : i32
    return %c0_i32, %c0_i32_0 : i32, i32
  }
  func.func @transform_11(%arg0: i32) -> (i32, i32) {
    %c0_i32 = arith.constant 0 : i32
    %c0_i32_0 = arith.constant 0 : i32
    %c0_i32_1 = arith.constant 0 : i32
    return %c0_i32, %c0_i32_0 : i32, i32
  }
}

</mosaic_0001>

<llo_original>
// kernel: tpu_custom_call.1
$region0: #{tpu_custom_call.1}
  #allocation0 [shape = 'u32[]', space=smem, size = 0x4, offset = 0x4, fixed_abs, tag = 'smem constant byte address 0x4 - core index']
  #allocation1 [shape = 'u32[144,128]{1,0:T(1,128)}', space=vmem, size = 0x12000, scoped, tag = 'internal scratch']
  %s0 = inlined_call_operand.hbm [shape: f32[16,16], index: 0, kind: input, shape index: {}]
  %s1 = inlined_call_operand.vmem [shape: f32[4,32], index: 1, kind: input, shape index: {}]
  %s2 = inlined_call_operand.hbm [shape: f32[16,32], index: 2, kind: input, shape index: {}]
  %s3 = inlined_call_operand.vmem [shape: f32[1,32], index: 3, kind: input, shape index: {}]
  %s4 = inlined_call_operand.vmem [shape: f32[5,32,96], index: 4, kind: input, shape index: {}]
  %s5 = inlined_call_operand.hbm [shape: f32[15,32,32], index: 5, kind: input, shape index: {}]
  %s6 = inlined_call_operand.hbm [shape: f32[5,10,32], index: 6, kind: input, shape index: {}]
  %s7 = inlined_call_operand.hbm [shape: f32[4,32,32], index: 7, kind: input, shape index: {}]
  %s8 = inlined_call_operand.vmem [shape: f32[4,1,32], index: 8, kind: input, shape index: {}]
  %s9 = inlined_call_operand.vmem [shape: f32[4,32,8], index: 9, kind: input, shape index: {}]
  %s10 = inlined_call_operand.vmem [shape: f32[1,8], index: 10, kind: input, shape index: {}]
  %s11 = inlined_call_operand.hbm [shape: f32[2,8], index: 11, kind: output, shape index: {}]
  %s12 = sld [smem:[#allocation0]]
  $region74: #{tpu_custom_call.1} parent=0
    _
  %s14 = ssub.s32 1, %s12
  %s15 = scalar_select 0, %s14, %s12
  $region1: #{tpu_custom_call.1} parent=0
    #allocation2 [shape = 'u8[8192]{0}', space=vmem, size = 0x2000, scoped, tag = 'input window, operand 0, single buffered']
    #allocation3 [shape = 's32[1]{0}', space=sflag, size = 0x4, scoped, tag = 'scoped memory for tpu_custom_call.1']
    #allocation4 [shape = 's32[1]{0}', space=sflag, size = 0x4, scoped, tag = 'scoped memory for tpu_custom_call.1']
    #allocation5 [shape = 'u8[8192]{0}', space=vmem, size = 0x2000, scoped, tag = 'input window, operand 2, single buffered']
    #allocation6 [shape = 's32[1]{0}', space=sflag, size = 0x4, scoped, tag = 'scoped memory for tpu_custom_call.1']
    #allocation7 [shape = 'u8[245760]{0}', space=vmem, size = 0x3c000, scoped, tag = 'input window, operand 5, single buffered']
    #allocation8 [shape = 'u8[40960]{0}', space=vmem, size = 0xa000, scoped, tag = 'input window, operand 6, single buffered']
    #allocation9 [shape = 's32[1]{0}', space=sflag, size = 0x4, scoped, tag = 'scoped memory for tpu_custom_call.1']
    #allocation10 [shape = 'u8[65536]{0}', space=vmem, size = 0x10000, scoped, tag = 'input window, operand 7, single buffered']
    #allocation11 [shape = 'u8[1024]{0}', space=vmem, size = 0x400, scoped, tag = 'output window, operand 0, single buffered']
    %16 = vsyncpa [#allocation3], 0
    %17 = vsyncpa [#allocation6], 0
    %18 = vsyncpa [#allocation9], 0
    %19 = vsyncpa [#allocation4], 0
    // Predicated region
    $region2: #{tpu_custom_call.1} parent=1 // pred_check
      _
    $region3: #{tpu_custom_call.1} parent=1 // pred_check_branch
      %21 = sbr.rel (0) target = $region5
    $region4: #{tpu_custom_call.1} parent=1 // pred_region
      %s23 = ssub.s32 256, 256
      %24 = vsyncadd [#allocation3], %s23
      %s25 = sshll.u32 [#allocation2], 4
      %s26 = int_to_ptr.vmem [resolvable:$true] %s25
      %31 = dma.hbm_to_vmem [thread:$0]  %s0, 256, %s26, [#allocation3], 128, 128, 8
    $region5: #{tpu_custom_call.1} parent=1 // pred_fallthru
      _
    // Predicated region
    $region6: #{tpu_custom_call.1} parent=1 // pred_check
      _
    $region7: #{tpu_custom_call.1} parent=1 // pred_check_branch
      %33 = sbr.rel (0) target = $region9
    $region8: #{tpu_custom_call.1} parent=1 // pred_region
      _
    $region9: #{tpu_custom_call.1} parent=1 // pred_fallthru
      _
    // Predicated region
    $region10: #{tpu_custom_call.1} parent=1 // pred_check
      _
    $region11: #{tpu_custom_call.1} parent=1 // pred_check_branch
      %35 = sbr.rel (0) target = $region13
    $region12: #{tpu_custom_call.1} parent=1 // pred_region
      %s37 = ssub.s32 256, 256
      %38 = vsyncadd [#allocation6], %s37
      %s39 = sshll.u32 [#allocation5], 4
      %s40 = int_to_ptr.vmem [resolvable:$true] %s39
      %45 = dma.hbm_to_vmem [thread:$0]  %s2, 256, %s40, [#allocation6], 128, 128, 8
    $region13: #{tpu_custom_call.1} parent=1 // pred_fallthru
      _
    // Predicated region
    $region14: #{tpu_custom_call.1} parent=1 // pred_check
      _
    $region15: #{tpu_custom_call.1} parent=1 // pred_check_branch
      %47 = sbr.rel (0) target = $region17
    $region16: #{tpu_custom_call.1} parent=1 // pred_region
      _
    $region17: #{tpu_custom_call.1} parent=1 // pred_fallthru
      _
    // Predicated region
    $region18: #{tpu_custom_call.1} parent=1 // pred_check
      _
    $region19: #{tpu_custom_call.1} parent=1 // pred_check_branch
      %49 = sbr.rel (0) target = $region21
    $region20: #{tpu_custom_call.1} parent=1 // pred_region
      _
    $region21: #{tpu_custom_call.1} parent=1 // pred_fallthru
      _
    // Predicated region
    $region22: #{tpu_custom_call.1} parent=1 // pred_check
      _
    $region23: #{tpu_custom_call.1} parent=1 // pred_check_branch
      %51 = sbr.rel (0) target = $region25
    $region24: #{tpu_custom_call.1} parent=1 // pred_region
      %s53 = ssub.s32 7680, 7680
      %54 = vsyncadd [#allocation6], %s53
      %s55 = sshll.u32 [#allocation7], 4
      %s56 = int_to_ptr.vmem [resolvable:$true] %s55
      %61 = dma.hbm_to_vmem [thread:$0]  %s5, 7680, %s56, [#allocation6], 128, 128, 8
    $region25: #{tpu_custom_call.1} parent=1 // pred_fallthru
      _
    // Predicated region
    $region26: #{tpu_custom_call.1} parent=1 // pred_check
      _
    $region27: #{tpu_custom_call.1} parent=1 // pred_check_branch
      %63 = sbr.rel (0) target = $region29
    $region28: #{tpu_custom_call.1} parent=1 // pred_region
      %s65 = ssub.s32 1280, 1280
      %66 = vsyncadd [#allocation9], %s65
      %s67 = sshll.u32 [#allocation8], 4
      %s68 = int_to_ptr.vmem [resolvable:$true] %s67
      %73 = dma.hbm_to_vmem [thread:$0]  %s6, 1280, %s68, [#allocation9], 128, 128, 8
    $region29: #{tpu_custom_call.1} parent=1 // pred_fallthru
      _
    // Predicated region
    $region30: #{tpu_custom_call.1} parent=1 // pred_check
      _
    $region31: #{tpu_custom_call.1} parent=1 // pred_check_branch
      %75 = sbr.rel (0) target = $region33
    $region32: #{tpu_custom_call.1} parent=1 // pred_region
      %s77 = ssub.s32 2048, 2048
      %78 = vsyncadd [#allocation9], %s77
      %s79 = sshll.u32 [#allocation10], 4
      %s80 = int_to_ptr.vmem [resolvable:$true] %s79
      %85 = dma.hbm_to_vmem [thread:$0]  %s7, 2048, %s80, [#allocation9], 128, 128, 8
    $region33: #{tpu_custom_call.1} parent=1 // pred_fallthru
      _
    // Predicated region
    $region34: #{tpu_custom_call.1} parent=1 // pred_check
      _
    $region35: #{tpu_custom_call.1} parent=1 // pred_check_branch
      %87 = sbr.rel (0) target = $region37
    $region36: #{tpu_custom_call.1} parent=1 // pred_region
      _
    $region37: #{tpu_custom_call.1} parent=1 // pred_fallthru
      _
    // Predicated region
    $region38: #{tpu_custom_call.1} parent=1 // pred_check
      _
    $region39: #{tpu_custom_call.1} parent=1 // pred_check_branch
      %89 = sbr.rel (0) target = $region41
    $region40: #{tpu_custom_call.1} parent=1 // pred_region
      _
    $region41: #{tpu_custom_call.1} parent=1 // pred_fallthru
      _
    // Predicated region
    $region42: #{tpu_custom_call.1} parent=1 // pred_check
      _
    $region43: #{tpu_custom_call.1} parent=1 // pred_check_branch
      %91 = sbr.rel (0) target = $region45
    $region44: #{tpu_custom_call.1} parent=1 // pred_region
      _
    $region45: #{tpu_custom_call.1} parent=1 // pred_fallthru
      _
    // Predicated region
    $region46: #{tpu_custom_call.1} parent=1 // pred_check
      _
    $region47: #{tpu_custom_call.1} parent=1 // pred_check_branch
      %93 = sbr.rel (0) target = $region49
    $region48: #{tpu_custom_call.1} parent=1 // pred_region
      %94 = dma.done [#allocation3], 256
    $region49: #{tpu_custom_call.1} parent=1 // pred_fallthru
      _
    // Predicated region
    $region50: #{tpu_custom_call.1} parent=1 // pred_check
      _
    $region51: #{tpu_custom_call.1} parent=1 // pred_check_branch
      %96 = sbr.rel (0) target = $region53
    $region52: #{tpu_custom_call.1} parent=1 // pred_region
      %97 = dma.done [#allocation6], 256
    $region53: #{tpu_custom_call.1} parent=1 // pred_fallthru
      _
    // Predicated region
    $region54: #{tpu_custom_call.1} parent=1 // pred_check
      _
    $region55: #{tpu_custom_call.1} parent=1 // pred_check_branch
      %99 = sbr.rel (0) target = $region57
    $region56: #{tpu_custom_call.1} parent=1 // pred_region
      %100 = dma.done [#allocation6], 7680
    $region57: #{tpu_custom_call.1} parent=1 // pred_fallthru
      _
    // Predicated region
    $region58: #{tpu_custom_call.1} parent=1 // pred_check
      _
    $region59: #{tpu_custom_call.1} parent=1 // pred_check_branch
      %102 = sbr.rel (0) target = $region61
    $region60: #{tpu_custom_call.1} parent=1 // pred_region
      %103 = dma.done [#allocation9], 1280
    $region61: #{tpu_custom_call.1} parent=1 // pred_fallthru
      _
    // Predicated region
    $region62: #{tpu_custom_call.1} parent=1 // pred_check
      _
    $region63: #{tpu_custom_call.1} parent=1 // pred_check_branch
      %105 = sbr.rel (0) target = $region65
    $region64: #{tpu_custom_call.1} parent=1 // pred_region
      %106 = dma.done [#allocation9], 2048
    $region65: #{tpu_custom_call.1} parent=1 // pred_fallthru
      _
    %v107 = vld [vmem:[#allocation2] sm:$0xff]
    %v108 = vld [vmem:[#allocation2 + $0x8] sm:$0xff]
    %v109 = vld [vmem:[#allocation5] sm:$0xff]
    %v110 = vld [vmem:[#allocation5 + $0x8] sm:$0xff]
    %v111 = vld [vmem:[%s3] sm:$0x1]
    %v113 = vlaneseq
    %v114 = vshrl.u32 %v113, 7
    %v115 = vsub.s32 0, %v114
    %v116 = vrot.slane %v111, %v115
    %vm118 = vcmask 130048
    %v120 = vsel %vm118, %v107, 0
    %v123 = vsel %vm118, %v108, 0
    %125 = vmatprep.subr.mxu0 0.0
    %126 = vmatpush1.msra.mxu0 0.0
    %127 = vmatprep.subr.mxu0 0.0
    %128 = vmatpush1.msra.mxu0 0.0
    %129 = vmatprep.subr.mxu0 0.0
    %130 = vmatpush1.msra.mxu0 0.0
    %131 = vmatprep.subr.mxu0 0.0
    %132 = vmatpush1.msra.mxu0 0.0
    %133 = vmatprep.subr.mxu0 0.0
    %134 = vmatpush1.msra.mxu0 0.0
    %135 = vmatprep.subr.mxu0 0.0
    %136 = vmatpush1.msra.mxu0 0.0
    %137 = vmatprep.subr.mxu0 0.0
    %138 = vmatpush1.msra.mxu0 0.0
    %139 = vmatprep.subr.mxu0 0.0
    %140 = vmatpush1.msra.mxu0 0.0
    %141 = vmatprep.subr.mxu0 0.0
    %142 = vmatpush1.msra.mxu0 0.0
    %143 = vmatprep.subr.mxu0 0.0
    %144 = vmatpush1.msra.mxu0 0.0
    %145 = vmatprep.subr.mxu0 0.0
    %146 = vmatpush1.msra.mxu0 0.0
    %147 = vmatprep.subr.mxu0 0.0
    %148 = vmatpush1.msra.mxu0 0.0
    %149 = vmatprep.subr.mxu0 0.0
    %150 = vmatpush1.msra.mxu0 0.0
    %151 = vmatprep.subr.mxu0 0.0
    %152 = vmatpush1.msra.mxu0 0.0
    %153 = vmatprep.subr.mxu0 0.0
    %154 = vmatpush1.msra.mxu0 %v110
    %155 = vmatprep.subr.mxu0 0.0
    %156 = vmatpush1.msra.mxu0 %v109
    %157 = vmatprep.subr.mxu0 0.0
    %158 = vmatpush2.msra.mxu0 0.0
    %159 = vmatprep.subr.mxu0 0.0
    %160 = vmatpush2.msra.mxu0 0.0
    %161 = vmatprep.subr.mxu0 0.0
    %162 = vmatpush2.msra.mxu0 0.0
    %163 = vmatprep.subr.mxu0 0.0
    %164 = vmatpush2.msra.mxu0 0.0
    %165 = vmatprep.subr.mxu0 0.0
    %166 = vmatpush2.msra.mxu0 0.0
    %167 = vmatprep.subr.mxu0 0.0
    %168 = vmatpush2.msra.mxu0 0.0
    %169 = vmatprep.subr.mxu0 0.0
    %170 = vmatpush2.msra.mxu0 0.0
    %171 = vmatprep.subr.mxu0 0.0
    %172 = vmatpush2.msra.mxu0 0.0
    %173 = vmatprep.subr.mxu0 0.0
    %174 = vmatpush2.msra.mxu0 0.0
    %175 = vmatprep.subr.mxu0 0.0
    %176 = vmatpush2.msra.mxu0 0.0
    %177 = vmatprep.subr.mxu0 0.0
    %178 = vmatpush2.msra.mxu0 0.0
    %179 = vmatprep.subr.mxu0 0.0
    %180 = vmatpush2.msra.mxu0 0.0
    %181 = vmatprep.subr.mxu0 0.0
    %182 = vmatpush2.msra.mxu0 0.0
    %183 = vmatprep.subr.mxu0 0.0
    %184 = vmatpush2.msra.mxu0 0.0
    %185 = vmatprep.subr.mxu0 0.0
    %186 = vmatpush2.msra.mxu0 0.0
    %187 = vmatprep.subr.mxu0 0.0
    %188 = vmatpush2.msra.mxu0 0.0
    %189 = vmatprep.mubr.f32.mxu0 0.0
    %190 = vmatmul.mubr.f32.gmra.mxu0 %v120
    %v191 = vpop.f32.mrf.mxu0
    %v192 = vadd.f32 %v116, %v191
    %v193 = vpop.f32.mrf.mxu0
    %194 = vmatprep.mubr.f32.mxu0 0.0
    %195 = vmatmul.mubr.f32.gmra.mxu0 %v123
    %v196 = vpop.f32.mrf.mxu0
    %v197 = vadd.f32 %v116, %v196
    %v198 = vpop.f32.mrf.mxu0
    %199 = vdwg.mxu0
    %v200 = vld [vmem:[%s4] sm:$0xff]
    %v201 = vld [vmem:[%s4 + $0x8] sm:$0xff]
    %v202 = vld [vmem:[%s4 + $0x10] sm:$0xff]
    %v203 = vld [vmem:[%s4 + $0x18] sm:$0xff]
    %v204 = vld [vmem:[#allocation7] sm:$0xff]
    %v205 = vld [vmem:[#allocation7 + $0x8] sm:$0xff]
    %v206 = vld [vmem:[#allocation7 + $0x10] sm:$0xff]
    %v207 = vld [vmem:[#allocation7 + $0x18] sm:$0xff]
    %s208 = scalar_lea.vmem [#allocation7], 32
    %v209 = vld [vmem:[%s208] sm:$0xff]
    %v210 = vld [vmem:[%s208 + $0x8] sm:$0xff]
    %v211 = vld [vmem:[%s208 + $0x10] sm:$0xff]
    %v212 = vld [vmem:[%s208 + $0x18] sm:$0xff]
    %s213 = scalar_lea.vmem [#allocation7], 64
    %v214 = vld [vmem:[%s213] sm:$0xff]
    %v215 = vld [vmem:[%s213 + $0x8] sm:$0xff]
    %v216 = vld [vmem:[%s213 + $0x10] sm:$0xff]
    %v217 = vld [vmem:[%s213 + $0x18] sm:$0xff]
    %v218 = vld [vmem:[#allocation8] sm:$0xff]
    %v219 = vld [vmem:[#allocation8 + $0x8] sm:$0x3]
    %vm220 = vcmask 261120
    %v221 = vsel %vm220, %v192, 0.0
    %222 = vadd.xlane.f32.xlu0 %v221
    %v223 = vpop.xlane.xlu0 %222
    %v224 = vsel %vm220, %v197, 0.0
    %225 = vadd.xlane.f32.xlu0 %v224
    %v226 = vpop.xlane.xlu0 %225
    %v227 = vrcp.pop 32.0
    %v228 = vmul.f32 %v223, %v227
    %v229 = vmul.f32 %v226, %v227
    %v230 = vmul.f32 %v192, %v192
    %v231 = vmul.f32 %v197, %v197
    %v232 = vsel %vm220, %v230, 0.0
    %233 = vadd.xlane.f32.xlu0 %v232
    %v234 = vpop.xlane.xlu0 %233
    %v235 = vsel %vm220, %v231, 0.0
    %236 = vadd.xlane.f32.xlu0 %v235
    %v237 = vpop.xlane.xlu0 %236
    %v238 = vmul.f32 %v234, %v227
    %v239 = vmul.f32 %v237, %v227
    %v240 = vmul.f32 %v228, %v228
    %v241 = vmul.f32 %v229, %v229
    %v242 = vsub.f32 %v238, %v240
    %v243 = vsub.f32 %v239, %v241
    %v244 = vsub.f32 %v192, %v228
    %v245 = vsub.f32 %v197, %v229
    %v246 = vadd.f32 %v242, 1e-05
    %v247 = vadd.f32 %v243, 1e-05
    %v248 = vrsqrt.pop %v246
    %v249 = vrsqrt.pop %v247
    %v250 = vmul.f32 %v244, %v248
    %v251 = vmul.f32 %v245, %v249
    %v252 = vlaneseq
    %v253 = vshrl.u32 %v252, 7
    %v254 = vsub.s32 4, %v253
    %v255 = vrot.slane %v218, %v254
    %v256 = vmul.f32 %v250, %v255
    %v257 = vmul.f32 %v251, %v255
    %v258 = vlaneseq
    %v259 = vshrl.u32 %v258, 7
    %v260 = vsub.s32 5, %v259
    %v261 = vrot.slane %v218, %v260
    %v262 = vadd.f32 %v256, %v261
    %v263 = vadd.f32 %v257, %v261
    %v265 = vsel %vm220, %v262, 0
    %v268 = vsel %vm220, %v263, 0
    %270 = vmatprep.subr.mxu0 0.0
    %271 = vmatpush1.msra.mxu0 0.0
    %272 = vmatprep.subr.mxu0 0.0
    %273 = vmatpush1.msra.mxu0 0.0
    %274 = vmatprep.subr.mxu0 0.0
    %275 = vmatpush1.msra.mxu0 0.0
    %276 = vmatprep.subr.mxu0 0.0
    %277 = vmatpush1.msra.mxu0 0.0
    %278 = vmatprep.subr.mxu0 0.0
    %279 = vmatpush1.msra.mxu0 0.0
    %280 = vmatprep.subr.mxu0 0.0
    %281 = vmatpush1.msra.mxu0 0.0
    %282 = vmatprep.subr.mxu0 0.0
    %283 = vmatpush1.msra.mxu0 0.0
    %284 = vmatprep.subr.mxu0 0.0
    %285 = vmatpush1.msra.mxu0 0.0
    %286 = vmatprep.subr.mxu0 0.0
    %287 = vmatpush1.msra.mxu0 0.0
    %288 = vmatprep.subr.mxu0 0.0
    %289 = vmatpush1.msra.mxu0 0.0
    %290 = vmatprep.subr.mxu0 0.0
    %291 = vmatpush1.msra.mxu0 0.0
    %292 = vmatprep.subr.mxu0 0.0
    %293 = vmatpush1.msra.mxu0 0.0
    %294 = vmatprep.subr.mxu0 0.0
    %295 = vmatpush1.msra.mxu0 %v203
    %296 = vmatprep.subr.mxu0 0.0
    %297 = vmatpush1.msra.mxu0 %v202
    %298 = vmatprep.subr.mxu0 0.0
    %299 = vmatpush1.msra.mxu0 %v201
    %300 = vmatprep.subr.mxu0 0.0
    %301 = vmatpush1.msra.mxu0 %v200
    %302 = vmatprep.subr.mxu0 0.0
    %303 = vmatpush2.msra.mxu0 0.0
    %304 = vmatprep.subr.mxu0 0.0
    %305 = vmatpush2.msra.mxu0 0.0
    %306 = vmatprep.subr.mxu0 0.0
    %307 = vmatpush2.msra.mxu0 0.0
    %308 = vmatprep.subr.mxu0 0.0
    %309 = vmatpush2.msra.mxu0 0.0
    %310 = vmatprep.subr.mxu0 0.0
    %311 = vmatpush2.msra.mxu0 0.0
    %312 = vmatprep.subr.mxu0 0.0
    %313 = vmatpush2.msra.mxu0 0.0
    %314 = vmatprep.subr.mxu0 0.0
    %315 = vmatpush2.msra.mxu0 0.0
    %316 = vmatprep.subr.mxu0 0.0
    %317 = vmatpush2.msra.mxu0 0.0
    %318 = vmatprep.subr.mxu0 0.0
    %319 = vmatpush2.msra.mxu0 0.0
    %320 = vmatprep.subr.mxu0 0.0
    %321 = vmatpush2.msra.mxu0 0.0
    %322 = vmatprep.subr.mxu0 0.0
    %323 = vmatpush2.msra.mxu0 0.0
    %324 = vmatprep.subr.mxu0 0.0
    %325 = vmatpush2.msra.mxu0 0.0
    %326 = vmatprep.subr.mxu0 0.0
    %327 = vmatpush2.msra.mxu0 0.0
    %328 = vmatprep.subr.mxu0 0.0
    %329 = vmatpush2.msra.mxu0 0.0
    %330 = vmatprep.subr.mxu0 0.0
    %331 = vmatpush2.msra.mxu0 0.0
    %332 = vmatprep.subr.mxu0 0.0
    %333 = vmatpush2.msra.mxu0 0.0
    %334 = vmatprep.mubr.f32.mxu0 0.0
    %335 = vmatmul.mubr.f32.gmra.mxu0 %v265
    %v336 = vpop.f32.mrf.mxu0
    %v337 = vadd.f32 0.0, %v336
    %v338 = vpop.f32.mrf.mxu0
    %339 = vmatprep.mubr.f32.mxu0 0.0
    %340 = vmatmul.mubr.f32.gmra.mxu0 %v268
    %v341 = vpop.f32.mrf.mxu0
    %v342 = vadd.f32 0.0, %v341
    %v343 = vpop.f32.mrf.mxu0
    %344 = vdwg.mxu0
    %v345 = vlaneseq
    %v346 = vshrl.u32 %v345, 7
    %v347 = vsub.s32 0, %v346
    %v348 = vrot.slane %v218, %v347
    %v349 = vadd.f32 %v337, %v348
    %v350 = vadd.f32 %v342, %v348
    %v351 = vlaneseq
    %v352 = vshrl.u32 %v351, 7
    %v353 = vsub.s32 1, %v352
    %v354 = vrot.slane %v218, %v353
    %356 = vrot.lane.b32.xlu0 %v354, 32
    %v357 = vpop.permute.xlu0 %356
    %v359 = vadd.f32 %v337, %v357
    %v360 = vadd.f32 %v342, %v357
    %v361 = vlaneseq
    %v362 = vshrl.u32 %v361, 7
    %v363 = vsub.s32 2, %v362
    %v364 = vrot.slane %v218, %v363
    %366 = vrot.lane.b32.xlu0 %v364, 64
    %v367 = vpop.permute.xlu0 %366
    %v369 = vadd.f32 %v337, %v367
    %v370 = vadd.f32 %v342, %v367
    %372 = vrot.lane.b32.xlu0 %v359, 96
    %v373 = vpop.permute.xlu0 %372
    %v375 = vsel %vm118, %v349, 0
    %v377 = vsel %vm118, %v373, 0
    %379 = vmatprep.subr.mxu0 0.0
    %380 = vmatpush1.xpose.msra.mxu0 0.0
    %381 = vmatprep.subr.mxu0 0.0
    %382 = vmatpush1.xpose.msra.mxu0 0.0
    %383 = vmatprep.subr.mxu0 0.0
    %384 = vmatpush1.xpose.msra.mxu0 0.0
    %385 = vmatprep.subr.mxu0 0.0
    %386 = vmatpush1.xpose.msra.mxu0 0.0
    %387 = vmatprep.subr.mxu0 0.0
    %388 = vmatpush1.xpose.msra.mxu0 0.0
    %389 = vmatprep.subr.mxu0 0.0
    %390 = vmatpush1.xpose.msra.mxu0 0.0
    %391 = vmatprep.subr.mxu0 0.0
    %392 = vmatpush1.xpose.msra.mxu0 0.0
    %393 = vmatprep.subr.mxu0 0.0
    %394 = vmatpush1.xpose.msra.mxu0 0.0
    %395 = vmatprep.subr.mxu0 0.0
    %396 = vmatpush1.xpose.msra.mxu0 0.0
    %397 = vmatprep.subr.mxu0 0.0
    %398 = vmatpush1.xpose.msra.mxu0 0.0
    %399 = vmatprep.subr.mxu0 0.0
    %400 = vmatpush1.xpose.msra.mxu0 0.0
    %401 = vmatprep.subr.mxu0 0.0
    %402 = vmatpush1.xpose.msra.mxu0 0.0
    %403 = vmatprep.subr.mxu0 0.0
    %404 = vmatpush1.xpose.msra.mxu0 0.0
    %405 = vmatprep.subr.mxu0 0.0
    %406 = vmatpush1.xpose.msra.mxu0 0.0
    %407 = vmatprep.subr.mxu0 0.0
    %408 = vmatpush1.xpose.msra.mxu0 0.0
    %409 = vmatprep.subr.mxu0 0.0
    %410 = vmatpush1.xpose.msra.mxu0 %v377
    %411 = vmatprep.subr.mxu0 0.0
    %412 = vmatpush2.xpose.msra.mxu0 0.0
    %413 = vmatprep.subr.mxu0 0.0
    %414 = vmatpush2.xpose.msra.mxu0 0.0
    %415 = vmatprep.subr.mxu0 0.0
    %416 = vmatpush2.xpose.msra.mxu0 0.0
    %417 = vmatprep.subr.mxu0 0.0
    %418 = vmatpush2.xpose.msra.mxu0 0.0
    %419 = vmatprep.subr.mxu0 0.0
    %420 = vmatpush2.xpose.msra.mxu0 0.0
    %421 = vmatprep.subr.mxu0 0.0
    %422 = vmatpush2.xpose.msra.mxu0 0.0
    %423 = vmatprep.subr.mxu0 0.0
    %424 = vmatpush2.xpose.msra.mxu0 0.0
    %425 = vmatprep.subr.mxu0 0.0
    %426 = vmatpush2.xpose.msra.mxu0 0.0
    %427 = vmatprep.subr.mxu0 0.0
    %428 = vmatpush2.xpose.msra.mxu0 0.0
    %429 = vmatprep.subr.mxu0 0.0
    %430 = vmatpush2.xpose.msra.mxu0 0.0
    %431 = vmatprep.subr.mxu0 0.0
    %432 = vmatpush2.xpose.msra.mxu0 0.0
    %433 = vmatprep.subr.mxu0 0.0
    %434 = vmatpush2.xpose.msra.mxu0 0.0
    %435 = vmatprep.subr.mxu0 0.0
    %436 = vmatpush2.xpose.msra.mxu0 0.0
    %437 = vmatprep.subr.mxu0 0.0
    %438 = vmatpush2.xpose.msra.mxu0 0.0
    %439 = vmatprep.subr.mxu0 0.0
    %440 = vmatpush2.xpose.msra.mxu0 0.0
    %441 = vmatprep.subr.mxu0 0.0
    %442 = vmatpush2.xpose.msra.mxu0 0.0
    %443 = vmatprep.mubr.f32.mxu0 0.0
    %444 = vmatmul.mubr.f32.gmra.mxu0 %v375
    %v445 = vpop.f32.mrf.mxu0
    %v446 = vadd.f32 0.0, %v445
    %v447 = vpop.f32.mrf.mxu0
    %448 = vdwg.mxu0
    %v449 = vmul.f32 %v446, 0.25
    %vm450 = vcmask 64512
    %v451 = vsel %vm450, %v449, -inf
    %452 = vmax.xlane.f32.xlu0 %v451
    %v453 = vpop.xlane.xlu0 %452
    %v454 = vsub.f32 %v449, %v453
    %v455 = vmul.f32 %v454, 1.442695
    %v456 = vpow.pop %v455
    %v457 = vsel %vm450, %v456, 0.0
    %458 = vadd.xlane.f32.xlu0 %v457
    %v459 = vpop.xlane.xlu0 %458
    %v460 = vrcp.pop %v459
    %v461 = vmul.f32 %v456, %v460
    %463 = vrot.lane.b32.xlu0 %v369, 64
    %v464 = vpop.permute.xlu0 %463
    %v467 = vsel %vm450, %v461, 0
    %469 = vmatprep.subr.mxu0 0.0
    %470 = vmatpush1.msra.mxu0 0.0
    %471 = vmatprep.subr.mxu0 0.0
    %472 = vmatpush1.msra.mxu0 0.0
    %473 = vmatprep.subr.mxu0 0.0
    %474 = vmatpush1.msra.mxu0 0.0
    %475 = vmatprep.subr.mxu0 0.0
    %476 = vmatpush1.msra.mxu0 0.0
    %477 = vmatprep.subr.mxu0 0.0
    %478 = vmatpush1.msra.mxu0 0.0
    %479 = vmatprep.subr.mxu0 0.0
    %480 = vmatpush1.msra.mxu0 0.0
    %481 = vmatprep.subr.mxu0 0.0
    %482 = vmatpush1.msra.mxu0 0.0
    %483 = vmatprep.subr.mxu0 0.0
    %484 = vmatpush1.msra.mxu0 0.0
    %485 = vmatprep.subr.mxu0 0.0
    %486 = vmatpush1.msra.mxu0 0.0
    %487 = vmatprep.subr.mxu0 0.0
    %488 = vmatpush1.msra.mxu0 0.0
    %489 = vmatprep.subr.mxu0 0.0
    %490 = vmatpush1.msra.mxu0 0.0
    %491 = vmatprep.subr.mxu0 0.0
    %492 = vmatpush1.msra.mxu0 0.0
    %493 = vmatprep.subr.mxu0 0.0
    %494 = vmatpush1.msra.mxu0 0.0
    %495 = vmatprep.subr.mxu0 0.0
    %496 = vmatpush1.msra.mxu0 0.0
    %497 = vmatprep.subr.mxu0 0.0
    %498 = vmatpush1.msra.mxu0 0.0
    %499 = vmatprep.subr.mxu0 0.0
    %500 = vmatpush1.msra.mxu0 %v464
    %501 = vmatprep.subr.mxu0 0.0
    %502 = vmatpush2.msra.mxu0 0.0
    %503 = vmatprep.subr.mxu0 0.0
    %504 = vmatpush2.msra.mxu0 0.0
    %505 = vmatprep.subr.mxu0 0.0
    %506 = vmatpush2.msra.mxu0 0.0
    %507 = vmatprep.subr.mxu0 0.0
    %508 = vmatpush2.msra.mxu0 0.0
    %509 = vmatprep.subr.mxu0 0.0
    %510 = vmatpush2.msra.mxu0 0.0
    %511 = vmatprep.subr.mxu0 0.0
    %512 = vmatpush2.msra.mxu0 0.0
    %513 = vmatprep.subr.mxu0 0.0
    %514 = vmatpush2.msra.mxu0 0.0
    %515 = vmatprep.subr.mxu0 0.0
    %516 = vmatpush2.msra.mxu0 0.0
    %517 = vmatprep.subr.mxu0 0.0
    %518 = vmatpush2.msra.mxu0 0.0
    %519 = vmatprep.subr.mxu0 0.0
    %520 = vmatpush2.msra.mxu0 0.0
    %521 = vmatprep.subr.mxu0 0.0
    %522 = vmatpush2.msra.mxu0 0.0
    %523 = vmatprep.subr.mxu0 0.0
    %524 = vmatpush2.msra.mxu0 0.0
    %525 = vmatprep.subr.mxu0 0.0
    %526 = vmatpush2.msra.mxu0 0.0
    %527 = vmatprep.subr.mxu0 0.0
    %528 = vmatpush2.msra.mxu0 0.0
    %529 = vmatprep.subr.mxu0 0.0
    %530 = vmatpush2.msra.mxu0 0.0
    %531 = vmatprep.subr.mxu0 0.0
    %532 = vmatpush2.msra.mxu0 0.0
    %533 = vmatprep.mubr.f32.mxu0 0.0
    %534 = vmatmul.mubr.f32.gmra.mxu0 %v467
    %v535 = vpop.f32.mrf.mxu0
    %v536 = vadd.f32 0.0, %v535
    %v537 = vpop.f32.mrf.mxu0
    %538 = vdwg.mxu0
    %539 = vrot.lane.b32.xlu0 %v349, 112
    %v540 = vpop.permute.xlu0 %539
    %541 = vrot.lane.b32.xlu0 %v359, 80
    %v542 = vpop.permute.xlu0 %541
    %v543 = vsel %vm118, %v540, 0
    %v545 = vsel %vm118, %v542, 0
    %547 = vmatprep.subr.mxu0 0.0
    %548 = vmatpush1.xpose.msra.mxu0 0.0
    %549 = vmatprep.subr.mxu0 0.0
    %550 = vmatpush1.xpose.msra.mxu0 0.0
    %551 = vmatprep.subr.mxu0 0.0
    %552 = vmatpush1.xpose.msra.mxu0 0.0
    %553 = vmatprep.subr.mxu0 0.0
    %554 = vmatpush1.xpose.msra.mxu0 0.0
    %555 = vmatprep.subr.mxu0 0.0
    %556 = vmatpush1.xpose.msra.mxu0 0.0
    %557 = vmatprep.subr.mxu0 0.0
    %558 = vmatpush1.xpose.msra.mxu0 0.0
    %559 = vmatprep.subr.mxu0 0.0
    %560 = vmatpush1.xpose.msra.mxu0 0.0
    %561 = vmatprep.subr.mxu0 0.0
    %562 = vmatpush1.xpose.msra.mxu0 0.0
    %563 = vmatprep.subr.mxu0 0.0
    %564 = vmatpush1.xpose.msra.mxu0 0.0
    %565 = vmatprep.subr.mxu0 0.0
    %566 = vmatpush1.xpose.msra.mxu0 0.0
    %567 = vmatprep.subr.mxu0 0.0
    %568 = vmatpush1.xpose.msra.mxu0 0.0
    %569 = vmatprep.subr.mxu0 0.0
    %570 = vmatpush1.xpose.msra.mxu0 0.0
    %571 = vmatprep.subr.mxu0 0.0
    %572 = vmatpush1.xpose.msra.mxu0 0.0
    %573 = vmatprep.subr.mxu0 0.0
    %574 = vmatpush1.xpose.msra.mxu0 0.0
    %575 = vmatprep.subr.mxu0 0.0
    %576 = vmatpush1.xpose.msra.mxu0 0.0
    %577 = vmatprep.subr.mxu0 0.0
    %578 = vmatpush1.xpose.msra.mxu0 %v545
    %579 = vmatprep.subr.mxu0 0.0
    %580 = vmatpush2.xpose.msra.mxu0 0.0
    %581 = vmatprep.subr.mxu0 0.0
    %582 = vmatpush2.xpose.msra.mxu0 0.0
    %583 = vmatprep.subr.mxu0 0.0
    %584 = vmatpush2.xpose.msra.mxu0 0.0
    %585 = vmatprep.subr.mxu0 0.0
    %586 = vmatpush2.xpose.msra.mxu0 0.0
    %587 = vmatprep.subr.mxu0 0.0
    %588 = vmatpush2.xpose.msra.mxu0 0.0
    %589 = vmatprep.subr.mxu0 0.0
    %590 = vmatpush2.xpose.msra.mxu0 0.0
    %591 = vmatprep.subr.mxu0 0.0
    %592 = vmatpush2.xpose.msra.mxu0 0.0
    %593 = vmatprep.subr.mxu0 0.0
    %594 = vmatpush2.xpose.msra.mxu0 0.0
    %595 = vmatprep.subr.mxu0 0.0
    %596 = vmatpush2.xpose.msra.mxu0 0.0
    %597 = vmatprep.subr.mxu0 0.0
    %598 = vmatpush2.xpose.msra.mxu0 0.0
    %599 = vmatprep.subr.mxu0 0.0
    %600 = vmatpush2.xpose.msra.mxu0 0.0
    %601 = vmatprep.subr.mxu0 0.0
    %602 = vmatpush2.xpose.msra.mxu0 0.0
    %603 = vmatprep.subr.mxu0 0.0
    %604 = vmatpush2.xpose.msra.mxu0 0.0
    %605 = vmatprep.subr.mxu0 0.0
    %606 = vmatpush2.xpose.msra.mxu0 0.0
    %607 = vmatprep.subr.mxu0 0.0
    %608 = vmatpush2.xpose.msra.mxu0 0.0
    %609 = vmatprep.subr.mxu0 0.0
    %610 = vmatpush2.xpose.msra.mxu0 0.0
    %611 = vmatprep.mubr.f32.mxu0 0.0
    %612 = vmatmul.mubr.f32.gmra.mxu0 %v543
    %v613 = vpop.f32.mrf.mxu0
    %v614 = vadd.f32 0.0, %v613
    %v615 = vpop.f32.mrf.mxu0
    %616 = vdwg.mxu0
    %v617 = vmul.f32 %v614, 0.25
    %v618 = vsel %vm450, %v617, -inf
    %619 = vmax.xlane.f32.xlu0 %v618
    %v620 = vpop.xlane.xlu0 %619
    %v621 = vsub.f32 %v617, %v620
    %v622 = vmul.f32 %v621, 1.442695
    %v623 = vpow.pop %v622
    %v624 = vsel %vm450, %v623, 0.0
    %625 = vadd.xlane.f32.xlu0 %v624
    %v626 = vpop.xlane.xlu0 %625
    %v627 = vrcp.pop %v626
    %v628 = vmul.f32 %v623, %v627
    %629 = vrot.lane.b32.xlu0 %v369, 48
    %v630 = vpop.permute.xlu0 %629
    %v633 = vsel %vm450, %v628, 0
    %635 = vmatprep.subr.mxu0 0.0
    %636 = vmatpush1.msra.mxu0 0.0
    %637 = vmatprep.subr.mxu0 0.0
    %638 = vmatpush1.msra.mxu0 0.0
    %639 = vmatprep.subr.mxu0 0.0
    %640 = vmatpush1.msra.mxu0 0.0
    %641 = vmatprep.subr.mxu0 0.0
    %642 = vmatpush1.msra.mxu0 0.0
    %643 = vmatprep.subr.mxu0 0.0
    %644 = vmatpush1.msra.mxu0 0.0
    %645 = vmatprep.subr.mxu0 0.0
    %646 = vmatpush1.msra.mxu0 0.0
    %647 = vmatprep.subr.mxu0 0.0
    %648 = vmatpush1.msra.mxu0 0.0
    %649 = vmatprep.subr.mxu0 0.0
    %650 = vmatpush1.msra.mxu0 0.0
    %651 = vmatprep.subr.mxu0 0.0
    %652 = vmatpush1.msra.mxu0 0.0
    %653 = vmatprep.subr.mxu0 0.0
    %654 = vmatpush1.msra.mxu0 0.0
    %655 = vmatprep.subr.mxu0 0.0
    %656 = vmatpush1.msra.mxu0 0.0
    %657 = vmatprep.subr.mxu0 0.0
    %658 = vmatpush1.msra.mxu0 0.0
    %659 = vmatprep.subr.mxu0 0.0
    %660 = vmatpush1.msra.mxu0 0.0
    %661 = vmatprep.subr.mxu0 0.0
    %662 = vmatpush1.msra.mxu0 0.0
    %663 = vmatprep.subr.mxu0 0.0
    %664 = vmatpush1.msra.mxu0 0.0
    %665 = vmatprep.subr.mxu0 0.0
    %666 = vmatpush1.msra.mxu0 %v630
    %667 = vmatprep.subr.mxu0 0.0
    %668 = vmatpush2.msra.mxu0 0.0
    %669 = vmatprep.subr.mxu0 0.0
    %670 = vmatpush2.msra.mxu0 0.0
    %671 = vmatprep.subr.mxu0 0.0
    %672 = vmatpush2.msra.mxu0 0.0
    %673 = vmatprep.subr.mxu0 0.0
    %674 = vmatpush2.msra.mxu0 0.0
    %675 = vmatprep.subr.mxu0 0.0
    %676 = vmatpush2.msra.mxu0 0.0
    %677 = vmatprep.subr.mxu0 0.0
    %678 = vmatpush2.msra.mxu0 0.0
    %679 = vmatprep.subr.mxu0 0.0
    %680 = vmatpush2.msra.mxu0 0.0
    %681 = vmatprep.subr.mxu0 0.0
    %682 = vmatpush2.msra.mxu0 0.0
    %683 = vmatprep.subr.mxu0 0.0
    %684 = vmatpush2.msra.mxu0 0.0
    %685 = vmatprep.subr.mxu0 0.0
    %686 = vmatpush2.msra.mxu0 0.0
    %687 = vmatprep.subr.mxu0 0.0
    %688 = vmatpush2.msra.mxu0 0.0
    %689 = vmatprep.subr.mxu0 0.0
    %690 = vmatpush2.msra.mxu0 0.0
    %691 = vmatprep.subr.mxu0 0.0
    %692 = vmatpush2.msra.mxu0 0.0
    %693 = vmatprep.subr.mxu0 0.0
    %694 = vmatpush2.msra.mxu0 0.0
    %695 = vmatprep.subr.mxu0 0.0
    %696 = vmatpush2.msra.mxu0 0.0
    %697 = vmatprep.subr.mxu0 0.0
    %698 = vmatpush2.msra.mxu0 0.0
    %699 = vmatprep.mubr.f32.mxu0 0.0
    %700 = vmatmul.mubr.f32.gmra.mxu0 %v633
    %v701 = vpop.f32.mrf.mxu0
    %v702 = vadd.f32 0.0, %v701
    %v703 = vpop.f32.mrf.mxu0
    %704 = vdwg.mxu0
    %v706 = vsel %vm118, %v702, 0
    %708 = vmatprep.subr.mxu0 0.0
    %709 = vmatpush1.msra.mxu0 0.0
    %710 = vmatprep.subr.mxu0 0.0
    %711 = vmatpush1.msra.mxu0 0.0
    %712 = vmatprep.subr.mxu0 0.0
    %713 = vmatpush1.msra.mxu0 0.0
    %714 = vmatprep.subr.mxu0 0.0
    %715 = vmatpush1.msra.mxu0 0.0
    %716 = vmatprep.subr.mxu0 0.0
    %717 = vmatpush1.msra.mxu0 0.0
    %718 = vmatprep.subr.mxu0 0.0
    %719 = vmatpush1.msra.mxu0 0.0
    %720 = vmatprep.subr.mxu0 0.0
    %721 = vmatpush1.msra.mxu0 0.0
    %722 = vmatprep.subr.mxu0 0.0
    %723 = vmatpush1.msra.mxu0 0.0
    %724 = vmatprep.subr.mxu0 0.0
    %725 = vmatpush1.msra.mxu0 0.0
    %726 = vmatprep.subr.mxu0 0.0
    %727 = vmatpush1.msra.mxu0 0.0
    %728 = vmatprep.subr.mxu0 0.0
    %729 = vmatpush1.msra.mxu0 0.0
    %730 = vmatprep.subr.mxu0 0.0
    %731 = vmatpush1.msra.mxu0 0.0
    %732 = vmatprep.subr.mxu0 0.0
    %733 = vmatpush1.msra.mxu0 0.0
    %734 = vmatprep.subr.mxu0 0.0
    %735 = vmatpush1.msra.mxu0 0.0
    %736 = vmatprep.subr.mxu0 0.0
    %737 = vmatpush1.msra.mxu0 %v207
    %738 = vmatprep.subr.mxu0 0.0
    %739 = vmatpush1.msra.mxu0 %v206
    %740 = vmatprep.subr.mxu0 0.0
    %741 = vmatpush2.msra.mxu0 0.0
    %742 = vmatprep.subr.mxu0 0.0
    %743 = vmatpush2.msra.mxu0 0.0
    %744 = vmatprep.subr.mxu0 0.0
    %745 = vmatpush2.msra.mxu0 0.0
    %746 = vmatprep.subr.mxu0 0.0
    %747 = vmatpush2.msra.mxu0 0.0
    %748 = vmatprep.subr.mxu0 0.0
    %749 = vmatpush2.msra.mxu0 0.0
    %750 = vmatprep.subr.mxu0 0.0
    %751 = vmatpush2.msra.mxu0 0.0
    %752 = vmatprep.subr.mxu0 0.0
    %753 = vmatpush2.msra.mxu0 0.0
    %754 = vmatprep.subr.mxu0 0.0
    %755 = vmatpush2.msra.mxu0 0.0
    %756 = vmatprep.subr.mxu0 0.0
    %757 = vmatpush2.msra.mxu0 0.0
    %758 = vmatprep.subr.mxu0 0.0
    %759 = vmatpush2.msra.mxu0 0.0
    %760 = vmatprep.subr.mxu0 0.0
    %761 = vmatpush2.msra.mxu0 0.0
    %762 = vmatprep.subr.mxu0 0.0
    %763 = vmatpush2.msra.mxu0 0.0
    %764 = vmatprep.subr.mxu0 0.0
    %765 = vmatpush2.msra.mxu0 0.0
    %766 = vmatprep.subr.mxu0 0.0
    %767 = vmatpush2.msra.mxu0 0.0
    %768 = vmatprep.subr.mxu0 0.0
    %769 = vmatpush2.msra.mxu0 0.0
    %770 = vmatprep.subr.mxu0 0.0
    %771 = vmatpush2.msra.mxu0 0.0
    %772 = vmatprep.mubr.f32.mxu0 0.0
    %773 = vmatmul.mubr.f32.gmra.mxu0 %v706
    %v774 = vpop.f32.mrf.mxu0
    %v775 = vadd.f32 0.0, %v774
    %v776 = vpop.f32.mrf.mxu0
    %777 = vdwg.mxu0
    %v779 = vsel %vm118, %v536, 0
    %781 = vmatprep.subr.mxu0 0.0
    %782 = vmatpush1.msra.mxu0 0.0
    %783 = vmatprep.subr.mxu0 0.0
    %784 = vmatpush1.msra.mxu0 0.0
    %785 = vmatprep.subr.mxu0 0.0
    %786 = vmatpush1.msra.mxu0 0.0
    %787 = vmatprep.subr.mxu0 0.0
    %788 = vmatpush1.msra.mxu0 0.0
    %789 = vmatprep.subr.mxu0 0.0
    %790 = vmatpush1.msra.mxu0 0.0
    %791 = vmatprep.subr.mxu0 0.0
    %792 = vmatpush1.msra.mxu0 0.0
    %793 = vmatprep.subr.mxu0 0.0
    %794 = vmatpush1.msra.mxu0 0.0
    %795 = vmatprep.subr.mxu0 0.0
    %796 = vmatpush1.msra.mxu0 0.0
    %797 = vmatprep.subr.mxu0 0.0
    %798 = vmatpush1.msra.mxu0 0.0
    %799 = vmatprep.subr.mxu0 0.0
    %800 = vmatpush1.msra.mxu0 0.0
    %801 = vmatprep.subr.mxu0 0.0
    %802 = vmatpush1.msra.mxu0 0.0
    %803 = vmatprep.subr.mxu0 0.0
    %804 = vmatpush1.msra.mxu0 0.0
    %805 = vmatprep.subr.mxu0 0.0
    %806 = vmatpush1.msra.mxu0 0.0
    %807 = vmatprep.subr.mxu0 0.0
    %808 = vmatpush1.msra.mxu0 0.0
    %809 = vmatprep.subr.mxu0 0.0
    %810 = vmatpush1.msra.mxu0 %v205
    %811 = vmatprep.subr.mxu0 0.0
    %812 = vmatpush1.msra.mxu0 %v204
    %813 = vmatprep.subr.mxu0 0.0
    %814 = vmatpush2.msra.mxu0 0.0
    %815 = vmatprep.subr.mxu0 0.0
    %816 = vmatpush2.msra.mxu0 0.0
    %817 = vmatprep.subr.mxu0 0.0
    %818 = vmatpush2.msra.mxu0 0.0
    %819 = vmatprep.subr.mxu0 0.0
    %820 = vmatpush2.msra.mxu0 0.0
    %821 = vmatprep.subr.mxu0 0.0
    %822 = vmatpush2.msra.mxu0 0.0
    %823 = vmatprep.subr.mxu0 0.0
    %824 = vmatpush2.msra.mxu0 0.0
    %825 = vmatprep.subr.mxu0 0.0
    %826 = vmatpush2.msra.mxu0 0.0
    %827 = vmatprep.subr.mxu0 0.0
    %828 = vmatpush2.msra.mxu0 0.0
    %829 = vmatprep.subr.mxu0 0.0
    %830 = vmatpush2.msra.mxu0 0.0
    %831 = vmatprep.subr.mxu0 0.0
    %832 = vmatpush2.msra.mxu0 0.0
    %833 = vmatprep.subr.mxu0 0.0
    %834 = vmatpush2.msra.mxu0 0.0
    %835 = vmatprep.subr.mxu0 0.0
    %836 = vmatpush2.msra.mxu0 0.0
    %837 = vmatprep.subr.mxu0 0.0
    %838 = vmatpush2.msra.mxu0 0.0
    %839 = vmatprep.subr.mxu0 0.0
    %840 = vmatpush2.msra.mxu0 0.0
    %841 = vmatprep.subr.mxu0 0.0
    %842 = vmatpush2.msra.mxu0 0.0
    %843 = vmatprep.subr.mxu0 0.0
    %844 = vmatpush2.msra.mxu0 0.0
    %845 = vmatprep.mubr.f32.mxu0 0.0
    %846 = vmatmul.mubr.f32.gmra.mxu0 %v779
    %v847 = vpop.f32.mrf.mxu0
    %v848 = vadd.f32 %v775, %v847
    %v849 = vpop.f32.mrf.mxu0
    %850 = vdwg.mxu0
    %v851 = vlaneseq
    %v852 = vshrl.u32 %v851, 7
    %v853 = vsub.s32 3, %v852
    %v854 = vrot.slane %v218, %v853
    %v855 = vadd.f32 %v848, %v854
    %857 = vrot.lane.b32.xlu0 %v360, 96
    %v858 = vpop.permute.xlu0 %857
    %v860 = vsel %vm118, %v350, 0
    %v862 = vsel %vm118, %v858, 0
    %864 = vmatprep.subr.mxu0 0.0
    %865 = vmatpush1.xpose.msra.mxu0 0.0
    %866 = vmatprep.subr.mxu0 0.0
    %867 = vmatpush1.xpose.msra.mxu0 0.0
    %868 = vmatprep.subr.mxu0 0.0
    %869 = vmatpush1.xpose.msra.mxu0 0.0
    %870 = vmatprep.subr.mxu0 0.0
    %871 = vmatpush1.xpose.msra.mxu0 0.0
    %872 = vmatprep.subr.mxu0 0.0
    %873 = vmatpush1.xpose.msra.mxu0 0.0
    %874 = vmatprep.subr.mxu0 0.0
    %875 = vmatpush1.xpose.msra.mxu0 0.0
    %876 = vmatprep.subr.mxu0 0.0
    %877 = vmatpush1.xpose.msra.mxu0 0.0
    %878 = vmatprep.subr.mxu0 0.0
    %879 = vmatpush1.xpose.msra.mxu0 0.0
    %880 = vmatprep.subr.mxu0 0.0
    %881 = vmatpush1.xpose.msra.mxu0 0.0
    %882 = vmatprep.subr.mxu0 0.0
    %883 = vmatpush1.xpose.msra.mxu0 0.0
    %884 = vmatprep.subr.mxu0 0.0
    %885 = vmatpush1.xpose.msra.mxu0 0.0
    %886 = vmatprep.subr.mxu0 0.0
    %887 = vmatpush1.xpose.msra.mxu0 0.0
    %888 = vmatprep.subr.mxu0 0.0
    %889 = vmatpush1.xpose.msra.mxu0 0.0
    %890 = vmatprep.subr.mxu0 0.0
    %891 = vmatpush1.xpose.msra.mxu0 0.0
    %892 = vmatprep.subr.mxu0 0.0
    %893 = vmatpush1.xpose.msra.mxu0 0.0
    %894 = vmatprep.subr.mxu0 0.0
    %895 = vmatpush1.xpose.msra.mxu0 %v862
    %896 = vmatprep.subr.mxu0 0.0
    %897 = vmatpush2.xpose.msra.mxu0 0.0
    %898 = vmatprep.subr.mxu0 0.0
    %899 = vmatpush2.xpose.msra.mxu0 0.0
    %900 = vmatprep.subr.mxu0 0.0
    %901 = vmatpush2.xpose.msra.mxu0 0.0
    %902 = vmatprep.subr.mxu0 0.0
    %903 = vmatpush2.xpose.msra.mxu0 0.0
    %904 = vmatprep.subr.mxu0 0.0
    %905 = vmatpush2.xpose.msra.mxu0 0.0
    %906 = vmatprep.subr.mxu0 0.0
    %907 = vmatpush2.xpose.msra.mxu0 0.0
    %908 = vmatprep.subr.mxu0 0.0
    %909 = vmatpush2.xpose.msra.mxu0 0.0
    %910 = vmatprep.subr.mxu0 0.0
    %911 = vmatpush2.xpose.msra.mxu0 0.0
    %912 = vmatprep.subr.mxu0 0.0
    %913 = vmatpush2.xpose.msra.mxu0 0.0
    %914 = vmatprep.subr.mxu0 0.0
    %915 = vmatpush2.xpose.msra.mxu0 0.0
    %916 = vmatprep.subr.mxu0 0.0
    %917 = vmatpush2.xpose.msra.mxu0 0.0
    %918 = vmatprep.subr.mxu0 0.0
    %919 = vmatpush2.xpose.msra.mxu0 0.0
    %920 = vmatprep.subr.mxu0 0.0
    %921 = vmatpush2.xpose.msra.mxu0 0.0
    %922 = vmatprep.subr.mxu0 0.0
    %923 = vmatpush2.xpose.msra.mxu0 0.0
    %924 = vmatprep.subr.mxu0 0.0
    %925 = vmatpush2.xpose.msra.mxu0 0.0
    %926 = vmatprep.subr.mxu0 0.0
    %927 = vmatpush2.xpose.msra.mxu0 0.0
    %928 = vmatprep.mubr.f32.mxu0 0.0
    %929 = vmatmul.mubr.f32.gmra.mxu0 %v860
    %v930 = vpop.f32.mrf.mxu0
    %v931 = vadd.f32 0.0, %v930
    %v932 = vpop.f32.mrf.mxu0
    %933 = vdwg.mxu0
    %v934 = vmul.f32 %v931, 0.25
    %v935 = vsel %vm450, %v934, -inf
    %936 = vmax.xlane.f32.xlu0 %v935
    %v937 = vpop.xlane.xlu0 %936
    %v938 = vsub.f32 %v934, %v937
    %v939 = vmul.f32 %v938, 1.442695
    %v940 = vpow.pop %v939
    %v941 = vsel %vm450, %v940, 0.0
    %942 = vadd.xlane.f32.xlu0 %v941
    %v943 = vpop.xlane.xlu0 %942
    %v944 = vrcp.pop %v943
    %v945 = vmul.f32 %v940, %v944
    %947 = vrot.lane.b32.xlu0 %v370, 64
    %v948 = vpop.permute.xlu0 %947
    %v951 = vsel %vm450, %v945, 0
    %953 = vmatprep.subr.mxu0 0.0
    %954 = vmatpush1.msra.mxu0 0.0
    %955 = vmatprep.subr.mxu0 0.0
    %956 = vmatpush1.msra.mxu0 0.0
    %957 = vmatprep.subr.mxu0 0.0
    %958 = vmatpush1.msra.mxu0 0.0
    %959 = vmatprep.subr.mxu0 0.0
    %960 = vmatpush1.msra.mxu0 0.0
    %961 = vmatprep.subr.mxu0 0.0
    %962 = vmatpush1.msra.mxu0 0.0
    %963 = vmatprep.subr.mxu0 0.0
    %964 = vmatpush1.msra.mxu0 0.0
    %965 = vmatprep.subr.mxu0 0.0
    %966 = vmatpush1.msra.mxu0 0.0
    %967 = vmatprep.subr.mxu0 0.0
    %968 = vmatpush1.msra.mxu0 0.0
    %969 = vmatprep.subr.mxu0 0.0
    %970 = vmatpush1.msra.mxu0 0.0
    %971 = vmatprep.subr.mxu0 0.0
    %972 = vmatpush1.msra.mxu0 0.0
    %973 = vmatprep.subr.mxu0 0.0
    %974 = vmatpush1.msra.mxu0 0.0
    %975 = vmatprep.subr.mxu0 0.0
    %976 = vmatpush1.msra.mxu0 0.0
    %977 = vmatprep.subr.mxu0 0.0
    %978 = vmatpush1.msra.mxu0 0.0
    %979 = vmatprep.subr.mxu0 0.0
    %980 = vmatpush1.msra.mxu0 0.0
    %981 = vmatprep.subr.mxu0 0.0
    %982 = vmatpush1.msra.mxu0 0.0
    %983 = vmatprep.subr.mxu0 0.0
    %984 = vmatpush1.msra.mxu0 %v948
    %985 = vmatprep.subr.mxu0 0.0
    %986 = vmatpush2.msra.mxu0 0.0
    %987 = vmatprep.subr.mxu0 0.0
    %988 = vmatpush2.msra.mxu0 0.0
    %989 = vmatprep.subr.mxu0 0.0
    %990 = vmatpush2.msra.mxu0 0.0
    %991 = vmatprep.subr.mxu0 0.0
    %992 = vmatpush2.msra.mxu0 0.0
    %993 = vmatprep.subr.mxu0 0.0
    %994 = vmatpush2.msra.mxu0 0.0
    %995 = vmatprep.subr.mxu0 0.0
    %996 = vmatpush2.msra.mxu0 0.0
    %997 = vmatprep.subr.mxu0 0.0
    %998 = vmatpush2.msra.mxu0 0.0
    %999 = vmatprep.subr.mxu0 0.0
    %1000 = vmatpush2.msra.mxu0 0.0
    %1001 = vmatprep.subr.mxu0 0.0
    %1002 = vmatpush2.msra.mxu0 0.0
    %1003 = vmatprep.subr.mxu0 0.0
    %1004 = vmatpush2.msra.mxu0 0.0
    %1005 = vmatprep.subr.mxu0 0.0
    %1006 = vmatpush2.msra.mxu0 0.0
    %1007 = vmatprep.subr.mxu0 0.0
    %1008 = vmatpush2.msra.mxu0 0.0
    %1009 = vmatprep.subr.mxu0 0.0
    %1010 = vmatpush2.msra.mxu0 0.0
    %1011 = vmatprep.subr.mxu0 0.0
    %1012 = vmatpush2.msra.mxu0 0.0
    %1013 = vmatprep.subr.mxu0 0.0
    %1014 = vmatpush2.msra.mxu0 0.0
    %1015 = vmatprep.subr.mxu0 0.0
    %1016 = vmatpush2.msra.mxu0 0.0
    %1017 = vmatprep.mubr.f32.mxu0 0.0
    %1018 = vmatmul.mubr.f32.gmra.mxu0 %v951
    %v1019 = vpop.f32.mrf.mxu0
    %v1020 = vadd.f32 0.0, %v1019
    %v1021 = vpop.f32.mrf.mxu0
    %1022 = vdwg.mxu0
    %1023 = vrot.lane.b32.xlu0 %v350, 112
    %v1024 = vpop.permute.xlu0 %1023
    %1025 = vrot.lane.b32.xlu0 %v360, 80
    %v1026 = vpop.permute.xlu0 %1025
    %v1027 = vsel %vm118, %v1024, 0
    %v1029 = vsel %vm118, %v1026, 0
    %1031 = vmatprep.subr.mxu0 0.0
    %1032 = vmatpush1.xpose.msra.mxu0 0.0
    %1033 = vmatprep.subr.mxu0 0.0
    %1034 = vmatpush1.xpose.msra.mxu0 0.0
    %1035 = vmatprep.subr.mxu0 0.0
    %1036 = vmatpush1.xpose.msra.mxu0 0.0
    %1037 = vmatprep.subr.mxu0 0.0
    %1038 = vmatpush1.xpose.msra.mxu0 0.0
    %1039 = vmatprep.subr.mxu0 0.0
    %1040 = vmatpush1.xpose.msra.mxu0 0.0
    %1041 = vmatprep.subr.mxu0 0.0
    %1042 = vmatpush1.xpose.msra.mxu0 0.0
    %1043 = vmatprep.subr.mxu0 0.0
    %1044 = vmatpush1.xpose.msra.mxu0 0.0
    %1045 = vmatprep.subr.mxu0 0.0
    %1046 = vmatpush1.xpose.msra.mxu0 0.0
    %1047 = vmatprep.subr.mxu0 0.0
    %1048 = vmatpush1.xpose.msra.mxu0 0.0
    %1049 = vmatprep.subr.mxu0 0.0
    %1050 = vmatpush1.xpose.msra.mxu0 0.0
    %1051 = vmatprep.subr.mxu0 0.0
    %1052 = vmatpush1.xpose.msra.mxu0 0.0
    %1053 = vmatprep.subr.mxu0 0.0
    %1054 = vmatpush1.xpose.msra.mxu0 0.0
    %1055 = vmatprep.subr.mxu0 0.0
    %1056 = vmatpush1.xpose.msra.mxu0 0.0
    %1057 = vmatprep.subr.mxu0 0.0
    %1058 = vmatpush1.xpose.msra.mxu0 0.0
    %1059 = vmatprep.subr.mxu0 0.0
    %1060 = vmatpush1.xpose.msra.mxu0 0.0
    %1061 = vmatprep.subr.mxu0 0.0
    %1062 = vmatpush1.xpose.msra.mxu0 %v1029
    %1063 = vmatprep.subr.mxu0 0.0
    %1064 = vmatpush2.xpose.msra.mxu0 0.0
    %1065 = vmatprep.subr.mxu0 0.0
    %1066 = vmatpush2.xpose.msra.mxu0 0.0
    %1067 = vmatprep.subr.mxu0 0.0
    %1068 = vmatpush2.xpose.msra.mxu0 0.0
    %1069 = vmatprep.subr.mxu0 0.0
    %1070 = vmatpush2.xpose.msra.mxu0 0.0
    %1071 = vmatprep.subr.mxu0 0.0
    %1072 = vmatpush2.xpose.msra.mxu0 0.0
    %1073 = vmatprep.subr.mxu0 0.0
    %1074 = vmatpush2.xpose.msra.mxu0 0.0
    %1075 = vmatprep.subr.mxu0 0.0
    %1076 = vmatpush2.xpose.msra.mxu0 0.0
    %1077 = vmatprep.subr.mxu0 0.0
    %1078 = vmatpush2.xpose.msra.mxu0 0.0
    %1079 = vmatprep.subr.mxu0 0.0
    %1080 = vmatpush2.xpose.msra.mxu0 0.0
    %1081 = vmatprep.subr.mxu0 0.0
    %1082 = vmatpush2.xpose.msra.mxu0 0.0
    %1083 = vmatprep.subr.mxu0 0.0
    %1084 = vmatpush2.xpose.msra.mxu0 0.0
    %1085 = vmatprep.subr.mxu0 0.0
    %1086 = vmatpush2.xpose.msra.mxu0 0.0
    %1087 = vmatprep.subr.mxu0 0.0
    %1088 = vmatpush2.xpose.msra.mxu0 0.0
    %1089 = vmatprep.subr.mxu0 0.0
    %1090 = vmatpush2.xpose.msra.mxu0 0.0
    %1091 = vmatprep.subr.mxu0 0.0
    %1092 = vmatpush2.xpose.msra.mxu0 0.0
    %1093 = vmatprep.subr.mxu0 0.0
    %1094 = vmatpush2.xpose.msra.mxu0 0.0
    %1095 = vmatprep.mubr.f32.mxu0 0.0
    %1096 = vmatmul.mubr.f32.gmra.mxu0 %v1027
    %v1097 = vpop.f32.mrf.mxu0
    %v1098 = vadd.f32 0.0, %v1097
    %v1099 = vpop.f32.mrf.mxu0
    %1100 = vdwg.mxu0
    %v1101 = vmul.f32 %v1098, 0.25
    %v1102 = vsel %vm450, %v1101, -inf
    %1103 = vmax.xlane.f32.xlu0 %v1102
    %v1104 = vpop.xlane.xlu0 %1103
    %v1105 = vsub.f32 %v1101, %v1104
    %v1106 = vmul.f32 %v1105, 1.442695
    %v1107 = vpow.pop %v1106
    %v1108 = vsel %vm450, %v1107, 0.0
    %1109 = vadd.xlane.f32.xlu0 %v1108
    %v1110 = vpop.xlane.xlu0 %1109
    %v1111 = vrcp.pop %v1110
    %v1112 = vmul.f32 %v1107, %v1111
    %1113 = vrot.lane.b32.xlu0 %v370, 48
    %v1114 = vpop.permute.xlu0 %1113
    %v1117 = vsel %vm450, %v1112, 0
    %1119 = vmatprep.subr.mxu0 0.0
    %1120 = vmatpush1.msra.mxu0 0.0
    %1121 = vmatprep.subr.mxu0 0.0
    %1122 = vmatpush1.msra.mxu0 0.0
    %1123 = vmatprep.subr.mxu0 0.0
    %1124 = vmatpush1.msra.mxu0 0.0
    %1125 = vmatprep.subr.mxu0 0.0
    %1126 = vmatpush1.msra.mxu0 0.0
    %1127 = vmatprep.subr.mxu0 0.0
    %1128 = vmatpush1.msra.mxu0 0.0
    %1129 = vmatprep.subr.mxu0 0.0
    %1130 = vmatpush1.msra.mxu0 0.0
    %1131 = vmatprep.subr.mxu0 0.0
    %1132 = vmatpush1.msra.mxu0 0.0
    %1133 = vmatprep.subr.mxu0 0.0
    %1134 = vmatpush1.msra.mxu0 0.0
    %1135 = vmatprep.subr.mxu0 0.0
    %1136 = vmatpush1.msra.mxu0 0.0
    %1137 = vmatprep.subr.mxu0 0.0
    %1138 = vmatpush1.msra.mxu0 0.0
    %1139 = vmatprep.subr.mxu0 0.0
    %1140 = vmatpush1.msra.mxu0 0.0
    %1141 = vmatprep.subr.mxu0 0.0
    %1142 = vmatpush1.msra.mxu0 0.0
    %1143 = vmatprep.subr.mxu0 0.0
    %1144 = vmatpush1.msra.mxu0 0.0
    %1145 = vmatprep.subr.mxu0 0.0
    %1146 = vmatpush1.msra.mxu0 0.0
    %1147 = vmatprep.subr.mxu0 0.0
    %1148 = vmatpush1.msra.mxu0 0.0
    %1149 = vmatprep.subr.mxu0 0.0
    %1150 = vmatpush1.msra.mxu0 %v1114
    %1151 = vmatprep.subr.mxu0 0.0
    %1152 = vmatpush2.msra.mxu0 0.0
    %1153 = vmatprep.subr.mxu0 0.0
    %1154 = vmatpush2.msra.mxu0 0.0
    %1155 = vmatprep.subr.mxu0 0.0
    %1156 = vmatpush2.msra.mxu0 0.0
    %1157 = vmatprep.subr.mxu0 0.0
    %1158 = vmatpush2.msra.mxu0 0.0
    %1159 = vmatprep.subr.mxu0 0.0
    %1160 = vmatpush2.msra.mxu0 0.0
    %1161 = vmatprep.subr.mxu0 0.0
    %1162 = vmatpush2.msra.mxu0 0.0
    %1163 = vmatprep.subr.mxu0 0.0
    %1164 = vmatpush2.msra.mxu0 0.0
    %1165 = vmatprep.subr.mxu0 0.0
    %1166 = vmatpush2.msra.mxu0 0.0
    %1167 = vmatprep.subr.mxu0 0.0
    %1168 = vmatpush2.msra.mxu0 0.0
    %1169 = vmatprep.subr.mxu0 0.0
    %1170 = vmatpush2.msra.mxu0 0.0
    %1171 = vmatprep.subr.mxu0 0.0
    %1172 = vmatpush2.msra.mxu0 0.0
    %1173 = vmatprep.subr.mxu0 0.0
    %1174 = vmatpush2.msra.mxu0 0.0
    %1175 = vmatprep.subr.mxu0 0.0
    %1176 = vmatpush2.msra.mxu0 0.0
    %1177 = vmatprep.subr.mxu0 0.0
    %1178 = vmatpush2.msra.mxu0 0.0
    %1179 = vmatprep.subr.mxu0 0.0
    %1180 = vmatpush2.msra.mxu0 0.0
    %1181 = vmatprep.subr.mxu0 0.0
    %1182 = vmatpush2.msra.mxu0 0.0
    %1183 = vmatprep.mubr.f32.mxu0 0.0
    %1184 = vmatmul.mubr.f32.gmra.mxu0 %v1117
    %v1185 = vpop.f32.mrf.mxu0
    %v1186 = vadd.f32 0.0, %v1185
    %v1187 = vpop.f32.mrf.mxu0
    %1188 = vdwg.mxu0
    %v1190 = vsel %vm118, %v1186, 0
    %1192 = vmatprep.subr.mxu0 0.0
    %1193 = vmatpush1.msra.mxu0 0.0
    %1194 = vmatprep.subr.mxu0 0.0
    %1195 = vmatpush1.msra.mxu0 0.0
    %1196 = vmatprep.subr.mxu0 0.0
    %1197 = vmatpush1.msra.mxu0 0.0
    %1198 = vmatprep.subr.mxu0 0.0
    %1199 = vmatpush1.msra.mxu0 0.0
    %1200 = vmatprep.subr.mxu0 0.0
    %1201 = vmatpush1.msra.mxu0 0.0
    %1202 = vmatprep.subr.mxu0 0.0
    %1203 = vmatpush1.msra.mxu0 0.0
    %1204 = vmatprep.subr.mxu0 0.0
    %1205 = vmatpush1.msra.mxu0 0.0
    %1206 = vmatprep.subr.mxu0 0.0
    %1207 = vmatpush1.msra.mxu0 0.0
    %1208 = vmatprep.subr.mxu0 0.0
    %1209 = vmatpush1.msra.mxu0 0.0
    %1210 = vmatprep.subr.mxu0 0.0
    %1211 = vmatpush1.msra.mxu0 0.0
    %1212 = vmatprep.subr.mxu0 0.0
    %1213 = vmatpush1.msra.mxu0 0.0
    %1214 = vmatprep.subr.mxu0 0.0
    %1215 = vmatpush1.msra.mxu0 0.0
    %1216 = vmatprep.subr.mxu0 0.0
    %1217 = vmatpush1.msra.mxu0 0.0
    %1218 = vmatprep.subr.mxu0 0.0
    %1219 = vmatpush1.msra.mxu0 0.0
    %1220 = vmatprep.subr.mxu0 0.0
    %1221 = vmatpush1.msra.mxu0 %v207
    %1222 = vmatprep.subr.mxu0 0.0
    %1223 = vmatpush1.msra.mxu0 %v206
    %1224 = vmatprep.subr.mxu0 0.0
    %1225 = vmatpush2.msra.mxu0 0.0
    %1226 = vmatprep.subr.mxu0 0.0
    %1227 = vmatpush2.msra.mxu0 0.0
    %1228 = vmatprep.subr.mxu0 0.0
    %1229 = vmatpush2.msra.mxu0 0.0
    %1230 = vmatprep.subr.mxu0 0.0
    %1231 = vmatpush2.msra.mxu0 0.0
    %1232 = vmatprep.subr.mxu0 0.0
    %1233 = vmatpush2.msra.mxu0 0.0
    %1234 = vmatprep.subr.mxu0 0.0
    %1235 = vmatpush2.msra.mxu0 0.0
    %1236 = vmatprep.subr.mxu0 0.0
    %1237 = vmatpush2.msra.mxu0 0.0
    %1238 = vmatprep.subr.mxu0 0.0
    %1239 = vmatpush2.msra.mxu0 0.0
    %1240 = vmatprep.subr.mxu0 0.0
    %1241 = vmatpush2.msra.mxu0 0.0
    %1242 = vmatprep.subr.mxu0 0.0
    %1243 = vmatpush2.msra.mxu0 0.0
    %1244 = vmatprep.subr.mxu0 0.0
    %1245 = vmatpush2.msra.mxu0 0.0
    %1246 = vmatprep.subr.mxu0 0.0
    %1247 = vmatpush2.msra.mxu0 0.0
    %1248 = vmatprep.subr.mxu0 0.0
    %1249 = vmatpush2.msra.mxu0 0.0
    %1250 = vmatprep.subr.mxu0 0.0
    %1251 = vmatpush2.msra.mxu0 0.0
    %1252 = vmatprep.subr.mxu0 0.0
    %1253 = vmatpush2.msra.mxu0 0.0
    %1254 = vmatprep.subr.mxu0 0.0
    %1255 = vmatpush2.msra.mxu0 0.0
    %1256 = vmatprep.mubr.f32.mxu0 0.0
    %1257 = vmatmul.mubr.f32.gmra.mxu0 %v1190
    %v1258 = vpop.f32.mrf.mxu0
    %v1259 = vadd.f32 0.0, %v1258
    %v1260 = vpop.f32.mrf.mxu0
    %1261 = vdwg.mxu0
    %v1263 = vsel %vm118, %v1020, 0
    %1265 = vmatprep.subr.mxu0 0.0
    %1266 = vmatpush1.msra.mxu0 0.0
    %1267 = vmatprep.subr.mxu0 0.0
    %1268 = vmatpush1.msra.mxu0 0.0
    %1269 = vmatprep.subr.mxu0 0.0
    %1270 = vmatpush1.msra.mxu0 0.0
    %1271 = vmatprep.subr.mxu0 0.0
    %1272 = vmatpush1.msra.mxu0 0.0
    %1273 = vmatprep.subr.mxu0 0.0
    %1274 = vmatpush1.msra.mxu0 0.0
    %1275 = vmatprep.subr.mxu0 0.0
    %1276 = vmatpush1.msra.mxu0 0.0
    %1277 = vmatprep.subr.mxu0 0.0
    %1278 = vmatpush1.msra.mxu0 0.0
    %1279 = vmatprep.subr.mxu0 0.0
    %1280 = vmatpush1.msra.mxu0 0.0
    %1281 = vmatprep.subr.mxu0 0.0
    %1282 = vmatpush1.msra.mxu0 0.0
    %1283 = vmatprep.subr.mxu0 0.0
    %1284 = vmatpush1.msra.mxu0 0.0
    %1285 = vmatprep.subr.mxu0 0.0
    %1286 = vmatpush1.msra.mxu0 0.0
    %1287 = vmatprep.subr.mxu0 0.0
    %1288 = vmatpush1.msra.mxu0 0.0
    %1289 = vmatprep.subr.mxu0 0.0
    %1290 = vmatpush1.msra.mxu0 0.0
    %1291 = vmatprep.subr.mxu0 0.0
    %1292 = vmatpush1.msra.mxu0 0.0
    %1293 = vmatprep.subr.mxu0 0.0
    %1294 = vmatpush1.msra.mxu0 %v205
    %1295 = vmatprep.subr.mxu0 0.0
    %1296 = vmatpush1.msra.mxu0 %v204
    %1297 = vmatprep.subr.mxu0 0.0
    %1298 = vmatpush2.msra.mxu0 0.0
    %1299 = vmatprep.subr.mxu0 0.0
    %1300 = vmatpush2.msra.mxu0 0.0
    %1301 = vmatprep.subr.mxu0 0.0
    %1302 = vmatpush2.msra.mxu0 0.0
    %1303 = vmatprep.subr.mxu0 0.0
    %1304 = vmatpush2.msra.mxu0 0.0
    %1305 = vmatprep.subr.mxu0 0.0
    %1306 = vmatpush2.msra.mxu0 0.0
    %1307 = vmatprep.subr.mxu0 0.0
    %1308 = vmatpush2.msra.mxu0 0.0
    %1309 = vmatprep.subr.mxu0 0.0
    %1310 = vmatpush2.msra.mxu0 0.0
    %1311 = vmatprep.subr.mxu0 0.0
    %1312 = vmatpush2.msra.mxu0 0.0
    %1313 = vmatprep.subr.mxu0 0.0
    %1314 = vmatpush2.msra.mxu0 0.0
    %1315 = vmatprep.subr.mxu0 0.0
    %1316 = vmatpush2.msra.mxu0 0.0
    %1317 = vmatprep.subr.mxu0 0.0
    %1318 = vmatpush2.msra.mxu0 0.0
    %1319 = vmatprep.subr.mxu0 0.0
    %1320 = vmatpush2.msra.mxu0 0.0
    %1321 = vmatprep.subr.mxu0 0.0
    %1322 = vmatpush2.msra.mxu0 0.0
    %1323 = vmatprep.subr.mxu0 0.0
    %1324 = vmatpush2.msra.mxu0 0.0
    %1325 = vmatprep.subr.mxu0 0.0
    %1326 = vmatpush2.msra.mxu0 0.0
    %1327 = vmatprep.subr.mxu0 0.0
    %1328 = vmatpush2.msra.mxu0 0.0
    %1329 = vmatprep.mubr.f32.mxu0 0.0
    %1330 = vmatmul.mubr.f32.gmra.mxu0 %v1263
    %v1331 = vpop.f32.mrf.mxu0
    %v1332 = vadd.f32 %v1259, %v1331
    %v1333 = vpop.f32.mrf.mxu0
    %1334 = vdwg.mxu0
    %v1335 = vadd.f32 %v1332, %v854
    %v1336 = vadd.f32 %v192, %v855
    %v1337 = vadd.f32 %v197, %v1335
    %v1338 = vsel %vm220, %v1336, 0.0
    %1339 = vadd.xlane.f32.xlu0 %v1338
    %v1340 = vpop.xlane.xlu0 %1339
    %v1341 = vsel %vm220, %v1337, 0.0
    %1342 = vadd.xlane.f32.xlu0 %v1341
    %v1343 = vpop.xlane.xlu0 %1342
    %v1344 = vmul.f32 %v1340, %v227
    %v1345 = vmul.f32 %v1343, %v227
    %v1346 = vmul.f32 %v1336, %v1336
    %v1347 = vmul.f32 %v1337, %v1337
    %v1348 = vsel %vm220, %v1346, 0.0
    %1349 = vadd.xlane.f32.xlu0 %v1348
    %v1350 = vpop.xlane.xlu0 %1349
    %v1351 = vsel %vm220, %v1347, 0.0
    %1352 = vadd.xlane.f32.xlu0 %v1351
    %v1353 = vpop.xlane.xlu0 %1352
    %v1354 = vmul.f32 %v1350, %v227
    %v1355 = vmul.f32 %v1353, %v227
    %v1356 = vmul.f32 %v1344, %v1344
    %v1357 = vmul.f32 %v1345, %v1345
    %v1358 = vsub.f32 %v1354, %v1356
    %v1359 = vsub.f32 %v1355, %v1357
    %v1360 = vsub.f32 %v1336, %v1344
    %v1361 = vsub.f32 %v1337, %v1345
    %v1362 = vadd.f32 %v1358, 1e-05
    %v1363 = vadd.f32 %v1359, 1e-05
    %v1364 = vrsqrt.pop %v1362
    %v1365 = vrsqrt.pop %v1363
    %v1366 = vmul.f32 %v1360, %v1364
    %v1367 = vmul.f32 %v1361, %v1365
    %v1368 = vlaneseq
    %v1369 = vshrl.u32 %v1368, 7
    %v1370 = vsub.s32 6, %v1369
    %v1371 = vrot.slane %v218, %v1370
    %v1372 = vmul.f32 %v1366, %v1371
    %v1373 = vmul.f32 %v1367, %v1371
    %v1374 = vlaneseq
    %v1375 = vshrl.u32 %v1374, 7
    %v1376 = vsub.s32 7, %v1375
    %v1377 = vrot.slane %v218, %v1376
    %v1378 = vadd.f32 %v1372, %v1377
    %v1379 = vadd.f32 %v1373, %v1377
    %v1380 = vlaneseq
    %v1381 = vshrl.u32 %v1380, 7
    %v1382 = vsub.s32 0, %v1381
    %v1383 = vrot.slane %v219, %v1382
    %v1385 = vsel %vm220, %v1378, 0
    %v1388 = vsel %vm220, %v1379, 0
    %1390 = vmatprep.subr.mxu0 0.0
    %1391 = vmatpush1.msra.mxu0 0.0
    %1392 = vmatprep.subr.mxu0 0.0
    %1393 = vmatpush1.msra.mxu0 0.0
    %1394 = vmatprep.subr.mxu0 0.0
    %1395 = vmatpush1.msra.mxu0 0.0
    %1396 = vmatprep.subr.mxu0 0.0
    %1397 = vmatpush1.msra.mxu0 0.0
    %1398 = vmatprep.subr.mxu0 0.0
    %1399 = vmatpush1.msra.mxu0 0.0
    %1400 = vmatprep.subr.mxu0 0.0
    %1401 = vmatpush1.msra.mxu0 0.0
    %1402 = vmatprep.subr.mxu0 0.0
    %1403 = vmatpush1.msra.mxu0 0.0
    %1404 = vmatprep.subr.mxu0 0.0
    %1405 = vmatpush1.msra.mxu0 0.0
    %1406 = vmatprep.subr.mxu0 0.0
    %1407 = vmatpush1.msra.mxu0 0.0
    %1408 = vmatprep.subr.mxu0 0.0
    %1409 = vmatpush1.msra.mxu0 0.0
    %1410 = vmatprep.subr.mxu0 0.0
    %1411 = vmatpush1.msra.mxu0 0.0
    %1412 = vmatprep.subr.mxu0 0.0
    %1413 = vmatpush1.msra.mxu0 0.0
    %1414 = vmatprep.subr.mxu0 0.0
    %1415 = vmatpush1.msra.mxu0 %v212
    %1416 = vmatprep.subr.mxu0 0.0
    %1417 = vmatpush1.msra.mxu0 %v211
    %1418 = vmatprep.subr.mxu0 0.0
    %1419 = vmatpush1.msra.mxu0 %v210
    %1420 = vmatprep.subr.mxu0 0.0
    %1421 = vmatpush1.msra.mxu0 %v209
    %1422 = vmatprep.subr.mxu0 0.0
    %1423 = vmatpush2.msra.mxu0 0.0
    %1424 = vmatprep.subr.mxu0 0.0
    %1425 = vmatpush2.msra.mxu0 0.0
    %1426 = vmatprep.subr.mxu0 0.0
    %1427 = vmatpush2.msra.mxu0 0.0
    %1428 = vmatprep.subr.mxu0 0.0
    %1429 = vmatpush2.msra.mxu0 0.0
    %1430 = vmatprep.subr.mxu0 0.0
    %1431 = vmatpush2.msra.mxu0 0.0
    %1432 = vmatprep.subr.mxu0 0.0
    %1433 = vmatpush2.msra.mxu0 0.0
    %1434 = vmatprep.subr.mxu0 0.0
    %1435 = vmatpush2.msra.mxu0 0.0
    %1436 = vmatprep.subr.mxu0 0.0
    %1437 = vmatpush2.msra.mxu0 0.0
    %1438 = vmatprep.subr.mxu0 0.0
    %1439 = vmatpush2.msra.mxu0 0.0
    %1440 = vmatprep.subr.mxu0 0.0
    %1441 = vmatpush2.msra.mxu0 0.0
    %1442 = vmatprep.subr.mxu0 0.0
    %1443 = vmatpush2.msra.mxu0 0.0
    %1444 = vmatprep.subr.mxu0 0.0
    %1445 = vmatpush2.msra.mxu0 0.0
    %1446 = vmatprep.subr.mxu0 0.0
    %1447 = vmatpush2.msra.mxu0 0.0
    %1448 = vmatprep.subr.mxu0 0.0
    %1449 = vmatpush2.msra.mxu0 0.0
    %1450 = vmatprep.subr.mxu0 0.0
    %1451 = vmatpush2.msra.mxu0 0.0
    %1452 = vmatprep.subr.mxu0 0.0
    %1453 = vmatpush2.msra.mxu0 0.0
    %1454 = vmatprep.mubr.f32.mxu0 0.0
    %1455 = vmatmul.mubr.f32.gmra.mxu0 %v1385
    %v1456 = vpop.f32.mrf.mxu0
    %v1457 = vadd.f32 %v1383, %v1456
    %v1458 = vpop.f32.mrf.mxu0
    %1459 = vmatprep.mubr.f32.mxu0 0.0
    %1460 = vmatmul.mubr.f32.gmra.mxu0 %v1388
    %v1461 = vpop.f32.mrf.mxu0
    %v1462 = vadd.f32 %v1383, %v1461
    %v1463 = vpop.f32.mrf.mxu0
    %1464 = vdwg.mxu0
    %v1465 = vmax.f32 %v1457, 0.0
    %v1466 = vmax.f32 %v1462, 0.0
    %v1467 = vlaneseq
    %v1468 = vshrl.u32 %v1467, 7
    %v1469 = vsub.s32 1, %v1468
    %v1470 = vrot.slane %v219, %v1469
    %v1472 = vsel %vm220, %v1465, 0
    %v1475 = vsel %vm220, %v1466, 0
    %1477 = vmatprep.subr.mxu0 0.0
    %1478 = vmatpush1.msra.mxu0 0.0
    %1479 = vmatprep.subr.mxu0 0.0
    %1480 = vmatpush1.msra.mxu0 0.0
    %1481 = vmatprep.subr.mxu0 0.0
    %1482 = vmatpush1.msra.mxu0 0.0
    %1483 = vmatprep.subr.mxu0 0.0
    %1484 = vmatpush1.msra.mxu0 0.0
    %1485 = vmatprep.subr.mxu0 0.0
    %1486 = vmatpush1.msra.mxu0 0.0
    %1487 = vmatprep.subr.mxu0 0.0
    %1488 = vmatpush1.msra.mxu0 0.0
    %1489 = vmatprep.subr.mxu0 0.0
    %1490 = vmatpush1.msra.mxu0 0.0
    %1491 = vmatprep.subr.mxu0 0.0
    %1492 = vmatpush1.msra.mxu0 0.0
    %1493 = vmatprep.subr.mxu0 0.0
    %1494 = vmatpush1.msra.mxu0 0.0
    %1495 = vmatprep.subr.mxu0 0.0
    %1496 = vmatpush1.msra.mxu0 0.0
    %1497 = vmatprep.subr.mxu0 0.0
    %1498 = vmatpush1.msra.mxu0 0.0
    %1499 = vmatprep.subr.mxu0 0.0
    %1500 = vmatpush1.msra.mxu0 0.0
    %1501 = vmatprep.subr.mxu0 0.0
    %1502 = vmatpush1.msra.mxu0 %v217
    %1503 = vmatprep.subr.mxu0 0.0
    %1504 = vmatpush1.msra.mxu0 %v216
    %1505 = vmatprep.subr.mxu0 0.0
    %1506 = vmatpush1.msra.mxu0 %v215
    %1507 = vmatprep.subr.mxu0 0.0
    %1508 = vmatpush1.msra.mxu0 %v214
    %1509 = vmatprep.subr.mxu0 0.0
    %1510 = vmatpush2.msra.mxu0 0.0
    %1511 = vmatprep.subr.mxu0 0.0
    %1512 = vmatpush2.msra.mxu0 0.0
    %1513 = vmatprep.subr.mxu0 0.0
    %1514 = vmatpush2.msra.mxu0 0.0
    %1515 = vmatprep.subr.mxu0 0.0
    %1516 = vmatpush2.msra.mxu0 0.0
    %1517 = vmatprep.subr.mxu0 0.0
    %1518 = vmatpush2.msra.mxu0 0.0
    %1519 = vmatprep.subr.mxu0 0.0
    %1520 = vmatpush2.msra.mxu0 0.0
    %1521 = vmatprep.subr.mxu0 0.0
    %1522 = vmatpush2.msra.mxu0 0.0
    %1523 = vmatprep.subr.mxu0 0.0
    %1524 = vmatpush2.msra.mxu0 0.0
    %1525 = vmatprep.subr.mxu0 0.0
    %1526 = vmatpush2.msra.mxu0 0.0
    %1527 = vmatprep.subr.mxu0 0.0
    %1528 = vmatpush2.msra.mxu0 0.0
    %1529 = vmatprep.subr.mxu0 0.0
    %1530 = vmatpush2.msra.mxu0 0.0
    %1531 = vmatprep.subr.mxu0 0.0
    %1532 = vmatpush2.msra.mxu0 0.0
    %1533 = vmatprep.subr.mxu0 0.0
    %1534 = vmatpush2.msra.mxu0 0.0
    %1535 = vmatprep.subr.mxu0 0.0
    %1536 = vmatpush2.msra.mxu0 0.0
    %1537 = vmatprep.subr.mxu0 0.0
    %1538 = vmatpush2.msra.mxu0 0.0
    %1539 = vmatprep.subr.mxu0 0.0
    %1540 = vmatpush2.msra.mxu0 0.0
    %1541 = vmatprep.mubr.f32.mxu0 0.0
    %1542 = vmatmul.mubr.f32.gmra.mxu0 %v1472
    %v1543 = vpop.f32.mrf.mxu0
    %v1544 = vadd.f32 %v1470, %v1543
    %v1545 = vpop.f32.mrf.mxu0
    %1546 = vmatprep.mubr.f32.mxu0 0.0
    %1547 = vmatmul.mubr.f32.gmra.mxu0 %v1475
    %v1548 = vpop.f32.mrf.mxu0
    %v1549 = vadd.f32 %v1470, %v1548
    %v1550 = vpop.f32.mrf.mxu0
    %1551 = vdwg.mxu0
    %v1552 = vadd.f32 %v1336, %v1544
    %v1553 = vadd.f32 %v1337, %v1549
    %v1554 = vld [vmem:[#allocation10] sm:$0xff]
    %v1555 = vld [vmem:[#allocation10 + $0x8] sm:$0xff]
    %v1556 = vld [vmem:[#allocation10 + $0x10] sm:$0xff]
    %v1557 = vld [vmem:[#allocation10 + $0x18] sm:$0xff]
    %v1558 = vld [vmem:[%s8] sm:$0x1]
    %v1560 = vlaneseq
    %v1561 = vshrl.u32 %v1560, 7
    %v1562 = vsub.s32 0, %v1561
    %v1563 = vrot.slane %v1558, %v1562
    %v1566 = vsel %vm220, %v1552, 0
    %v1569 = vsel %vm220, %v1553, 0
    %1571 = vmatprep.subr.mxu0 0.0
    %1572 = vmatpush1.msra.mxu0 0.0
    %1573 = vmatprep.subr.mxu0 0.0
    %1574 = vmatpush1.msra.mxu0 0.0
    %1575 = vmatprep.subr.mxu0 0.0
    %1576 = vmatpush1.msra.mxu0 0.0
    %1577 = vmatprep.subr.mxu0 0.0
    %1578 = vmatpush1.msra.mxu0 0.0
    %1579 = vmatprep.subr.mxu0 0.0
    %1580 = vmatpush1.msra.mxu0 0.0
    %1581 = vmatprep.subr.mxu0 0.0
    %1582 = vmatpush1.msra.mxu0 0.0
    %1583 = vmatprep.subr.mxu0 0.0
    %1584 = vmatpush1.msra.mxu0 0.0
    %1585 = vmatprep.subr.mxu0 0.0
    %1586 = vmatpush1.msra.mxu0 0.0
    %1587 = vmatprep.subr.mxu0 0.0
    %1588 = vmatpush1.msra.mxu0 0.0
    %1589 = vmatprep.subr.mxu0 0.0
    %1590 = vmatpush1.msra.mxu0 0.0
    %1591 = vmatprep.subr.mxu0 0.0
    %1592 = vmatpush1.msra.mxu0 0.0
    %1593 = vmatprep.subr.mxu0 0.0
    %1594 = vmatpush1.msra.mxu0 0.0
    %1595 = vmatprep.subr.mxu0 0.0
    %1596 = vmatpush1.msra.mxu0 %v1557
    %1597 = vmatprep.subr.mxu0 0.0
    %1598 = vmatpush1.msra.mxu0 %v1556
    %1599 = vmatprep.subr.mxu0 0.0
    %1600 = vmatpush1.msra.mxu0 %v1555
    %1601 = vmatprep.subr.mxu0 0.0
    %1602 = vmatpush1.msra.mxu0 %v1554
    %1603 = vmatprep.subr.mxu0 0.0
    %1604 = vmatpush2.msra.mxu0 0.0
    %1605 = vmatprep.subr.mxu0 0.0
    %1606 = vmatpush2.msra.mxu0 0.0
    %1607 = vmatprep.subr.mxu0 0.0
    %1608 = vmatpush2.msra.mxu0 0.0
    %1609 = vmatprep.subr.mxu0 0.0
    %1610 = vmatpush2.msra.mxu0 0.0
    %1611 = vmatprep.subr.mxu0 0.0
    %1612 = vmatpush2.msra.mxu0 0.0
    %1613 = vmatprep.subr.mxu0 0.0
    %1614 = vmatpush2.msra.mxu0 0.0
    %1615 = vmatprep.subr.mxu0 0.0
    %1616 = vmatpush2.msra.mxu0 0.0
    %1617 = vmatprep.subr.mxu0 0.0
    %1618 = vmatpush2.msra.mxu0 0.0
    %1619 = vmatprep.subr.mxu0 0.0
    %1620 = vmatpush2.msra.mxu0 0.0
    %1621 = vmatprep.subr.mxu0 0.0
    %1622 = vmatpush2.msra.mxu0 0.0
    %1623 = vmatprep.subr.mxu0 0.0
    %1624 = vmatpush2.msra.mxu0 0.0
    %1625 = vmatprep.subr.mxu0 0.0
    %1626 = vmatpush2.msra.mxu0 0.0
    %1627 = vmatprep.subr.mxu0 0.0
    %1628 = vmatpush2.msra.mxu0 0.0
    %1629 = vmatprep.subr.mxu0 0.0
    %1630 = vmatpush2.msra.mxu0 0.0
    %1631 = vmatprep.subr.mxu0 0.0
    %1632 = vmatpush2.msra.mxu0 0.0
    %1633 = vmatprep.subr.mxu0 0.0
    %1634 = vmatpush2.msra.mxu0 0.0
    %1635 = vmatprep.mubr.f32.mxu0 0.0
    %1636 = vmatmul.mubr.f32.gmra.mxu0 %v1566
    %v1637 = vpop.f32.mrf.mxu0
    %v1638 = vadd.f32 %v1563, %v1637
    %v1639 = vpop.f32.mrf.mxu0
    %1640 = vmatprep.mubr.f32.mxu0 0.0
    %1641 = vmatmul.mubr.f32.gmra.mxu0 %v1569
    %v1642 = vpop.f32.mrf.mxu0
    %v1643 = vadd.f32 %v1563, %v1642
    %v1644 = vpop.f32.mrf.mxu0
    %1645 = vdwg.mxu0
    %s1646 = scalar_lea.vmem %s4, 32
    %v1647 = vld [vmem:[%s1646] sm:$0xff]
    %v1648 = vld [vmem:[%s1646 + $0x8] sm:$0xff]
    %v1649 = vld [vmem:[%s1646 + $0x10] sm:$0xff]
    %v1650 = vld [vmem:[%s1646 + $0x18] sm:$0xff]
    %s1651 = scalar_lea.vmem [#allocation7], 96
    %v1652 = vld [vmem:[%s1651] sm:$0xff]
    %v1653 = vld [vmem:[%s1651 + $0x8] sm:$0xff]
    %v1654 = vld [vmem:[%s1651 + $0x10] sm:$0xff]
    %v1655 = vld [vmem:[%s1651 + $0x18] sm:$0xff]
    %s1656 = scalar_lea.vmem [#allocation7], 128
    %v1657 = vld [vmem:[%s1656] sm:$0xff]
    %v1658 = vld [vmem:[%s1656 + $0x8] sm:$0xff]
    %v1659 = vld [vmem:[%s1656 + $0x10] sm:$0xff]
    %v1660 = vld [vmem:[%s1656 + $0x18] sm:$0xff]
    %s1661 = scalar_lea.vmem [#allocation7], 160
    %v1662 = vld [vmem:[%s1661] sm:$0xff]
    %v1663 = vld [vmem:[%s1661 + $0x8] sm:$0xff]
    %v1664 = vld [vmem:[%s1661 + $0x10] sm:$0xff]
    %v1665 = vld [vmem:[%s1661 + $0x18] sm:$0xff]
    %s1666 = scalar_lea.vmem [#allocation8], 16
    %v1667 = vld [vmem:[%s1666] sm:$0xff]
    %v1668 = vld [vmem:[%s1666 + $0x8] sm:$0x3]
    %v1669 = vsel %vm220, %v1638, 0.0
    %1670 = vadd.xlane.f32.xlu0 %v1669
    %v1671 = vpop.xlane.xlu0 %1670
    %v1672 = vsel %vm220, %v1643, 0.0
    %1673 = vadd.xlane.f32.xlu0 %v1672
    %v1674 = vpop.xlane.xlu0 %1673
    %v1675 = vmul.f32 %v1671, %v227
    %v1676 = vmul.f32 %v1674, %v227
    %v1677 = vmul.f32 %v1638, %v1638
    %v1678 = vmul.f32 %v1643, %v1643
    %v1679 = vsel %vm220, %v1677, 0.0
    %1680 = vadd.xlane.f32.xlu0 %v1679
    %v1681 = vpop.xlane.xlu0 %1680
    %v1682 = vsel %vm220, %v1678, 0.0
    %1683 = vadd.xlane.f32.xlu0 %v1682
    %v1684 = vpop.xlane.xlu0 %1683
    %v1685 = vmul.f32 %v1681, %v227
    %v1686 = vmul.f32 %v1684, %v227
    %v1687 = vmul.f32 %v1675, %v1675
    %v1688 = vmul.f32 %v1676, %v1676
    %v1689 = vsub.f32 %v1685, %v1687
    %v1690 = vsub.f32 %v1686, %v1688
    %v1691 = vsub.f32 %v1638, %v1675
    %v1692 = vsub.f32 %v1643, %v1676
    %v1693 = vadd.f32 %v1689, 1e-05
    %v1694 = vadd.f32 %v1690, 1e-05
    %v1695 = vrsqrt.pop %v1693
    %v1696 = vrsqrt.pop %v1694
    %v1697 = vmul.f32 %v1691, %v1695
    %v1698 = vmul.f32 %v1692, %v1696
    %v1699 = vlaneseq
    %v1700 = vshrl.u32 %v1699, 7
    %v1701 = vsub.s32 4, %v1700
    %v1702 = vrot.slane %v1667, %v1701
    %v1703 = vmul.f32 %v1697, %v1702
    %v1704 = vmul.f32 %v1698, %v1702
    %v1705 = vlaneseq
    %v1706 = vshrl.u32 %v1705, 7
    %v1707 = vsub.s32 5, %v1706
    %v1708 = vrot.slane %v1667, %v1707
    %v1709 = vadd.f32 %v1703, %v1708
    %v1710 = vadd.f32 %v1704, %v1708
    %v1712 = vsel %vm220, %v1709, 0
    %v1715 = vsel %vm220, %v1710, 0
    %1717 = vmatprep.subr.mxu0 0.0
    %1718 = vmatpush1.msra.mxu0 0.0
    %1719 = vmatprep.subr.mxu0 0.0
    %1720 = vmatpush1.msra.mxu0 0.0
    %1721 = vmatprep.subr.mxu0 0.0
    %1722 = vmatpush1.msra.mxu0 0.0
    %1723 = vmatprep.subr.mxu0 0.0
    %1724 = vmatpush1.msra.mxu0 0.0
    %1725 = vmatprep.subr.mxu0 0.0
    %1726 = vmatpush1.msra.mxu0 0.0
    %1727 = vmatprep.subr.mxu0 0.0
    %1728 = vmatpush1.msra.mxu0 0.0
    %1729 = vmatprep.subr.mxu0 0.0
    %1730 = vmatpush1.msra.mxu0 0.0
    %1731 = vmatprep.subr.mxu0 0.0
    %1732 = vmatpush1.msra.mxu0 0.0
    %1733 = vmatprep.subr.mxu0 0.0
    %1734 = vmatpush1.msra.mxu0 0.0
    %1735 = vmatprep.subr.mxu0 0.0
    %1736 = vmatpush1.msra.mxu0 0.0
    %1737 = vmatprep.subr.mxu0 0.0
    %1738 = vmatpush1.msra.mxu0 0.0
    %1739 = vmatprep.subr.mxu0 0.0
    %1740 = vmatpush1.msra.mxu0 0.0
    %1741 = vmatprep.subr.mxu0 0.0
    %1742 = vmatpush1.msra.mxu0 %v1650
    %1743 = vmatprep.subr.mxu0 0.0
    %1744 = vmatpush1.msra.mxu0 %v1649
    %1745 = vmatprep.subr.mxu0 0.0
    %1746 = vmatpush1.msra.mxu0 %v1648
    %1747 = vmatprep.subr.mxu0 0.0
    %1748 = vmatpush1.msra.mxu0 %v1647
    %1749 = vmatprep.subr.mxu0 0.0
    %1750 = vmatpush2.msra.mxu0 0.0
    %1751 = vmatprep.subr.mxu0 0.0
    %1752 = vmatpush2.msra.mxu0 0.0
    %1753 = vmatprep.subr.mxu0 0.0
    %1754 = vmatpush2.msra.mxu0 0.0
    %1755 = vmatprep.subr.mxu0 0.0
    %1756 = vmatpush2.msra.mxu0 0.0
    %1757 = vmatprep.subr.mxu0 0.0
    %1758 = vmatpush2.msra.mxu0 0.0
    %1759 = vmatprep.subr.mxu0 0.0
    %1760 = vmatpush2.msra.mxu0 0.0
    %1761 = vmatprep.subr.mxu0 0.0
    %1762 = vmatpush2.msra.mxu0 0.0
    %1763 = vmatprep.subr.mxu0 0.0
    %1764 = vmatpush2.msra.mxu0 0.0
    %1765 = vmatprep.subr.mxu0 0.0
    %1766 = vmatpush2.msra.mxu0 0.0
    %1767 = vmatprep.subr.mxu0 0.0
    %1768 = vmatpush2.msra.mxu0 0.0
    %1769 = vmatprep.subr.mxu0 0.0
    %1770 = vmatpush2.msra.mxu0 0.0
    %1771 = vmatprep.subr.mxu0 0.0
    %1772 = vmatpush2.msra.mxu0 0.0
    %1773 = vmatprep.subr.mxu0 0.0
    %1774 = vmatpush2.msra.mxu0 0.0
    %1775 = vmatprep.subr.mxu0 0.0
    %1776 = vmatpush2.msra.mxu0 0.0
    %1777 = vmatprep.subr.mxu0 0.0
    %1778 = vmatpush2.msra.mxu0 0.0
    %1779 = vmatprep.subr.mxu0 0.0
    %1780 = vmatpush2.msra.mxu0 0.0
    %1781 = vmatprep.mubr.f32.mxu0 0.0
    %1782 = vmatmul.mubr.f32.gmra.mxu0 %v1712
    %v1783 = vpop.f32.mrf.mxu0
    %v1784 = vadd.f32 0.0, %v1783
    %v1785 = vpop.f32.mrf.mxu0
    %1786 = vmatprep.mubr.f32.mxu0 0.0
    %1787 = vmatmul.mubr.f32.gmra.mxu0 %v1715
    %v1788 = vpop.f32.mrf.mxu0
    %v1789 = vadd.f32 0.0, %v1788
    %v1790 = vpop.f32.mrf.mxu0
    %1791 = vdwg.mxu0
    %v1792 = vlaneseq
    %v1793 = vshrl.u32 %v1792, 7
    %v1794 = vsub.s32 0, %v1793
    %v1795 = vrot.slane %v1667, %v1794
    %v1796 = vadd.f32 %v1784, %v1795
    %v1797 = vadd.f32 %v1789, %v1795
    %v1798 = vlaneseq
    %v1799 = vshrl.u32 %v1798, 7
    %v1800 = vsub.s32 1, %v1799
    %v1801 = vrot.slane %v1667, %v1800
    %1803 = vrot.lane.b32.xlu0 %v1801, 32
    %v1804 = vpop.permute.xlu0 %1803
    %v1806 = vadd.f32 %v1784, %v1804
    %v1807 = vadd.f32 %v1789, %v1804
    %v1808 = vlaneseq
    %v1809 = vshrl.u32 %v1808, 7
    %v1810 = vsub.s32 2, %v1809
    %v1811 = vrot.slane %v1667, %v1810
    %1813 = vrot.lane.b32.xlu0 %v1811, 64
    %v1814 = vpop.permute.xlu0 %1813
    %v1816 = vadd.f32 %v1784, %v1814
    %v1817 = vadd.f32 %v1789, %v1814
    %1819 = vrot.lane.b32.xlu0 %v1806, 96
    %v1820 = vpop.permute.xlu0 %1819
    %v1822 = vsel %vm118, %v1796, 0
    %v1824 = vsel %vm118, %v1820, 0
    %1826 = vmatprep.subr.mxu0 0.0
    %1827 = vmatpush1.xpose.msra.mxu0 0.0
    %1828 = vmatprep.subr.mxu0 0.0
    %1829 = vmatpush1.xpose.msra.mxu0 0.0
    %1830 = vmatprep.subr.mxu0 0.0
    %1831 = vmatpush1.xpose.msra.mxu0 0.0
    %1832 = vmatprep.subr.mxu0 0.0
    %1833 = vmatpush1.xpose.msra.mxu0 0.0
    %1834 = vmatprep.subr.mxu0 0.0
    %1835 = vmatpush1.xpose.msra.mxu0 0.0
    %1836 = vmatprep.subr.mxu0 0.0
    %1837 = vmatpush1.xpose.msra.mxu0 0.0
    %1838 = vmatprep.subr.mxu0 0.0
    %1839 = vmatpush1.xpose.msra.mxu0 0.0
    %1840 = vmatprep.subr.mxu0 0.0
    %1841 = vmatpush1.xpose.msra.mxu0 0.0
    %1842 = vmatprep.subr.mxu0 0.0
    %1843 = vmatpush1.xpose.msra.mxu0 0.0
    %1844 = vmatprep.subr.mxu0 0.0
    %1845 = vmatpush1.xpose.msra.mxu0 0.0
    %1846 = vmatprep.subr.mxu0 0.0
    %1847 = vmatpush1.xpose.msra.mxu0 0.0
    %1848 = vmatprep.subr.mxu0 0.0
    %1849 = vmatpush1.xpose.msra.mxu0 0.0
    %1850 = vmatprep.subr.mxu0 0.0
    %1851 = vmatpush1.xpose.msra.mxu0 0.0
    %1852 = vmatprep.subr.mxu0 0.0
    %1853 = vmatpush1.xpose.msra.mxu0 0.0
    %1854 = vmatprep.subr.mxu0 0.0
    %1855 = vmatpush1.xpose.msra.mxu0 0.0
    %1856 = vmatprep.subr.mxu0 0.0
    %1857 = vmatpush1.xpose.msra.mxu0 %v1824
    %1858 = vmatprep.subr.mxu0 0.0
    %1859 = vmatpush2.xpose.msra.mxu0 0.0
    %1860 = vmatprep.subr.mxu0 0.0
    %1861 = vmatpush2.xpose.msra.mxu0 0.0
    %1862 = vmatprep.subr.mxu0 0.0
    %1863 = vmatpush2.xpose.msra.mxu0 0.0
    %1864 = vmatprep.subr.mxu0 0.0
    %1865 = vmatpush2.xpose.msra.mxu0 0.0
    %1866 = vmatprep.subr.mxu0 0.0
    %1867 = vmatpush2.xpose.msra.mxu0 0.0
    %1868 = vmatprep.subr.mxu0 0.0
    %1869 = vmatpush2.xpose.msra.mxu0 0.0
    %1870 = vmatprep.subr.mxu0 0.0
    %1871 = vmatpush2.xpose.msra.mxu0 0.0
    %1872 = vmatprep.subr.mxu0 0.0
    %1873 = vmatpush2.xpose.msra.mxu0 0.0
    %1874 = vmatprep.subr.mxu0 0.0
    %1875 = vmatpush2.xpose.msra.mxu0 0.0
    %1876 = vmatprep.subr.mxu0 0.0
    %1877 = vmatpush2.xpose.msra.mxu0 0.0
    %1878 = vmatprep.subr.mxu0 0.0
    %1879 = vmatpush2.xpose.msra.mxu0 0.0
    %1880 = vmatprep.subr.mxu0 0.0
    %1881 = vmatpush2.xpose.msra.mxu0 0.0
    %1882 = vmatprep.subr.mxu0 0.0
    %1883 = vmatpush2.xpose.msra.mxu0 0.0
    %1884 = vmatprep.subr.mxu0 0.0
    %1885 = vmatpush2.xpose.msra.mxu0 0.0
    %1886 = vmatprep.subr.mxu0 0.0
    %1887 = vmatpush2.xpose.msra.mxu0 0.0
    %1888 = vmatprep.subr.mxu0 0.0
    %1889 = vmatpush2.xpose.msra.mxu0 0.0
    %1890 = vmatprep.mubr.f32.mxu0 0.0
    %1891 = vmatmul.mubr.f32.gmra.mxu0 %v1822
    %v1892 = vpop.f32.mrf.mxu0
    %v1893 = vadd.f32 0.0, %v1892
    %v1894 = vpop.f32.mrf.mxu0
    %1895 = vdwg.mxu0
    %v1896 = vmul.f32 %v1893, 0.25
    %v1897 = vsel %vm450, %v1896, -inf
    %1898 = vmax.xlane.f32.xlu0 %v1897
    %v1899 = vpop.xlane.xlu0 %1898
    %v1900 = vsub.f32 %v1896, %v1899
    %v1901 = vmul.f32 %v1900, 1.442695
    %v1902 = vpow.pop %v1901
    %v1903 = vsel %vm450, %v1902, 0.0
    %1904 = vadd.xlane.f32.xlu0 %v1903
    %v1905 = vpop.xlane.xlu0 %1904
    %v1906 = vrcp.pop %v1905
    %v1907 = vmul.f32 %v1902, %v1906
    %1909 = vrot.lane.b32.xlu0 %v1816, 64
    %v1910 = vpop.permute.xlu0 %1909
    %v1913 = vsel %vm450, %v1907, 0
    %1915 = vmatprep.subr.mxu0 0.0
    %1916 = vmatpush1.msra.mxu0 0.0
    %1917 = vmatprep.subr.mxu0 0.0
    %1918 = vmatpush1.msra.mxu0 0.0
    %1919 = vmatprep.subr.mxu0 0.0
    %1920 = vmatpush1.msra.mxu0 0.0
    %1921 = vmatprep.subr.mxu0 0.0
    %1922 = vmatpush1.msra.mxu0 0.0
    %1923 = vmatprep.subr.mxu0 0.0
    %1924 = vmatpush1.msra.mxu0 0.0
    %1925 = vmatprep.subr.mxu0 0.0
    %1926 = vmatpush1.msra.mxu0 0.0
    %1927 = vmatprep.subr.mxu0 0.0
    %1928 = vmatpush1.msra.mxu0 0.0
    %1929 = vmatprep.subr.mxu0 0.0
    %1930 = vmatpush1.msra.mxu0 0.0
    %1931 = vmatprep.subr.mxu0 0.0
    %1932 = vmatpush1.msra.mxu0 0.0
    %1933 = vmatprep.subr.mxu0 0.0
    %1934 = vmatpush1.msra.mxu0 0.0
    %1935 = vmatprep.subr.mxu0 0.0
    %1936 = vmatpush1.msra.mxu0 0.0
    %1937 = vmatprep.subr.mxu0 0.0
    %1938 = vmatpush1.msra.mxu0 0.0
    %1939 = vmatprep.subr.mxu0 0.0
    %1940 = vmatpush1.msra.mxu0 0.0
    %1941 = vmatprep.subr.mxu0 0.0
    %1942 = vmatpush1.msra.mxu0 0.0
    %1943 = vmatprep.subr.mxu0 0.0
    %1944 = vmatpush1.msra.mxu0 0.0
    %1945 = vmatprep.subr.mxu0 0.0
    %1946 = vmatpush1.msra.mxu0 %v1910
    %1947 = vmatprep.subr.mxu0 0.0
    %1948 = vmatpush2.msra.mxu0 0.0
    %1949 = vmatprep.subr.mxu0 0.0
    %1950 = vmatpush2.msra.mxu0 0.0
    %1951 = vmatprep.subr.mxu0 0.0
    %1952 = vmatpush2.msra.mxu0 0.0
    %1953 = vmatprep.subr.mxu0 0.0
    %1954 = vmatpush2.msra.mxu0 0.0
    %1955 = vmatprep.subr.mxu0 0.0
    %1956 = vmatpush2.msra.mxu0 0.0
    %1957 = vmatprep.subr.mxu0 0.0
    %1958 = vmatpush2.msra.mxu0 0.0
    %1959 = vmatprep.subr.mxu0 0.0
    %1960 = vmatpush2.msra.mxu0 0.0
    %1961 = vmatprep.subr.mxu0 0.0
    %1962 = vmatpush2.msra.mxu0 0.0
    %1963 = vmatprep.subr.mxu0 0.0
    %1964 = vmatpush2.msra.mxu0 0.0
    %1965 = vmatprep.subr.mxu0 0.0
    %1966 = vmatpush2.msra.mxu0 0.0
    %1967 = vmatprep.subr.mxu0 0.0
    %1968 = vmatpush2.msra.mxu0 0.0
    %1969 = vmatprep.subr.mxu0 0.0
    %1970 = vmatpush2.msra.mxu0 0.0
    %1971 = vmatprep.subr.mxu0 0.0
    %1972 = vmatpush2.msra.mxu0 0.0
    %1973 = vmatprep.subr.mxu0 0.0
    %1974 = vmatpush2.msra.mxu0 0.0
    %1975 = vmatprep.subr.mxu0 0.0
    %1976 = vmatpush2.msra.mxu0 0.0
    %1977 = vmatprep.subr.mxu0 0.0
    %1978 = vmatpush2.msra.mxu0 0.0
    %1979 = vmatprep.mubr.f32.mxu0 0.0
    %1980 = vmatmul.mubr.f32.gmra.mxu0 %v1913
    %v1981 = vpop.f32.mrf.mxu0
    %v1982 = vadd.f32 0.0, %v1981
    %v1983 = vpop.f32.mrf.mxu0
    %1984 = vdwg.mxu0
    %1985 = vrot.lane.b32.xlu0 %v1796, 112
    %v1986 = vpop.permute.xlu0 %1985
    %1987 = vrot.lane.b32.xlu0 %v1806, 80
    %v1988 = vpop.permute.xlu0 %1987
    %v1989 = vsel %vm118, %v1986, 0
    %v1991 = vsel %vm118, %v1988, 0
    %1993 = vmatprep.subr.mxu0 0.0
    %1994 = vmatpush1.xpose.msra.mxu0 0.0
    %1995 = vmatprep.subr.mxu0 0.0
    %1996 = vmatpush1.xpose.msra.mxu0 0.0
    %1997 = vmatprep.subr.mxu0 0.0
    %1998 = vmatpush1.xpose.msra.mxu0 0.0
    %1999 = vmatprep.subr.mxu0 0.0
    %2000 = vmatpush1.xpose.msra.mxu0 0.0
    %2001 = vmatprep.subr.mxu0 0.0
    %2002 = vmatpush1.xpose.msra.mxu0 0.0
    %2003 = vmatprep.subr.mxu0 0.0
    %2004 = vmatpush1.xpose.msra.mxu0 0.0
    %2005 = vmatprep.subr.mxu0 0.0
    %2006 = vmatpush1.xpose.msra.mxu0 0.0
    %2007 = vmatprep.subr.mxu0 0.0
    %2008 = vmatpush1.xpose.msra.mxu0 0.0
    %2009 = vmatprep.subr.mxu0 0.0
    %2010 = vmatpush1.xpose.msra.mxu0 0.0
    %2011 = vmatprep.subr.mxu0 0.0
    %2012 = vmatpush1.xpose.msra.mxu0 0.0
    %2013 = vmatprep.subr.mxu0 0.0
    %2014 = vmatpush1.xpose.msra.mxu0 0.0
    %2015 = vmatprep.subr.mxu0 0.0
    %2016 = vmatpush1.xpose.msra.mxu0 0.0
    %2017 = vmatprep.subr.mxu0 0.0
    %2018 = vmatpush1.xpose.msra.mxu0 0.0
    %2019 = vmatprep.subr.mxu0 0.0
    %2020 = vmatpush1.xpose.msra.mxu0 0.0
    %2021 = vmatprep.subr.mxu0 0.0
    %2022 = vmatpush1.xpose.msra.mxu0 0.0
    %2023 = vmatprep.subr.mxu0 0.0
    %2024 = vmatpush1.xpose.msra.mxu0 %v1991
    %2025 = vmatprep.subr.mxu0 0.0
    %2026 = vmatpush2.xpose.msra.mxu0 0.0
    %2027 = vmatprep.subr.mxu0 0.0
    %2028 = vmatpush2.xpose.msra.mxu0 0.0
    %2029 = vmatprep.subr.mxu0 0.0
    %2030 = vmatpush2.xpose.msra.mxu0 0.0
    %2031 = vmatprep.subr.mxu0 0.0
    %2032 = vmatpush2.xpose.msra.mxu0 0.0
    %2033 = vmatprep.subr.mxu0 0.0
    %2034 = vmatpush2.xpose.msra.mxu0 0.0
    %2035 = vmatprep.subr.mxu0 0.0
    %2036 = vmatpush2.xpose.msra.mxu0 0.0
    %2037 = vmatprep.subr.mxu0 0.0
    %2038 = vmatpush2.xpose.msra.mxu0 0.0
    %2039 = vmatprep.subr.mxu0 0.0
    %2040 = vmatpush2.xpose.msra.mxu0 0.0
    %2041 = vmatprep.subr.mxu0 0.0
    %2042 = vmatpush2.xpose.msra.mxu0 0.0
    %2043 = vmatprep.subr.mxu0 0.0
    %2044 = vmatpush2.xpose.msra.mxu0 0.0
    %2045 = vmatprep.subr.mxu0 0.0
    %2046 = vmatpush2.xpose.msra.mxu0 0.0
    %2047 = vmatprep.subr.mxu0 0.0
    %2048 = vmatpush2.xpose.msra.mxu0 0.0
    %2049 = vmatprep.subr.mxu0 0.0
    %2050 = vmatpush2.xpose.msra.mxu0 0.0
    %2051 = vmatprep.subr.mxu0 0.0
    %2052 = vmatpush2.xpose.msra.mxu0 0.0
    %2053 = vmatprep.subr.mxu0 0.0
    %2054 = vmatpush2.xpose.msra.mxu0 0.0
    %2055 = vmatprep.subr.mxu0 0.0
    %2056 = vmatpush2.xpose.msra.mxu0 0.0
    %2057 = vmatprep.mubr.f32.mxu0 0.0
    %2058 = vmatmul.mubr.f32.gmra.mxu0 %v1989
    %v2059 = vpop.f32.mrf.mxu0
    %v2060 = vadd.f32 0.0, %v2059
    %v2061 = vpop.f32.mrf.mxu0
    %2062 = vdwg.mxu0
    %v2063 = vmul.f32 %v2060, 0.25
    %v2064 = vsel %vm450, %v2063, -inf
    %2065 = vmax.xlane.f32.xlu0 %v2064
    %v2066 = vpop.xlane.xlu0 %2065
    %v2067 = vsub.f32 %v2063, %v2066
    %v2068 = vmul.f32 %v2067, 1.442695
    %v2069 = vpow.pop %v2068
    %v2070 = vsel %vm450, %v2069, 0.0
    %2071 = vadd.xlane.f32.xlu0 %v2070
    %v2072 = vpop.xlane.xlu0 %2071
    %v2073 = vrcp.pop %v2072
    %v2074 = vmul.f32 %v2069, %v2073
    %2075 = vrot.lane.b32.xlu0 %v1816, 48
    %v2076 = vpop.permute.xlu0 %2075
    %v2079 = vsel %vm450, %v2074, 0
    %2081 = vmatprep.subr.mxu0 0.0
    %2082 = vmatpush1.msra.mxu0 0.0
    %2083 = vmatprep.subr.mxu0 0.0
    %2084 = vmatpush1.msra.mxu0 0.0
    %2085 = vmatprep.subr.mxu0 0.0
    %2086 = vmatpush1.msra.mxu0 0.0
    %2087 = vmatprep.subr.mxu0 0.0
    %2088 = vmatpush1.msra.mxu0 0.0
    %2089 = vmatprep.subr.mxu0 0.0
    %2090 = vmatpush1.msra.mxu0 0.0
    %2091 = vmatprep.subr.mxu0 0.0
    %2092 = vmatpush1.msra.mxu0 0.0
    %2093 = vmatprep.subr.mxu0 0.0
    %2094 = vmatpush1.msra.mxu0 0.0
    %2095 = vmatprep.subr.mxu0 0.0
    %2096 = vmatpush1.msra.mxu0 0.0
    %2097 = vmatprep.subr.mxu0 0.0
    %2098 = vmatpush1.msra.mxu0 0.0
    %2099 = vmatprep.subr.mxu0 0.0
    %2100 = vmatpush1.msra.mxu0 0.0
    %2101 = vmatprep.subr.mxu0 0.0
    %2102 = vmatpush1.msra.mxu0 0.0
    %2103 = vmatprep.subr.mxu0 0.0
    %2104 = vmatpush1.msra.mxu0 0.0
    %2105 = vmatprep.subr.mxu0 0.0
    %2106 = vmatpush1.msra.mxu0 0.0
    %2107 = vmatprep.subr.mxu0 0.0
    %2108 = vmatpush1.msra.mxu0 0.0
    %2109 = vmatprep.subr.mxu0 0.0
    %2110 = vmatpush1.msra.mxu0 0.0
    %2111 = vmatprep.subr.mxu0 0.0
    %2112 = vmatpush1.msra.mxu0 %v2076
    %2113 = vmatprep.subr.mxu0 0.0
    %2114 = vmatpush2.msra.mxu0 0.0
    %2115 = vmatprep.subr.mxu0 0.0
    %2116 = vmatpush2.msra.mxu0 0.0
    %2117 = vmatprep.subr.mxu0 0.0
    %2118 = vmatpush2.msra.mxu0 0.0
    %2119 = vmatprep.subr.mxu0 0.0
    %2120 = vmatpush2.msra.mxu0 0.0
    %2121 = vmatprep.subr.mxu0 0.0
    %2122 = vmatpush2.msra.mxu0 0.0
    %2123 = vmatprep.subr.mxu0 0.0
    %2124 = vmatpush2.msra.mxu0 0.0
    %2125 = vmatprep.subr.mxu0 0.0
    %2126 = vmatpush2.msra.mxu0 0.0
    %2127 = vmatprep.subr.mxu0 0.0
    %2128 = vmatpush2.msra.mxu0 0.0
    %2129 = vmatprep.subr.mxu0 0.0
    %2130 = vmatpush2.msra.mxu0 0.0
    %2131 = vmatprep.subr.mxu0 0.0
    %2132 = vmatpush2.msra.mxu0 0.0
    %2133 = vmatprep.subr.mxu0 0.0
    %2134 = vmatpush2.msra.mxu0 0.0
    %2135 = vmatprep.subr.mxu0 0.0
    %2136 = vmatpush2.msra.mxu0 0.0
    %2137 = vmatprep.subr.mxu0 0.0
    %2138 = vmatpush2.msra.mxu0 0.0
    %2139 = vmatprep.subr.mxu0 0.0
    %2140 = vmatpush2.msra.mxu0 0.0
    %2141 = vmatprep.subr.mxu0 0.0
    %2142 = vmatpush2.msra.mxu0 0.0
    %2143 = vmatprep.subr.mxu0 0.0
    %2144 = vmatpush2.msra.mxu0 0.0
    %2145 = vmatprep.mubr.f32.mxu0 0.0
    %2146 = vmatmul.mubr.f32.gmra.mxu0 %v2079
    %v2147 = vpop.f32.mrf.mxu0
    %v2148 = vadd.f32 0.0, %v2147
    %v2149 = vpop.f32.mrf.mxu0
    %2150 = vdwg.mxu0
    %v2152 = vsel %vm118, %v2148, 0
    %2154 = vmatprep.subr.mxu0 0.0
    %2155 = vmatpush1.msra.mxu0 0.0
    %2156 = vmatprep.subr.mxu0 0.0
    %2157 = vmatpush1.msra.mxu0 0.0
    %2158 = vmatprep.subr.mxu0 0.0
    %2159 = vmatpush1.msra.mxu0 0.0
    %2160 = vmatprep.subr.mxu0 0.0
    %2161 = vmatpush1.msra.mxu0 0.0
    %2162 = vmatprep.subr.mxu0 0.0
    %2163 = vmatpush1.msra.mxu0 0.0
    %2164 = vmatprep.subr.mxu0 0.0
    %2165 = vmatpush1.msra.mxu0 0.0
    %2166 = vmatprep.subr.mxu0 0.0
    %2167 = vmatpush1.msra.mxu0 0.0
    %2168 = vmatprep.subr.mxu0 0.0
    %2169 = vmatpush1.msra.mxu0 0.0
    %2170 = vmatprep.subr.mxu0 0.0
    %2171 = vmatpush1.msra.mxu0 0.0
    %2172 = vmatprep.subr.mxu0 0.0
    %2173 = vmatpush1.msra.mxu0 0.0
    %2174 = vmatprep.subr.mxu0 0.0
    %2175 = vmatpush1.msra.mxu0 0.0
    %2176 = vmatprep.subr.mxu0 0.0
    %2177 = vmatpush1.msra.mxu0 0.0
    %2178 = vmatprep.subr.mxu0 0.0
    %2179 = vmatpush1.msra.mxu0 0.0
    %2180 = vmatprep.subr.mxu0 0.0
    %2181 = vmatpush1.msra.mxu0 0.0
    %2182 = vmatprep.subr.mxu0 0.0
    %2183 = vmatpush1.msra.mxu0 %v1655
    %2184 = vmatprep.subr.mxu0 0.0
    %2185 = vmatpush1.msra.mxu0 %v1654
    %2186 = vmatprep.subr.mxu0 0.0
    %2187 = vmatpush2.msra.mxu0 0.0
    %2188 = vmatprep.subr.mxu0 0.0
    %2189 = vmatpush2.msra.mxu0 0.0
    %2190 = vmatprep.subr.mxu0 0.0
    %2191 = vmatpush2.msra.mxu0 0.0
    %2192 = vmatprep.subr.mxu0 0.0
    %2193 = vmatpush2.msra.mxu0 0.0
    %2194 = vmatprep.subr.mxu0 0.0
    %2195 = vmatpush2.msra.mxu0 0.0
    %2196 = vmatprep.subr.mxu0 0.0
    %2197 = vmatpush2.msra.mxu0 0.0
    %2198 = vmatprep.subr.mxu0 0.0
    %2199 = vmatpush2.msra.mxu0 0.0
    %2200 = vmatprep.subr.mxu0 0.0
    %2201 = vmatpush2.msra.mxu0 0.0
    %2202 = vmatprep.subr.mxu0 0.0
    %2203 = vmatpush2.msra.mxu0 0.0
    %2204 = vmatprep.subr.mxu0 0.0
    %2205 = vmatpush2.msra.mxu0 0.0
    %2206 = vmatprep.subr.mxu0 0.0
    %2207 = vmatpush2.msra.mxu0 0.0
    %2208 = vmatprep.subr.mxu0 0.0
    %2209 = vmatpush2.msra.mxu0 0.0
    %2210 = vmatprep.subr.mxu0 0.0
    %2211 = vmatpush2.msra.mxu0 0.0
    %2212 = vmatprep.subr.mxu0 0.0
    %2213 = vmatpush2.msra.mxu0 0.0
    %2214 = vmatprep.subr.mxu0 0.0
    %2215 = vmatpush2.msra.mxu0 0.0
    %2216 = vmatprep.subr.mxu0 0.0
    %2217 = vmatpush2.msra.mxu0 0.0
    %2218 = vmatprep.mubr.f32.mxu0 0.0
    %2219 = vmatmul.mubr.f32.gmra.mxu0 %v2152
    %v2220 = vpop.f32.mrf.mxu0
    %v2221 = vadd.f32 0.0, %v2220
    %v2222 = vpop.f32.mrf.mxu0
    %2223 = vdwg.mxu0
    %v2225 = vsel %vm118, %v1982, 0
    %2227 = vmatprep.subr.mxu0 0.0
    %2228 = vmatpush1.msra.mxu0 0.0
    %2229 = vmatprep.subr.mxu0 0.0
    %2230 = vmatpush1.msra.mxu0 0.0
    %2231 = vmatprep.subr.mxu0 0.0
    %2232 = vmatpush1.msra.mxu0 0.0
    %2233 = vmatprep.subr.mxu0 0.0
    %2234 = vmatpush1.msra.mxu0 0.0
    %2235 = vmatprep.subr.mxu0 0.0
    %2236 = vmatpush1.msra.mxu0 0.0
    %2237 = vmatprep.subr.mxu0 0.0
    %2238 = vmatpush1.msra.mxu0 0.0
    %2239 = vmatprep.subr.mxu0 0.0
    %2240 = vmatpush1.msra.mxu0 0.0
    %2241 = vmatprep.subr.mxu0 0.0
    %2242 = vmatpush1.msra.mxu0 0.0
    %2243 = vmatprep.subr.mxu0 0.0
    %2244 = vmatpush1.msra.mxu0 0.0
    %2245 = vmatprep.subr.mxu0 0.0
    %2246 = vmatpush1.msra.mxu0 0.0
    %2247 = vmatprep.subr.mxu0 0.0
    %2248 = vmatpush1.msra.mxu0 0.0
    %2249 = vmatprep.subr.mxu0 0.0
    %2250 = vmatpush1.msra.mxu0 0.0
    %2251 = vmatprep.subr.mxu0 0.0
    %2252 = vmatpush1.msra.mxu0 0.0
    %2253 = vmatprep.subr.mxu0 0.0
    %2254 = vmatpush1.msra.mxu0 0.0
    %2255 = vmatprep.subr.mxu0 0.0
    %2256 = vmatpush1.msra.mxu0 %v1653
    %2257 = vmatprep.subr.mxu0 0.0
    %2258 = vmatpush1.msra.mxu0 %v1652
    %2259 = vmatprep.subr.mxu0 0.0
    %2260 = vmatpush2.msra.mxu0 0.0
    %2261 = vmatprep.subr.mxu0 0.0
    %2262 = vmatpush2.msra.mxu0 0.0
    %2263 = vmatprep.subr.mxu0 0.0
    %2264 = vmatpush2.msra.mxu0 0.0
    %2265 = vmatprep.subr.mxu0 0.0
    %2266 = vmatpush2.msra.mxu0 0.0
    %2267 = vmatprep.subr.mxu0 0.0
    %2268 = vmatpush2.msra.mxu0 0.0
    %2269 = vmatprep.subr.mxu0 0.0
    %2270 = vmatpush2.msra.mxu0 0.0
    %2271 = vmatprep.subr.mxu0 0.0
    %2272 = vmatpush2.msra.mxu0 0.0
    %2273 = vmatprep.subr.mxu0 0.0
    %2274 = vmatpush2.msra.mxu0 0.0
    %2275 = vmatprep.subr.mxu0 0.0
    %2276 = vmatpush2.msra.mxu0 0.0
    %2277 = vmatprep.subr.mxu0 0.0
    %2278 = vmatpush2.msra.mxu0 0.0
    %2279 = vmatprep.subr.mxu0 0.0
    %2280 = vmatpush2.msra.mxu0 0.0
    %2281 = vmatprep.subr.mxu0 0.0
    %2282 = vmatpush2.msra.mxu0 0.0
    %2283 = vmatprep.subr.mxu0 0.0
    %2284 = vmatpush2.msra.mxu0 0.0
    %2285 = vmatprep.subr.mxu0 0.0
    %2286 = vmatpush2.msra.mxu0 0.0
    %2287 = vmatprep.subr.mxu0 0.0
    %2288 = vmatpush2.msra.mxu0 0.0
    %2289 = vmatprep.subr.mxu0 0.0
    %2290 = vmatpush2.msra.mxu0 0.0
    %2291 = vmatprep.mubr.f32.mxu0 0.0
    %2292 = vmatmul.mubr.f32.gmra.mxu0 %v2225
    %v2293 = vpop.f32.mrf.mxu0
    %v2294 = vadd.f32 %v2221, %v2293
    %v2295 = vpop.f32.mrf.mxu0
    %2296 = vdwg.mxu0
    %v2297 = vlaneseq
    %v2298 = vshrl.u32 %v2297, 7
    %v2299 = vsub.s32 3, %v2298
    %v2300 = vrot.slane %v1667, %v2299
    %v2301 = vadd.f32 %v2294, %v2300
    %2303 = vrot.lane.b32.xlu0 %v1807, 96
    %v2304 = vpop.permute.xlu0 %2303
    %v2306 = vsel %vm118, %v1797, 0
    %v2308 = vsel %vm118, %v2304, 0
    %2310 = vmatprep.subr.mxu0 0.0
    %2311 = vmatpush1.xpose.msra.mxu0 0.0
    %2312 = vmatprep.subr.mxu0 0.0
    %2313 = vmatpush1.xpose.msra.mxu0 0.0
    %2314 = vmatprep.subr.mxu0 0.0
    %2315 = vmatpush1.xpose.msra.mxu0 0.0
    %2316 = vmatprep.subr.mxu0 0.0
    %2317 = vmatpush1.xpose.msra.mxu0 0.0
    %2318 = vmatprep.subr.mxu0 0.0
    %2319 = vmatpush1.xpose.msra.mxu0 0.0
    %2320 = vmatprep.subr.mxu0 0.0
    %2321 = vmatpush1.xpose.msra.mxu0 0.0
    %2322 = vmatprep.subr.mxu0 0.0
    %2323 = vmatpush1.xpose.msra.mxu0 0.0
    %2324 = vmatprep.subr.mxu0 0.0
    %2325 = vmatpush1.xpose.msra.mxu0 0.0
    %2326 = vmatprep.subr.mxu0 0.0
    %2327 = vmatpush1.xpose.msra.mxu0 0.0
    %2328 = vmatprep.subr.mxu0 0.0
    %2329 = vmatpush1.xpose.msra.mxu0 0.0
    %2330 = vmatprep.subr.mxu0 0.0
    %2331 = vmatpush1.xpose.msra.mxu0 0.0
    %2332 = vmatprep.subr.mxu0 0.0
    %2333 = vmatpush1.xpose.msra.mxu0 0.0
    %2334 = vmatprep.subr.mxu0 0.0
    %2335 = vmatpush1.xpose.msra.mxu0 0.0
    %2336 = vmatprep.subr.mxu0 0.0
    %2337 = vmatpush1.xpose.msra.mxu0 0.0
    %2338 = vmatprep.subr.mxu0 0.0
    %2339 = vmatpush1.xpose.msra.mxu0 0.0
    %2340 = vmatprep.subr.mxu0 0.0
    %2341 = vmatpush1.xpose.msra.mxu0 %v2308
    %2342 = vmatprep.subr.mxu0 0.0
    %2343 = vmatpush2.xpose.msra.mxu0 0.0
    %2344 = vmatprep.subr.mxu0 0.0
    %2345 = vmatpush2.xpose.msra.mxu0 0.0
    %2346 = vmatprep.subr.mxu0 0.0
    %2347 = vmatpush2.xpose.msra.mxu0 0.0
    %2348 = vmatprep.subr.mxu0 0.0
    %2349 = vmatpush2.xpose.msra.mxu0 0.0
    %2350 = vmatprep.subr.mxu0 0.0
    %2351 = vmatpush2.xpose.msra.mxu0 0.0
    %2352 = vmatprep.subr.mxu0 0.0
    %2353 = vmatpush2.xpose.msra.mxu0 0.0
    %2354 = vmatprep.subr.mxu0 0.0
    %2355 = vmatpush2.xpose.msra.mxu0 0.0
    %2356 = vmatprep.subr.mxu0 0.0
    %2357 = vmatpush2.xpose.msra.mxu0 0.0
    %2358 = vmatprep.subr.mxu0 0.0
    %2359 = vmatpush2.xpose.msra.mxu0 0.0
    %2360 = vmatprep.subr.mxu0 0.0
    %2361 = vmatpush2.xpose.msra.mxu0 0.0
    %2362 = vmatprep.subr.mxu0 0.0
    %2363 = vmatpush2.xpose.msra.mxu0 0.0
    %2364 = vmatprep.subr.mxu0 0.0
    %2365 = vmatpush2.xpose.msra.mxu0 0.0
    %2366 = vmatprep.subr.mxu0 0.0
    %2367 = vmatpush2.xpose.msra.mxu0 0.0
    %2368 = vmatprep.subr.mxu0 0.0
    %2369 = vmatpush2.xpose.msra.mxu0 0.0
    %2370 = vmatprep.subr.mxu0 0.0
    %2371 = vmatpush2.xpose.msra.mxu0 0.0
    %2372 = vmatprep.subr.mxu0 0.0
    %2373 = vmatpush2.xpose.msra.mxu0 0.0
    %2374 = vmatprep.mubr.f32.mxu0 0.0
    %2375 = vmatmul.mubr.f32.gmra.mxu0 %v2306
    %v2376 = vpop.f32.mrf.mxu0
    %v2377 = vadd.f32 0.0, %v2376
    %v2378 = vpop.f32.mrf.mxu0
    %2379 = vdwg.mxu0
    %v2380 = vmul.f32 %v2377, 0.25
    %v2381 = vsel %vm450, %v2380, -inf
    %2382 = vmax.xlane.f32.xlu0 %v2381
    %v2383 = vpop.xlane.xlu0 %2382
    %v2384 = vsub.f32 %v2380, %v2383
    %v2385 = vmul.f32 %v2384, 1.442695
    %v2386 = vpow.pop %v2385
    %v2387 = vsel %vm450, %v2386, 0.0
    %2388 = vadd.xlane.f32.xlu0 %v2387
    %v2389 = vpop.xlane.xlu0 %2388
    %v2390 = vrcp.pop %v2389
    %v2391 = vmul.f32 %v2386, %v2390
    %2393 = vrot.lane.b32.xlu0 %v1817, 64
    %v2394 = vpop.permute.xlu0 %2393
    %v2397 = vsel %vm450, %v2391, 0
    %2399 = vmatprep.subr.mxu0 0.0
    %2400 = vmatpush1.msra.mxu0 0.0
    %2401 = vmatprep.subr.mxu0 0.0
    %2402 = vmatpush1.msra.mxu0 0.0
    %2403 = vmatprep.subr.mxu0 0.0
    %2404 = vmatpush1.msra.mxu0 0.0
    %2405 = vmatprep.subr.mxu0 0.0
    %2406 = vmatpush1.msra.mxu0 0.0
    %2407 = vmatprep.subr.mxu0 0.0
    %2408 = vmatpush1.msra.mxu0 0.0
    %2409 = vmatprep.subr.mxu0 0.0
    %2410 = vmatpush1.msra.mxu0 0.0
    %2411 = vmatprep.subr.mxu0 0.0
    %2412 = vmatpush1.msra.mxu0 0.0
    %2413 = vmatprep.subr.mxu0 0.0
    %2414 = vmatpush1.msra.mxu0 0.0
    %2415 = vmatprep.subr.mxu0 0.0
    %2416 = vmatpush1.msra.mxu0 0.0
    %2417 = vmatprep.subr.mxu0 0.0
    %2418 = vmatpush1.msra.mxu0 0.0
    %2419 = vmatprep.subr.mxu0 0.0
    %2420 = vmatpush1.msra.mxu0 0.0
    %2421 = vmatprep.subr.mxu0 0.0
    %2422 = vmatpush1.msra.mxu0 0.0
    %2423 = vmatprep.subr.mxu0 0.0
    %2424 = vmatpush1.msra.mxu0 0.0
    %2425 = vmatprep.subr.mxu0 0.0
    %2426 = vmatpush1.msra.mxu0 0.0
    %2427 = vmatprep.subr.mxu0 0.0
    %2428 = vmatpush1.msra.mxu0 0.0
    %2429 = vmatprep.subr.mxu0 0.0
    %2430 = vmatpush1.msra.mxu0 %v2394
    %2431 = vmatprep.subr.mxu0 0.0
    %2432 = vmatpush2.msra.mxu0 0.0
    %2433 = vmatprep.subr.mxu0 0.0
    %2434 = vmatpush2.msra.mxu0 0.0
    %2435 = vmatprep.subr.mxu0 0.0
    %2436 = vmatpush2.msra.mxu0 0.0
    %2437 = vmatprep.subr.mxu0 0.0
    %2438 = vmatpush2.msra.mxu0 0.0
    %2439 = vmatprep.subr.mxu0 0.0
    %2440 = vmatpush2.msra.mxu0 0.0
    %2441 = vmatprep.subr.mxu0 0.0
    %2442 = vmatpush2.msra.mxu0 0.0
    %2443 = vmatprep.subr.mxu0 0.0
    %2444 = vmatpush2.msra.mxu0 0.0
    %2445 = vmatprep.subr.mxu0 0.0
    %2446 = vmatpush2.msra.mxu0 0.0
    %2447 = vmatprep.subr.mxu0 0.0
    %2448 = vmatpush2.msra.mxu0 0.0
    %2449 = vmatprep.subr.mxu0 0.0
    %2450 = vmatpush2.msra.mxu0 0.0
    %2451 = vmatprep.subr.mxu0 0.0
    %2452 = vmatpush2.msra.mxu0 0.0
    %2453 = vmatprep.subr.mxu0 0.0
    %2454 = vmatpush2.msra.mxu0 0.0
    %2455 = vmatprep.subr.mxu0 0.0
    %2456 = vmatpush2.msra.mxu0 0.0
    %2457 = vmatprep.subr.mxu0 0.0
    %2458 = vmatpush2.msra.mxu0 0.0
    %2459 = vmatprep.subr.mxu0 0.0
    %2460 = vmatpush2.msra.mxu0 0.0
    %2461 = vmatprep.subr.mxu0 0.0
    %2462 = vmatpush2.msra.mxu0 0.0
    %2463 = vmatprep.mubr.f32.mxu0 0.0
    %2464 = vmatmul.mubr.f32.gmra.mxu0 %v2397
    %v2465 = vpop.f32.mrf.mxu0
    %v2466 = vadd.f32 0.0, %v2465
    %v2467 = vpop.f32.mrf.mxu0
    %2468 = vdwg.mxu0
    %2469 = vrot.lane.b32.xlu0 %v1797, 112
    %v2470 = vpop.permute.xlu0 %2469
    %2471 = vrot.lane.b32.xlu0 %v1807, 80
    %v2472 = vpop.permute.xlu0 %2471
    %v2473 = vsel %vm118, %v2470, 0
    %v2475 = vsel %vm118, %v2472, 0
    %2477 = vmatprep.subr.mxu0 0.0
    %2478 = vmatpush1.xpose.msra.mxu0 0.0
    %2479 = vmatprep.subr.mxu0 0.0
    %2480 = vmatpush1.xpose.msra.mxu0 0.0
    %2481 = vmatprep.subr.mxu0 0.0
    %2482 = vmatpush1.xpose.msra.mxu0 0.0
    %2483 = vmatprep.subr.mxu0 0.0
    %2484 = vmatpush1.xpose.msra.mxu0 0.0
    %2485 = vmatprep.subr.mxu0 0.0
    %2486 = vmatpush1.xpose.msra.mxu0 0.0
    %2487 = vmatprep.subr.mxu0 0.0
    %2488 = vmatpush1.xpose.msra.mxu0 0.0
    %2489 = vmatprep.subr.mxu0 0.0
    %2490 = vmatpush1.xpose.msra.mxu0 0.0
    %2491 = vmatprep.subr.mxu0 0.0
    %2492 = vmatpush1.xpose.msra.mxu0 0.0
    %2493 = vmatprep.subr.mxu0 0.0
    %2494 = vmatpush1.xpose.msra.mxu0 0.0
    %2495 = vmatprep.subr.mxu0 0.0
    %2496 = vmatpush1.xpose.msra.mxu0 0.0
    %2497 = vmatprep.subr.mxu0 0.0
    %2498 = vmatpush1.xpose.msra.mxu0 0.0
    %2499 = vmatprep.subr.mxu0 0.0
    %2500 = vmatpush1.xpose.msra.mxu0 0.0
    %2501 = vmatprep.subr.mxu0 0.0
    %2502 = vmatpush1.xpose.msra.mxu0 0.0
    %2503 = vmatprep.subr.mxu0 0.0
    %2504 = vmatpush1.xpose.msra.mxu0 0.0
    %2505 = vmatprep.subr.mxu0 0.0
    %2506 = vmatpush1.xpose.msra.mxu0 0.0
    %2507 = vmatprep.subr.mxu0 0.0
    %2508 = vmatpush1.xpose.msra.mxu0 %v2475
    %2509 = vmatprep.subr.mxu0 0.0
    %2510 = vmatpush2.xpose.msra.mxu0 0.0
    %2511 = vmatprep.subr.mxu0 0.0
    %2512 = vmatpush2.xpose.msra.mxu0 0.0
    %2513 = vmatprep.subr.mxu0 0.0
    %2514 = vmatpush2.xpose.msra.mxu0 0.0
    %2515 = vmatprep.subr.mxu0 0.0
    %2516 = vmatpush2.xpose.msra.mxu0 0.0
    %2517 = vmatprep.subr.mxu0 0.0
    %2518 = vmatpush2.xpose.msra.mxu0 0.0
    %2519 = vmatprep.subr.mxu0 0.0
    %2520 = vmatpush2.xpose.msra.mxu0 0.0
    %2521 = vmatprep.subr.mxu0 0.0
    %2522 = vmatpush2.xpose.msra.mxu0 0.0
    %2523 = vmatprep.subr.mxu0 0.0
    %2524 = vmatpush2.xpose.msra.mxu0 0.0
    %2525 = vmatprep.subr.mxu0 0.0
    %2526 = vmatpush2.xpose.msra.mxu0 0.0
    %2527 = vmatprep.subr.mxu0 0.0
    %2528 = vmatpush2.xpose.msra.mxu0 0.0
    %2529 = vmatprep.subr.mxu0 0.0
    %2530 = vmatpush2.xpose.msra.mxu0 0.0
    %2531 = vmatprep.subr.mxu0 0.0
    %2532 = vmatpush2.xpose.msra.mxu0 0.0
    %2533 = vmatprep.subr.mxu0 0.0
    %2534 = vmatpush2.xpose.msra.mxu0 0.0
    %2535 = vmatprep.subr.mxu0 0.0
    %2536 = vmatpush2.xpose.msra.mxu0 0.0
    %2537 = vmatprep.subr.mxu0 0.0
    %2538 = vmatpush2.xpose.msra.mxu0 0.0
    %2539 = vmatprep.subr.mxu0 0.0
    %2540 = vmatpush2.xpose.msra.mxu0 0.0
    %2541 = vmatprep.mubr.f32.mxu0 0.0
    %2542 = vmatmul.mubr.f32.gmra.mxu0 %v2473
    %v2543 = vpop.f32.mrf.mxu0
    %v2544 = vadd.f32 0.0, %v2543
    %v2545 = vpop.f32.mrf.mxu0
    %2546 = vdwg.mxu0
    %v2547 = vmul.f32 %v2544, 0.25
    %v2548 = vsel %vm450, %v2547, -inf
    %2549 = vmax.xlane.f32.xlu0 %v2548
    %v2550 = vpop.xlane.xlu0 %2549
    %v2551 = vsub.f32 %v2547, %v2550
    %v2552 = vmul.f32 %v2551, 1.442695
    %v2553 = vpow.pop %v2552
    %v2554 = vsel %vm450, %v2553, 0.0
    %2555 = vadd.xlane.f32.xlu0 %v2554
    %v2556 = vpop.xlane.xlu0 %2555
    %v2557 = vrcp.pop %v2556
    %v2558 = vmul.f32 %v2553, %v2557
    %2559 = vrot.lane.b32.xlu0 %v1817, 48
    %v2560 = vpop.permute.xlu0 %2559
    %v2563 = vsel %vm450, %v2558, 0
    %2565 = vmatprep.subr.mxu0 0.0
    %2566 = vmatpush1.msra.mxu0 0.0
    %2567 = vmatprep.subr.mxu0 0.0
    %2568 = vmatpush1.msra.mxu0 0.0
    %2569 = vmatprep.subr.mxu0 0.0
    %2570 = vmatpush1.msra.mxu0 0.0
    %2571 = vmatprep.subr.mxu0 0.0
    %2572 = vmatpush1.msra.mxu0 0.0
    %2573 = vmatprep.subr.mxu0 0.0
    %2574 = vmatpush1.msra.mxu0 0.0
    %2575 = vmatprep.subr.mxu0 0.0
    %2576 = vmatpush1.msra.mxu0 0.0
    %2577 = vmatprep.subr.mxu0 0.0
    %2578 = vmatpush1.msra.mxu0 0.0
    %2579 = vmatprep.subr.mxu0 0.0
    %2580 = vmatpush1.msra.mxu0 0.0
    %2581 = vmatprep.subr.mxu0 0.0
    %2582 = vmatpush1.msra.mxu0 0.0
    %2583 = vmatprep.subr.mxu0 0.0
    %2584 = vmatpush1.msra.mxu0 0.0
    %2585 = vmatprep.subr.mxu0 0.0
    %2586 = vmatpush1.msra.mxu0 0.0
    %2587 = vmatprep.subr.mxu0 0.0
    %2588 = vmatpush1.msra.mxu0 0.0
    %2589 = vmatprep.subr.mxu0 0.0
    %2590 = vmatpush1.msra.mxu0 0.0
    %2591 = vmatprep.subr.mxu0 0.0
    %2592 = vmatpush1.msra.mxu0 0.0
    %2593 = vmatprep.subr.mxu0 0.0
    %2594 = vmatpush1.msra.mxu0 0.0
    %2595 = vmatprep.subr.mxu0 0.0
    %2596 = vmatpush1.msra.mxu0 %v2560
    %2597 = vmatprep.subr.mxu0 0.0
    %2598 = vmatpush2.msra.mxu0 0.0
    %2599 = vmatprep.subr.mxu0 0.0
    %2600 = vmatpush2.msra.mxu0 0.0
    %2601 = vmatprep.subr.mxu0 0.0
    %2602 = vmatpush2.msra.mxu0 0.0
    %2603 = vmatprep.subr.mxu0 0.0
    %2604 = vmatpush2.msra.mxu0 0.0
    %2605 = vmatprep.subr.mxu0 0.0
    %2606 = vmatpush2.msra.mxu0 0.0
    %2607 = vmatprep.subr.mxu0 0.0
    %2608 = vmatpush2.msra.mxu0 0.0
    %2609 = vmatprep.subr.mxu0 0.0
    %2610 = vmatpush2.msra.mxu0 0.0
    %2611 = vmatprep.subr.mxu0 0.0
    %2612 = vmatpush2.msra.mxu0 0.0
    %2613 = vmatprep.subr.mxu0 0.0
    %2614 = vmatpush2.msra.mxu0 0.0
    %2615 = vmatprep.subr.mxu0 0.0
    %2616 = vmatpush2.msra.mxu0 0.0
    %2617 = vmatprep.subr.mxu0 0.0
    %2618 = vmatpush2.msra.mxu0 0.0
    %2619 = vmatprep.subr.mxu0 0.0
    %2620 = vmatpush2.msra.mxu0 0.0
    %2621 = vmatprep.subr.mxu0 0.0
    %2622 = vmatpush2.msra.mxu0 0.0
    %2623 = vmatprep.subr.mxu0 0.0
    %2624 = vmatpush2.msra.mxu0 0.0
    %2625 = vmatprep.subr.mxu0 0.0
    %2626 = vmatpush2.msra.mxu0 0.0
    %2627 = vmatprep.subr.mxu0 0.0
    %2628 = vmatpush2.msra.mxu0 0.0
    %2629 = vmatprep.mubr.f32.mxu0 0.0
    %2630 = vmatmul.mubr.f32.gmra.mxu0 %v2563
    %v2631 = vpop.f32.mrf.mxu0
    %v2632 = vadd.f32 0.0, %v2631
    %v2633 = vpop.f32.mrf.mxu0
    %2634 = vdwg.mxu0
    %v2636 = vsel %vm118, %v2632, 0
    %2638 = vmatprep.subr.mxu0 0.0
    %2639 = vmatpush1.msra.mxu0 0.0
    %2640 = vmatprep.subr.mxu0 0.0
    %2641 = vmatpush1.msra.mxu0 0.0
    %2642 = vmatprep.subr.mxu0 0.0
    %2643 = vmatpush1.msra.mxu0 0.0
    %2644 = vmatprep.subr.mxu0 0.0
    %2645 = vmatpush1.msra.mxu0 0.0
    %2646 = vmatprep.subr.mxu0 0.0
    %2647 = vmatpush1.msra.mxu0 0.0
    %2648 = vmatprep.subr.mxu0 0.0
    %2649 = vmatpush1.msra.mxu0 0.0
    %2650 = vmatprep.subr.mxu0 0.0
    %2651 = vmatpush1.msra.mxu0 0.0
    %2652 = vmatprep.subr.mxu0 0.0
    %2653 = vmatpush1.msra.mxu0 0.0
    %2654 = vmatprep.subr.mxu0 0.0
    %2655 = vmatpush1.msra.mxu0 0.0
    %2656 = vmatprep.subr.mxu0 0.0
    %2657 = vmatpush1.msra.mxu0 0.0
    %2658 = vmatprep.subr.mxu0 0.0
    %2659 = vmatpush1.msra.mxu0 0.0
    %2660 = vmatprep.subr.mxu0 0.0
    %2661 = vmatpush1.msra.mxu0 0.0
    %2662 = vmatprep.subr.mxu0 0.0
    %2663 = vmatpush1.msra.mxu0 0.0
    %2664 = vmatprep.subr.mxu0 0.0
    %2665 = vmatpush1.msra.mxu0 0.0
    %2666 = vmatprep.subr.mxu0 0.0
    %2667 = vmatpush1.msra.mxu0 %v1655
    %2668 = vmatprep.subr.mxu0 0.0
    %2669 = vmatpush1.msra.mxu0 %v1654
    %2670 = vmatprep.subr.mxu0 0.0
    %2671 = vmatpush2.msra.mxu0 0.0
    %2672 = vmatprep.subr.mxu0 0.0
    %2673 = vmatpush2.msra.mxu0 0.0
    %2674 = vmatprep.subr.mxu0 0.0
    %2675 = vmatpush2.msra.mxu0 0.0
    %2676 = vmatprep.subr.mxu0 0.0
    %2677 = vmatpush2.msra.mxu0 0.0
    %2678 = vmatprep.subr.mxu0 0.0
    %2679 = vmatpush2.msra.mxu0 0.0
    %2680 = vmatprep.subr.mxu0 0.0
    %2681 = vmatpush2.msra.mxu0 0.0
    %2682 = vmatprep.subr.mxu0 0.0
    %2683 = vmatpush2.msra.mxu0 0.0
    %2684 = vmatprep.subr.mxu0 0.0
    %2685 = vmatpush2.msra.mxu0 0.0
    %2686 = vmatprep.subr.mxu0 0.0
    %2687 = vmatpush2.msra.mxu0 0.0
    %2688 = vmatprep.subr.mxu0 0.0
    %2689 = vmatpush2.msra.mxu0 0.0
    %2690 = vmatprep.subr.mxu0 0.0
    %2691 = vmatpush2.msra.mxu0 0.0
    %2692 = vmatprep.subr.mxu0 0.0
    %2693 = vmatpush2.msra.mxu0 0.0
    %2694 = vmatprep.subr.mxu0 0.0
    %2695 = vmatpush2.msra.mxu0 0.0
    %2696 = vmatprep.subr.mxu0 0.0
    %2697 = vmatpush2.msra.mxu0 0.0
    %2698 = vmatprep.subr.mxu0 0.0
    %2699 = vmatpush2.msra.mxu0 0.0
    %2700 = vmatprep.subr.mxu0 0.0
    %2701 = vmatpush2.msra.mxu0 0.0
    %2702 = vmatprep.mubr.f32.mxu0 0.0
    %2703 = vmatmul.mubr.f32.gmra.mxu0 %v2636
    %v2704 = vpop.f32.mrf.mxu0
    %v2705 = vadd.f32 0.0, %v2704
    %v2706 = vpop.f32.mrf.mxu0
    %2707 = vdwg.mxu0
    %v2709 = vsel %vm118, %v2466, 0
    %2711 = vmatprep.subr.mxu0 0.0
    %2712 = vmatpush1.msra.mxu0 0.0
    %2713 = vmatprep.subr.mxu0 0.0
    %2714 = vmatpush1.msra.mxu0 0.0
    %2715 = vmatprep.subr.mxu0 0.0
    %2716 = vmatpush1.msra.mxu0 0.0
    %2717 = vmatprep.subr.mxu0 0.0
    %2718 = vmatpush1.msra.mxu0 0.0
    %2719 = vmatprep.subr.mxu0 0.0
    %2720 = vmatpush1.msra.mxu0 0.0
    %2721 = vmatprep.subr.mxu0 0.0
    %2722 = vmatpush1.msra.mxu0 0.0
    %2723 = vmatprep.subr.mxu0 0.0
    %2724 = vmatpush1.msra.mxu0 0.0
    %2725 = vmatprep.subr.mxu0 0.0
    %2726 = vmatpush1.msra.mxu0 0.0
    %2727 = vmatprep.subr.mxu0 0.0
    %2728 = vmatpush1.msra.mxu0 0.0
    %2729 = vmatprep.subr.mxu0 0.0
    %2730 = vmatpush1.msra.mxu0 0.0
    %2731 = vmatprep.subr.mxu0 0.0
    %2732 = vmatpush1.msra.mxu0 0.0
    %2733 = vmatprep.subr.mxu0 0.0
    %2734 = vmatpush1.msra.mxu0 0.0
    %2735 = vmatprep.subr.mxu0 0.0
    %2736 = vmatpush1.msra.mxu0 0.0
    %2737 = vmatprep.subr.mxu0 0.0
    %2738 = vmatpush1.msra.mxu0 0.0
    %2739 = vmatprep.subr.mxu0 0.0
    %2740 = vmatpush1.msra.mxu0 %v1653
    %2741 = vmatprep.subr.mxu0 0.0
    %2742 = vmatpush1.msra.mxu0 %v1652
    %2743 = vmatprep.subr.mxu0 0.0
    %2744 = vmatpush2.msra.mxu0 0.0
    %2745 = vmatprep.subr.mxu0 0.0
    %2746 = vmatpush2.msra.mxu0 0.0
    %2747 = vmatprep.subr.mxu0 0.0
    %2748 = vmatpush2.msra.mxu0 0.0
    %2749 = vmatprep.subr.mxu0 0.0
    %2750 = vmatpush2.msra.mxu0 0.0
    %2751 = vmatprep.subr.mxu0 0.0
    %2752 = vmatpush2.msra.mxu0 0.0
    %2753 = vmatprep.subr.mxu0 0.0
    %2754 = vmatpush2.msra.mxu0 0.0
    %2755 = vmatprep.subr.mxu0 0.0
    %2756 = vmatpush2.msra.mxu0 0.0
    %2757 = vmatprep.subr.mxu0 0.0
    %2758 = vmatpush2.msra.mxu0 0.0
    %2759 = vmatprep.subr.mxu0 0.0
    %2760 = vmatpush2.msra.mxu0 0.0
    %2761 = vmatprep.subr.mxu0 0.0
    %2762 = vmatpush2.msra.mxu0 0.0
    %2763 = vmatprep.subr.mxu0 0.0
    %2764 = vmatpush2.msra.mxu0 0.0
    %2765 = vmatprep.subr.mxu0 0.0
    %2766 = vmatpush2.msra.mxu0 0.0
    %2767 = vmatprep.subr.mxu0 0.0
    %2768 = vmatpush2.msra.mxu0 0.0
    %2769 = vmatprep.subr.mxu0 0.0
    %2770 = vmatpush2.msra.mxu0 0.0
    %2771 = vmatprep.subr.mxu0 0.0
    %2772 = vmatpush2.msra.mxu0 0.0
    %2773 = vmatprep.subr.mxu0 0.0
    %2774 = vmatpush2.msra.mxu0 0.0
    %2775 = vmatprep.mubr.f32.mxu0 0.0
    %2776 = vmatmul.mubr.f32.gmra.mxu0 %v2709
    %v2777 = vpop.f32.mrf.mxu0
    %v2778 = vadd.f32 %v2705, %v2777
    %v2779 = vpop.f32.mrf.mxu0
    %2780 = vdwg.mxu0
    %v2781 = vadd.f32 %v2778, %v2300
    %v2782 = vadd.f32 %v1638, %v2301
    %v2783 = vadd.f32 %v1643, %v2781
    %v2784 = vsel %vm220, %v2782, 0.0
    %2785 = vadd.xlane.f32.xlu0 %v2784
    %v2786 = vpop.xlane.xlu0 %2785
    %v2787 = vsel %vm220, %v2783, 0.0
    %2788 = vadd.xlane.f32.xlu0 %v2787
    %v2789 = vpop.xlane.xlu0 %2788
    %v2790 = vmul.f32 %v2786, %v227
    %v2791 = vmul.f32 %v2789, %v227
    %v2792 = vmul.f32 %v2782, %v2782
    %v2793 = vmul.f32 %v2783, %v2783
    %v2794 = vsel %vm220, %v2792, 0.0
    %2795 = vadd.xlane.f32.xlu0 %v2794
    %v2796 = vpop.xlane.xlu0 %2795
    %v2797 = vsel %vm220, %v2793, 0.0
    %2798 = vadd.xlane.f32.xlu0 %v2797
    %v2799 = vpop.xlane.xlu0 %2798
    %v2800 = vmul.f32 %v2796, %v227
    %v2801 = vmul.f32 %v2799, %v227
    %v2802 = vmul.f32 %v2790, %v2790
    %v2803 = vmul.f32 %v2791, %v2791
    %v2804 = vsub.f32 %v2800, %v2802
    %v2805 = vsub.f32 %v2801, %v2803
    %v2806 = vsub.f32 %v2782, %v2790
    %v2807 = vsub.f32 %v2783, %v2791
    %v2808 = vadd.f32 %v2804, 1e-05
    %v2809 = vadd.f32 %v2805, 1e-05
    %v2810 = vrsqrt.pop %v2808
    %v2811 = vrsqrt.pop %v2809
    %v2812 = vmul.f32 %v2806, %v2810
    %v2813 = vmul.f32 %v2807, %v2811
    %v2814 = vlaneseq
    %v2815 = vshrl.u32 %v2814, 7
    %v2816 = vsub.s32 6, %v2815
    %v2817 = vrot.slane %v1667, %v2816
    %v2818 = vmul.f32 %v2812, %v2817
    %v2819 = vmul.f32 %v2813, %v2817
    %v2820 = vlaneseq
    %v2821 = vshrl.u32 %v2820, 7
    %v2822 = vsub.s32 7, %v2821
    %v2823 = vrot.slane %v1667, %v2822
    %v2824 = vadd.f32 %v2818, %v2823
    %v2825 = vadd.f32 %v2819, %v2823
    %v2826 = vlaneseq
    %v2827 = vshrl.u32 %v2826, 7
    %v2828 = vsub.s32 0, %v2827
    %v2829 = vrot.slane %v1668, %v2828
    %v2831 = vsel %vm220, %v2824, 0
    %v2834 = vsel %vm220, %v2825, 0
    %2836 = vmatprep.subr.mxu0 0.0
    %2837 = vmatpush1.msra.mxu0 0.0
    %2838 = vmatprep.subr.mxu0 0.0
    %2839 = vmatpush1.msra.mxu0 0.0
    %2840 = vmatprep.subr.mxu0 0.0
    %2841 = vmatpush1.msra.mxu0 0.0
    %2842 = vmatprep.subr.mxu0 0.0
    %2843 = vmatpush1.msra.mxu0 0.0
    %2844 = vmatprep.subr.mxu0 0.0
    %2845 = vmatpush1.msra.mxu0 0.0
    %2846 = vmatprep.subr.mxu0 0.0
    %2847 = vmatpush1.msra.mxu0 0.0
    %2848 = vmatprep.subr.mxu0 0.0
    %2849 = vmatpush1.msra.mxu0 0.0
    %2850 = vmatprep.subr.mxu0 0.0
    %2851 = vmatpush1.msra.mxu0 0.0
    %2852 = vmatprep.subr.mxu0 0.0
    %2853 = vmatpush1.msra.mxu0 0.0
    %2854 = vmatprep.subr.mxu0 0.0
    %2855 = vmatpush1.msra.mxu0 0.0
    %2856 = vmatprep.subr.mxu0 0.0
    %2857 = vmatpush1.msra.mxu0 0.0
    %2858 = vmatprep.subr.mxu0 0.0
    %2859 = vmatpush1.msra.mxu0 0.0
    %2860 = vmatprep.subr.mxu0 0.0
    %2861 = vmatpush1.msra.mxu0 %v1660
    %2862 = vmatprep.subr.mxu0 0.0
    %2863 = vmatpush1.msra.mxu0 %v1659
    %2864 = vmatprep.subr.mxu0 0.0
    %2865 = vmatpush1.msra.mxu0 %v1658
    %2866 = vmatprep.subr.mxu0 0.0
    %2867 = vmatpush1.msra.mxu0 %v1657
    %2868 = vmatprep.subr.mxu0 0.0
    %2869 = vmatpush2.msra.mxu0 0.0
    %2870 = vmatprep.subr.mxu0 0.0
    %2871 = vmatpush2.msra.mxu0 0.0
    %2872 = vmatprep.subr.mxu0 0.0
    %2873 = vmatpush2.msra.mxu0 0.0
    %2874 = vmatprep.subr.mxu0 0.0
    %2875 = vmatpush2.msra.mxu0 0.0
    %2876 = vmatprep.subr.mxu0 0.0
    %2877 = vmatpush2.msra.mxu0 0.0
    %2878 = vmatprep.subr.mxu0 0.0
    %2879 = vmatpush2.msra.mxu0 0.0
    %2880 = vmatprep.subr.mxu0 0.0
    %2881 = vmatpush2.msra.mxu0 0.0
    %2882 = vmatprep.subr.mxu0 0.0
    %2883 = vmatpush2.msra.mxu0 0.0
    %2884 = vmatprep.subr.mxu0 0.0
    %2885 = vmatpush2.msra.mxu0 0.0
    %2886 = vmatprep.subr.mxu0 0.0
    %2887 = vmatpush2.msra.mxu0 0.0
    %2888 = vmatprep.subr.mxu0 0.0
    %2889 = vmatpush2.msra.mxu0 0.0
    %2890 = vmatprep.subr.mxu0 0.0
    %2891 = vmatpush2.msra.mxu0 0.0
    %2892 = vmatprep.subr.mxu0 0.0
    %2893 = vmatpush2.msra.mxu0 0.0
    %2894 = vmatprep.subr.mxu0 0.0
    %2895 = vmatpush2.msra.mxu0 0.0
    %2896 = vmatprep.subr.mxu0 0.0
    %2897 = vmatpush2.msra.mxu0 0.0
    %2898 = vmatprep.subr.mxu0 0.0
    %2899 = vmatpush2.msra.mxu0 0.0
    %2900 = vmatprep.mubr.f32.mxu0 0.0
    %2901 = vmatmul.mubr.f32.gmra.mxu0 %v2831
    %v2902 = vpop.f32.mrf.mxu0
    %v2903 = vadd.f32 %v2829, %v2902
    %v2904 = vpop.f32.mrf.mxu0
    %2905 = vmatprep.mubr.f32.mxu0 0.0
    %2906 = vmatmul.mubr.f32.gmra.mxu0 %v2834
    %v2907 = vpop.f32.mrf.mxu0
    %v2908 = vadd.f32 %v2829, %v2907
    %v2909 = vpop.f32.mrf.mxu0
    %2910 = vdwg.mxu0
    %v2911 = vmax.f32 %v2903, 0.0
    %v2912 = vmax.f32 %v2908, 0.0
    %v2913 = vlaneseq
    %v2914 = vshrl.u32 %v2913, 7
    %v2915 = vsub.s32 1, %v2914
    %v2916 = vrot.slane %v1668, %v2915
    %v2918 = vsel %vm220, %v2911, 0
    %v2921 = vsel %vm220, %v2912, 0
    %2923 = vmatprep.subr.mxu0 0.0
    %2924 = vmatpush1.msra.mxu0 0.0
    %2925 = vmatprep.subr.mxu0 0.0
    %2926 = vmatpush1.msra.mxu0 0.0
    %2927 = vmatprep.subr.mxu0 0.0
    %2928 = vmatpush1.msra.mxu0 0.0
    %2929 = vmatprep.subr.mxu0 0.0
    %2930 = vmatpush1.msra.mxu0 0.0
    %2931 = vmatprep.subr.mxu0 0.0
    %2932 = vmatpush1.msra.mxu0 0.0
    %2933 = vmatprep.subr.mxu0 0.0
    %2934 = vmatpush1.msra.mxu0 0.0
    %2935 = vmatprep.subr.mxu0 0.0
    %2936 = vmatpush1.msra.mxu0 0.0
    %2937 = vmatprep.subr.mxu0 0.0
    %2938 = vmatpush1.msra.mxu0 0.0
    %2939 = vmatprep.subr.mxu0 0.0
    %2940 = vmatpush1.msra.mxu0 0.0
    %2941 = vmatprep.subr.mxu0 0.0
    %2942 = vmatpush1.msra.mxu0 0.0
    %2943 = vmatprep.subr.mxu0 0.0
    %2944 = vmatpush1.msra.mxu0 0.0
    %2945 = vmatprep.subr.mxu0 0.0
    %2946 = vmatpush1.msra.mxu0 0.0
    %2947 = vmatprep.subr.mxu0 0.0
    %2948 = vmatpush1.msra.mxu0 %v1665
    %2949 = vmatprep.subr.mxu0 0.0
    %2950 = vmatpush1.msra.mxu0 %v1664
    %2951 = vmatprep.subr.mxu0 0.0
    %2952 = vmatpush1.msra.mxu0 %v1663
    %2953 = vmatprep.subr.mxu0 0.0
    %2954 = vmatpush1.msra.mxu0 %v1662
    %2955 = vmatprep.subr.mxu0 0.0
    %2956 = vmatpush2.msra.mxu0 0.0
    %2957 = vmatprep.subr.mxu0 0.0
    %2958 = vmatpush2.msra.mxu0 0.0
    %2959 = vmatprep.subr.mxu0 0.0
    %2960 = vmatpush2.msra.mxu0 0.0
    %2961 = vmatprep.subr.mxu0 0.0
    %2962 = vmatpush2.msra.mxu0 0.0
    %2963 = vmatprep.subr.mxu0 0.0
    %2964 = vmatpush2.msra.mxu0 0.0
    %2965 = vmatprep.subr.mxu0 0.0
    %2966 = vmatpush2.msra.mxu0 0.0
    %2967 = vmatprep.subr.mxu0 0.0
    %2968 = vmatpush2.msra.mxu0 0.0
    %2969 = vmatprep.subr.mxu0 0.0
    %2970 = vmatpush2.msra.mxu0 0.0
    %2971 = vmatprep.subr.mxu0 0.0
    %2972 = vmatpush2.msra.mxu0 0.0
    %2973 = vmatprep.subr.mxu0 0.0
    %2974 = vmatpush2.msra.mxu0 0.0
    %2975 = vmatprep.subr.mxu0 0.0
    %2976 = vmatpush2.msra.mxu0 0.0
    %2977 = vmatprep.subr.mxu0 0.0
    %2978 = vmatpush2.msra.mxu0 0.0
    %2979 = vmatprep.subr.mxu0 0.0
    %2980 = vmatpush2.msra.mxu0 0.0
    %2981 = vmatprep.subr.mxu0 0.0
    %2982 = vmatpush2.msra.mxu0 0.0
    %2983 = vmatprep.subr.mxu0 0.0
    %2984 = vmatpush2.msra.mxu0 0.0
    %2985 = vmatprep.subr.mxu0 0.0
    %2986 = vmatpush2.msra.mxu0 0.0
    %2987 = vmatprep.mubr.f32.mxu0 0.0
    %2988 = vmatmul.mubr.f32.gmra.mxu0 %v2918
    %v2989 = vpop.f32.mrf.mxu0
    %v2990 = vadd.f32 %v2916, %v2989
    %v2991 = vpop.f32.mrf.mxu0
    %2992 = vmatprep.mubr.f32.mxu0 0.0
    %2993 = vmatmul.mubr.f32.gmra.mxu0 %v2921
    %v2994 = vpop.f32.mrf.mxu0
    %v2995 = vadd.f32 %v2916, %v2994
    %v2996 = vpop.f32.mrf.mxu0
    %2997 = vdwg.mxu0
    %v2998 = vadd.f32 %v2782, %v2990
    %v2999 = vadd.f32 %v2783, %v2995
    %s3000 = scalar_lea.vmem [#allocation10], 32
    %v3001 = vld [vmem:[%s3000] sm:$0xff]
    %v3002 = vld [vmem:[%s3000 + $0x8] sm:$0xff]
    %v3003 = vld [vmem:[%s3000 + $0x10] sm:$0xff]
    %v3004 = vld [vmem:[%s3000 + $0x18] sm:$0xff]
    %s3005 = scalar_lea.vmem %s8, 1
    %v3006 = vld [vmem:[%s3005] sm:$0x1]
    %v3008 = vlaneseq
    %v3009 = vshrl.u32 %v3008, 7
    %v3010 = vsub.s32 0, %v3009
    %v3011 = vrot.slane %v3006, %v3010
    %v3014 = vsel %vm220, %v2998, 0
    %v3017 = vsel %vm220, %v2999, 0
    %3019 = vmatprep.subr.mxu0 0.0
    %3020 = vmatpush1.msra.mxu0 0.0
    %3021 = vmatprep.subr.mxu0 0.0
    %3022 = vmatpush1.msra.mxu0 0.0
    %3023 = vmatprep.subr.mxu0 0.0
    %3024 = vmatpush1.msra.mxu0 0.0
    %3025 = vmatprep.subr.mxu0 0.0
    %3026 = vmatpush1.msra.mxu0 0.0
    %3027 = vmatprep.subr.mxu0 0.0
    %3028 = vmatpush1.msra.mxu0 0.0
    %3029 = vmatprep.subr.mxu0 0.0
    %3030 = vmatpush1.msra.mxu0 0.0
    %3031 = vmatprep.subr.mxu0 0.0
    %3032 = vmatpush1.msra.mxu0 0.0
    %3033 = vmatprep.subr.mxu0 0.0
    %3034 = vmatpush1.msra.mxu0 0.0
    %3035 = vmatprep.subr.mxu0 0.0
    %3036 = vmatpush1.msra.mxu0 0.0
    %3037 = vmatprep.subr.mxu0 0.0
    %3038 = vmatpush1.msra.mxu0 0.0
    %3039 = vmatprep.subr.mxu0 0.0
    %3040 = vmatpush1.msra.mxu0 0.0
    %3041 = vmatprep.subr.mxu0 0.0
    %3042 = vmatpush1.msra.mxu0 0.0
    %3043 = vmatprep.subr.mxu0 0.0
    %3044 = vmatpush1.msra.mxu0 %v3004
    %3045 = vmatprep.subr.mxu0 0.0
    %3046 = vmatpush1.msra.mxu0 %v3003
    %3047 = vmatprep.subr.mxu0 0.0
    %3048 = vmatpush1.msra.mxu0 %v3002
    %3049 = vmatprep.subr.mxu0 0.0
    %3050 = vmatpush1.msra.mxu0 %v3001
    %3051 = vmatprep.subr.mxu0 0.0
    %3052 = vmatpush2.msra.mxu0 0.0
    %3053 = vmatprep.subr.mxu0 0.0
    %3054 = vmatpush2.msra.mxu0 0.0
    %3055 = vmatprep.subr.mxu0 0.0
    %3056 = vmatpush2.msra.mxu0 0.0
    %3057 = vmatprep.subr.mxu0 0.0
    %3058 = vmatpush2.msra.mxu0 0.0
    %3059 = vmatprep.subr.mxu0 0.0
    %3060 = vmatpush2.msra.mxu0 0.0
    %3061 = vmatprep.subr.mxu0 0.0
    %3062 = vmatpush2.msra.mxu0 0.0
    %3063 = vmatprep.subr.mxu0 0.0
    %3064 = vmatpush2.msra.mxu0 0.0
    %3065 = vmatprep.subr.mxu0 0.0
    %3066 = vmatpush2.msra.mxu0 0.0
    %3067 = vmatprep.subr.mxu0 0.0
    %3068 = vmatpush2.msra.mxu0 0.0
    %3069 = vmatprep.subr.mxu0 0.0
    %3070 = vmatpush2.msra.mxu0 0.0
    %3071 = vmatprep.subr.mxu0 0.0
    %3072 = vmatpush2.msra.mxu0 0.0
    %3073 = vmatprep.subr.mxu0 0.0
    %3074 = vmatpush2.msra.mxu0 0.0
    %3075 = vmatprep.subr.mxu0 0.0
    %3076 = vmatpush2.msra.mxu0 0.0
    %3077 = vmatprep.subr.mxu0 0.0
    %3078 = vmatpush2.msra.mxu0 0.0
    %3079 = vmatprep.subr.mxu0 0.0
    %3080 = vmatpush2.msra.mxu0 0.0
    %3081 = vmatprep.subr.mxu0 0.0
    %3082 = vmatpush2.msra.mxu0 0.0
    %3083 = vmatprep.mubr.f32.mxu0 0.0
    %3084 = vmatmul.mubr.f32.gmra.mxu0 %v3014
    %v3085 = vpop.f32.mrf.mxu0
    %v3086 = vadd.f32 %v3011, %v3085
    %v3087 = vpop.f32.mrf.mxu0
    %3088 = vmatprep.mubr.f32.mxu0 0.0
    %3089 = vmatmul.mubr.f32.gmra.mxu0 %v3017
    %v3090 = vpop.f32.mrf.mxu0
    %v3091 = vadd.f32 %v3011, %v3090
    %v3092 = vpop.f32.mrf.mxu0
    %3093 = vdwg.mxu0
    %s3094 = scalar_lea.vmem %s4, 64
    %v3095 = vld [vmem:[%s3094] sm:$0xff]
    %v3096 = vld [vmem:[%s3094 + $0x8] sm:$0xff]
    %v3097 = vld [vmem:[%s3094 + $0x10] sm:$0xff]
    %v3098 = vld [vmem:[%s3094 + $0x18] sm:$0xff]
    %s3099 = scalar_lea.vmem [#allocation7], 192
    %v3100 = vld [vmem:[%s3099] sm:$0xff]
    %v3101 = vld [vmem:[%s3099 + $0x8] sm:$0xff]
    %v3102 = vld [vmem:[%s3099 + $0x10] sm:$0xff]
    %v3103 = vld [vmem:[%s3099 + $0x18] sm:$0xff]
    %s3104 = scalar_lea.vmem [#allocation7], 224
    %v3105 = vld [vmem:[%s3104] sm:$0xff]
    %v3106 = vld [vmem:[%s3104 + $0x8] sm:$0xff]
    %v3107 = vld [vmem:[%s3104 + $0x10] sm:$0xff]
    %v3108 = vld [vmem:[%s3104 + $0x18] sm:$0xff]
    %s3109 = scalar_lea.vmem [#allocation7], 256
    %v3110 = vld [vmem:[%s3109] sm:$0xff]
    %v3111 = vld [vmem:[%s3109 + $0x8] sm:$0xff]
    %v3112 = vld [vmem:[%s3109 + $0x10] sm:$0xff]
    %v3113 = vld [vmem:[%s3109 + $0x18] sm:$0xff]
    %s3114 = scalar_lea.vmem [#allocation8], 32
    %v3115 = vld [vmem:[%s3114] sm:$0xff]
    %v3116 = vld [vmem:[%s3114 + $0x8] sm:$0x3]
    %v3117 = vld [vmem:[%s1] sm:$0xf]
    %vm3118 = vcmask 257024
    %v3119 = vsel %vm3118, %v3117, 0.0
    %3120 = vadd.xlane.f32.xlu0 %v3119
    %v3121 = vpop.xlane.xlu0 %3120
    %v3122 = vmul.f32 %v3121, %v227
    %v3123 = vmul.f32 %v3117, %v3117
    %v3124 = vsel %vm3118, %v3123, 0.0
    %3125 = vadd.xlane.f32.xlu0 %v3124
    %v3126 = vpop.xlane.xlu0 %3125
    %v3127 = vmul.f32 %v3126, %v227
    %v3128 = vmul.f32 %v3122, %v3122
    %v3129 = vsub.f32 %v3127, %v3128
    %v3130 = vsub.f32 %v3117, %v3122
    %v3131 = vadd.f32 %v3129, 1e-05
    %v3132 = vrsqrt.pop %v3131
    %v3133 = vmul.f32 %v3130, %v3132
    %v3134 = vlaneseq
    %v3135 = vshrl.u32 %v3134, 7
    %v3136 = vsub.s32 4, %v3135
    %v3137 = vrot.slane %v3115, %v3136
    %v3138 = vmul.f32 %v3133, %v3137
    %v3139 = vlaneseq
    %v3140 = vshrl.u32 %v3139, 7
    %v3141 = vsub.s32 5, %v3140
    %v3142 = vrot.slane %v3115, %v3141
    %v3143 = vadd.f32 %v3138, %v3142
    %v3144 = vlaneseq
    %v3145 = vshrl.u32 %v3144, 7
    %v3146 = vsub.s32 0, %v3145
    %v3147 = vrot.slane %v3115, %v3146
    %v3149 = vsel %vm220, %v3143, 0
    %3151 = vmatprep.subr.mxu0 0.0
    %3152 = vmatpush1.msra.mxu0 0.0
    %3153 = vmatprep.subr.mxu0 0.0
    %3154 = vmatpush1.msra.mxu0 0.0
    %3155 = vmatprep.subr.mxu0 0.0
    %3156 = vmatpush1.msra.mxu0 0.0
    %3157 = vmatprep.subr.mxu0 0.0
    %3158 = vmatpush1.msra.mxu0 0.0
    %3159 = vmatprep.subr.mxu0 0.0
    %3160 = vmatpush1.msra.mxu0 0.0
    %3161 = vmatprep.subr.mxu0 0.0
    %3162 = vmatpush1.msra.mxu0 0.0
    %3163 = vmatprep.subr.mxu0 0.0
    %3164 = vmatpush1.msra.mxu0 0.0
    %3165 = vmatprep.subr.mxu0 0.0
    %3166 = vmatpush1.msra.mxu0 0.0
    %3167 = vmatprep.subr.mxu0 0.0
    %3168 = vmatpush1.msra.mxu0 0.0
    %3169 = vmatprep.subr.mxu0 0.0
    %3170 = vmatpush1.msra.mxu0 0.0
    %3171 = vmatprep.subr.mxu0 0.0
    %3172 = vmatpush1.msra.mxu0 0.0
    %3173 = vmatprep.subr.mxu0 0.0
    %3174 = vmatpush1.msra.mxu0 0.0
    %3175 = vmatprep.subr.mxu0 0.0
    %3176 = vmatpush1.msra.mxu0 %v3098
    %3177 = vmatprep.subr.mxu0 0.0
    %3178 = vmatpush1.msra.mxu0 %v3097
    %3179 = vmatprep.subr.mxu0 0.0
    %3180 = vmatpush1.msra.mxu0 %v3096
    %3181 = vmatprep.subr.mxu0 0.0
    %3182 = vmatpush1.msra.mxu0 %v3095
    %3183 = vmatprep.subr.mxu0 0.0
    %3184 = vmatpush2.msra.mxu0 0.0
    %3185 = vmatprep.subr.mxu0 0.0
    %3186 = vmatpush2.msra.mxu0 0.0
    %3187 = vmatprep.subr.mxu0 0.0
    %3188 = vmatpush2.msra.mxu0 0.0
    %3189 = vmatprep.subr.mxu0 0.0
    %3190 = vmatpush2.msra.mxu0 0.0
    %3191 = vmatprep.subr.mxu0 0.0
    %3192 = vmatpush2.msra.mxu0 0.0
    %3193 = vmatprep.subr.mxu0 0.0
    %3194 = vmatpush2.msra.mxu0 0.0
    %3195 = vmatprep.subr.mxu0 0.0
    %3196 = vmatpush2.msra.mxu0 0.0
    %3197 = vmatprep.subr.mxu0 0.0
    %3198 = vmatpush2.msra.mxu0 0.0
    %3199 = vmatprep.subr.mxu0 0.0
    %3200 = vmatpush2.msra.mxu0 0.0
    %3201 = vmatprep.subr.mxu0 0.0
    %3202 = vmatpush2.msra.mxu0 0.0
    %3203 = vmatprep.subr.mxu0 0.0
    %3204 = vmatpush2.msra.mxu0 0.0
    %3205 = vmatprep.subr.mxu0 0.0
    %3206 = vmatpush2.msra.mxu0 0.0
    %3207 = vmatprep.subr.mxu0 0.0
    %3208 = vmatpush2.msra.mxu0 0.0
    %3209 = vmatprep.subr.mxu0 0.0
    %3210 = vmatpush2.msra.mxu0 0.0
    %3211 = vmatprep.subr.mxu0 0.0
    %3212 = vmatpush2.msra.mxu0 0.0
    %3213 = vmatprep.subr.mxu0 0.0
    %3214 = vmatpush2.msra.mxu0 0.0
    %3215 = vmatprep.mubr.f32.mxu0 0.0
    %3216 = vmatmul.mubr.f32.gmra.mxu0 %v3149
    %v3217 = vpop.f32.mrf.mxu0
    %v3218 = vadd.f32 %v3147, %v3217
    %v3219 = vpop.f32.mrf.mxu0
    %3220 = vdwg.mxu0
    %v3221 = vsel %vm220, %v3086, 0.0
    %3222 = vadd.xlane.f32.xlu0 %v3221
    %v3223 = vpop.xlane.xlu0 %3222
    %v3224 = vmul.f32 %v3223, %v227
    %v3225 = vmul.f32 %v3086, %v3086
    %v3226 = vsel %vm220, %v3225, 0.0
    %3227 = vadd.xlane.f32.xlu0 %v3226
    %v3228 = vpop.xlane.xlu0 %3227
    %v3229 = vmul.f32 %v3228, %v227
    %v3230 = vmul.f32 %v3224, %v3224
    %v3231 = vsub.f32 %v3229, %v3230
    %v3232 = vsub.f32 %v3086, %v3224
    %v3233 = vadd.f32 %v3231, 1e-05
    %v3234 = vrsqrt.pop %v3233
    %v3235 = vmul.f32 %v3232, %v3234
    %v3236 = vmul.f32 %v3235, %v3137
    %v3237 = vadd.f32 %v3236, %v3142
    %3242 = vrot.lane.b32.xlu0 %v3095, 96
    %v3243 = vpop.permute.xlu0 %3242
    %3244 = vrot.lane.b32.xlu0 %v3096, 96
    %v3245 = vpop.permute.xlu0 %3244
    %3246 = vrot.lane.b32.xlu0 %v3097, 96
    %v3247 = vpop.permute.xlu0 %3246
    %3248 = vrot.lane.b32.xlu0 %v3098, 96
    %v3249 = vpop.permute.xlu0 %3248
    %v3255 = vsel %vm220, %v3237, 0
    %3257 = vmatprep.subr.mxu0 0.0
    %3258 = vmatpush1.msra.mxu0 0.0
    %3259 = vmatprep.subr.mxu0 0.0
    %3260 = vmatpush1.msra.mxu0 0.0
    %3261 = vmatprep.subr.mxu0 0.0
    %3262 = vmatpush1.msra.mxu0 0.0
    %3263 = vmatprep.subr.mxu0 0.0
    %3264 = vmatpush1.msra.mxu0 0.0
    %3265 = vmatprep.subr.mxu0 0.0
    %3266 = vmatpush1.msra.mxu0 0.0
    %3267 = vmatprep.subr.mxu0 0.0
    %3268 = vmatpush1.msra.mxu0 0.0
    %3269 = vmatprep.subr.mxu0 0.0
    %3270 = vmatpush1.msra.mxu0 0.0
    %3271 = vmatprep.subr.mxu0 0.0
    %3272 = vmatpush1.msra.mxu0 0.0
    %3273 = vmatprep.subr.mxu0 0.0
    %3274 = vmatpush1.msra.mxu0 0.0
    %3275 = vmatprep.subr.mxu0 0.0
    %3276 = vmatpush1.msra.mxu0 0.0
    %3277 = vmatprep.subr.mxu0 0.0
    %3278 = vmatpush1.msra.mxu0 0.0
    %3279 = vmatprep.subr.mxu0 0.0
    %3280 = vmatpush1.msra.mxu0 0.0
    %3281 = vmatprep.subr.mxu0 0.0
    %3282 = vmatpush1.msra.mxu0 %v3249
    %3283 = vmatprep.subr.mxu0 0.0
    %3284 = vmatpush1.msra.mxu0 %v3247
    %3285 = vmatprep.subr.mxu0 0.0
    %3286 = vmatpush1.msra.mxu0 %v3245
    %3287 = vmatprep.subr.mxu0 0.0
    %3288 = vmatpush1.msra.mxu0 %v3243
    %3289 = vmatprep.subr.mxu0 0.0
    %3290 = vmatpush2.msra.mxu0 0.0
    %3291 = vmatprep.subr.mxu0 0.0
    %3292 = vmatpush2.msra.mxu0 0.0
    %3293 = vmatprep.subr.mxu0 0.0
    %3294 = vmatpush2.msra.mxu0 0.0
    %3295 = vmatprep.subr.mxu0 0.0
    %3296 = vmatpush2.msra.mxu0 0.0
    %3297 = vmatprep.subr.mxu0 0.0
    %3298 = vmatpush2.msra.mxu0 0.0
    %3299 = vmatprep.subr.mxu0 0.0
    %3300 = vmatpush2.msra.mxu0 0.0
    %3301 = vmatprep.subr.mxu0 0.0
    %3302 = vmatpush2.msra.mxu0 0.0
    %3303 = vmatprep.subr.mxu0 0.0
    %3304 = vmatpush2.msra.mxu0 0.0
    %3305 = vmatprep.subr.mxu0 0.0
    %3306 = vmatpush2.msra.mxu0 0.0
    %3307 = vmatprep.subr.mxu0 0.0
    %3308 = vmatpush2.msra.mxu0 0.0
    %3309 = vmatprep.subr.mxu0 0.0
    %3310 = vmatpush2.msra.mxu0 0.0
    %3311 = vmatprep.subr.mxu0 0.0
    %3312 = vmatpush2.msra.mxu0 0.0
    %3313 = vmatprep.subr.mxu0 0.0
    %3314 = vmatpush2.msra.mxu0 0.0
    %3315 = vmatprep.subr.mxu0 0.0
    %3316 = vmatpush2.msra.mxu0 0.0
    %3317 = vmatprep.subr.mxu0 0.0
    %3318 = vmatpush2.msra.mxu0 0.0
    %3319 = vmatprep.subr.mxu0 0.0
    %3320 = vmatpush2.msra.mxu0 0.0
    %3321 = vmatprep.mubr.f32.mxu0 0.0
    %3322 = vmatmul.mubr.f32.gmra.mxu0 %v3255
    %v3323 = vpop.f32.mrf.mxu0
    %v3324 = vadd.f32 0.0, %v3323
    %v3325 = vpop.f32.mrf.mxu0
    %3326 = vdwg.mxu0
    %v3327 = vlaneseq
    %v3328 = vshrl.u32 %v3327, 7
    %v3329 = vsub.s32 1, %v3328
    %v3330 = vrot.slane %v3115, %v3329
    %v3331 = vadd.f32 %v3324, %v3330
    %v3332 = vlaneseq
    %v3333 = vshrl.u32 %v3332, 7
    %v3334 = vsub.s32 2, %v3333
    %v3335 = vrot.slane %v3115, %v3334
    %3337 = vrot.lane.b32.xlu0 %v3335, 32
    %v3338 = vpop.permute.xlu0 %3337
    %v3340 = vadd.f32 %v3324, %v3338
    %v3342 = vsel %vm118, %v3218, 0
    %v3345 = vsel %vm118, %v3331, 0
    %3347 = vmatprep.subr.mxu0 0.0
    %3348 = vmatpush1.xpose.msra.mxu0 0.0
    %3349 = vmatprep.subr.mxu0 0.0
    %3350 = vmatpush1.xpose.msra.mxu0 0.0
    %3351 = vmatprep.subr.mxu0 0.0
    %3352 = vmatpush1.xpose.msra.mxu0 0.0
    %3353 = vmatprep.subr.mxu0 0.0
    %3354 = vmatpush1.xpose.msra.mxu0 0.0
    %3355 = vmatprep.subr.mxu0 0.0
    %3356 = vmatpush1.xpose.msra.mxu0 0.0
    %3357 = vmatprep.subr.mxu0 0.0
    %3358 = vmatpush1.xpose.msra.mxu0 0.0
    %3359 = vmatprep.subr.mxu0 0.0
    %3360 = vmatpush1.xpose.msra.mxu0 0.0
    %3361 = vmatprep.subr.mxu0 0.0
    %3362 = vmatpush1.xpose.msra.mxu0 0.0
    %3363 = vmatprep.subr.mxu0 0.0
    %3364 = vmatpush1.xpose.msra.mxu0 0.0
    %3365 = vmatprep.subr.mxu0 0.0
    %3366 = vmatpush1.xpose.msra.mxu0 0.0
    %3367 = vmatprep.subr.mxu0 0.0
    %3368 = vmatpush1.xpose.msra.mxu0 0.0
    %3369 = vmatprep.subr.mxu0 0.0
    %3370 = vmatpush1.xpose.msra.mxu0 0.0
    %3371 = vmatprep.subr.mxu0 0.0
    %3372 = vmatpush1.xpose.msra.mxu0 0.0
    %3373 = vmatprep.subr.mxu0 0.0
    %3374 = vmatpush1.xpose.msra.mxu0 0.0
    %3375 = vmatprep.subr.mxu0 0.0
    %3376 = vmatpush1.xpose.msra.mxu0 0.0
    %3377 = vmatprep.subr.mxu0 0.0
    %3378 = vmatpush1.xpose.msra.mxu0 %v3345
    %3379 = vmatprep.subr.mxu0 0.0
    %3380 = vmatpush2.xpose.msra.mxu0 0.0
    %3381 = vmatprep.subr.mxu0 0.0
    %3382 = vmatpush2.xpose.msra.mxu0 0.0
    %3383 = vmatprep.subr.mxu0 0.0
    %3384 = vmatpush2.xpose.msra.mxu0 0.0
    %3385 = vmatprep.subr.mxu0 0.0
    %3386 = vmatpush2.xpose.msra.mxu0 0.0
    %3387 = vmatprep.subr.mxu0 0.0
    %3388 = vmatpush2.xpose.msra.mxu0 0.0
    %3389 = vmatprep.subr.mxu0 0.0
    %3390 = vmatpush2.xpose.msra.mxu0 0.0
    %3391 = vmatprep.subr.mxu0 0.0
    %3392 = vmatpush2.xpose.msra.mxu0 0.0
    %3393 = vmatprep.subr.mxu0 0.0
    %3394 = vmatpush2.xpose.msra.mxu0 0.0
    %3395 = vmatprep.subr.mxu0 0.0
    %3396 = vmatpush2.xpose.msra.mxu0 0.0
    %3397 = vmatprep.subr.mxu0 0.0
    %3398 = vmatpush2.xpose.msra.mxu0 0.0
    %3399 = vmatprep.subr.mxu0 0.0
    %3400 = vmatpush2.xpose.msra.mxu0 0.0
    %3401 = vmatprep.subr.mxu0 0.0
    %3402 = vmatpush2.xpose.msra.mxu0 0.0
    %3403 = vmatprep.subr.mxu0 0.0
    %3404 = vmatpush2.xpose.msra.mxu0 0.0
    %3405 = vmatprep.subr.mxu0 0.0
    %3406 = vmatpush2.xpose.msra.mxu0 0.0
    %3407 = vmatprep.subr.mxu0 0.0
    %3408 = vmatpush2.xpose.msra.mxu0 0.0
    %3409 = vmatprep.subr.mxu0 0.0
    %3410 = vmatpush2.xpose.msra.mxu0 0.0
    %3411 = vmatprep.mubr.f32.mxu0 0.0
    %3412 = vmatmul.mubr.f32.gmra.mxu0 %v3342
    %v3413 = vpop.f32.mrf.mxu0
    %v3414 = vadd.f32 0.0, %v3413
    %v3415 = vpop.f32.mrf.mxu0
    %3416 = vdwg.mxu0
    %v3417 = vmul.f32 %v3414, 0.25
    %vm3418 = vcmask 60416
    %v3419 = vsel %vm3418, %v3417, -inf
    %3420 = vmax.xlane.f32.xlu0 %v3419
    %v3421 = vpop.xlane.xlu0 %3420
    %v3422 = vsub.f32 %v3417, %v3421
    %v3423 = vmul.f32 %v3422, 1.442695
    %v3424 = vpow.pop %v3423
    %v3425 = vsel %vm3418, %v3424, 0.0
    %3426 = vadd.xlane.f32.xlu0 %v3425
    %v3427 = vpop.xlane.xlu0 %3426
    %v3428 = vrcp.pop %v3427
    %v3429 = vmul.f32 %v3424, %v3428
    %3431 = vrot.lane.b32.xlu0 %v3340, 96
    %v3432 = vpop.permute.xlu0 %3431
    %v3435 = vsel %vm450, %v3429, 0
    %3437 = vmatprep.subr.mxu0 0.0
    %3438 = vmatpush1.msra.mxu0 0.0
    %3439 = vmatprep.subr.mxu0 0.0
    %3440 = vmatpush1.msra.mxu0 0.0
    %3441 = vmatprep.subr.mxu0 0.0
    %3442 = vmatpush1.msra.mxu0 0.0
    %3443 = vmatprep.subr.mxu0 0.0
    %3444 = vmatpush1.msra.mxu0 0.0
    %3445 = vmatprep.subr.mxu0 0.0
    %3446 = vmatpush1.msra.mxu0 0.0
    %3447 = vmatprep.subr.mxu0 0.0
    %3448 = vmatpush1.msra.mxu0 0.0
    %3449 = vmatprep.subr.mxu0 0.0
    %3450 = vmatpush1.msra.mxu0 0.0
    %3451 = vmatprep.subr.mxu0 0.0
    %3452 = vmatpush1.msra.mxu0 0.0
    %3453 = vmatprep.subr.mxu0 0.0
    %3454 = vmatpush1.msra.mxu0 0.0
    %3455 = vmatprep.subr.mxu0 0.0
    %3456 = vmatpush1.msra.mxu0 0.0
    %3457 = vmatprep.subr.mxu0 0.0
    %3458 = vmatpush1.msra.mxu0 0.0
    %3459 = vmatprep.subr.mxu0 0.0
    %3460 = vmatpush1.msra.mxu0 0.0
    %3461 = vmatprep.subr.mxu0 0.0
    %3462 = vmatpush1.msra.mxu0 0.0
    %3463 = vmatprep.subr.mxu0 0.0
    %3464 = vmatpush1.msra.mxu0 0.0
    %3465 = vmatprep.subr.mxu0 0.0
    %3466 = vmatpush1.msra.mxu0 0.0
    %3467 = vmatprep.subr.mxu0 0.0
    %3468 = vmatpush1.msra.mxu0 %v3432
    %3469 = vmatprep.subr.mxu0 0.0
    %3470 = vmatpush2.msra.mxu0 0.0
    %3471 = vmatprep.subr.mxu0 0.0
    %3472 = vmatpush2.msra.mxu0 0.0
    %3473 = vmatprep.subr.mxu0 0.0
    %3474 = vmatpush2.msra.mxu0 0.0
    %3475 = vmatprep.subr.mxu0 0.0
    %3476 = vmatpush2.msra.mxu0 0.0
    %3477 = vmatprep.subr.mxu0 0.0
    %3478 = vmatpush2.msra.mxu0 0.0
    %3479 = vmatprep.subr.mxu0 0.0
    %3480 = vmatpush2.msra.mxu0 0.0
    %3481 = vmatprep.subr.mxu0 0.0
    %3482 = vmatpush2.msra.mxu0 0.0
    %3483 = vmatprep.subr.mxu0 0.0
    %3484 = vmatpush2.msra.mxu0 0.0
    %3485 = vmatprep.subr.mxu0 0.0
    %3486 = vmatpush2.msra.mxu0 0.0
    %3487 = vmatprep.subr.mxu0 0.0
    %3488 = vmatpush2.msra.mxu0 0.0
    %3489 = vmatprep.subr.mxu0 0.0
    %3490 = vmatpush2.msra.mxu0 0.0
    %3491 = vmatprep.subr.mxu0 0.0
    %3492 = vmatpush2.msra.mxu0 0.0
    %3493 = vmatprep.subr.mxu0 0.0
    %3494 = vmatpush2.msra.mxu0 0.0
    %3495 = vmatprep.subr.mxu0 0.0
    %3496 = vmatpush2.msra.mxu0 0.0
    %3497 = vmatprep.subr.mxu0 0.0
    %3498 = vmatpush2.msra.mxu0 0.0
    %3499 = vmatprep.subr.mxu0 0.0
    %3500 = vmatpush2.msra.mxu0 0.0
    %3501 = vmatprep.mubr.f32.mxu0 0.0
    %3502 = vmatmul.mubr.f32.gmra.mxu0 %v3435
    %v3503 = vpop.f32.mrf.mxu0
    %v3504 = vadd.f32 0.0, %v3503
    %v3505 = vpop.f32.mrf.mxu0
    %3506 = vdwg.mxu0
    %3507 = vrot.lane.b32.xlu0 %v3218, 112
    %v3508 = vpop.permute.xlu0 %3507
    %3509 = vrot.lane.b32.xlu0 %v3331, 112
    %v3510 = vpop.permute.xlu0 %3509
    %v3511 = vsel %vm118, %v3508, 0
    %v3513 = vsel %vm118, %v3510, 0
    %3515 = vmatprep.subr.mxu0 0.0
    %3516 = vmatpush1.xpose.msra.mxu0 0.0
    %3517 = vmatprep.subr.mxu0 0.0
    %3518 = vmatpush1.xpose.msra.mxu0 0.0
    %3519 = vmatprep.subr.mxu0 0.0
    %3520 = vmatpush1.xpose.msra.mxu0 0.0
    %3521 = vmatprep.subr.mxu0 0.0
    %3522 = vmatpush1.xpose.msra.mxu0 0.0
    %3523 = vmatprep.subr.mxu0 0.0
    %3524 = vmatpush1.xpose.msra.mxu0 0.0
    %3525 = vmatprep.subr.mxu0 0.0
    %3526 = vmatpush1.xpose.msra.mxu0 0.0
    %3527 = vmatprep.subr.mxu0 0.0
    %3528 = vmatpush1.xpose.msra.mxu0 0.0
    %3529 = vmatprep.subr.mxu0 0.0
    %3530 = vmatpush1.xpose.msra.mxu0 0.0
    %3531 = vmatprep.subr.mxu0 0.0
    %3532 = vmatpush1.xpose.msra.mxu0 0.0
    %3533 = vmatprep.subr.mxu0 0.0
    %3534 = vmatpush1.xpose.msra.mxu0 0.0
    %3535 = vmatprep.subr.mxu0 0.0
    %3536 = vmatpush1.xpose.msra.mxu0 0.0
    %3537 = vmatprep.subr.mxu0 0.0
    %3538 = vmatpush1.xpose.msra.mxu0 0.0
    %3539 = vmatprep.subr.mxu0 0.0
    %3540 = vmatpush1.xpose.msra.mxu0 0.0
    %3541 = vmatprep.subr.mxu0 0.0
    %3542 = vmatpush1.xpose.msra.mxu0 0.0
    %3543 = vmatprep.subr.mxu0 0.0
    %3544 = vmatpush1.xpose.msra.mxu0 0.0
    %3545 = vmatprep.subr.mxu0 0.0
    %3546 = vmatpush1.xpose.msra.mxu0 %v3513
    %3547 = vmatprep.subr.mxu0 0.0
    %3548 = vmatpush2.xpose.msra.mxu0 0.0
    %3549 = vmatprep.subr.mxu0 0.0
    %3550 = vmatpush2.xpose.msra.mxu0 0.0
    %3551 = vmatprep.subr.mxu0 0.0
    %3552 = vmatpush2.xpose.msra.mxu0 0.0
    %3553 = vmatprep.subr.mxu0 0.0
    %3554 = vmatpush2.xpose.msra.mxu0 0.0
    %3555 = vmatprep.subr.mxu0 0.0
    %3556 = vmatpush2.xpose.msra.mxu0 0.0
    %3557 = vmatprep.subr.mxu0 0.0
    %3558 = vmatpush2.xpose.msra.mxu0 0.0
    %3559 = vmatprep.subr.mxu0 0.0
    %3560 = vmatpush2.xpose.msra.mxu0 0.0
    %3561 = vmatprep.subr.mxu0 0.0
    %3562 = vmatpush2.xpose.msra.mxu0 0.0
    %3563 = vmatprep.subr.mxu0 0.0
    %3564 = vmatpush2.xpose.msra.mxu0 0.0
    %3565 = vmatprep.subr.mxu0 0.0
    %3566 = vmatpush2.xpose.msra.mxu0 0.0
    %3567 = vmatprep.subr.mxu0 0.0
    %3568 = vmatpush2.xpose.msra.mxu0 0.0
    %3569 = vmatprep.subr.mxu0 0.0
    %3570 = vmatpush2.xpose.msra.mxu0 0.0
    %3571 = vmatprep.subr.mxu0 0.0
    %3572 = vmatpush2.xpose.msra.mxu0 0.0
    %3573 = vmatprep.subr.mxu0 0.0
    %3574 = vmatpush2.xpose.msra.mxu0 0.0
    %3575 = vmatprep.subr.mxu0 0.0
    %3576 = vmatpush2.xpose.msra.mxu0 0.0
    %3577 = vmatprep.subr.mxu0 0.0
    %3578 = vmatpush2.xpose.msra.mxu0 0.0
    %3579 = vmatprep.mubr.f32.mxu0 0.0
    %3580 = vmatmul.mubr.f32.gmra.mxu0 %v3511
    %v3581 = vpop.f32.mrf.mxu0
    %v3582 = vadd.f32 0.0, %v3581
    %v3583 = vpop.f32.mrf.mxu0
    %3584 = vdwg.mxu0
    %v3585 = vmul.f32 %v3582, 0.25
    %v3586 = vsel %vm3418, %v3585, -inf
    %3587 = vmax.xlane.f32.xlu0 %v3586
    %v3588 = vpop.xlane.xlu0 %3587
    %v3589 = vsub.f32 %v3585, %v3588
    %v3590 = vmul.f32 %v3589, 1.442695
    %v3591 = vpow.pop %v3590
    %v3592 = vsel %vm3418, %v3591, 0.0
    %3593 = vadd.xlane.f32.xlu0 %v3592
    %v3594 = vpop.xlane.xlu0 %3593
    %v3595 = vrcp.pop %v3594
    %v3596 = vmul.f32 %v3591, %v3595
    %3597 = vrot.lane.b32.xlu0 %v3340, 80
    %v3598 = vpop.permute.xlu0 %3597
    %v3601 = vsel %vm450, %v3596, 0
    %3603 = vmatprep.subr.mxu0 0.0
    %3604 = vmatpush1.msra.mxu0 0.0
    %3605 = vmatprep.subr.mxu0 0.0
    %3606 = vmatpush1.msra.mxu0 0.0
    %3607 = vmatprep.subr.mxu0 0.0
    %3608 = vmatpush1.msra.mxu0 0.0
    %3609 = vmatprep.subr.mxu0 0.0
    %3610 = vmatpush1.msra.mxu0 0.0
    %3611 = vmatprep.subr.mxu0 0.0
    %3612 = vmatpush1.msra.mxu0 0.0
    %3613 = vmatprep.subr.mxu0 0.0
    %3614 = vmatpush1.msra.mxu0 0.0
    %3615 = vmatprep.subr.mxu0 0.0
    %3616 = vmatpush1.msra.mxu0 0.0
    %3617 = vmatprep.subr.mxu0 0.0
    %3618 = vmatpush1.msra.mxu0 0.0
    %3619 = vmatprep.subr.mxu0 0.0
    %3620 = vmatpush1.msra.mxu0 0.0
    %3621 = vmatprep.subr.mxu0 0.0
    %3622 = vmatpush1.msra.mxu0 0.0
    %3623 = vmatprep.subr.mxu0 0.0
    %3624 = vmatpush1.msra.mxu0 0.0
    %3625 = vmatprep.subr.mxu0 0.0
    %3626 = vmatpush1.msra.mxu0 0.0
    %3627 = vmatprep.subr.mxu0 0.0
    %3628 = vmatpush1.msra.mxu0 0.0
    %3629 = vmatprep.subr.mxu0 0.0
    %3630 = vmatpush1.msra.mxu0 0.0
    %3631 = vmatprep.subr.mxu0 0.0
    %3632 = vmatpush1.msra.mxu0 0.0
    %3633 = vmatprep.subr.mxu0 0.0
    %3634 = vmatpush1.msra.mxu0 %v3598
    %3635 = vmatprep.subr.mxu0 0.0
    %3636 = vmatpush2.msra.mxu0 0.0
    %3637 = vmatprep.subr.mxu0 0.0
    %3638 = vmatpush2.msra.mxu0 0.0
    %3639 = vmatprep.subr.mxu0 0.0
    %3640 = vmatpush2.msra.mxu0 0.0
    %3641 = vmatprep.subr.mxu0 0.0
    %3642 = vmatpush2.msra.mxu0 0.0
    %3643 = vmatprep.subr.mxu0 0.0
    %3644 = vmatpush2.msra.mxu0 0.0
    %3645 = vmatprep.subr.mxu0 0.0
    %3646 = vmatpush2.msra.mxu0 0.0
    %3647 = vmatprep.subr.mxu0 0.0
    %3648 = vmatpush2.msra.mxu0 0.0
    %3649 = vmatprep.subr.mxu0 0.0
    %3650 = vmatpush2.msra.mxu0 0.0
    %3651 = vmatprep.subr.mxu0 0.0
    %3652 = vmatpush2.msra.mxu0 0.0
    %3653 = vmatprep.subr.mxu0 0.0
    %3654 = vmatpush2.msra.mxu0 0.0
    %3655 = vmatprep.subr.mxu0 0.0
    %3656 = vmatpush2.msra.mxu0 0.0
    %3657 = vmatprep.subr.mxu0 0.0
    %3658 = vmatpush2.msra.mxu0 0.0
    %3659 = vmatprep.subr.mxu0 0.0
    %3660 = vmatpush2.msra.mxu0 0.0
    %3661 = vmatprep.subr.mxu0 0.0
    %3662 = vmatpush2.msra.mxu0 0.0
    %3663 = vmatprep.subr.mxu0 0.0
    %3664 = vmatpush2.msra.mxu0 0.0
    %3665 = vmatprep.subr.mxu0 0.0
    %3666 = vmatpush2.msra.mxu0 0.0
    %3667 = vmatprep.mubr.f32.mxu0 0.0
    %3668 = vmatmul.mubr.f32.gmra.mxu0 %v3601
    %v3669 = vpop.f32.mrf.mxu0
    %v3670 = vadd.f32 0.0, %v3669
    %v3671 = vpop.f32.mrf.mxu0
    %3672 = vdwg.mxu0
    %v3674 = vsel %vm118, %v3670, 0
    %3676 = vmatprep.subr.mxu0 0.0
    %3677 = vmatpush1.msra.mxu0 0.0
    %3678 = vmatprep.subr.mxu0 0.0
    %3679 = vmatpush1.msra.mxu0 0.0
    %3680 = vmatprep.subr.mxu0 0.0
    %3681 = vmatpush1.msra.mxu0 0.0
    %3682 = vmatprep.subr.mxu0 0.0
    %3683 = vmatpush1.msra.mxu0 0.0
    %3684 = vmatprep.subr.mxu0 0.0
    %3685 = vmatpush1.msra.mxu0 0.0
    %3686 = vmatprep.subr.mxu0 0.0
    %3687 = vmatpush1.msra.mxu0 0.0
    %3688 = vmatprep.subr.mxu0 0.0
    %3689 = vmatpush1.msra.mxu0 0.0
    %3690 = vmatprep.subr.mxu0 0.0
    %3691 = vmatpush1.msra.mxu0 0.0
    %3692 = vmatprep.subr.mxu0 0.0
    %3693 = vmatpush1.msra.mxu0 0.0
    %3694 = vmatprep.subr.mxu0 0.0
    %3695 = vmatpush1.msra.mxu0 0.0
    %3696 = vmatprep.subr.mxu0 0.0
    %3697 = vmatpush1.msra.mxu0 0.0
    %3698 = vmatprep.subr.mxu0 0.0
    %3699 = vmatpush1.msra.mxu0 0.0
    %3700 = vmatprep.subr.mxu0 0.0
    %3701 = vmatpush1.msra.mxu0 0.0
    %3702 = vmatprep.subr.mxu0 0.0
    %3703 = vmatpush1.msra.mxu0 0.0
    %3704 = vmatprep.subr.mxu0 0.0
    %3705 = vmatpush1.msra.mxu0 %v3103
    %3706 = vmatprep.subr.mxu0 0.0
    %3707 = vmatpush1.msra.mxu0 %v3102
    %3708 = vmatprep.subr.mxu0 0.0
    %3709 = vmatpush2.msra.mxu0 0.0
    %3710 = vmatprep.subr.mxu0 0.0
    %3711 = vmatpush2.msra.mxu0 0.0
    %3712 = vmatprep.subr.mxu0 0.0
    %3713 = vmatpush2.msra.mxu0 0.0
    %3714 = vmatprep.subr.mxu0 0.0
    %3715 = vmatpush2.msra.mxu0 0.0
    %3716 = vmatprep.subr.mxu0 0.0
    %3717 = vmatpush2.msra.mxu0 0.0
    %3718 = vmatprep.subr.mxu0 0.0
    %3719 = vmatpush2.msra.mxu0 0.0
    %3720 = vmatprep.subr.mxu0 0.0
    %3721 = vmatpush2.msra.mxu0 0.0
    %3722 = vmatprep.subr.mxu0 0.0
    %3723 = vmatpush2.msra.mxu0 0.0
    %3724 = vmatprep.subr.mxu0 0.0
    %3725 = vmatpush2.msra.mxu0 0.0
    %3726 = vmatprep.subr.mxu0 0.0
    %3727 = vmatpush2.msra.mxu0 0.0
    %3728 = vmatprep.subr.mxu0 0.0
    %3729 = vmatpush2.msra.mxu0 0.0
    %3730 = vmatprep.subr.mxu0 0.0
    %3731 = vmatpush2.msra.mxu0 0.0
    %3732 = vmatprep.subr.mxu0 0.0
    %3733 = vmatpush2.msra.mxu0 0.0
    %3734 = vmatprep.subr.mxu0 0.0
    %3735 = vmatpush2.msra.mxu0 0.0
    %3736 = vmatprep.subr.mxu0 0.0
    %3737 = vmatpush2.msra.mxu0 0.0
    %3738 = vmatprep.subr.mxu0 0.0
    %3739 = vmatpush2.msra.mxu0 0.0
    %3740 = vmatprep.mubr.f32.mxu0 0.0
    %3741 = vmatmul.mubr.f32.gmra.mxu0 %v3674
    %v3742 = vpop.f32.mrf.mxu0
    %v3743 = vadd.f32 0.0, %v3742
    %v3744 = vpop.f32.mrf.mxu0
    %3745 = vdwg.mxu0
    %v3747 = vsel %vm118, %v3504, 0
    %3749 = vmatprep.subr.mxu0 0.0
    %3750 = vmatpush1.msra.mxu0 0.0
    %3751 = vmatprep.subr.mxu0 0.0
    %3752 = vmatpush1.msra.mxu0 0.0
    %3753 = vmatprep.subr.mxu0 0.0
    %3754 = vmatpush1.msra.mxu0 0.0
    %3755 = vmatprep.subr.mxu0 0.0
    %3756 = vmatpush1.msra.mxu0 0.0
    %3757 = vmatprep.subr.mxu0 0.0
    %3758 = vmatpush1.msra.mxu0 0.0
    %3759 = vmatprep.subr.mxu0 0.0
    %3760 = vmatpush1.msra.mxu0 0.0
    %3761 = vmatprep.subr.mxu0 0.0
    %3762 = vmatpush1.msra.mxu0 0.0
    %3763 = vmatprep.subr.mxu0 0.0
    %3764 = vmatpush1.msra.mxu0 0.0
    %3765 = vmatprep.subr.mxu0 0.0
    %3766 = vmatpush1.msra.mxu0 0.0
    %3767 = vmatprep.subr.mxu0 0.0
    %3768 = vmatpush1.msra.mxu0 0.0
    %3769 = vmatprep.subr.mxu0 0.0
    %3770 = vmatpush1.msra.mxu0 0.0
    %3771 = vmatprep.subr.mxu0 0.0
    %3772 = vmatpush1.msra.mxu0 0.0
    %3773 = vmatprep.subr.mxu0 0.0
    %3774 = vmatpush1.msra.mxu0 0.0
    %3775 = vmatprep.subr.mxu0 0.0
    %3776 = vmatpush1.msra.mxu0 0.0
    %3777 = vmatprep.subr.mxu0 0.0
    %3778 = vmatpush1.msra.mxu0 %v3101
    %3779 = vmatprep.subr.mxu0 0.0
    %3780 = vmatpush1.msra.mxu0 %v3100
    %3781 = vmatprep.subr.mxu0 0.0
    %3782 = vmatpush2.msra.mxu0 0.0
    %3783 = vmatprep.subr.mxu0 0.0
    %3784 = vmatpush2.msra.mxu0 0.0
    %3785 = vmatprep.subr.mxu0 0.0
    %3786 = vmatpush2.msra.mxu0 0.0
    %3787 = vmatprep.subr.mxu0 0.0
    %3788 = vmatpush2.msra.mxu0 0.0
    %3789 = vmatprep.subr.mxu0 0.0
    %3790 = vmatpush2.msra.mxu0 0.0
    %3791 = vmatprep.subr.mxu0 0.0
    %3792 = vmatpush2.msra.mxu0 0.0
    %3793 = vmatprep.subr.mxu0 0.0
    %3794 = vmatpush2.msra.mxu0 0.0
    %3795 = vmatprep.subr.mxu0 0.0
    %3796 = vmatpush2.msra.mxu0 0.0
    %3797 = vmatprep.subr.mxu0 0.0
    %3798 = vmatpush2.msra.mxu0 0.0
    %3799 = vmatprep.subr.mxu0 0.0
    %3800 = vmatpush2.msra.mxu0 0.0
    %3801 = vmatprep.subr.mxu0 0.0
    %3802 = vmatpush2.msra.mxu0 0.0
    %3803 = vmatprep.subr.mxu0 0.0
    %3804 = vmatpush2.msra.mxu0 0.0
    %3805 = vmatprep.subr.mxu0 0.0
    %3806 = vmatpush2.msra.mxu0 0.0
    %3807 = vmatprep.subr.mxu0 0.0
    %3808 = vmatpush2.msra.mxu0 0.0
    %3809 = vmatprep.subr.mxu0 0.0
    %3810 = vmatpush2.msra.mxu0 0.0
    %3811 = vmatprep.subr.mxu0 0.0
    %3812 = vmatpush2.msra.mxu0 0.0
    %3813 = vmatprep.mubr.f32.mxu0 0.0
    %3814 = vmatmul.mubr.f32.gmra.mxu0 %v3747
    %v3815 = vpop.f32.mrf.mxu0
    %v3816 = vadd.f32 %v3743, %v3815
    %v3817 = vpop.f32.mrf.mxu0
    %3818 = vdwg.mxu0
    %v3819 = vlaneseq
    %v3820 = vshrl.u32 %v3819, 7
    %v3821 = vsub.s32 3, %v3820
    %v3822 = vrot.slane %v3115, %v3821
    %v3823 = vadd.f32 %v3816, %v3822
    %v3824 = vadd.f32 %v3117, %v3823
    %v3825 = vsel %vm3118, %v3824, 0.0
    %3826 = vadd.xlane.f32.xlu0 %v3825
    %v3827 = vpop.xlane.xlu0 %3826
    %v3828 = vmul.f32 %v3827, %v227
    %v3829 = vmul.f32 %v3824, %v3824
    %v3830 = vsel %vm3118, %v3829, 0.0
    %3831 = vadd.xlane.f32.xlu0 %v3830
    %v3832 = vpop.xlane.xlu0 %3831
    %v3833 = vmul.f32 %v3832, %v227
    %v3834 = vmul.f32 %v3828, %v3828
    %v3835 = vsub.f32 %v3833, %v3834
    %v3836 = vsub.f32 %v3824, %v3828
    %v3837 = vadd.f32 %v3835, 1e-05
    %v3838 = vrsqrt.pop %v3837
    %v3839 = vmul.f32 %v3836, %v3838
    %v3840 = vlaneseq
    %v3841 = vshrl.u32 %v3840, 7
    %v3842 = vsub.s32 6, %v3841
    %v3843 = vrot.slane %v3115, %v3842
    %v3844 = vmul.f32 %v3839, %v3843
    %v3845 = vlaneseq
    %v3846 = vshrl.u32 %v3845, 7
    %v3847 = vsub.s32 7, %v3846
    %v3848 = vrot.slane %v3115, %v3847
    %v3849 = vadd.f32 %v3844, %v3848
    %v3850 = vlaneseq
    %v3851 = vshrl.u32 %v3850, 7
    %v3852 = vsub.s32 0, %v3851
    %v3853 = vrot.slane %v3116, %v3852
    %v3855 = vsel %vm220, %v3849, 0
    %3857 = vmatprep.subr.mxu0 0.0
    %3858 = vmatpush1.msra.mxu0 0.0
    %3859 = vmatprep.subr.mxu0 0.0
    %3860 = vmatpush1.msra.mxu0 0.0
    %3861 = vmatprep.subr.mxu0 0.0
    %3862 = vmatpush1.msra.mxu0 0.0
    %3863 = vmatprep.subr.mxu0 0.0
    %3864 = vmatpush1.msra.mxu0 0.0
    %3865 = vmatprep.subr.mxu0 0.0
    %3866 = vmatpush1.msra.mxu0 0.0
    %3867 = vmatprep.subr.mxu0 0.0
    %3868 = vmatpush1.msra.mxu0 0.0
    %3869 = vmatprep.subr.mxu0 0.0
    %3870 = vmatpush1.msra.mxu0 0.0
    %3871 = vmatprep.subr.mxu0 0.0
    %3872 = vmatpush1.msra.mxu0 0.0
    %3873 = vmatprep.subr.mxu0 0.0
    %3874 = vmatpush1.msra.mxu0 0.0
    %3875 = vmatprep.subr.mxu0 0.0
    %3876 = vmatpush1.msra.mxu0 0.0
    %3877 = vmatprep.subr.mxu0 0.0
    %3878 = vmatpush1.msra.mxu0 0.0
    %3879 = vmatprep.subr.mxu0 0.0
    %3880 = vmatpush1.msra.mxu0 0.0
    %3881 = vmatprep.subr.mxu0 0.0
    %3882 = vmatpush1.msra.mxu0 %v3108
    %3883 = vmatprep.subr.mxu0 0.0
    %3884 = vmatpush1.msra.mxu0 %v3107
    %3885 = vmatprep.subr.mxu0 0.0
    %3886 = vmatpush1.msra.mxu0 %v3106
    %3887 = vmatprep.subr.mxu0 0.0
    %3888 = vmatpush1.msra.mxu0 %v3105
    %3889 = vmatprep.subr.mxu0 0.0
    %3890 = vmatpush2.msra.mxu0 0.0
    %3891 = vmatprep.subr.mxu0 0.0
    %3892 = vmatpush2.msra.mxu0 0.0
    %3893 = vmatprep.subr.mxu0 0.0
    %3894 = vmatpush2.msra.mxu0 0.0
    %3895 = vmatprep.subr.mxu0 0.0
    %3896 = vmatpush2.msra.mxu0 0.0
    %3897 = vmatprep.subr.mxu0 0.0
    %3898 = vmatpush2.msra.mxu0 0.0
    %3899 = vmatprep.subr.mxu0 0.0
    %3900 = vmatpush2.msra.mxu0 0.0
    %3901 = vmatprep.subr.mxu0 0.0
    %3902 = vmatpush2.msra.mxu0 0.0
    %3903 = vmatprep.subr.mxu0 0.0
    %3904 = vmatpush2.msra.mxu0 0.0
    %3905 = vmatprep.subr.mxu0 0.0
    %3906 = vmatpush2.msra.mxu0 0.0
    %3907 = vmatprep.subr.mxu0 0.0
    %3908 = vmatpush2.msra.mxu0 0.0
    %3909 = vmatprep.subr.mxu0 0.0
    %3910 = vmatpush2.msra.mxu0 0.0
    %3911 = vmatprep.subr.mxu0 0.0
    %3912 = vmatpush2.msra.mxu0 0.0
    %3913 = vmatprep.subr.mxu0 0.0
    %3914 = vmatpush2.msra.mxu0 0.0
    %3915 = vmatprep.subr.mxu0 0.0
    %3916 = vmatpush2.msra.mxu0 0.0
    %3917 = vmatprep.subr.mxu0 0.0
    %3918 = vmatpush2.msra.mxu0 0.0
    %3919 = vmatprep.subr.mxu0 0.0
    %3920 = vmatpush2.msra.mxu0 0.0
    %3921 = vmatprep.mubr.f32.mxu0 0.0
    %3922 = vmatmul.mubr.f32.gmra.mxu0 %v3855
    %v3923 = vpop.f32.mrf.mxu0
    %v3924 = vadd.f32 %v3853, %v3923
    %v3925 = vpop.f32.mrf.mxu0
    %3926 = vdwg.mxu0
    %v3927 = vmax.f32 %v3924, 0.0
    %v3928 = vlaneseq
    %v3929 = vshrl.u32 %v3928, 7
    %v3930 = vsub.s32 1, %v3929
    %v3931 = vrot.slane %v3116, %v3930
    %v3933 = vsel %vm220, %v3927, 0
    %3935 = vmatprep.subr.mxu0 0.0
    %3936 = vmatpush1.msra.mxu0 0.0
    %3937 = vmatprep.subr.mxu0 0.0
    %3938 = vmatpush1.msra.mxu0 0.0
    %3939 = vmatprep.subr.mxu0 0.0
    %3940 = vmatpush1.msra.mxu0 0.0
    %3941 = vmatprep.subr.mxu0 0.0
    %3942 = vmatpush1.msra.mxu0 0.0
    %3943 = vmatprep.subr.mxu0 0.0
    %3944 = vmatpush1.msra.mxu0 0.0
    %3945 = vmatprep.subr.mxu0 0.0
    %3946 = vmatpush1.msra.mxu0 0.0
    %3947 = vmatprep.subr.mxu0 0.0
    %3948 = vmatpush1.msra.mxu0 0.0
    %3949 = vmatprep.subr.mxu0 0.0
    %3950 = vmatpush1.msra.mxu0 0.0
    %3951 = vmatprep.subr.mxu0 0.0
    %3952 = vmatpush1.msra.mxu0 0.0
    %3953 = vmatprep.subr.mxu0 0.0
    %3954 = vmatpush1.msra.mxu0 0.0
    %3955 = vmatprep.subr.mxu0 0.0
    %3956 = vmatpush1.msra.mxu0 0.0
    %3957 = vmatprep.subr.mxu0 0.0
    %3958 = vmatpush1.msra.mxu0 0.0
    %3959 = vmatprep.subr.mxu0 0.0
    %3960 = vmatpush1.msra.mxu0 %v3113
    %3961 = vmatprep.subr.mxu0 0.0
    %3962 = vmatpush1.msra.mxu0 %v3112
    %3963 = vmatprep.subr.mxu0 0.0
    %3964 = vmatpush1.msra.mxu0 %v3111
    %3965 = vmatprep.subr.mxu0 0.0
    %3966 = vmatpush1.msra.mxu0 %v3110
    %3967 = vmatprep.subr.mxu0 0.0
    %3968 = vmatpush2.msra.mxu0 0.0
    %3969 = vmatprep.subr.mxu0 0.0
    %3970 = vmatpush2.msra.mxu0 0.0
    %3971 = vmatprep.subr.mxu0 0.0
    %3972 = vmatpush2.msra.mxu0 0.0
    %3973 = vmatprep.subr.mxu0 0.0
    %3974 = vmatpush2.msra.mxu0 0.0
    %3975 = vmatprep.subr.mxu0 0.0
    %3976 = vmatpush2.msra.mxu0 0.0
    %3977 = vmatprep.subr.mxu0 0.0
    %3978 = vmatpush2.msra.mxu0 0.0
    %3979 = vmatprep.subr.mxu0 0.0
    %3980 = vmatpush2.msra.mxu0 0.0
    %3981 = vmatprep.subr.mxu0 0.0
    %3982 = vmatpush2.msra.mxu0 0.0
    %3983 = vmatprep.subr.mxu0 0.0
    %3984 = vmatpush2.msra.mxu0 0.0
    %3985 = vmatprep.subr.mxu0 0.0
    %3986 = vmatpush2.msra.mxu0 0.0
    %3987 = vmatprep.subr.mxu0 0.0
    %3988 = vmatpush2.msra.mxu0 0.0
    %3989 = vmatprep.subr.mxu0 0.0
    %3990 = vmatpush2.msra.mxu0 0.0
    %3991 = vmatprep.subr.mxu0 0.0
    %3992 = vmatpush2.msra.mxu0 0.0
    %3993 = vmatprep.subr.mxu0 0.0
    %3994 = vmatpush2.msra.mxu0 0.0
    %3995 = vmatprep.subr.mxu0 0.0
    %3996 = vmatpush2.msra.mxu0 0.0
    %3997 = vmatprep.subr.mxu0 0.0
    %3998 = vmatpush2.msra.mxu0 0.0
    %3999 = vmatprep.mubr.f32.mxu0 0.0
    %4000 = vmatmul.mubr.f32.gmra.mxu0 %v3933
    %v4001 = vpop.f32.mrf.mxu0
    %v4002 = vadd.f32 %v3931, %v4001
    %v4003 = vpop.f32.mrf.mxu0
    %4004 = vdwg.mxu0
    %v4005 = vadd.f32 %v3824, %v4002
    %v4006 = vsel %vm220, %v3091, 0.0
    %4007 = vadd.xlane.f32.xlu0 %v4006
    %v4008 = vpop.xlane.xlu0 %4007
    %v4009 = vmul.f32 %v4008, %v227
    %v4010 = vmul.f32 %v3091, %v3091
    %v4011 = vsel %vm220, %v4010, 0.0
    %4012 = vadd.xlane.f32.xlu0 %v4011
    %v4013 = vpop.xlane.xlu0 %4012
    %v4014 = vmul.f32 %v4013, %v227
    %v4015 = vmul.f32 %v4009, %v4009
    %v4016 = vsub.f32 %v4014, %v4015
    %v4017 = vsub.f32 %v3091, %v4009
    %v4018 = vadd.f32 %v4016, 1e-05
    %v4019 = vrsqrt.pop %v4018
    %v4020 = vmul.f32 %v4017, %v4019
    %v4021 = vmul.f32 %v4020, %v3137
    %v4022 = vadd.f32 %v4021, %v3142
    %v4024 = vsel %vm220, %v4022, 0
    %4026 = vmatprep.subr.mxu0 0.0
    %4027 = vmatpush1.msra.mxu0 0.0
    %4028 = vmatprep.subr.mxu0 0.0
    %4029 = vmatpush1.msra.mxu0 0.0
    %4030 = vmatprep.subr.mxu0 0.0
    %4031 = vmatpush1.msra.mxu0 0.0
    %4032 = vmatprep.subr.mxu0 0.0
    %4033 = vmatpush1.msra.mxu0 0.0
    %4034 = vmatprep.subr.mxu0 0.0
    %4035 = vmatpush1.msra.mxu0 0.0
    %4036 = vmatprep.subr.mxu0 0.0
    %4037 = vmatpush1.msra.mxu0 0.0
    %4038 = vmatprep.subr.mxu0 0.0
    %4039 = vmatpush1.msra.mxu0 0.0
    %4040 = vmatprep.subr.mxu0 0.0
    %4041 = vmatpush1.msra.mxu0 0.0
    %4042 = vmatprep.subr.mxu0 0.0
    %4043 = vmatpush1.msra.mxu0 0.0
    %4044 = vmatprep.subr.mxu0 0.0
    %4045 = vmatpush1.msra.mxu0 0.0
    %4046 = vmatprep.subr.mxu0 0.0
    %4047 = vmatpush1.msra.mxu0 0.0
    %4048 = vmatprep.subr.mxu0 0.0
    %4049 = vmatpush1.msra.mxu0 0.0
    %4050 = vmatprep.subr.mxu0 0.0
    %4051 = vmatpush1.msra.mxu0 %v3249
    %4052 = vmatprep.subr.mxu0 0.0
    %4053 = vmatpush1.msra.mxu0 %v3247
    %4054 = vmatprep.subr.mxu0 0.0
    %4055 = vmatpush1.msra.mxu0 %v3245
    %4056 = vmatprep.subr.mxu0 0.0
    %4057 = vmatpush1.msra.mxu0 %v3243
    %4058 = vmatprep.subr.mxu0 0.0
    %4059 = vmatpush2.msra.mxu0 0.0
    %4060 = vmatprep.subr.mxu0 0.0
    %4061 = vmatpush2.msra.mxu0 0.0
    %4062 = vmatprep.subr.mxu0 0.0
    %4063 = vmatpush2.msra.mxu0 0.0
    %4064 = vmatprep.subr.mxu0 0.0
    %4065 = vmatpush2.msra.mxu0 0.0
    %4066 = vmatprep.subr.mxu0 0.0
    %4067 = vmatpush2.msra.mxu0 0.0
    %4068 = vmatprep.subr.mxu0 0.0
    %4069 = vmatpush2.msra.mxu0 0.0
    %4070 = vmatprep.subr.mxu0 0.0
    %4071 = vmatpush2.msra.mxu0 0.0
    %4072 = vmatprep.subr.mxu0 0.0
    %4073 = vmatpush2.msra.mxu0 0.0
    %4074 = vmatprep.subr.mxu0 0.0
    %4075 = vmatpush2.msra.mxu0 0.0
    %4076 = vmatprep.subr.mxu0 0.0
    %4077 = vmatpush2.msra.mxu0 0.0
    %4078 = vmatprep.subr.mxu0 0.0
    %4079 = vmatpush2.msra.mxu0 0.0
    %4080 = vmatprep.subr.mxu0 0.0
    %4081 = vmatpush2.msra.mxu0 0.0
    %4082 = vmatprep.subr.mxu0 0.0
    %4083 = vmatpush2.msra.mxu0 0.0
    %4084 = vmatprep.subr.mxu0 0.0
    %4085 = vmatpush2.msra.mxu0 0.0
    %4086 = vmatprep.subr.mxu0 0.0
    %4087 = vmatpush2.msra.mxu0 0.0
    %4088 = vmatprep.subr.mxu0 0.0
    %4089 = vmatpush2.msra.mxu0 0.0
    %4090 = vmatprep.mubr.f32.mxu0 0.0
    %4091 = vmatmul.mubr.f32.gmra.mxu0 %v4024
    %v4092 = vpop.f32.mrf.mxu0
    %v4093 = vadd.f32 0.0, %v4092
    %v4094 = vpop.f32.mrf.mxu0
    %4095 = vdwg.mxu0
    %v4096 = vadd.f32 %v4093, %v3330
    %v4097 = vadd.f32 %v4093, %v3338
    %v4099 = vsel %vm118, %v4096, 0
    %4101 = vmatprep.subr.mxu0 0.0
    %4102 = vmatpush1.xpose.msra.mxu0 0.0
    %4103 = vmatprep.subr.mxu0 0.0
    %4104 = vmatpush1.xpose.msra.mxu0 0.0
    %4105 = vmatprep.subr.mxu0 0.0
    %4106 = vmatpush1.xpose.msra.mxu0 0.0
    %4107 = vmatprep.subr.mxu0 0.0
    %4108 = vmatpush1.xpose.msra.mxu0 0.0
    %4109 = vmatprep.subr.mxu0 0.0
    %4110 = vmatpush1.xpose.msra.mxu0 0.0
    %4111 = vmatprep.subr.mxu0 0.0
    %4112 = vmatpush1.xpose.msra.mxu0 0.0
    %4113 = vmatprep.subr.mxu0 0.0
    %4114 = vmatpush1.xpose.msra.mxu0 0.0
    %4115 = vmatprep.subr.mxu0 0.0
    %4116 = vmatpush1.xpose.msra.mxu0 0.0
    %4117 = vmatprep.subr.mxu0 0.0
    %4118 = vmatpush1.xpose.msra.mxu0 0.0
    %4119 = vmatprep.subr.mxu0 0.0
    %4120 = vmatpush1.xpose.msra.mxu0 0.0
    %4121 = vmatprep.subr.mxu0 0.0
    %4122 = vmatpush1.xpose.msra.mxu0 0.0
    %4123 = vmatprep.subr.mxu0 0.0
    %4124 = vmatpush1.xpose.msra.mxu0 0.0
    %4125 = vmatprep.subr.mxu0 0.0
    %4126 = vmatpush1.xpose.msra.mxu0 0.0
    %4127 = vmatprep.subr.mxu0 0.0
    %4128 = vmatpush1.xpose.msra.mxu0 0.0
    %4129 = vmatprep.subr.mxu0 0.0
    %4130 = vmatpush1.xpose.msra.mxu0 0.0
    %4131 = vmatprep.subr.mxu0 0.0
    %4132 = vmatpush1.xpose.msra.mxu0 %v4099
    %4133 = vmatprep.subr.mxu0 0.0
    %4134 = vmatpush2.xpose.msra.mxu0 0.0
    %4135 = vmatprep.subr.mxu0 0.0
    %4136 = vmatpush2.xpose.msra.mxu0 0.0
    %4137 = vmatprep.subr.mxu0 0.0
    %4138 = vmatpush2.xpose.msra.mxu0 0.0
    %4139 = vmatprep.subr.mxu0 0.0
    %4140 = vmatpush2.xpose.msra.mxu0 0.0
    %4141 = vmatprep.subr.mxu0 0.0
    %4142 = vmatpush2.xpose.msra.mxu0 0.0
    %4143 = vmatprep.subr.mxu0 0.0
    %4144 = vmatpush2.xpose.msra.mxu0 0.0
    %4145 = vmatprep.subr.mxu0 0.0
    %4146 = vmatpush2.xpose.msra.mxu0 0.0
    %4147 = vmatprep.subr.mxu0 0.0
    %4148 = vmatpush2.xpose.msra.mxu0 0.0
    %4149 = vmatprep.subr.mxu0 0.0
    %4150 = vmatpush2.xpose.msra.mxu0 0.0
    %4151 = vmatprep.subr.mxu0 0.0
    %4152 = vmatpush2.xpose.msra.mxu0 0.0
    %4153 = vmatprep.subr.mxu0 0.0
    %4154 = vmatpush2.xpose.msra.mxu0 0.0
    %4155 = vmatprep.subr.mxu0 0.0
    %4156 = vmatpush2.xpose.msra.mxu0 0.0
    %4157 = vmatprep.subr.mxu0 0.0
    %4158 = vmatpush2.xpose.msra.mxu0 0.0
    %4159 = vmatprep.subr.mxu0 0.0
    %4160 = vmatpush2.xpose.msra.mxu0 0.0
    %4161 = vmatprep.subr.mxu0 0.0
    %4162 = vmatpush2.xpose.msra.mxu0 0.0
    %4163 = vmatprep.subr.mxu0 0.0
    %4164 = vmatpush2.xpose.msra.mxu0 0.0
    %4165 = vmatprep.mubr.f32.mxu0 0.0
    %4166 = vmatmul.mubr.f32.gmra.mxu0 %v3342
    %v4167 = vpop.f32.mrf.mxu0
    %v4168 = vadd.f32 0.0, %v4167
    %v4169 = vpop.f32.mrf.mxu0
    %4170 = vdwg.mxu0
    %v4171 = vmul.f32 %v4168, 0.25
    %v4172 = vsel %vm3418, %v4171, -inf
    %4173 = vmax.xlane.f32.xlu0 %v4172
    %v4174 = vpop.xlane.xlu0 %4173
    %v4175 = vsub.f32 %v4171, %v4174
    %v4176 = vmul.f32 %v4175, 1.442695
    %v4177 = vpow.pop %v4176
    %v4178 = vsel %vm3418, %v4177, 0.0
    %4179 = vadd.xlane.f32.xlu0 %v4178
    %v4180 = vpop.xlane.xlu0 %4179
    %v4181 = vrcp.pop %v4180
    %v4182 = vmul.f32 %v4177, %v4181
    %4184 = vrot.lane.b32.xlu0 %v4097, 96
    %v4185 = vpop.permute.xlu0 %4184
    %v4188 = vsel %vm450, %v4182, 0
    %4190 = vmatprep.subr.mxu0 0.0
    %4191 = vmatpush1.msra.mxu0 0.0
    %4192 = vmatprep.subr.mxu0 0.0
    %4193 = vmatpush1.msra.mxu0 0.0
    %4194 = vmatprep.subr.mxu0 0.0
    %4195 = vmatpush1.msra.mxu0 0.0
    %4196 = vmatprep.subr.mxu0 0.0
    %4197 = vmatpush1.msra.mxu0 0.0
    %4198 = vmatprep.subr.mxu0 0.0
    %4199 = vmatpush1.msra.mxu0 0.0
    %4200 = vmatprep.subr.mxu0 0.0
    %4201 = vmatpush1.msra.mxu0 0.0
    %4202 = vmatprep.subr.mxu0 0.0
    %4203 = vmatpush1.msra.mxu0 0.0
    %4204 = vmatprep.subr.mxu0 0.0
    %4205 = vmatpush1.msra.mxu0 0.0
    %4206 = vmatprep.subr.mxu0 0.0
    %4207 = vmatpush1.msra.mxu0 0.0
    %4208 = vmatprep.subr.mxu0 0.0
    %4209 = vmatpush1.msra.mxu0 0.0
    %4210 = vmatprep.subr.mxu0 0.0
    %4211 = vmatpush1.msra.mxu0 0.0
    %4212 = vmatprep.subr.mxu0 0.0
    %4213 = vmatpush1.msra.mxu0 0.0
    %4214 = vmatprep.subr.mxu0 0.0
    %4215 = vmatpush1.msra.mxu0 0.0
    %4216 = vmatprep.subr.mxu0 0.0
    %4217 = vmatpush1.msra.mxu0 0.0
    %4218 = vmatprep.subr.mxu0 0.0
    %4219 = vmatpush1.msra.mxu0 0.0
    %4220 = vmatprep.subr.mxu0 0.0
    %4221 = vmatpush1.msra.mxu0 %v4185
    %4222 = vmatprep.subr.mxu0 0.0
    %4223 = vmatpush2.msra.mxu0 0.0
    %4224 = vmatprep.subr.mxu0 0.0
    %4225 = vmatpush2.msra.mxu0 0.0
    %4226 = vmatprep.subr.mxu0 0.0
    %4227 = vmatpush2.msra.mxu0 0.0
    %4228 = vmatprep.subr.mxu0 0.0
    %4229 = vmatpush2.msra.mxu0 0.0
    %4230 = vmatprep.subr.mxu0 0.0
    %4231 = vmatpush2.msra.mxu0 0.0
    %4232 = vmatprep.subr.mxu0 0.0
    %4233 = vmatpush2.msra.mxu0 0.0
    %4234 = vmatprep.subr.mxu0 0.0
    %4235 = vmatpush2.msra.mxu0 0.0
    %4236 = vmatprep.subr.mxu0 0.0
    %4237 = vmatpush2.msra.mxu0 0.0
    %4238 = vmatprep.subr.mxu0 0.0
    %4239 = vmatpush2.msra.mxu0 0.0
    %4240 = vmatprep.subr.mxu0 0.0
    %4241 = vmatpush2.msra.mxu0 0.0
    %4242 = vmatprep.subr.mxu0 0.0
    %4243 = vmatpush2.msra.mxu0 0.0
    %4244 = vmatprep.subr.mxu0 0.0
    %4245 = vmatpush2.msra.mxu0 0.0
    %4246 = vmatprep.subr.mxu0 0.0
    %4247 = vmatpush2.msra.mxu0 0.0
    %4248 = vmatprep.subr.mxu0 0.0
    %4249 = vmatpush2.msra.mxu0 0.0
    %4250 = vmatprep.subr.mxu0 0.0
    %4251 = vmatpush2.msra.mxu0 0.0
    %4252 = vmatprep.subr.mxu0 0.0
    %4253 = vmatpush2.msra.mxu0 0.0
    %4254 = vmatprep.mubr.f32.mxu0 0.0
    %4255 = vmatmul.mubr.f32.gmra.mxu0 %v4188
    %v4256 = vpop.f32.mrf.mxu0
    %v4257 = vadd.f32 0.0, %v4256
    %v4258 = vpop.f32.mrf.mxu0
    %4259 = vdwg.mxu0
    %4260 = vrot.lane.b32.xlu0 %v4096, 112
    %v4261 = vpop.permute.xlu0 %4260
    %v4262 = vsel %vm118, %v4261, 0
    %4264 = vmatprep.subr.mxu0 0.0
    %4265 = vmatpush1.xpose.msra.mxu0 0.0
    %4266 = vmatprep.subr.mxu0 0.0
    %4267 = vmatpush1.xpose.msra.mxu0 0.0
    %4268 = vmatprep.subr.mxu0 0.0
    %4269 = vmatpush1.xpose.msra.mxu0 0.0
    %4270 = vmatprep.subr.mxu0 0.0
    %4271 = vmatpush1.xpose.msra.mxu0 0.0
    %4272 = vmatprep.subr.mxu0 0.0
    %4273 = vmatpush1.xpose.msra.mxu0 0.0
    %4274 = vmatprep.subr.mxu0 0.0
    %4275 = vmatpush1.xpose.msra.mxu0 0.0
    %4276 = vmatprep.subr.mxu0 0.0
    %4277 = vmatpush1.xpose.msra.mxu0 0.0
    %4278 = vmatprep.subr.mxu0 0.0
    %4279 = vmatpush1.xpose.msra.mxu0 0.0
    %4280 = vmatprep.subr.mxu0 0.0
    %4281 = vmatpush1.xpose.msra.mxu0 0.0
    %4282 = vmatprep.subr.mxu0 0.0
    %4283 = vmatpush1.xpose.msra.mxu0 0.0
    %4284 = vmatprep.subr.mxu0 0.0
    %4285 = vmatpush1.xpose.msra.mxu0 0.0
    %4286 = vmatprep.subr.mxu0 0.0
    %4287 = vmatpush1.xpose.msra.mxu0 0.0
    %4288 = vmatprep.subr.mxu0 0.0
    %4289 = vmatpush1.xpose.msra.mxu0 0.0
    %4290 = vmatprep.subr.mxu0 0.0
    %4291 = vmatpush1.xpose.msra.mxu0 0.0
    %4292 = vmatprep.subr.mxu0 0.0
    %4293 = vmatpush1.xpose.msra.mxu0 0.0
    %4294 = vmatprep.subr.mxu0 0.0
    %4295 = vmatpush1.xpose.msra.mxu0 %v4262
    %4296 = vmatprep.subr.mxu0 0.0
    %4297 = vmatpush2.xpose.msra.mxu0 0.0
    %4298 = vmatprep.subr.mxu0 0.0
    %4299 = vmatpush2.xpose.msra.mxu0 0.0
    %4300 = vmatprep.subr.mxu0 0.0
    %4301 = vmatpush2.xpose.msra.mxu0 0.0
    %4302 = vmatprep.subr.mxu0 0.0
    %4303 = vmatpush2.xpose.msra.mxu0 0.0
    %4304 = vmatprep.subr.mxu0 0.0
    %4305 = vmatpush2.xpose.msra.mxu0 0.0
    %4306 = vmatprep.subr.mxu0 0.0
    %4307 = vmatpush2.xpose.msra.mxu0 0.0
    %4308 = vmatprep.subr.mxu0 0.0
    %4309 = vmatpush2.xpose.msra.mxu0 0.0
    %4310 = vmatprep.subr.mxu0 0.0
    %4311 = vmatpush2.xpose.msra.mxu0 0.0
    %4312 = vmatprep.subr.mxu0 0.0
    %4313 = vmatpush2.xpose.msra.mxu0 0.0
    %4314 = vmatprep.subr.mxu0 0.0
    %4315 = vmatpush2.xpose.msra.mxu0 0.0
    %4316 = vmatprep.subr.mxu0 0.0
    %4317 = vmatpush2.xpose.msra.mxu0 0.0
    %4318 = vmatprep.subr.mxu0 0.0
    %4319 = vmatpush2.xpose.msra.mxu0 0.0
    %4320 = vmatprep.subr.mxu0 0.0
    %4321 = vmatpush2.xpose.msra.mxu0 0.0
    %4322 = vmatprep.subr.mxu0 0.0
    %4323 = vmatpush2.xpose.msra.mxu0 0.0
    %4324 = vmatprep.subr.mxu0 0.0
    %4325 = vmatpush2.xpose.msra.mxu0 0.0
    %4326 = vmatprep.subr.mxu0 0.0
    %4327 = vmatpush2.xpose.msra.mxu0 0.0
    %4328 = vmatprep.mubr.f32.mxu0 0.0
    %4329 = vmatmul.mubr.f32.gmra.mxu0 %v3511
    %v4330 = vpop.f32.mrf.mxu0
    %v4331 = vadd.f32 0.0, %v4330
    %v4332 = vpop.f32.mrf.mxu0
    %4333 = vdwg.mxu0
    %v4334 = vmul.f32 %v4331, 0.25
    %v4335 = vsel %vm3418, %v4334, -inf
    %4336 = vmax.xlane.f32.xlu0 %v4335
    %v4337 = vpop.xlane.xlu0 %4336
    %v4338 = vsub.f32 %v4334, %v4337
    %v4339 = vmul.f32 %v4338, 1.442695
    %v4340 = vpow.pop %v4339
    %v4341 = vsel %vm3418, %v4340, 0.0
    %4342 = vadd.xlane.f32.xlu0 %v4341
    %v4343 = vpop.xlane.xlu0 %4342
    %v4344 = vrcp.pop %v4343
    %v4345 = vmul.f32 %v4340, %v4344
    %4346 = vrot.lane.b32.xlu0 %v4097, 80
    %v4347 = vpop.permute.xlu0 %4346
    %v4350 = vsel %vm450, %v4345, 0
    %4352 = vmatprep.subr.mxu0 0.0
    %4353 = vmatpush1.msra.mxu0 0.0
    %4354 = vmatprep.subr.mxu0 0.0
    %4355 = vmatpush1.msra.mxu0 0.0
    %4356 = vmatprep.subr.mxu0 0.0
    %4357 = vmatpush1.msra.mxu0 0.0
    %4358 = vmatprep.subr.mxu0 0.0
    %4359 = vmatpush1.msra.mxu0 0.0
    %4360 = vmatprep.subr.mxu0 0.0
    %4361 = vmatpush1.msra.mxu0 0.0
    %4362 = vmatprep.subr.mxu0 0.0
    %4363 = vmatpush1.msra.mxu0 0.0
    %4364 = vmatprep.subr.mxu0 0.0
    %4365 = vmatpush1.msra.mxu0 0.0
    %4366 = vmatprep.subr.mxu0 0.0
    %4367 = vmatpush1.msra.mxu0 0.0
    %4368 = vmatprep.subr.mxu0 0.0
    %4369 = vmatpush1.msra.mxu0 0.0
    %4370 = vmatprep.subr.mxu0 0.0
    %4371 = vmatpush1.msra.mxu0 0.0
    %4372 = vmatprep.subr.mxu0 0.0
    %4373 = vmatpush1.msra.mxu0 0.0
    %4374 = vmatprep.subr.mxu0 0.0
    %4375 = vmatpush1.msra.mxu0 0.0
    %4376 = vmatprep.subr.mxu0 0.0
    %4377 = vmatpush1.msra.mxu0 0.0
    %4378 = vmatprep.subr.mxu0 0.0
    %4379 = vmatpush1.msra.mxu0 0.0
    %4380 = vmatprep.subr.mxu0 0.0
    %4381 = vmatpush1.msra.mxu0 0.0
    %4382 = vmatprep.subr.mxu0 0.0
    %4383 = vmatpush1.msra.mxu0 %v4347
    %4384 = vmatprep.subr.mxu0 0.0
    %4385 = vmatpush2.msra.mxu0 0.0
    %4386 = vmatprep.subr.mxu0 0.0
    %4387 = vmatpush2.msra.mxu0 0.0
    %4388 = vmatprep.subr.mxu0 0.0
    %4389 = vmatpush2.msra.mxu0 0.0
    %4390 = vmatprep.subr.mxu0 0.0
    %4391 = vmatpush2.msra.mxu0 0.0
    %4392 = vmatprep.subr.mxu0 0.0
    %4393 = vmatpush2.msra.mxu0 0.0
    %4394 = vmatprep.subr.mxu0 0.0
    %4395 = vmatpush2.msra.mxu0 0.0
    %4396 = vmatprep.subr.mxu0 0.0
    %4397 = vmatpush2.msra.mxu0 0.0
    %4398 = vmatprep.subr.mxu0 0.0
    %4399 = vmatpush2.msra.mxu0 0.0
    %4400 = vmatprep.subr.mxu0 0.0
    %4401 = vmatpush2.msra.mxu0 0.0
    %4402 = vmatprep.subr.mxu0 0.0
    %4403 = vmatpush2.msra.mxu0 0.0
    %4404 = vmatprep.subr.mxu0 0.0
    %4405 = vmatpush2.msra.mxu0 0.0
    %4406 = vmatprep.subr.mxu0 0.0
    %4407 = vmatpush2.msra.mxu0 0.0
    %4408 = vmatprep.subr.mxu0 0.0
    %4409 = vmatpush2.msra.mxu0 0.0
    %4410 = vmatprep.subr.mxu0 0.0
    %4411 = vmatpush2.msra.mxu0 0.0
    %4412 = vmatprep.subr.mxu0 0.0
    %4413 = vmatpush2.msra.mxu0 0.0
    %4414 = vmatprep.subr.mxu0 0.0
    %4415 = vmatpush2.msra.mxu0 0.0
    %4416 = vmatprep.mubr.f32.mxu0 0.0
    %4417 = vmatmul.mubr.f32.gmra.mxu0 %v4350
    %v4418 = vpop.f32.mrf.mxu0
    %v4419 = vadd.f32 0.0, %v4418
    %v4420 = vpop.f32.mrf.mxu0
    %4421 = vdwg.mxu0
    %v4423 = vsel %vm118, %v4419, 0
    %4425 = vmatprep.subr.mxu0 0.0
    %4426 = vmatpush1.msra.mxu0 0.0
    %4427 = vmatprep.subr.mxu0 0.0
    %4428 = vmatpush1.msra.mxu0 0.0
    %4429 = vmatprep.subr.mxu0 0.0
    %4430 = vmatpush1.msra.mxu0 0.0
    %4431 = vmatprep.subr.mxu0 0.0
    %4432 = vmatpush1.msra.mxu0 0.0
    %4433 = vmatprep.subr.mxu0 0.0
    %4434 = vmatpush1.msra.mxu0 0.0
    %4435 = vmatprep.subr.mxu0 0.0
    %4436 = vmatpush1.msra.mxu0 0.0
    %4437 = vmatprep.subr.mxu0 0.0
    %4438 = vmatpush1.msra.mxu0 0.0
    %4439 = vmatprep.subr.mxu0 0.0
    %4440 = vmatpush1.msra.mxu0 0.0
    %4441 = vmatprep.subr.mxu0 0.0
    %4442 = vmatpush1.msra.mxu0 0.0
    %4443 = vmatprep.subr.mxu0 0.0
    %4444 = vmatpush1.msra.mxu0 0.0
    %4445 = vmatprep.subr.mxu0 0.0
    %4446 = vmatpush1.msra.mxu0 0.0
    %4447 = vmatprep.subr.mxu0 0.0
    %4448 = vmatpush1.msra.mxu0 0.0
    %4449 = vmatprep.subr.mxu0 0.0
    %4450 = vmatpush1.msra.mxu0 0.0
    %4451 = vmatprep.subr.mxu0 0.0
    %4452 = vmatpush1.msra.mxu0 0.0
    %4453 = vmatprep.subr.mxu0 0.0
    %4454 = vmatpush1.msra.mxu0 %v3103
    %4455 = vmatprep.subr.mxu0 0.0
    %4456 = vmatpush1.msra.mxu0 %v3102
    %4457 = vmatprep.subr.mxu0 0.0
    %4458 = vmatpush2.msra.mxu0 0.0
    %4459 = vmatprep.subr.mxu0 0.0
    %4460 = vmatpush2.msra.mxu0 0.0
    %4461 = vmatprep.subr.mxu0 0.0
    %4462 = vmatpush2.msra.mxu0 0.0
    %4463 = vmatprep.subr.mxu0 0.0
    %4464 = vmatpush2.msra.mxu0 0.0
    %4465 = vmatprep.subr.mxu0 0.0
    %4466 = vmatpush2.msra.mxu0 0.0
    %4467 = vmatprep.subr.mxu0 0.0
    %4468 = vmatpush2.msra.mxu0 0.0
    %4469 = vmatprep.subr.mxu0 0.0
    %4470 = vmatpush2.msra.mxu0 0.0
    %4471 = vmatprep.subr.mxu0 0.0
    %4472 = vmatpush2.msra.mxu0 0.0
    %4473 = vmatprep.subr.mxu0 0.0
    %4474 = vmatpush2.msra.mxu0 0.0
    %4475 = vmatprep.subr.mxu0 0.0
    %4476 = vmatpush2.msra.mxu0 0.0
    %4477 = vmatprep.subr.mxu0 0.0
    %4478 = vmatpush2.msra.mxu0 0.0
    %4479 = vmatprep.subr.mxu0 0.0
    %4480 = vmatpush2.msra.mxu0 0.0
    %4481 = vmatprep.subr.mxu0 0.0
    %4482 = vmatpush2.msra.mxu0 0.0
    %4483 = vmatprep.subr.mxu0 0.0
    %4484 = vmatpush2.msra.mxu0 0.0
    %4485 = vmatprep.subr.mxu0 0.0
    %4486 = vmatpush2.msra.mxu0 0.0
    %4487 = vmatprep.subr.mxu0 0.0
    %4488 = vmatpush2.msra.mxu0 0.0
    %4489 = vmatprep.mubr.f32.mxu0 0.0
    %4490 = vmatmul.mubr.f32.gmra.mxu0 %v4423
    %v4491 = vpop.f32.mrf.mxu0
    %v4492 = vadd.f32 0.0, %v4491
    %v4493 = vpop.f32.mrf.mxu0
    %4494 = vdwg.mxu0
    %v4496 = vsel %vm118, %v4257, 0
    %4498 = vmatprep.subr.mxu0 0.0
    %4499 = vmatpush1.msra.mxu0 0.0
    %4500 = vmatprep.subr.mxu0 0.0
    %4501 = vmatpush1.msra.mxu0 0.0
    %4502 = vmatprep.subr.mxu0 0.0
    %4503 = vmatpush1.msra.mxu0 0.0
    %4504 = vmatprep.subr.mxu0 0.0
    %4505 = vmatpush1.msra.mxu0 0.0
    %4506 = vmatprep.subr.mxu0 0.0
    %4507 = vmatpush1.msra.mxu0 0.0
    %4508 = vmatprep.subr.mxu0 0.0
    %4509 = vmatpush1.msra.mxu0 0.0
    %4510 = vmatprep.subr.mxu0 0.0
    %4511 = vmatpush1.msra.mxu0 0.0
    %4512 = vmatprep.subr.mxu0 0.0
    %4513 = vmatpush1.msra.mxu0 0.0
    %4514 = vmatprep.subr.mxu0 0.0
    %4515 = vmatpush1.msra.mxu0 0.0
    %4516 = vmatprep.subr.mxu0 0.0
    %4517 = vmatpush1.msra.mxu0 0.0
    %4518 = vmatprep.subr.mxu0 0.0
    %4519 = vmatpush1.msra.mxu0 0.0
    %4520 = vmatprep.subr.mxu0 0.0
    %4521 = vmatpush1.msra.mxu0 0.0
    %4522 = vmatprep.subr.mxu0 0.0
    %4523 = vmatpush1.msra.mxu0 0.0
    %4524 = vmatprep.subr.mxu0 0.0
    %4525 = vmatpush1.msra.mxu0 0.0
    %4526 = vmatprep.subr.mxu0 0.0
    %4527 = vmatpush1.msra.mxu0 %v3101
    %4528 = vmatprep.subr.mxu0 0.0
    %4529 = vmatpush1.msra.mxu0 %v3100
    %4530 = vmatprep.subr.mxu0 0.0
    %4531 = vmatpush2.msra.mxu0 0.0
    %4532 = vmatprep.subr.mxu0 0.0
    %4533 = vmatpush2.msra.mxu0 0.0
    %4534 = vmatprep.subr.mxu0 0.0
    %4535 = vmatpush2.msra.mxu0 0.0
    %4536 = vmatprep.subr.mxu0 0.0
    %4537 = vmatpush2.msra.mxu0 0.0
    %4538 = vmatprep.subr.mxu0 0.0
    %4539 = vmatpush2.msra.mxu0 0.0
    %4540 = vmatprep.subr.mxu0 0.0
    %4541 = vmatpush2.msra.mxu0 0.0
    %4542 = vmatprep.subr.mxu0 0.0
    %4543 = vmatpush2.msra.mxu0 0.0
    %4544 = vmatprep.subr.mxu0 0.0
    %4545 = vmatpush2.msra.mxu0 0.0
    %4546 = vmatprep.subr.mxu0 0.0
    %4547 = vmatpush2.msra.mxu0 0.0
    %4548 = vmatprep.subr.mxu0 0.0
    %4549 = vmatpush2.msra.mxu0 0.0
    %4550 = vmatprep.subr.mxu0 0.0
    %4551 = vmatpush2.msra.mxu0 0.0
    %4552 = vmatprep.subr.mxu0 0.0
    %4553 = vmatpush2.msra.mxu0 0.0
    %4554 = vmatprep.subr.mxu0 0.0
    %4555 = vmatpush2.msra.mxu0 0.0
    %4556 = vmatprep.subr.mxu0 0.0
    %4557 = vmatpush2.msra.mxu0 0.0
    %4558 = vmatprep.subr.mxu0 0.0
    %4559 = vmatpush2.msra.mxu0 0.0
    %4560 = vmatprep.subr.mxu0 0.0
    %4561 = vmatpush2.msra.mxu0 0.0
    %4562 = vmatprep.mubr.f32.mxu0 0.0
    %4563 = vmatmul.mubr.f32.gmra.mxu0 %v4496
    %v4564 = vpop.f32.mrf.mxu0
    %v4565 = vadd.f32 %v4492, %v4564
    %v4566 = vpop.f32.mrf.mxu0
    %4567 = vdwg.mxu0
    %v4568 = vadd.f32 %v4565, %v3822
    %v4569 = vadd.f32 %v3117, %v4568
    %v4570 = vsel %vm3118, %v4569, 0.0
    %4571 = vadd.xlane.f32.xlu0 %v4570
    %v4572 = vpop.xlane.xlu0 %4571
    %v4573 = vmul.f32 %v4572, %v227
    %v4574 = vmul.f32 %v4569, %v4569
    %v4575 = vsel %vm3118, %v4574, 0.0
    %4576 = vadd.xlane.f32.xlu0 %v4575
    %v4577 = vpop.xlane.xlu0 %4576
    %v4578 = vmul.f32 %v4577, %v227
    %v4579 = vmul.f32 %v4573, %v4573
    %v4580 = vsub.f32 %v4578, %v4579
    %v4581 = vsub.f32 %v4569, %v4573
    %v4582 = vadd.f32 %v4580, 1e-05
    %v4583 = vrsqrt.pop %v4582
    %v4584 = vmul.f32 %v4581, %v4583
    %v4585 = vmul.f32 %v4584, %v3843
    %v4586 = vadd.f32 %v4585, %v3848
    %v4588 = vsel %vm220, %v4586, 0
    %4590 = vmatprep.subr.mxu0 0.0
    %4591 = vmatpush1.msra.mxu0 0.0
    %4592 = vmatprep.subr.mxu0 0.0
    %4593 = vmatpush1.msra.mxu0 0.0
    %4594 = vmatprep.subr.mxu0 0.0
    %4595 = vmatpush1.msra.mxu0 0.0
    %4596 = vmatprep.subr.mxu0 0.0
    %4597 = vmatpush1.msra.mxu0 0.0
    %4598 = vmatprep.subr.mxu0 0.0
    %4599 = vmatpush1.msra.mxu0 0.0
    %4600 = vmatprep.subr.mxu0 0.0
    %4601 = vmatpush1.msra.mxu0 0.0
    %4602 = vmatprep.subr.mxu0 0.0
    %4603 = vmatpush1.msra.mxu0 0.0
    %4604 = vmatprep.subr.mxu0 0.0
    %4605 = vmatpush1.msra.mxu0 0.0
    %4606 = vmatprep.subr.mxu0 0.0
    %4607 = vmatpush1.msra.mxu0 0.0
    %4608 = vmatprep.subr.mxu0 0.0
    %4609 = vmatpush1.msra.mxu0 0.0
    %4610 = vmatprep.subr.mxu0 0.0
    %4611 = vmatpush1.msra.mxu0 0.0
    %4612 = vmatprep.subr.mxu0 0.0
    %4613 = vmatpush1.msra.mxu0 0.0
    %4614 = vmatprep.subr.mxu0 0.0
    %4615 = vmatpush1.msra.mxu0 %v3108
    %4616 = vmatprep.subr.mxu0 0.0
    %4617 = vmatpush1.msra.mxu0 %v3107
    %4618 = vmatprep.subr.mxu0 0.0
    %4619 = vmatpush1.msra.mxu0 %v3106
    %4620 = vmatprep.subr.mxu0 0.0
    %4621 = vmatpush1.msra.mxu0 %v3105
    %4622 = vmatprep.subr.mxu0 0.0
    %4623 = vmatpush2.msra.mxu0 0.0
    %4624 = vmatprep.subr.mxu0 0.0
    %4625 = vmatpush2.msra.mxu0 0.0
    %4626 = vmatprep.subr.mxu0 0.0
    %4627 = vmatpush2.msra.mxu0 0.0
    %4628 = vmatprep.subr.mxu0 0.0
    %4629 = vmatpush2.msra.mxu0 0.0
    %4630 = vmatprep.subr.mxu0 0.0
    %4631 = vmatpush2.msra.mxu0 0.0
    %4632 = vmatprep.subr.mxu0 0.0
    %4633 = vmatpush2.msra.mxu0 0.0
    %4634 = vmatprep.subr.mxu0 0.0
    %4635 = vmatpush2.msra.mxu0 0.0
    %4636 = vmatprep.subr.mxu0 0.0
    %4637 = vmatpush2.msra.mxu0 0.0
    %4638 = vmatprep.subr.mxu0 0.0
    %4639 = vmatpush2.msra.mxu0 0.0
    %4640 = vmatprep.subr.mxu0 0.0
    %4641 = vmatpush2.msra.mxu0 0.0
    %4642 = vmatprep.subr.mxu0 0.0
    %4643 = vmatpush2.msra.mxu0 0.0
    %4644 = vmatprep.subr.mxu0 0.0
    %4645 = vmatpush2.msra.mxu0 0.0
    %4646 = vmatprep.subr.mxu0 0.0
    %4647 = vmatpush2.msra.mxu0 0.0
    %4648 = vmatprep.subr.mxu0 0.0
    %4649 = vmatpush2.msra.mxu0 0.0
    %4650 = vmatprep.subr.mxu0 0.0
    %4651 = vmatpush2.msra.mxu0 0.0
    %4652 = vmatprep.subr.mxu0 0.0
    %4653 = vmatpush2.msra.mxu0 0.0
    %4654 = vmatprep.mubr.f32.mxu0 0.0
    %4655 = vmatmul.mubr.f32.gmra.mxu0 %v4588
    %v4656 = vpop.f32.mrf.mxu0
    %v4657 = vadd.f32 %v3853, %v4656
    %v4658 = vpop.f32.mrf.mxu0
    %4659 = vdwg.mxu0
    %v4660 = vmax.f32 %v4657, 0.0
    %v4662 = vsel %vm220, %v4660, 0
    %4664 = vmatprep.subr.mxu0 0.0
    %4665 = vmatpush1.msra.mxu0 0.0
    %4666 = vmatprep.subr.mxu0 0.0
    %4667 = vmatpush1.msra.mxu0 0.0
    %4668 = vmatprep.subr.mxu0 0.0
    %4669 = vmatpush1.msra.mxu0 0.0
    %4670 = vmatprep.subr.mxu0 0.0
    %4671 = vmatpush1.msra.mxu0 0.0
    %4672 = vmatprep.subr.mxu0 0.0
    %4673 = vmatpush1.msra.mxu0 0.0
    %4674 = vmatprep.subr.mxu0 0.0
    %4675 = vmatpush1.msra.mxu0 0.0
    %4676 = vmatprep.subr.mxu0 0.0
    %4677 = vmatpush1.msra.mxu0 0.0
    %4678 = vmatprep.subr.mxu0 0.0
    %4679 = vmatpush1.msra.mxu0 0.0
    %4680 = vmatprep.subr.mxu0 0.0
    %4681 = vmatpush1.msra.mxu0 0.0
    %4682 = vmatprep.subr.mxu0 0.0
    %4683 = vmatpush1.msra.mxu0 0.0
    %4684 = vmatprep.subr.mxu0 0.0
    %4685 = vmatpush1.msra.mxu0 0.0
    %4686 = vmatprep.subr.mxu0 0.0
    %4687 = vmatpush1.msra.mxu0 0.0
    %4688 = vmatprep.subr.mxu0 0.0
    %4689 = vmatpush1.msra.mxu0 %v3113
    %4690 = vmatprep.subr.mxu0 0.0
    %4691 = vmatpush1.msra.mxu0 %v3112
    %4692 = vmatprep.subr.mxu0 0.0
    %4693 = vmatpush1.msra.mxu0 %v3111
    %4694 = vmatprep.subr.mxu0 0.0
    %4695 = vmatpush1.msra.mxu0 %v3110
    %4696 = vmatprep.subr.mxu0 0.0
    %4697 = vmatpush2.msra.mxu0 0.0
    %4698 = vmatprep.subr.mxu0 0.0
    %4699 = vmatpush2.msra.mxu0 0.0
    %4700 = vmatprep.subr.mxu0 0.0
    %4701 = vmatpush2.msra.mxu0 0.0
    %4702 = vmatprep.subr.mxu0 0.0
    %4703 = vmatpush2.msra.mxu0 0.0
    %4704 = vmatprep.subr.mxu0 0.0
    %4705 = vmatpush2.msra.mxu0 0.0
    %4706 = vmatprep.subr.mxu0 0.0
    %4707 = vmatpush2.msra.mxu0 0.0
    %4708 = vmatprep.subr.mxu0 0.0
    %4709 = vmatpush2.msra.mxu0 0.0
    %4710 = vmatprep.subr.mxu0 0.0
    %4711 = vmatpush2.msra.mxu0 0.0
    %4712 = vmatprep.subr.mxu0 0.0
    %4713 = vmatpush2.msra.mxu0 0.0
    %4714 = vmatprep.subr.mxu0 0.0
    %4715 = vmatpush2.msra.mxu0 0.0
    %4716 = vmatprep.subr.mxu0 0.0
    %4717 = vmatpush2.msra.mxu0 0.0
    %4718 = vmatprep.subr.mxu0 0.0
    %4719 = vmatpush2.msra.mxu0 0.0
    %4720 = vmatprep.subr.mxu0 0.0
    %4721 = vmatpush2.msra.mxu0 0.0
    %4722 = vmatprep.subr.mxu0 0.0
    %4723 = vmatpush2.msra.mxu0 0.0
    %4724 = vmatprep.subr.mxu0 0.0
    %4725 = vmatpush2.msra.mxu0 0.0
    %4726 = vmatprep.subr.mxu0 0.0
    %4727 = vmatpush2.msra.mxu0 0.0
    %4728 = vmatprep.mubr.f32.mxu0 0.0
    %4729 = vmatmul.mubr.f32.gmra.mxu0 %v4662
    %v4730 = vpop.f32.mrf.mxu0
    %v4731 = vadd.f32 %v3931, %v4730
    %v4732 = vpop.f32.mrf.mxu0
    %4733 = vdwg.mxu0
    %v4734 = vadd.f32 %v4569, %v4731
    %s4735 = scalar_lea.vmem %s4, 96
    %v4736 = vld [vmem:[%s4735] sm:$0xff]
    %v4737 = vld [vmem:[%s4735 + $0x8] sm:$0xff]
    %v4738 = vld [vmem:[%s4735 + $0x10] sm:$0xff]
    %v4739 = vld [vmem:[%s4735 + $0x18] sm:$0xff]
    %s4740 = scalar_lea.vmem [#allocation7], 288
    %v4741 = vld [vmem:[%s4740] sm:$0xff]
    %v4742 = vld [vmem:[%s4740 + $0x8] sm:$0xff]
    %v4743 = vld [vmem:[%s4740 + $0x10] sm:$0xff]
    %v4744 = vld [vmem:[%s4740 + $0x18] sm:$0xff]
    %s4745 = scalar_lea.vmem [#allocation7], 320
    %v4746 = vld [vmem:[%s4745] sm:$0xff]
    %v4747 = vld [vmem:[%s4745 + $0x8] sm:$0xff]
    %v4748 = vld [vmem:[%s4745 + $0x10] sm:$0xff]
    %v4749 = vld [vmem:[%s4745 + $0x18] sm:$0xff]
    %s4750 = scalar_lea.vmem [#allocation7], 352
    %v4751 = vld [vmem:[%s4750] sm:$0xff]
    %v4752 = vld [vmem:[%s4750 + $0x8] sm:$0xff]
    %v4753 = vld [vmem:[%s4750 + $0x10] sm:$0xff]
    %v4754 = vld [vmem:[%s4750 + $0x18] sm:$0xff]
    %s4755 = scalar_lea.vmem [#allocation8], 48
    %v4756 = vld [vmem:[%s4755] sm:$0xff]
    %v4757 = vld [vmem:[%s4755 + $0x8] sm:$0x3]
    %v4758 = vsel %vm3118, %v4005, 0.0
    %4759 = vadd.xlane.f32.xlu0 %v4758
    %v4760 = vpop.xlane.xlu0 %4759
    %v4761 = vmul.f32 %v4760, %v227
    %v4762 = vmul.f32 %v4005, %v4005
    %v4763 = vsel %vm3118, %v4762, 0.0
    %4764 = vadd.xlane.f32.xlu0 %v4763
    %v4765 = vpop.xlane.xlu0 %4764
    %v4766 = vmul.f32 %v4765, %v227
    %v4767 = vmul.f32 %v4761, %v4761
    %v4768 = vsub.f32 %v4766, %v4767
    %v4769 = vsub.f32 %v4005, %v4761
    %v4770 = vadd.f32 %v4768, 1e-05
    %v4771 = vrsqrt.pop %v4770
    %v4772 = vmul.f32 %v4769, %v4771
    %v4773 = vlaneseq
    %v4774 = vshrl.u32 %v4773, 7
    %v4775 = vsub.s32 4, %v4774
    %v4776 = vrot.slane %v4756, %v4775
    %v4777 = vmul.f32 %v4772, %v4776
    %v4778 = vlaneseq
    %v4779 = vshrl.u32 %v4778, 7
    %v4780 = vsub.s32 5, %v4779
    %v4781 = vrot.slane %v4756, %v4780
    %v4782 = vadd.f32 %v4777, %v4781
    %v4784 = vsel %vm220, %v4782, 0
    %4786 = vmatprep.subr.mxu0 0.0
    %4787 = vmatpush1.msra.mxu0 0.0
    %4788 = vmatprep.subr.mxu0 0.0
    %4789 = vmatpush1.msra.mxu0 0.0
    %4790 = vmatprep.subr.mxu0 0.0
    %4791 = vmatpush1.msra.mxu0 0.0
    %4792 = vmatprep.subr.mxu0 0.0
    %4793 = vmatpush1.msra.mxu0 0.0
    %4794 = vmatprep.subr.mxu0 0.0
    %4795 = vmatpush1.msra.mxu0 0.0
    %4796 = vmatprep.subr.mxu0 0.0
    %4797 = vmatpush1.msra.mxu0 0.0
    %4798 = vmatprep.subr.mxu0 0.0
    %4799 = vmatpush1.msra.mxu0 0.0
    %4800 = vmatprep.subr.mxu0 0.0
    %4801 = vmatpush1.msra.mxu0 0.0
    %4802 = vmatprep.subr.mxu0 0.0
    %4803 = vmatpush1.msra.mxu0 0.0
    %4804 = vmatprep.subr.mxu0 0.0
    %4805 = vmatpush1.msra.mxu0 0.0
    %4806 = vmatprep.subr.mxu0 0.0
    %4807 = vmatpush1.msra.mxu0 0.0
    %4808 = vmatprep.subr.mxu0 0.0
    %4809 = vmatpush1.msra.mxu0 0.0
    %4810 = vmatprep.subr.mxu0 0.0
    %4811 = vmatpush1.msra.mxu0 %v4739
    %4812 = vmatprep.subr.mxu0 0.0
    %4813 = vmatpush1.msra.mxu0 %v4738
    %4814 = vmatprep.subr.mxu0 0.0
    %4815 = vmatpush1.msra.mxu0 %v4737
    %4816 = vmatprep.subr.mxu0 0.0
    %4817 = vmatpush1.msra.mxu0 %v4736
    %4818 = vmatprep.subr.mxu0 0.0
    %4819 = vmatpush2.msra.mxu0 0.0
    %4820 = vmatprep.subr.mxu0 0.0
    %4821 = vmatpush2.msra.mxu0 0.0
    %4822 = vmatprep.subr.mxu0 0.0
    %4823 = vmatpush2.msra.mxu0 0.0
    %4824 = vmatprep.subr.mxu0 0.0
    %4825 = vmatpush2.msra.mxu0 0.0
    %4826 = vmatprep.subr.mxu0 0.0
    %4827 = vmatpush2.msra.mxu0 0.0
    %4828 = vmatprep.subr.mxu0 0.0
    %4829 = vmatpush2.msra.mxu0 0.0
    %4830 = vmatprep.subr.mxu0 0.0
    %4831 = vmatpush2.msra.mxu0 0.0
    %4832 = vmatprep.subr.mxu0 0.0
    %4833 = vmatpush2.msra.mxu0 0.0
    %4834 = vmatprep.subr.mxu0 0.0
    %4835 = vmatpush2.msra.mxu0 0.0
    %4836 = vmatprep.subr.mxu0 0.0
    %4837 = vmatpush2.msra.mxu0 0.0
    %4838 = vmatprep.subr.mxu0 0.0
    %4839 = vmatpush2.msra.mxu0 0.0
    %4840 = vmatprep.subr.mxu0 0.0
    %4841 = vmatpush2.msra.mxu0 0.0
    %4842 = vmatprep.subr.mxu0 0.0
    %4843 = vmatpush2.msra.mxu0 0.0
    %4844 = vmatprep.subr.mxu0 0.0
    %4845 = vmatpush2.msra.mxu0 0.0
    %4846 = vmatprep.subr.mxu0 0.0
    %4847 = vmatpush2.msra.mxu0 0.0
    %4848 = vmatprep.subr.mxu0 0.0
    %4849 = vmatpush2.msra.mxu0 0.0
    %4850 = vmatprep.mubr.f32.mxu0 0.0
    %4851 = vmatmul.mubr.f32.gmra.mxu0 %v4784
    %v4852 = vpop.f32.mrf.mxu0
    %v4853 = vadd.f32 0.0, %v4852
    %v4854 = vpop.f32.mrf.mxu0
    %4855 = vdwg.mxu0
    %v4856 = vlaneseq
    %v4857 = vshrl.u32 %v4856, 7
    %v4858 = vsub.s32 0, %v4857
    %v4859 = vrot.slane %v4756, %v4858
    %v4860 = vadd.f32 %v4853, %v4859
    %v4861 = vlaneseq
    %v4862 = vshrl.u32 %v4861, 7
    %v4863 = vsub.s32 1, %v4862
    %v4864 = vrot.slane %v4756, %v4863
    %4866 = vrot.lane.b32.xlu0 %v4864, 32
    %v4867 = vpop.permute.xlu0 %4866
    %v4869 = vadd.f32 %v4853, %v4867
    %v4870 = vlaneseq
    %v4871 = vshrl.u32 %v4870, 7
    %v4872 = vsub.s32 2, %v4871
    %v4873 = vrot.slane %v4756, %v4872
    %4875 = vrot.lane.b32.xlu0 %v4873, 64
    %v4876 = vpop.permute.xlu0 %4875
    %v4878 = vadd.f32 %v4853, %v4876
    %4880 = vrot.lane.b32.xlu0 %v4869, 96
    %v4881 = vpop.permute.xlu0 %4880
    %v4883 = vsel %vm118, %v4860, 0
    %v4885 = vsel %vm118, %v4881, 0
    %4887 = vmatprep.subr.mxu0 0.0
    %4888 = vmatpush1.xpose.msra.mxu0 0.0
    %4889 = vmatprep.subr.mxu0 0.0
    %4890 = vmatpush1.xpose.msra.mxu0 0.0
    %4891 = vmatprep.subr.mxu0 0.0
    %4892 = vmatpush1.xpose.msra.mxu0 0.0
    %4893 = vmatprep.subr.mxu0 0.0
    %4894 = vmatpush1.xpose.msra.mxu0 0.0
    %4895 = vmatprep.subr.mxu0 0.0
    %4896 = vmatpush1.xpose.msra.mxu0 0.0
    %4897 = vmatprep.subr.mxu0 0.0
    %4898 = vmatpush1.xpose.msra.mxu0 0.0
    %4899 = vmatprep.subr.mxu0 0.0
    %4900 = vmatpush1.xpose.msra.mxu0 0.0
    %4901 = vmatprep.subr.mxu0 0.0
    %4902 = vmatpush1.xpose.msra.mxu0 0.0
    %4903 = vmatprep.subr.mxu0 0.0
    %4904 = vmatpush1.xpose.msra.mxu0 0.0
    %4905 = vmatprep.subr.mxu0 0.0
    %4906 = vmatpush1.xpose.msra.mxu0 0.0
    %4907 = vmatprep.subr.mxu0 0.0
    %4908 = vmatpush1.xpose.msra.mxu0 0.0
    %4909 = vmatprep.subr.mxu0 0.0
    %4910 = vmatpush1.xpose.msra.mxu0 0.0
    %4911 = vmatprep.subr.mxu0 0.0
    %4912 = vmatpush1.xpose.msra.mxu0 0.0
    %4913 = vmatprep.subr.mxu0 0.0
    %4914 = vmatpush1.xpose.msra.mxu0 0.0
    %4915 = vmatprep.subr.mxu0 0.0
    %4916 = vmatpush1.xpose.msra.mxu0 0.0
    %4917 = vmatprep.subr.mxu0 0.0
    %4918 = vmatpush1.xpose.msra.mxu0 %v4885
    %4919 = vmatprep.subr.mxu0 0.0
    %4920 = vmatpush2.xpose.msra.mxu0 0.0
    %4921 = vmatprep.subr.mxu0 0.0
    %4922 = vmatpush2.xpose.msra.mxu0 0.0
    %4923 = vmatprep.subr.mxu0 0.0
    %4924 = vmatpush2.xpose.msra.mxu0 0.0
    %4925 = vmatprep.subr.mxu0 0.0
    %4926 = vmatpush2.xpose.msra.mxu0 0.0
    %4927 = vmatprep.subr.mxu0 0.0
    %4928 = vmatpush2.xpose.msra.mxu0 0.0
    %4929 = vmatprep.subr.mxu0 0.0
    %4930 = vmatpush2.xpose.msra.mxu0 0.0
    %4931 = vmatprep.subr.mxu0 0.0
    %4932 = vmatpush2.xpose.msra.mxu0 0.0
    %4933 = vmatprep.subr.mxu0 0.0
    %4934 = vmatpush2.xpose.msra.mxu0 0.0
    %4935 = vmatprep.subr.mxu0 0.0
    %4936 = vmatpush2.xpose.msra.mxu0 0.0
    %4937 = vmatprep.subr.mxu0 0.0
    %4938 = vmatpush2.xpose.msra.mxu0 0.0
    %4939 = vmatprep.subr.mxu0 0.0
    %4940 = vmatpush2.xpose.msra.mxu0 0.0
    %4941 = vmatprep.subr.mxu0 0.0
    %4942 = vmatpush2.xpose.msra.mxu0 0.0
    %4943 = vmatprep.subr.mxu0 0.0
    %4944 = vmatpush2.xpose.msra.mxu0 0.0
    %4945 = vmatprep.subr.mxu0 0.0
    %4946 = vmatpush2.xpose.msra.mxu0 0.0
    %4947 = vmatprep.subr.mxu0 0.0
    %4948 = vmatpush2.xpose.msra.mxu0 0.0
    %4949 = vmatprep.subr.mxu0 0.0
    %4950 = vmatpush2.xpose.msra.mxu0 0.0
    %4951 = vmatprep.mubr.f32.mxu0 0.0
    %4952 = vmatmul.mubr.f32.gmra.mxu0 %v4883
    %v4953 = vpop.f32.mrf.mxu0
    %v4954 = vadd.f32 0.0, %v4953
    %v4955 = vpop.f32.mrf.mxu0
    %4956 = vdwg.mxu0
    %v4957 = vmul.f32 %v4954, 0.25
    %vm4958 = vcmask 27648
    %v4959 = vsel %vm4958, %v4957, -inf
    %4960 = vmax.xlane.f32.xlu0 %v4959
    %v4961 = vpop.xlane.xlu0 %4960
    %v4962 = vsub.f32 %v4957, %v4961
    %v4963 = vmul.f32 %v4962, 1.442695
    %v4964 = vpow.pop %v4963
    %v4965 = vsel %vm4958, %v4964, 0.0
    %4966 = vadd.xlane.f32.xlu0 %v4965
    %v4967 = vpop.xlane.xlu0 %4966
    %v4968 = vrcp.pop %v4967
    %v4969 = vmul.f32 %v4964, %v4968
    %4971 = vrot.lane.b32.xlu0 %v4878, 64
    %v4972 = vpop.permute.xlu0 %4971
    %vm4973 = vcmask 31744
    %v4975 = vsel %vm4973, %v4969, 0
    %vm4977 = vcmask 1043456
    %v4978 = vsel %vm4977, %v4972, 0
    %4980 = vmatprep.subr.mxu0 0.0
    %4981 = vmatpush1.msra.mxu0 0.0
    %4982 = vmatprep.subr.mxu0 0.0
    %4983 = vmatpush1.msra.mxu0 0.0
    %4984 = vmatprep.subr.mxu0 0.0
    %4985 = vmatpush1.msra.mxu0 0.0
    %4986 = vmatprep.subr.mxu0 0.0
    %4987 = vmatpush1.msra.mxu0 0.0
    %4988 = vmatprep.subr.mxu0 0.0
    %4989 = vmatpush1.msra.mxu0 0.0
    %4990 = vmatprep.subr.mxu0 0.0
    %4991 = vmatpush1.msra.mxu0 0.0
    %4992 = vmatprep.subr.mxu0 0.0
    %4993 = vmatpush1.msra.mxu0 0.0
    %4994 = vmatprep.subr.mxu0 0.0
    %4995 = vmatpush1.msra.mxu0 0.0
    %4996 = vmatprep.subr.mxu0 0.0
    %4997 = vmatpush1.msra.mxu0 0.0
    %4998 = vmatprep.subr.mxu0 0.0
    %4999 = vmatpush1.msra.mxu0 0.0
    %5000 = vmatprep.subr.mxu0 0.0
    %5001 = vmatpush1.msra.mxu0 0.0
    %5002 = vmatprep.subr.mxu0 0.0
    %5003 = vmatpush1.msra.mxu0 0.0
    %5004 = vmatprep.subr.mxu0 0.0
    %5005 = vmatpush1.msra.mxu0 0.0
    %5006 = vmatprep.subr.mxu0 0.0
    %5007 = vmatpush1.msra.mxu0 0.0
    %5008 = vmatprep.subr.mxu0 0.0
    %5009 = vmatpush1.msra.mxu0 0.0
    %5010 = vmatprep.subr.mxu0 0.0
    %5011 = vmatpush1.msra.mxu0 %v4978
    %5012 = vmatprep.subr.mxu0 0.0
    %5013 = vmatpush2.msra.mxu0 0.0
    %5014 = vmatprep.subr.mxu0 0.0
    %5015 = vmatpush2.msra.mxu0 0.0
    %5016 = vmatprep.subr.mxu0 0.0
    %5017 = vmatpush2.msra.mxu0 0.0
    %5018 = vmatprep.subr.mxu0 0.0
    %5019 = vmatpush2.msra.mxu0 0.0
    %5020 = vmatprep.subr.mxu0 0.0
    %5021 = vmatpush2.msra.mxu0 0.0
    %5022 = vmatprep.subr.mxu0 0.0
    %5023 = vmatpush2.msra.mxu0 0.0
    %5024 = vmatprep.subr.mxu0 0.0
    %5025 = vmatpush2.msra.mxu0 0.0
    %5026 = vmatprep.subr.mxu0 0.0
    %5027 = vmatpush2.msra.mxu0 0.0
    %5028 = vmatprep.subr.mxu0 0.0
    %5029 = vmatpush2.msra.mxu0 0.0
    %5030 = vmatprep.subr.mxu0 0.0
    %5031 = vmatpush2.msra.mxu0 0.0
    %5032 = vmatprep.subr.mxu0 0.0
    %5033 = vmatpush2.msra.mxu0 0.0
    %5034 = vmatprep.subr.mxu0 0.0
    %5035 = vmatpush2.msra.mxu0 0.0
    %5036 = vmatprep.subr.mxu0 0.0
    %5037 = vmatpush2.msra.mxu0 0.0
    %5038 = vmatprep.subr.mxu0 0.0
    %5039 = vmatpush2.msra.mxu0 0.0
    %5040 = vmatprep.subr.mxu0 0.0
    %5041 = vmatpush2.msra.mxu0 0.0
    %5042 = vmatprep.subr.mxu0 0.0
    %5043 = vmatpush2.msra.mxu0 0.0
    %5044 = vmatprep.mubr.f32.mxu0 0.0
    %5045 = vmatmul.mubr.f32.gmra.mxu0 %v4975
    %v5046 = vpop.f32.mrf.mxu0
    %v5047 = vadd.f32 0.0, %v5046
    %v5048 = vpop.f32.mrf.mxu0
    %5049 = vdwg.mxu0
    %5050 = vrot.lane.b32.xlu0 %v4860, 112
    %v5051 = vpop.permute.xlu0 %5050
    %5052 = vrot.lane.b32.xlu0 %v4869, 80
    %v5053 = vpop.permute.xlu0 %5052
    %v5054 = vsel %vm118, %v5051, 0
    %v5056 = vsel %vm118, %v5053, 0
    %5058 = vmatprep.subr.mxu0 0.0
    %5059 = vmatpush1.xpose.msra.mxu0 0.0
    %5060 = vmatprep.subr.mxu0 0.0
    %5061 = vmatpush1.xpose.msra.mxu0 0.0
    %5062 = vmatprep.subr.mxu0 0.0
    %5063 = vmatpush1.xpose.msra.mxu0 0.0
    %5064 = vmatprep.subr.mxu0 0.0
    %5065 = vmatpush1.xpose.msra.mxu0 0.0
    %5066 = vmatprep.subr.mxu0 0.0
    %5067 = vmatpush1.xpose.msra.mxu0 0.0
    %5068 = vmatprep.subr.mxu0 0.0
    %5069 = vmatpush1.xpose.msra.mxu0 0.0
    %5070 = vmatprep.subr.mxu0 0.0
    %5071 = vmatpush1.xpose.msra.mxu0 0.0
    %5072 = vmatprep.subr.mxu0 0.0
    %5073 = vmatpush1.xpose.msra.mxu0 0.0
    %5074 = vmatprep.subr.mxu0 0.0
    %5075 = vmatpush1.xpose.msra.mxu0 0.0
    %5076 = vmatprep.subr.mxu0 0.0
    %5077 = vmatpush1.xpose.msra.mxu0 0.0
    %5078 = vmatprep.subr.mxu0 0.0
    %5079 = vmatpush1.xpose.msra.mxu0 0.0
    %5080 = vmatprep.subr.mxu0 0.0
    %5081 = vmatpush1.xpose.msra.mxu0 0.0
    %5082 = vmatprep.subr.mxu0 0.0
    %5083 = vmatpush1.xpose.msra.mxu0 0.0
    %5084 = vmatprep.subr.mxu0 0.0
    %5085 = vmatpush1.xpose.msra.mxu0 0.0
    %5086 = vmatprep.subr.mxu0 0.0
    %5087 = vmatpush1.xpose.msra.mxu0 0.0
    %5088 = vmatprep.subr.mxu0 0.0
    %5089 = vmatpush1.xpose.msra.mxu0 %v5056
    %5090 = vmatprep.subr.mxu0 0.0
    %5091 = vmatpush2.xpose.msra.mxu0 0.0
    %5092 = vmatprep.subr.mxu0 0.0
    %5093 = vmatpush2.xpose.msra.mxu0 0.0
    %5094 = vmatprep.subr.mxu0 0.0
    %5095 = vmatpush2.xpose.msra.mxu0 0.0
    %5096 = vmatprep.subr.mxu0 0.0
    %5097 = vmatpush2.xpose.msra.mxu0 0.0
    %5098 = vmatprep.subr.mxu0 0.0
    %5099 = vmatpush2.xpose.msra.mxu0 0.0
    %5100 = vmatprep.subr.mxu0 0.0
    %5101 = vmatpush2.xpose.msra.mxu0 0.0
    %5102 = vmatprep.subr.mxu0 0.0
    %5103 = vmatpush2.xpose.msra.mxu0 0.0
    %5104 = vmatprep.subr.mxu0 0.0
    %5105 = vmatpush2.xpose.msra.mxu0 0.0
    %5106 = vmatprep.subr.mxu0 0.0
    %5107 = vmatpush2.xpose.msra.mxu0 0.0
    %5108 = vmatprep.subr.mxu0 0.0
    %5109 = vmatpush2.xpose.msra.mxu0 0.0
    %5110 = vmatprep.subr.mxu0 0.0
    %5111 = vmatpush2.xpose.msra.mxu0 0.0
    %5112 = vmatprep.subr.mxu0 0.0
    %5113 = vmatpush2.xpose.msra.mxu0 0.0
    %5114 = vmatprep.subr.mxu0 0.0
    %5115 = vmatpush2.xpose.msra.mxu0 0.0
    %5116 = vmatprep.subr.mxu0 0.0
    %5117 = vmatpush2.xpose.msra.mxu0 0.0
    %5118 = vmatprep.subr.mxu0 0.0
    %5119 = vmatpush2.xpose.msra.mxu0 0.0
    %5120 = vmatprep.subr.mxu0 0.0
    %5121 = vmatpush2.xpose.msra.mxu0 0.0
    %5122 = vmatprep.mubr.f32.mxu0 0.0
    %5123 = vmatmul.mubr.f32.gmra.mxu0 %v5054
    %v5124 = vpop.f32.mrf.mxu0
    %v5125 = vadd.f32 0.0, %v5124
    %v5126 = vpop.f32.mrf.mxu0
    %5127 = vdwg.mxu0
    %v5128 = vmul.f32 %v5125, 0.25
    %v5129 = vsel %vm4958, %v5128, -inf
    %5130 = vmax.xlane.f32.xlu0 %v5129
    %v5131 = vpop.xlane.xlu0 %5130
    %v5132 = vsub.f32 %v5128, %v5131
    %v5133 = vmul.f32 %v5132, 1.442695
    %v5134 = vpow.pop %v5133
    %v5135 = vsel %vm4958, %v5134, 0.0
    %5136 = vadd.xlane.f32.xlu0 %v5135
    %v5137 = vpop.xlane.xlu0 %5136
    %v5138 = vrcp.pop %v5137
    %v5139 = vmul.f32 %v5134, %v5138
    %5140 = vrot.lane.b32.xlu0 %v4878, 48
    %v5141 = vpop.permute.xlu0 %5140
    %v5143 = vsel %vm4973, %v5139, 0
    %v5145 = vsel %vm4977, %v5141, 0
    %5147 = vmatprep.subr.mxu0 0.0
    %5148 = vmatpush1.msra.mxu0 0.0
    %5149 = vmatprep.subr.mxu0 0.0
    %5150 = vmatpush1.msra.mxu0 0.0
    %5151 = vmatprep.subr.mxu0 0.0
    %5152 = vmatpush1.msra.mxu0 0.0
    %5153 = vmatprep.subr.mxu0 0.0
    %5154 = vmatpush1.msra.mxu0 0.0
    %5155 = vmatprep.subr.mxu0 0.0
    %5156 = vmatpush1.msra.mxu0 0.0
    %5157 = vmatprep.subr.mxu0 0.0
    %5158 = vmatpush1.msra.mxu0 0.0
    %5159 = vmatprep.subr.mxu0 0.0
    %5160 = vmatpush1.msra.mxu0 0.0
    %5161 = vmatprep.subr.mxu0 0.0
    %5162 = vmatpush1.msra.mxu0 0.0
    %5163 = vmatprep.subr.mxu0 0.0
    %5164 = vmatpush1.msra.mxu0 0.0
    %5165 = vmatprep.subr.mxu0 0.0
    %5166 = vmatpush1.msra.mxu0 0.0
    %5167 = vmatprep.subr.mxu0 0.0
    %5168 = vmatpush1.msra.mxu0 0.0
    %5169 = vmatprep.subr.mxu0 0.0
    %5170 = vmatpush1.msra.mxu0 0.0
    %5171 = vmatprep.subr.mxu0 0.0
    %5172 = vmatpush1.msra.mxu0 0.0
    %5173 = vmatprep.subr.mxu0 0.0
    %5174 = vmatpush1.msra.mxu0 0.0
    %5175 = vmatprep.subr.mxu0 0.0
    %5176 = vmatpush1.msra.mxu0 0.0
    %5177 = vmatprep.subr.mxu0 0.0
    %5178 = vmatpush1.msra.mxu0 %v5145
    %5179 = vmatprep.subr.mxu0 0.0
    %5180 = vmatpush2.msra.mxu0 0.0
    %5181 = vmatprep.subr.mxu0 0.0
    %5182 = vmatpush2.msra.mxu0 0.0
    %5183 = vmatprep.subr.mxu0 0.0
    %5184 = vmatpush2.msra.mxu0 0.0
    %5185 = vmatprep.subr.mxu0 0.0
    %5186 = vmatpush2.msra.mxu0 0.0
    %5187 = vmatprep.subr.mxu0 0.0
    %5188 = vmatpush2.msra.mxu0 0.0
    %5189 = vmatprep.subr.mxu0 0.0
    %5190 = vmatpush2.msra.mxu0 0.0
    %5191 = vmatprep.subr.mxu0 0.0
    %5192 = vmatpush2.msra.mxu0 0.0
    %5193 = vmatprep.subr.mxu0 0.0
    %5194 = vmatpush2.msra.mxu0 0.0
    %5195 = vmatprep.subr.mxu0 0.0
    %5196 = vmatpush2.msra.mxu0 0.0
    %5197 = vmatprep.subr.mxu0 0.0
    %5198 = vmatpush2.msra.mxu0 0.0
    %5199 = vmatprep.subr.mxu0 0.0
    %5200 = vmatpush2.msra.mxu0 0.0
    %5201 = vmatprep.subr.mxu0 0.0
    %5202 = vmatpush2.msra.mxu0 0.0
    %5203 = vmatprep.subr.mxu0 0.0
    %5204 = vmatpush2.msra.mxu0 0.0
    %5205 = vmatprep.subr.mxu0 0.0
    %5206 = vmatpush2.msra.mxu0 0.0
    %5207 = vmatprep.subr.mxu0 0.0
    %5208 = vmatpush2.msra.mxu0 0.0
    %5209 = vmatprep.subr.mxu0 0.0
    %5210 = vmatpush2.msra.mxu0 0.0
    %5211 = vmatprep.mubr.f32.mxu0 0.0
    %5212 = vmatmul.mubr.f32.gmra.mxu0 %v5143
    %v5213 = vpop.f32.mrf.mxu0
    %v5214 = vadd.f32 0.0, %v5213
    %v5215 = vpop.f32.mrf.mxu0
    %5216 = vdwg.mxu0
    %v5218 = vsel %vm118, %v5214, 0
    %5220 = vmatprep.subr.mxu0 0.0
    %5221 = vmatpush1.msra.mxu0 0.0
    %5222 = vmatprep.subr.mxu0 0.0
    %5223 = vmatpush1.msra.mxu0 0.0
    %5224 = vmatprep.subr.mxu0 0.0
    %5225 = vmatpush1.msra.mxu0 0.0
    %5226 = vmatprep.subr.mxu0 0.0
    %5227 = vmatpush1.msra.mxu0 0.0
    %5228 = vmatprep.subr.mxu0 0.0
    %5229 = vmatpush1.msra.mxu0 0.0
    %5230 = vmatprep.subr.mxu0 0.0
    %5231 = vmatpush1.msra.mxu0 0.0
    %5232 = vmatprep.subr.mxu0 0.0
    %5233 = vmatpush1.msra.mxu0 0.0
    %5234 = vmatprep.subr.mxu0 0.0
    %5235 = vmatpush1.msra.mxu0 0.0
    %5236 = vmatprep.subr.mxu0 0.0
    %5237 = vmatpush1.msra.mxu0 0.0
    %5238 = vmatprep.subr.mxu0 0.0
    %5239 = vmatpush1.msra.mxu0 0.0
    %5240 = vmatprep.subr.mxu0 0.0
    %5241 = vmatpush1.msra.mxu0 0.0
    %5242 = vmatprep.subr.mxu0 0.0
    %5243 = vmatpush1.msra.mxu0 0.0
    %5244 = vmatprep.subr.mxu0 0.0
    %5245 = vmatpush1.msra.mxu0 0.0
    %5246 = vmatprep.subr.mxu0 0.0
    %5247 = vmatpush1.msra.mxu0 0.0
    %5248 = vmatprep.subr.mxu0 0.0
    %5249 = vmatpush1.msra.mxu0 %v4744
    %5250 = vmatprep.subr.mxu0 0.0
    %5251 = vmatpush1.msra.mxu0 %v4743
    %5252 = vmatprep.subr.mxu0 0.0
    %5253 = vmatpush2.msra.mxu0 0.0
    %5254 = vmatprep.subr.mxu0 0.0
    %5255 = vmatpush2.msra.mxu0 0.0
    %5256 = vmatprep.subr.mxu0 0.0
    %5257 = vmatpush2.msra.mxu0 0.0
    %5258 = vmatprep.subr.mxu0 0.0
    %5259 = vmatpush2.msra.mxu0 0.0
    %5260 = vmatprep.subr.mxu0 0.0
    %5261 = vmatpush2.msra.mxu0 0.0
    %5262 = vmatprep.subr.mxu0 0.0
    %5263 = vmatpush2.msra.mxu0 0.0
    %5264 = vmatprep.subr.mxu0 0.0
    %5265 = vmatpush2.msra.mxu0 0.0
    %5266 = vmatprep.subr.mxu0 0.0
    %5267 = vmatpush2.msra.mxu0 0.0
    %5268 = vmatprep.subr.mxu0 0.0
    %5269 = vmatpush2.msra.mxu0 0.0
    %5270 = vmatprep.subr.mxu0 0.0
    %5271 = vmatpush2.msra.mxu0 0.0
    %5272 = vmatprep.subr.mxu0 0.0
    %5273 = vmatpush2.msra.mxu0 0.0
    %5274 = vmatprep.subr.mxu0 0.0
    %5275 = vmatpush2.msra.mxu0 0.0
    %5276 = vmatprep.subr.mxu0 0.0
    %5277 = vmatpush2.msra.mxu0 0.0
    %5278 = vmatprep.subr.mxu0 0.0
    %5279 = vmatpush2.msra.mxu0 0.0
    %5280 = vmatprep.subr.mxu0 0.0
    %5281 = vmatpush2.msra.mxu0 0.0
    %5282 = vmatprep.subr.mxu0 0.0
    %5283 = vmatpush2.msra.mxu0 0.0
    %5284 = vmatprep.mubr.f32.mxu0 0.0
    %5285 = vmatmul.mubr.f32.gmra.mxu0 %v5218
    %v5286 = vpop.f32.mrf.mxu0
    %v5287 = vadd.f32 0.0, %v5286
    %v5288 = vpop.f32.mrf.mxu0
    %5289 = vdwg.mxu0
    %v5291 = vsel %vm118, %v5047, 0
    %5293 = vmatprep.subr.mxu0 0.0
    %5294 = vmatpush1.msra.mxu0 0.0
    %5295 = vmatprep.subr.mxu0 0.0
    %5296 = vmatpush1.msra.mxu0 0.0
    %5297 = vmatprep.subr.mxu0 0.0
    %5298 = vmatpush1.msra.mxu0 0.0
    %5299 = vmatprep.subr.mxu0 0.0
    %5300 = vmatpush1.msra.mxu0 0.0
    %5301 = vmatprep.subr.mxu0 0.0
    %5302 = vmatpush1.msra.mxu0 0.0
    %5303 = vmatprep.subr.mxu0 0.0
    %5304 = vmatpush1.msra.mxu0 0.0
    %5305 = vmatprep.subr.mxu0 0.0
    %5306 = vmatpush1.msra.mxu0 0.0
    %5307 = vmatprep.subr.mxu0 0.0
    %5308 = vmatpush1.msra.mxu0 0.0
    %5309 = vmatprep.subr.mxu0 0.0
    %5310 = vmatpush1.msra.mxu0 0.0
    %5311 = vmatprep.subr.mxu0 0.0
    %5312 = vmatpush1.msra.mxu0 0.0
    %5313 = vmatprep.subr.mxu0 0.0
    %5314 = vmatpush1.msra.mxu0 0.0
    %5315 = vmatprep.subr.mxu0 0.0
    %5316 = vmatpush1.msra.mxu0 0.0
    %5317 = vmatprep.subr.mxu0 0.0
    %5318 = vmatpush1.msra.mxu0 0.0
    %5319 = vmatprep.subr.mxu0 0.0
    %5320 = vmatpush1.msra.mxu0 0.0
    %5321 = vmatprep.subr.mxu0 0.0
    %5322 = vmatpush1.msra.mxu0 %v4742
    %5323 = vmatprep.subr.mxu0 0.0
    %5324 = vmatpush1.msra.mxu0 %v4741
    %5325 = vmatprep.subr.mxu0 0.0
    %5326 = vmatpush2.msra.mxu0 0.0
    %5327 = vmatprep.subr.mxu0 0.0
    %5328 = vmatpush2.msra.mxu0 0.0
    %5329 = vmatprep.subr.mxu0 0.0
    %5330 = vmatpush2.msra.mxu0 0.0
    %5331 = vmatprep.subr.mxu0 0.0
    %5332 = vmatpush2.msra.mxu0 0.0
    %5333 = vmatprep.subr.mxu0 0.0
    %5334 = vmatpush2.msra.mxu0 0.0
    %5335 = vmatprep.subr.mxu0 0.0
    %5336 = vmatpush2.msra.mxu0 0.0
    %5337 = vmatprep.subr.mxu0 0.0
    %5338 = vmatpush2.msra.mxu0 0.0
    %5339 = vmatprep.subr.mxu0 0.0
    %5340 = vmatpush2.msra.mxu0 0.0
    %5341 = vmatprep.subr.mxu0 0.0
    %5342 = vmatpush2.msra.mxu0 0.0
    %5343 = vmatprep.subr.mxu0 0.0
    %5344 = vmatpush2.msra.mxu0 0.0
    %5345 = vmatprep.subr.mxu0 0.0
    %5346 = vmatpush2.msra.mxu0 0.0
    %5347 = vmatprep.subr.mxu0 0.0
    %5348 = vmatpush2.msra.mxu0 0.0
    %5349 = vmatprep.subr.mxu0 0.0
    %5350 = vmatpush2.msra.mxu0 0.0
    %5351 = vmatprep.subr.mxu0 0.0
    %5352 = vmatpush2.msra.mxu0 0.0
    %5353 = vmatprep.subr.mxu0 0.0
    %5354 = vmatpush2.msra.mxu0 0.0
    %5355 = vmatprep.subr.mxu0 0.0
    %5356 = vmatpush2.msra.mxu0 0.0
    %5357 = vmatprep.mubr.f32.mxu0 0.0
    %5358 = vmatmul.mubr.f32.gmra.mxu0 %v5291
    %v5359 = vpop.f32.mrf.mxu0
    %v5360 = vadd.f32 %v5287, %v5359
    %v5361 = vpop.f32.mrf.mxu0
    %5362 = vdwg.mxu0
    %v5363 = vlaneseq
    %v5364 = vshrl.u32 %v5363, 7
    %v5365 = vsub.s32 3, %v5364
    %v5366 = vrot.slane %v4756, %v5365
    %v5367 = vadd.f32 %v5360, %v5366
    %v5368 = vadd.f32 %v4005, %v5367
    %v5369 = vsel %vm3118, %v5368, 0.0
    %5370 = vadd.xlane.f32.xlu0 %v5369
    %v5371 = vpop.xlane.xlu0 %5370
    %v5372 = vmul.f32 %v5371, %v227
    %v5373 = vmul.f32 %v5368, %v5368
    %v5374 = vsel %vm3118, %v5373, 0.0
    %5375 = vadd.xlane.f32.xlu0 %v5374
    %v5376 = vpop.xlane.xlu0 %5375
    %v5377 = vmul.f32 %v5376, %v227
    %v5378 = vmul.f32 %v5372, %v5372
    %v5379 = vsub.f32 %v5377, %v5378
    %v5380 = vsub.f32 %v5368, %v5372
    %v5381 = vadd.f32 %v5379, 1e-05
    %v5382 = vrsqrt.pop %v5381
    %v5383 = vmul.f32 %v5380, %v5382
    %v5384 = vlaneseq
    %v5385 = vshrl.u32 %v5384, 7
    %v5386 = vsub.s32 6, %v5385
    %v5387 = vrot.slane %v4756, %v5386
    %v5388 = vmul.f32 %v5383, %v5387
    %v5389 = vlaneseq
    %v5390 = vshrl.u32 %v5389, 7
    %v5391 = vsub.s32 7, %v5390
    %v5392 = vrot.slane %v4756, %v5391
    %v5393 = vadd.f32 %v5388, %v5392
    %v5394 = vlaneseq
    %v5395 = vshrl.u32 %v5394, 7
    %v5396 = vsub.s32 0, %v5395
    %v5397 = vrot.slane %v4757, %v5396
    %v5399 = vsel %vm220, %v5393, 0
    %5401 = vmatprep.subr.mxu0 0.0
    %5402 = vmatpush1.msra.mxu0 0.0
    %5403 = vmatprep.subr.mxu0 0.0
    %5404 = vmatpush1.msra.mxu0 0.0
    %5405 = vmatprep.subr.mxu0 0.0
    %5406 = vmatpush1.msra.mxu0 0.0
    %5407 = vmatprep.subr.mxu0 0.0
    %5408 = vmatpush1.msra.mxu0 0.0
    %5409 = vmatprep.subr.mxu0 0.0
    %5410 = vmatpush1.msra.mxu0 0.0
    %5411 = vmatprep.subr.mxu0 0.0
    %5412 = vmatpush1.msra.mxu0 0.0
    %5413 = vmatprep.subr.mxu0 0.0
    %5414 = vmatpush1.msra.mxu0 0.0
    %5415 = vmatprep.subr.mxu0 0.0
    %5416 = vmatpush1.msra.mxu0 0.0
    %5417 = vmatprep.subr.mxu0 0.0
    %5418 = vmatpush1.msra.mxu0 0.0
    %5419 = vmatprep.subr.mxu0 0.0
    %5420 = vmatpush1.msra.mxu0 0.0
    %5421 = vmatprep.subr.mxu0 0.0
    %5422 = vmatpush1.msra.mxu0 0.0
    %5423 = vmatprep.subr.mxu0 0.0
    %5424 = vmatpush1.msra.mxu0 0.0
    %5425 = vmatprep.subr.mxu0 0.0
    %5426 = vmatpush1.msra.mxu0 %v4749
    %5427 = vmatprep.subr.mxu0 0.0
    %5428 = vmatpush1.msra.mxu0 %v4748
    %5429 = vmatprep.subr.mxu0 0.0
    %5430 = vmatpush1.msra.mxu0 %v4747
    %5431 = vmatprep.subr.mxu0 0.0
    %5432 = vmatpush1.msra.mxu0 %v4746
    %5433 = vmatprep.subr.mxu0 0.0
    %5434 = vmatpush2.msra.mxu0 0.0
    %5435 = vmatprep.subr.mxu0 0.0
    %5436 = vmatpush2.msra.mxu0 0.0
    %5437 = vmatprep.subr.mxu0 0.0
    %5438 = vmatpush2.msra.mxu0 0.0
    %5439 = vmatprep.subr.mxu0 0.0
    %5440 = vmatpush2.msra.mxu0 0.0
    %5441 = vmatprep.subr.mxu0 0.0
    %5442 = vmatpush2.msra.mxu0 0.0
    %5443 = vmatprep.subr.mxu0 0.0
    %5444 = vmatpush2.msra.mxu0 0.0
    %5445 = vmatprep.subr.mxu0 0.0
    %5446 = vmatpush2.msra.mxu0 0.0
    %5447 = vmatprep.subr.mxu0 0.0
    %5448 = vmatpush2.msra.mxu0 0.0
    %5449 = vmatprep.subr.mxu0 0.0
    %5450 = vmatpush2.msra.mxu0 0.0
    %5451 = vmatprep.subr.mxu0 0.0
    %5452 = vmatpush2.msra.mxu0 0.0
    %5453 = vmatprep.subr.mxu0 0.0
    %5454 = vmatpush2.msra.mxu0 0.0
    %5455 = vmatprep.subr.mxu0 0.0
    %5456 = vmatpush2.msra.mxu0 0.0
    %5457 = vmatprep.subr.mxu0 0.0
    %5458 = vmatpush2.msra.mxu0 0.0
    %5459 = vmatprep.subr.mxu0 0.0
    %5460 = vmatpush2.msra.mxu0 0.0
    %5461 = vmatprep.subr.mxu0 0.0
    %5462 = vmatpush2.msra.mxu0 0.0
    %5463 = vmatprep.subr.mxu0 0.0
    %5464 = vmatpush2.msra.mxu0 0.0
    %5465 = vmatprep.mubr.f32.mxu0 0.0
    %5466 = vmatmul.mubr.f32.gmra.mxu0 %v5399
    %v5467 = vpop.f32.mrf.mxu0
    %v5468 = vadd.f32 %v5397, %v5467
    %v5469 = vpop.f32.mrf.mxu0
    %5470 = vdwg.mxu0
    %v5471 = vmax.f32 %v5468, 0.0
    %v5472 = vlaneseq
    %v5473 = vshrl.u32 %v5472, 7
    %v5474 = vsub.s32 1, %v5473
    %v5475 = vrot.slane %v4757, %v5474
    %v5477 = vsel %vm220, %v5471, 0
    %5479 = vmatprep.subr.mxu0 0.0
    %5480 = vmatpush1.msra.mxu0 0.0
    %5481 = vmatprep.subr.mxu0 0.0
    %5482 = vmatpush1.msra.mxu0 0.0
    %5483 = vmatprep.subr.mxu0 0.0
    %5484 = vmatpush1.msra.mxu0 0.0
    %5485 = vmatprep.subr.mxu0 0.0
    %5486 = vmatpush1.msra.mxu0 0.0
    %5487 = vmatprep.subr.mxu0 0.0
    %5488 = vmatpush1.msra.mxu0 0.0
    %5489 = vmatprep.subr.mxu0 0.0
    %5490 = vmatpush1.msra.mxu0 0.0
    %5491 = vmatprep.subr.mxu0 0.0
    %5492 = vmatpush1.msra.mxu0 0.0
    %5493 = vmatprep.subr.mxu0 0.0
    %5494 = vmatpush1.msra.mxu0 0.0
    %5495 = vmatprep.subr.mxu0 0.0
    %5496 = vmatpush1.msra.mxu0 0.0
    %5497 = vmatprep.subr.mxu0 0.0
    %5498 = vmatpush1.msra.mxu0 0.0
    %5499 = vmatprep.subr.mxu0 0.0
    %5500 = vmatpush1.msra.mxu0 0.0
    %5501 = vmatprep.subr.mxu0 0.0
    %5502 = vmatpush1.msra.mxu0 0.0
    %5503 = vmatprep.subr.mxu0 0.0
    %5504 = vmatpush1.msra.mxu0 %v4754
    %5505 = vmatprep.subr.mxu0 0.0
    %5506 = vmatpush1.msra.mxu0 %v4753
    %5507 = vmatprep.subr.mxu0 0.0
    %5508 = vmatpush1.msra.mxu0 %v4752
    %5509 = vmatprep.subr.mxu0 0.0
    %5510 = vmatpush1.msra.mxu0 %v4751
    %5511 = vmatprep.subr.mxu0 0.0
    %5512 = vmatpush2.msra.mxu0 0.0
    %5513 = vmatprep.subr.mxu0 0.0
    %5514 = vmatpush2.msra.mxu0 0.0
    %5515 = vmatprep.subr.mxu0 0.0
    %5516 = vmatpush2.msra.mxu0 0.0
    %5517 = vmatprep.subr.mxu0 0.0
    %5518 = vmatpush2.msra.mxu0 0.0
    %5519 = vmatprep.subr.mxu0 0.0
    %5520 = vmatpush2.msra.mxu0 0.0
    %5521 = vmatprep.subr.mxu0 0.0
    %5522 = vmatpush2.msra.mxu0 0.0
    %5523 = vmatprep.subr.mxu0 0.0
    %5524 = vmatpush2.msra.mxu0 0.0
    %5525 = vmatprep.subr.mxu0 0.0
    %5526 = vmatpush2.msra.mxu0 0.0
    %5527 = vmatprep.subr.mxu0 0.0
    %5528 = vmatpush2.msra.mxu0 0.0
    %5529 = vmatprep.subr.mxu0 0.0
    %5530 = vmatpush2.msra.mxu0 0.0
    %5531 = vmatprep.subr.mxu0 0.0
    %5532 = vmatpush2.msra.mxu0 0.0
    %5533 = vmatprep.subr.mxu0 0.0
    %5534 = vmatpush2.msra.mxu0 0.0
    %5535 = vmatprep.subr.mxu0 0.0
    %5536 = vmatpush2.msra.mxu0 0.0
    %5537 = vmatprep.subr.mxu0 0.0
    %5538 = vmatpush2.msra.mxu0 0.0
    %5539 = vmatprep.subr.mxu0 0.0
    %5540 = vmatpush2.msra.mxu0 0.0
    %5541 = vmatprep.subr.mxu0 0.0
    %5542 = vmatpush2.msra.mxu0 0.0
    %5543 = vmatprep.mubr.f32.mxu0 0.0
    %5544 = vmatmul.mubr.f32.gmra.mxu0 %v5477
    %v5545 = vpop.f32.mrf.mxu0
    %v5546 = vadd.f32 %v5475, %v5545
    %v5547 = vpop.f32.mrf.mxu0
    %5548 = vdwg.mxu0
    %v5549 = vadd.f32 %v5368, %v5546
    %v5550 = vsel %vm3118, %v4734, 0.0
    %5551 = vadd.xlane.f32.xlu0 %v5550
    %v5552 = vpop.xlane.xlu0 %5551
    %v5553 = vmul.f32 %v5552, %v227
    %v5554 = vmul.f32 %v4734, %v4734
    %v5555 = vsel %vm3118, %v5554, 0.0
    %5556 = vadd.xlane.f32.xlu0 %v5555
    %v5557 = vpop.xlane.xlu0 %5556
    %v5558 = vmul.f32 %v5557, %v227
    %v5559 = vmul.f32 %v5553, %v5553
    %v5560 = vsub.f32 %v5558, %v5559
    %v5561 = vsub.f32 %v4734, %v5553
    %v5562 = vadd.f32 %v5560, 1e-05
    %v5563 = vrsqrt.pop %v5562
    %v5564 = vmul.f32 %v5561, %v5563
    %v5565 = vmul.f32 %v5564, %v4776
    %v5566 = vadd.f32 %v5565, %v4781
    %v5568 = vsel %vm220, %v5566, 0
    %5570 = vmatprep.subr.mxu0 0.0
    %5571 = vmatpush1.msra.mxu0 0.0
    %5572 = vmatprep.subr.mxu0 0.0
    %5573 = vmatpush1.msra.mxu0 0.0
    %5574 = vmatprep.subr.mxu0 0.0
    %5575 = vmatpush1.msra.mxu0 0.0
    %5576 = vmatprep.subr.mxu0 0.0
    %5577 = vmatpush1.msra.mxu0 0.0
    %5578 = vmatprep.subr.mxu0 0.0
    %5579 = vmatpush1.msra.mxu0 0.0
    %5580 = vmatprep.subr.mxu0 0.0
    %5581 = vmatpush1.msra.mxu0 0.0
    %5582 = vmatprep.subr.mxu0 0.0
    %5583 = vmatpush1.msra.mxu0 0.0
    %5584 = vmatprep.subr.mxu0 0.0
    %5585 = vmatpush1.msra.mxu0 0.0
    %5586 = vmatprep.subr.mxu0 0.0
    %5587 = vmatpush1.msra.mxu0 0.0
    %5588 = vmatprep.subr.mxu0 0.0
    %5589 = vmatpush1.msra.mxu0 0.0
    %5590 = vmatprep.subr.mxu0 0.0
    %5591 = vmatpush1.msra.mxu0 0.0
    %5592 = vmatprep.subr.mxu0 0.0
    %5593 = vmatpush1.msra.mxu0 0.0
    %5594 = vmatprep.subr.mxu0 0.0
    %5595 = vmatpush1.msra.mxu0 %v4739
    %5596 = vmatprep.subr.mxu0 0.0
    %5597 = vmatpush1.msra.mxu0 %v4738
    %5598 = vmatprep.subr.mxu0 0.0
    %5599 = vmatpush1.msra.mxu0 %v4737
    %5600 = vmatprep.subr.mxu0 0.0
    %5601 = vmatpush1.msra.mxu0 %v4736
    %5602 = vmatprep.subr.mxu0 0.0
    %5603 = vmatpush2.msra.mxu0 0.0
    %5604 = vmatprep.subr.mxu0 0.0
    %5605 = vmatpush2.msra.mxu0 0.0
    %5606 = vmatprep.subr.mxu0 0.0
    %5607 = vmatpush2.msra.mxu0 0.0
    %5608 = vmatprep.subr.mxu0 0.0
    %5609 = vmatpush2.msra.mxu0 0.0
    %5610 = vmatprep.subr.mxu0 0.0
    %5611 = vmatpush2.msra.mxu0 0.0
    %5612 = vmatprep.subr.mxu0 0.0
    %5613 = vmatpush2.msra.mxu0 0.0
    %5614 = vmatprep.subr.mxu0 0.0
    %5615 = vmatpush2.msra.mxu0 0.0
    %5616 = vmatprep.subr.mxu0 0.0
    %5617 = vmatpush2.msra.mxu0 0.0
    %5618 = vmatprep.subr.mxu0 0.0
    %5619 = vmatpush2.msra.mxu0 0.0
    %5620 = vmatprep.subr.mxu0 0.0
    %5621 = vmatpush2.msra.mxu0 0.0
    %5622 = vmatprep.subr.mxu0 0.0
    %5623 = vmatpush2.msra.mxu0 0.0
    %5624 = vmatprep.subr.mxu0 0.0
    %5625 = vmatpush2.msra.mxu0 0.0
    %5626 = vmatprep.subr.mxu0 0.0
    %5627 = vmatpush2.msra.mxu0 0.0
    %5628 = vmatprep.subr.mxu0 0.0
    %5629 = vmatpush2.msra.mxu0 0.0
    %5630 = vmatprep.subr.mxu0 0.0
    %5631 = vmatpush2.msra.mxu0 0.0
    %5632 = vmatprep.subr.mxu0 0.0
    %5633 = vmatpush2.msra.mxu0 0.0
    %5634 = vmatprep.mubr.f32.mxu0 0.0
    %5635 = vmatmul.mubr.f32.gmra.mxu0 %v5568
    %v5636 = vpop.f32.mrf.mxu0
    %v5637 = vadd.f32 0.0, %v5636
    %v5638 = vpop.f32.mrf.mxu0
    %5639 = vdwg.mxu0
    %v5640 = vadd.f32 %v5637, %v4859
    %v5641 = vadd.f32 %v5637, %v4867
    %v5642 = vadd.f32 %v5637, %v4876
    %5644 = vrot.lane.b32.xlu0 %v5641, 96
    %v5645 = vpop.permute.xlu0 %5644
    %v5647 = vsel %vm118, %v5640, 0
    %v5649 = vsel %vm118, %v5645, 0
    %5651 = vmatprep.subr.mxu0 0.0
    %5652 = vmatpush1.xpose.msra.mxu0 0.0
    %5653 = vmatprep.subr.mxu0 0.0
    %5654 = vmatpush1.xpose.msra.mxu0 0.0
    %5655 = vmatprep.subr.mxu0 0.0
    %5656 = vmatpush1.xpose.msra.mxu0 0.0
    %5657 = vmatprep.subr.mxu0 0.0
    %5658 = vmatpush1.xpose.msra.mxu0 0.0
    %5659 = vmatprep.subr.mxu0 0.0
    %5660 = vmatpush1.xpose.msra.mxu0 0.0
    %5661 = vmatprep.subr.mxu0 0.0
    %5662 = vmatpush1.xpose.msra.mxu0 0.0
    %5663 = vmatprep.subr.mxu0 0.0
    %5664 = vmatpush1.xpose.msra.mxu0 0.0
    %5665 = vmatprep.subr.mxu0 0.0
    %5666 = vmatpush1.xpose.msra.mxu0 0.0
    %5667 = vmatprep.subr.mxu0 0.0
    %5668 = vmatpush1.xpose.msra.mxu0 0.0
    %5669 = vmatprep.subr.mxu0 0.0
    %5670 = vmatpush1.xpose.msra.mxu0 0.0
    %5671 = vmatprep.subr.mxu0 0.0
    %5672 = vmatpush1.xpose.msra.mxu0 0.0
    %5673 = vmatprep.subr.mxu0 0.0
    %5674 = vmatpush1.xpose.msra.mxu0 0.0
    %5675 = vmatprep.subr.mxu0 0.0
    %5676 = vmatpush1.xpose.msra.mxu0 0.0
    %5677 = vmatprep.subr.mxu0 0.0
    %5678 = vmatpush1.xpose.msra.mxu0 0.0
    %5679 = vmatprep.subr.mxu0 0.0
    %5680 = vmatpush1.xpose.msra.mxu0 0.0
    %5681 = vmatprep.subr.mxu0 0.0
    %5682 = vmatpush1.xpose.msra.mxu0 %v5649
    %5683 = vmatprep.subr.mxu0 0.0
    %5684 = vmatpush2.xpose.msra.mxu0 0.0
    %5685 = vmatprep.subr.mxu0 0.0
    %5686 = vmatpush2.xpose.msra.mxu0 0.0
    %5687 = vmatprep.subr.mxu0 0.0
    %5688 = vmatpush2.xpose.msra.mxu0 0.0
    %5689 = vmatprep.subr.mxu0 0.0
    %5690 = vmatpush2.xpose.msra.mxu0 0.0
    %5691 = vmatprep.subr.mxu0 0.0
    %5692 = vmatpush2.xpose.msra.mxu0 0.0
    %5693 = vmatprep.subr.mxu0 0.0
    %5694 = vmatpush2.xpose.msra.mxu0 0.0
    %5695 = vmatprep.subr.mxu0 0.0
    %5696 = vmatpush2.xpose.msra.mxu0 0.0
    %5697 = vmatprep.subr.mxu0 0.0
    %5698 = vmatpush2.xpose.msra.mxu0 0.0
    %5699 = vmatprep.subr.mxu0 0.0
    %5700 = vmatpush2.xpose.msra.mxu0 0.0
    %5701 = vmatprep.subr.mxu0 0.0
    %5702 = vmatpush2.xpose.msra.mxu0 0.0
    %5703 = vmatprep.subr.mxu0 0.0
    %5704 = vmatpush2.xpose.msra.mxu0 0.0
    %5705 = vmatprep.subr.mxu0 0.0
    %5706 = vmatpush2.xpose.msra.mxu0 0.0
    %5707 = vmatprep.subr.mxu0 0.0
    %5708 = vmatpush2.xpose.msra.mxu0 0.0
    %5709 = vmatprep.subr.mxu0 0.0
    %5710 = vmatpush2.xpose.msra.mxu0 0.0
    %5711 = vmatprep.subr.mxu0 0.0
    %5712 = vmatpush2.xpose.msra.mxu0 0.0
    %5713 = vmatprep.subr.mxu0 0.0
    %5714 = vmatpush2.xpose.msra.mxu0 0.0
    %5715 = vmatprep.mubr.f32.mxu0 0.0
    %5716 = vmatmul.mubr.f32.gmra.mxu0 %v5647
    %v5717 = vpop.f32.mrf.mxu0
    %v5718 = vadd.f32 0.0, %v5717
    %v5719 = vpop.f32.mrf.mxu0
    %5720 = vdwg.mxu0
    %v5721 = vmul.f32 %v5718, 0.25
    %v5722 = vsel %vm4958, %v5721, -inf
    %5723 = vmax.xlane.f32.xlu0 %v5722
    %v5724 = vpop.xlane.xlu0 %5723
    %v5725 = vsub.f32 %v5721, %v5724
    %v5726 = vmul.f32 %v5725, 1.442695
    %v5727 = vpow.pop %v5726
    %v5728 = vsel %vm4958, %v5727, 0.0
    %5729 = vadd.xlane.f32.xlu0 %v5728
    %v5730 = vpop.xlane.xlu0 %5729
    %v5731 = vrcp.pop %v5730
    %v5732 = vmul.f32 %v5727, %v5731
    %5734 = vrot.lane.b32.xlu0 %v5642, 64
    %v5735 = vpop.permute.xlu0 %5734
    %v5737 = vsel %vm4973, %v5732, 0
    %v5739 = vsel %vm4977, %v5735, 0
    %5741 = vmatprep.subr.mxu0 0.0
    %5742 = vmatpush1.msra.mxu0 0.0
    %5743 = vmatprep.subr.mxu0 0.0
    %5744 = vmatpush1.msra.mxu0 0.0
    %5745 = vmatprep.subr.mxu0 0.0
    %5746 = vmatpush1.msra.mxu0 0.0
    %5747 = vmatprep.subr.mxu0 0.0
    %5748 = vmatpush1.msra.mxu0 0.0
    %5749 = vmatprep.subr.mxu0 0.0
    %5750 = vmatpush1.msra.mxu0 0.0
    %5751 = vmatprep.subr.mxu0 0.0
    %5752 = vmatpush1.msra.mxu0 0.0
    %5753 = vmatprep.subr.mxu0 0.0
    %5754 = vmatpush1.msra.mxu0 0.0
    %5755 = vmatprep.subr.mxu0 0.0
    %5756 = vmatpush1.msra.mxu0 0.0
    %5757 = vmatprep.subr.mxu0 0.0
    %5758 = vmatpush1.msra.mxu0 0.0
    %5759 = vmatprep.subr.mxu0 0.0
    %5760 = vmatpush1.msra.mxu0 0.0
    %5761 = vmatprep.subr.mxu0 0.0
    %5762 = vmatpush1.msra.mxu0 0.0
    %5763 = vmatprep.subr.mxu0 0.0
    %5764 = vmatpush1.msra.mxu0 0.0
    %5765 = vmatprep.subr.mxu0 0.0
    %5766 = vmatpush1.msra.mxu0 0.0
    %5767 = vmatprep.subr.mxu0 0.0
    %5768 = vmatpush1.msra.mxu0 0.0
    %5769 = vmatprep.subr.mxu0 0.0
    %5770 = vmatpush1.msra.mxu0 0.0
    %5771 = vmatprep.subr.mxu0 0.0
    %5772 = vmatpush1.msra.mxu0 %v5739
    %5773 = vmatprep.subr.mxu0 0.0
    %5774 = vmatpush2.msra.mxu0 0.0
    %5775 = vmatprep.subr.mxu0 0.0
    %5776 = vmatpush2.msra.mxu0 0.0
    %5777 = vmatprep.subr.mxu0 0.0
    %5778 = vmatpush2.msra.mxu0 0.0
    %5779 = vmatprep.subr.mxu0 0.0
    %5780 = vmatpush2.msra.mxu0 0.0
    %5781 = vmatprep.subr.mxu0 0.0
    %5782 = vmatpush2.msra.mxu0 0.0
    %5783 = vmatprep.subr.mxu0 0.0
    %5784 = vmatpush2.msra.mxu0 0.0
    %5785 = vmatprep.subr.mxu0 0.0
    %5786 = vmatpush2.msra.mxu0 0.0
    %5787 = vmatprep.subr.mxu0 0.0
    %5788 = vmatpush2.msra.mxu0 0.0
    %5789 = vmatprep.subr.mxu0 0.0
    %5790 = vmatpush2.msra.mxu0 0.0
    %5791 = vmatprep.subr.mxu0 0.0
    %5792 = vmatpush2.msra.mxu0 0.0
    %5793 = vmatprep.subr.mxu0 0.0
    %5794 = vmatpush2.msra.mxu0 0.0
    %5795 = vmatprep.subr.mxu0 0.0
    %5796 = vmatpush2.msra.mxu0 0.0
    %5797 = vmatprep.subr.mxu0 0.0
    %5798 = vmatpush2.msra.mxu0 0.0
    %5799 = vmatprep.subr.mxu0 0.0
    %5800 = vmatpush2.msra.mxu0 0.0
    %5801 = vmatprep.subr.mxu0 0.0
    %5802 = vmatpush2.msra.mxu0 0.0
    %5803 = vmatprep.subr.mxu0 0.0
    %5804 = vmatpush2.msra.mxu0 0.0
    %5805 = vmatprep.mubr.f32.mxu0 0.0
    %5806 = vmatmul.mubr.f32.gmra.mxu0 %v5737
    %v5807 = vpop.f32.mrf.mxu0
    %v5808 = vadd.f32 0.0, %v5807
    %v5809 = vpop.f32.mrf.mxu0
    %5810 = vdwg.mxu0
    %5811 = vrot.lane.b32.xlu0 %v5640, 112
    %v5812 = vpop.permute.xlu0 %5811
    %5813 = vrot.lane.b32.xlu0 %v5641, 80
    %v5814 = vpop.permute.xlu0 %5813
    %v5815 = vsel %vm118, %v5812, 0
    %v5817 = vsel %vm118, %v5814, 0
    %5819 = vmatprep.subr.mxu0 0.0
    %5820 = vmatpush1.xpose.msra.mxu0 0.0
    %5821 = vmatprep.subr.mxu0 0.0
    %5822 = vmatpush1.xpose.msra.mxu0 0.0
    %5823 = vmatprep.subr.mxu0 0.0
    %5824 = vmatpush1.xpose.msra.mxu0 0.0
    %5825 = vmatprep.subr.mxu0 0.0
    %5826 = vmatpush1.xpose.msra.mxu0 0.0
    %5827 = vmatprep.subr.mxu0 0.0
    %5828 = vmatpush1.xpose.msra.mxu0 0.0
    %5829 = vmatprep.subr.mxu0 0.0
    %5830 = vmatpush1.xpose.msra.mxu0 0.0
    %5831 = vmatprep.subr.mxu0 0.0
    %5832 = vmatpush1.xpose.msra.mxu0 0.0
    %5833 = vmatprep.subr.mxu0 0.0
    %5834 = vmatpush1.xpose.msra.mxu0 0.0
    %5835 = vmatprep.subr.mxu0 0.0
    %5836 = vmatpush1.xpose.msra.mxu0 0.0
    %5837 = vmatprep.subr.mxu0 0.0
    %5838 = vmatpush1.xpose.msra.mxu0 0.0
    %5839 = vmatprep.subr.mxu0 0.0
    %5840 = vmatpush1.xpose.msra.mxu0 0.0
    %5841 = vmatprep.subr.mxu0 0.0
    %5842 = vmatpush1.xpose.msra.mxu0 0.0
    %5843 = vmatprep.subr.mxu0 0.0
    %5844 = vmatpush1.xpose.msra.mxu0 0.0
    %5845 = vmatprep.subr.mxu0 0.0
    %5846 = vmatpush1.xpose.msra.mxu0 0.0
    %5847 = vmatprep.subr.mxu0 0.0
    %5848 = vmatpush1.xpose.msra.mxu0 0.0
    %5849 = vmatprep.subr.mxu0 0.0
    %5850 = vmatpush1.xpose.msra.mxu0 %v5817
    %5851 = vmatprep.subr.mxu0 0.0
    %5852 = vmatpush2.xpose.msra.mxu0 0.0
    %5853 = vmatprep.subr.mxu0 0.0
    %5854 = vmatpush2.xpose.msra.mxu0 0.0
    %5855 = vmatprep.subr.mxu0 0.0
    %5856 = vmatpush2.xpose.msra.mxu0 0.0
    %5857 = vmatprep.subr.mxu0 0.0
    %5858 = vmatpush2.xpose.msra.mxu0 0.0
    %5859 = vmatprep.subr.mxu0 0.0
    %5860 = vmatpush2.xpose.msra.mxu0 0.0
    %5861 = vmatprep.subr.mxu0 0.0
    %5862 = vmatpush2.xpose.msra.mxu0 0.0
    %5863 = vmatprep.subr.mxu0 0.0
    %5864 = vmatpush2.xpose.msra.mxu0 0.0
    %5865 = vmatprep.subr.mxu0 0.0
    %5866 = vmatpush2.xpose.msra.mxu0 0.0
    %5867 = vmatprep.subr.mxu0 0.0
    %5868 = vmatpush2.xpose.msra.mxu0 0.0
    %5869 = vmatprep.subr.mxu0 0.0
    %5870 = vmatpush2.xpose.msra.mxu0 0.0
    %5871 = vmatprep.subr.mxu0 0.0
    %5872 = vmatpush2.xpose.msra.mxu0 0.0
    %5873 = vmatprep.subr.mxu0 0.0
    %5874 = vmatpush2.xpose.msra.mxu0 0.0
    %5875 = vmatprep.subr.mxu0 0.0
    %5876 = vmatpush2.xpose.msra.mxu0 0.0
    %5877 = vmatprep.subr.mxu0 0.0
    %5878 = vmatpush2.xpose.msra.mxu0 0.0
    %5879 = vmatprep.subr.mxu0 0.0
    %5880 = vmatpush2.xpose.msra.mxu0 0.0
    %5881 = vmatprep.subr.mxu0 0.0
    %5882 = vmatpush2.xpose.msra.mxu0 0.0
    %5883 = vmatprep.mubr.f32.mxu0 0.0
    %5884 = vmatmul.mubr.f32.gmra.mxu0 %v5815
    %v5885 = vpop.f32.mrf.mxu0
    %v5886 = vadd.f32 0.0, %v5885
    %v5887 = vpop.f32.mrf.mxu0
    %5888 = vdwg.mxu0
    %v5889 = vmul.f32 %v5886, 0.25
    %v5890 = vsel %vm4958, %v5889, -inf
    %5891 = vmax.xlane.f32.xlu0 %v5890
    %v5892 = vpop.xlane.xlu0 %5891
    %v5893 = vsub.f32 %v5889, %v5892
    %v5894 = vmul.f32 %v5893, 1.442695
    %v5895 = vpow.pop %v5894
    %v5896 = vsel %vm4958, %v5895, 0.0
    %5897 = vadd.xlane.f32.xlu0 %v5896
    %v5898 = vpop.xlane.xlu0 %5897
    %v5899 = vrcp.pop %v5898
    %v5900 = vmul.f32 %v5895, %v5899
    %5901 = vrot.lane.b32.xlu0 %v5642, 48
    %v5902 = vpop.permute.xlu0 %5901
    %v5904 = vsel %vm4973, %v5900, 0
    %v5906 = vsel %vm4977, %v5902, 0
    %5908 = vmatprep.subr.mxu0 0.0
    %5909 = vmatpush1.msra.mxu0 0.0
    %5910 = vmatprep.subr.mxu0 0.0
    %5911 = vmatpush1.msra.mxu0 0.0
    %5912 = vmatprep.subr.mxu0 0.0
    %5913 = vmatpush1.msra.mxu0 0.0
    %5914 = vmatprep.subr.mxu0 0.0
    %5915 = vmatpush1.msra.mxu0 0.0
    %5916 = vmatprep.subr.mxu0 0.0
    %5917 = vmatpush1.msra.mxu0 0.0
    %5918 = vmatprep.subr.mxu0 0.0
    %5919 = vmatpush1.msra.mxu0 0.0
    %5920 = vmatprep.subr.mxu0 0.0
    %5921 = vmatpush1.msra.mxu0 0.0
    %5922 = vmatprep.subr.mxu0 0.0
    %5923 = vmatpush1.msra.mxu0 0.0
    %5924 = vmatprep.subr.mxu0 0.0
    %5925 = vmatpush1.msra.mxu0 0.0
    %5926 = vmatprep.subr.mxu0 0.0
    %5927 = vmatpush1.msra.mxu0 0.0
    %5928 = vmatprep.subr.mxu0 0.0
    %5929 = vmatpush1.msra.mxu0 0.0
    %5930 = vmatprep.subr.mxu0 0.0
    %5931 = vmatpush1.msra.mxu0 0.0
    %5932 = vmatprep.subr.mxu0 0.0
    %5933 = vmatpush1.msra.mxu0 0.0
    %5934 = vmatprep.subr.mxu0 0.0
    %5935 = vmatpush1.msra.mxu0 0.0
    %5936 = vmatprep.subr.mxu0 0.0
    %5937 = vmatpush1.msra.mxu0 0.0
    %5938 = vmatprep.subr.mxu0 0.0
    %5939 = vmatpush1.msra.mxu0 %v5906
    %5940 = vmatprep.subr.mxu0 0.0
    %5941 = vmatpush2.msra.mxu0 0.0
    %5942 = vmatprep.subr.mxu0 0.0
    %5943 = vmatpush2.msra.mxu0 0.0
    %5944 = vmatprep.subr.mxu0 0.0
    %5945 = vmatpush2.msra.mxu0 0.0
    %5946 = vmatprep.subr.mxu0 0.0
    %5947 = vmatpush2.msra.mxu0 0.0
    %5948 = vmatprep.subr.mxu0 0.0
    %5949 = vmatpush2.msra.mxu0 0.0
    %5950 = vmatprep.subr.mxu0 0.0
    %5951 = vmatpush2.msra.mxu0 0.0
    %5952 = vmatprep.subr.mxu0 0.0
    %5953 = vmatpush2.msra.mxu0 0.0
    %5954 = vmatprep.subr.mxu0 0.0
    %5955 = vmatpush2.msra.mxu0 0.0
    %5956 = vmatprep.subr.mxu0 0.0
    %5957 = vmatpush2.msra.mxu0 0.0
    %5958 = vmatprep.subr.mxu0 0.0
    %5959 = vmatpush2.msra.mxu0 0.0
    %5960 = vmatprep.subr.mxu0 0.0
    %5961 = vmatpush2.msra.mxu0 0.0
    %5962 = vmatprep.subr.mxu0 0.0
    %5963 = vmatpush2.msra.mxu0 0.0
    %5964 = vmatprep.subr.mxu0 0.0
    %5965 = vmatpush2.msra.mxu0 0.0
    %5966 = vmatprep.subr.mxu0 0.0
    %5967 = vmatpush2.msra.mxu0 0.0
    %5968 = vmatprep.subr.mxu0 0.0
    %5969 = vmatpush2.msra.mxu0 0.0
    %5970 = vmatprep.subr.mxu0 0.0
    %5971 = vmatpush2.msra.mxu0 0.0
    %5972 = vmatprep.mubr.f32.mxu0 0.0
    %5973 = vmatmul.mubr.f32.gmra.mxu0 %v5904
    %v5974 = vpop.f32.mrf.mxu0
    %v5975 = vadd.f32 0.0, %v5974
    %v5976 = vpop.f32.mrf.mxu0
    %5977 = vdwg.mxu0
    %v5979 = vsel %vm118, %v5975, 0
    %5981 = vmatprep.subr.mxu0 0.0
    %5982 = vmatpush1.msra.mxu0 0.0
    %5983 = vmatprep.subr.mxu0 0.0
    %5984 = vmatpush1.msra.mxu0 0.0
    %5985 = vmatprep.subr.mxu0 0.0
    %5986 = vmatpush1.msra.mxu0 0.0
    %5987 = vmatprep.subr.mxu0 0.0
    %5988 = vmatpush1.msra.mxu0 0.0
    %5989 = vmatprep.subr.mxu0 0.0
    %5990 = vmatpush1.msra.mxu0 0.0
    %5991 = vmatprep.subr.mxu0 0.0
    %5992 = vmatpush1.msra.mxu0 0.0
    %5993 = vmatprep.subr.mxu0 0.0
    %5994 = vmatpush1.msra.mxu0 0.0
    %5995 = vmatprep.subr.mxu0 0.0
    %5996 = vmatpush1.msra.mxu0 0.0
    %5997 = vmatprep.subr.mxu0 0.0
    %5998 = vmatpush1.msra.mxu0 0.0
    %5999 = vmatprep.subr.mxu0 0.0
    %6000 = vmatpush1.msra.mxu0 0.0
    %6001 = vmatprep.subr.mxu0 0.0
    %6002 = vmatpush1.msra.mxu0 0.0
    %6003 = vmatprep.subr.mxu0 0.0
    %6004 = vmatpush1.msra.mxu0 0.0
    %6005 = vmatprep.subr.mxu0 0.0
    %6006 = vmatpush1.msra.mxu0 0.0
    %6007 = vmatprep.subr.mxu0 0.0
    %6008 = vmatpush1.msra.mxu0 0.0
    %6009 = vmatprep.subr.mxu0 0.0
    %6010 = vmatpush1.msra.mxu0 %v4744
    %6011 = vmatprep.subr.mxu0 0.0
    %6012 = vmatpush1.msra.mxu0 %v4743
    %6013 = vmatprep.subr.mxu0 0.0
    %6014 = vmatpush2.msra.mxu0 0.0
    %6015 = vmatprep.subr.mxu0 0.0
    %6016 = vmatpush2.msra.mxu0 0.0
    %6017 = vmatprep.subr.mxu0 0.0
    %6018 = vmatpush2.msra.mxu0 0.0
    %6019 = vmatprep.subr.mxu0 0.0
    %6020 = vmatpush2.msra.mxu0 0.0
    %6021 = vmatprep.subr.mxu0 0.0
    %6022 = vmatpush2.msra.mxu0 0.0
    %6023 = vmatprep.subr.mxu0 0.0
    %6024 = vmatpush2.msra.mxu0 0.0
    %6025 = vmatprep.subr.mxu0 0.0
    %6026 = vmatpush2.msra.mxu0 0.0
    %6027 = vmatprep.subr.mxu0 0.0
    %6028 = vmatpush2.msra.mxu0 0.0
    %6029 = vmatprep.subr.mxu0 0.0
    %6030 = vmatpush2.msra.mxu0 0.0
    %6031 = vmatprep.subr.mxu0 0.0
    %6032 = vmatpush2.msra.mxu0 0.0
    %6033 = vmatprep.subr.mxu0 0.0
    %6034 = vmatpush2.msra.mxu0 0.0
    %6035 = vmatprep.subr.mxu0 0.0
    %6036 = vmatpush2.msra.mxu0 0.0
    %6037 = vmatprep.subr.mxu0 0.0
    %6038 = vmatpush2.msra.mxu0 0.0
    %6039 = vmatprep.subr.mxu0 0.0
    %6040 = vmatpush2.msra.mxu0 0.0
    %6041 = vmatprep.subr.mxu0 0.0
    %6042 = vmatpush2.msra.mxu0 0.0
    %6043 = vmatprep.subr.mxu0 0.0
    %6044 = vmatpush2.msra.mxu0 0.0
    %6045 = vmatprep.mubr.f32.mxu0 0.0
    %6046 = vmatmul.mubr.f32.gmra.mxu0 %v5979
    %v6047 = vpop.f32.mrf.mxu0
    %v6048 = vadd.f32 0.0, %v6047
    %v6049 = vpop.f32.mrf.mxu0
    %6050 = vdwg.mxu0
    %v6052 = vsel %vm118, %v5808, 0
    %6054 = vmatprep.subr.mxu0 0.0
    %6055 = vmatpush1.msra.mxu0 0.0
    %6056 = vmatprep.subr.mxu0 0.0
    %6057 = vmatpush1.msra.mxu0 0.0
    %6058 = vmatprep.subr.mxu0 0.0
    %6059 = vmatpush1.msra.mxu0 0.0
    %6060 = vmatprep.subr.mxu0 0.0
    %6061 = vmatpush1.msra.mxu0 0.0
    %6062 = vmatprep.subr.mxu0 0.0
    %6063 = vmatpush1.msra.mxu0 0.0
    %6064 = vmatprep.subr.mxu0 0.0
    %6065 = vmatpush1.msra.mxu0 0.0
    %6066 = vmatprep.subr.mxu0 0.0
    %6067 = vmatpush1.msra.mxu0 0.0
    %6068 = vmatprep.subr.mxu0 0.0
    %6069 = vmatpush1.msra.mxu0 0.0
    %6070 = vmatprep.subr.mxu0 0.0
    %6071 = vmatpush1.msra.mxu0 0.0
    %6072 = vmatprep.subr.mxu0 0.0
    %6073 = vmatpush1.msra.mxu0 0.0
    %6074 = vmatprep.subr.mxu0 0.0
    %6075 = vmatpush1.msra.mxu0 0.0
    %6076 = vmatprep.subr.mxu0 0.0
    %6077 = vmatpush1.msra.mxu0 0.0
    %6078 = vmatprep.subr.mxu0 0.0
    %6079 = vmatpush1.msra.mxu0 0.0
    %6080 = vmatprep.subr.mxu0 0.0
    %6081 = vmatpush1.msra.mxu0 0.0
    %6082 = vmatprep.subr.mxu0 0.0
    %6083 = vmatpush1.msra.mxu0 %v4742
    %6084 = vmatprep.subr.mxu0 0.0
    %6085 = vmatpush1.msra.mxu0 %v4741
    %6086 = vmatprep.subr.mxu0 0.0
    %6087 = vmatpush2.msra.mxu0 0.0
    %6088 = vmatprep.subr.mxu0 0.0
    %6089 = vmatpush2.msra.mxu0 0.0
    %6090 = vmatprep.subr.mxu0 0.0
    %6091 = vmatpush2.msra.mxu0 0.0
    %6092 = vmatprep.subr.mxu0 0.0
    %6093 = vmatpush2.msra.mxu0 0.0
    %6094 = vmatprep.subr.mxu0 0.0
    %6095 = vmatpush2.msra.mxu0 0.0
    %6096 = vmatprep.subr.mxu0 0.0
    %6097 = vmatpush2.msra.mxu0 0.0
    %6098 = vmatprep.subr.mxu0 0.0
    %6099 = vmatpush2.msra.mxu0 0.0
    %6100 = vmatprep.subr.mxu0 0.0
    %6101 = vmatpush2.msra.mxu0 0.0
    %6102 = vmatprep.subr.mxu0 0.0
    %6103 = vmatpush2.msra.mxu0 0.0
    %6104 = vmatprep.subr.mxu0 0.0
    %6105 = vmatpush2.msra.mxu0 0.0
    %6106 = vmatprep.subr.mxu0 0.0
    %6107 = vmatpush2.msra.mxu0 0.0
    %6108 = vmatprep.subr.mxu0 0.0
    %6109 = vmatpush2.msra.mxu0 0.0
    %6110 = vmatprep.subr.mxu0 0.0
    %6111 = vmatpush2.msra.mxu0 0.0
    %6112 = vmatprep.subr.mxu0 0.0
    %6113 = vmatpush2.msra.mxu0 0.0
    %6114 = vmatprep.subr.mxu0 0.0
    %6115 = vmatpush2.msra.mxu0 0.0
    %6116 = vmatprep.subr.mxu0 0.0
    %6117 = vmatpush2.msra.mxu0 0.0
    %6118 = vmatprep.mubr.f32.mxu0 0.0
    %6119 = vmatmul.mubr.f32.gmra.mxu0 %v6052
    %v6120 = vpop.f32.mrf.mxu0
    %v6121 = vadd.f32 %v6048, %v6120
    %v6122 = vpop.f32.mrf.mxu0
    %6123 = vdwg.mxu0
    %v6124 = vadd.f32 %v6121, %v5366
    %v6125 = vadd.f32 %v4734, %v6124
    %v6126 = vsel %vm3118, %v6125, 0.0
    %6127 = vadd.xlane.f32.xlu0 %v6126
    %v6128 = vpop.xlane.xlu0 %6127
    %v6129 = vmul.f32 %v6128, %v227
    %v6130 = vmul.f32 %v6125, %v6125
    %v6131 = vsel %vm3118, %v6130, 0.0
    %6132 = vadd.xlane.f32.xlu0 %v6131
    %v6133 = vpop.xlane.xlu0 %6132
    %v6134 = vmul.f32 %v6133, %v227
    %v6135 = vmul.f32 %v6129, %v6129
    %v6136 = vsub.f32 %v6134, %v6135
    %v6137 = vsub.f32 %v6125, %v6129
    %v6138 = vadd.f32 %v6136, 1e-05
    %v6139 = vrsqrt.pop %v6138
    %v6140 = vmul.f32 %v6137, %v6139
    %v6141 = vmul.f32 %v6140, %v5387
    %v6142 = vadd.f32 %v6141, %v5392
    %v6144 = vsel %vm220, %v6142, 0
    %6146 = vmatprep.subr.mxu0 0.0
    %6147 = vmatpush1.msra.mxu0 0.0
    %6148 = vmatprep.subr.mxu0 0.0
    %6149 = vmatpush1.msra.mxu0 0.0
    %6150 = vmatprep.subr.mxu0 0.0
    %6151 = vmatpush1.msra.mxu0 0.0
    %6152 = vmatprep.subr.mxu0 0.0
    %6153 = vmatpush1.msra.mxu0 0.0
    %6154 = vmatprep.subr.mxu0 0.0
    %6155 = vmatpush1.msra.mxu0 0.0
    %6156 = vmatprep.subr.mxu0 0.0
    %6157 = vmatpush1.msra.mxu0 0.0
    %6158 = vmatprep.subr.mxu0 0.0
    %6159 = vmatpush1.msra.mxu0 0.0
    %6160 = vmatprep.subr.mxu0 0.0
    %6161 = vmatpush1.msra.mxu0 0.0
    %6162 = vmatprep.subr.mxu0 0.0
    %6163 = vmatpush1.msra.mxu0 0.0
    %6164 = vmatprep.subr.mxu0 0.0
    %6165 = vmatpush1.msra.mxu0 0.0
    %6166 = vmatprep.subr.mxu0 0.0
    %6167 = vmatpush1.msra.mxu0 0.0
    %6168 = vmatprep.subr.mxu0 0.0
    %6169 = vmatpush1.msra.mxu0 0.0
    %6170 = vmatprep.subr.mxu0 0.0
    %6171 = vmatpush1.msra.mxu0 %v4749
    %6172 = vmatprep.subr.mxu0 0.0
    %6173 = vmatpush1.msra.mxu0 %v4748
    %6174 = vmatprep.subr.mxu0 0.0
    %6175 = vmatpush1.msra.mxu0 %v4747
    %6176 = vmatprep.subr.mxu0 0.0
    %6177 = vmatpush1.msra.mxu0 %v4746
    %6178 = vmatprep.subr.mxu0 0.0
    %6179 = vmatpush2.msra.mxu0 0.0
    %6180 = vmatprep.subr.mxu0 0.0
    %6181 = vmatpush2.msra.mxu0 0.0
    %6182 = vmatprep.subr.mxu0 0.0
    %6183 = vmatpush2.msra.mxu0 0.0
    %6184 = vmatprep.subr.mxu0 0.0
    %6185 = vmatpush2.msra.mxu0 0.0
    %6186 = vmatprep.subr.mxu0 0.0
    %6187 = vmatpush2.msra.mxu0 0.0
    %6188 = vmatprep.subr.mxu0 0.0
    %6189 = vmatpush2.msra.mxu0 0.0
    %6190 = vmatprep.subr.mxu0 0.0
    %6191 = vmatpush2.msra.mxu0 0.0
    %6192 = vmatprep.subr.mxu0 0.0
    %6193 = vmatpush2.msra.mxu0 0.0
    %6194 = vmatprep.subr.mxu0 0.0
    %6195 = vmatpush2.msra.mxu0 0.0
    %6196 = vmatprep.subr.mxu0 0.0
    %6197 = vmatpush2.msra.mxu0 0.0
    %6198 = vmatprep.subr.mxu0 0.0
    %6199 = vmatpush2.msra.mxu0 0.0
    %6200 = vmatprep.subr.mxu0 0.0
    %6201 = vmatpush2.msra.mxu0 0.0
    %6202 = vmatprep.subr.mxu0 0.0
    %6203 = vmatpush2.msra.mxu0 0.0
    %6204 = vmatprep.subr.mxu0 0.0
    %6205 = vmatpush2.msra.mxu0 0.0
    %6206 = vmatprep.subr.mxu0 0.0
    %6207 = vmatpush2.msra.mxu0 0.0
    %6208 = vmatprep.subr.mxu0 0.0
    %6209 = vmatpush2.msra.mxu0 0.0
    %6210 = vmatprep.mubr.f32.mxu0 0.0
    %6211 = vmatmul.mubr.f32.gmra.mxu0 %v6144
    %v6212 = vpop.f32.mrf.mxu0
    %v6213 = vadd.f32 %v5397, %v6212
    %v6214 = vpop.f32.mrf.mxu0
    %6215 = vdwg.mxu0
    %v6216 = vmax.f32 %v6213, 0.0
    %v6218 = vsel %vm220, %v6216, 0
    %6220 = vmatprep.subr.mxu0 0.0
    %6221 = vmatpush1.msra.mxu0 0.0
    %6222 = vmatprep.subr.mxu0 0.0
    %6223 = vmatpush1.msra.mxu0 0.0
    %6224 = vmatprep.subr.mxu0 0.0
    %6225 = vmatpush1.msra.mxu0 0.0
    %6226 = vmatprep.subr.mxu0 0.0
    %6227 = vmatpush1.msra.mxu0 0.0
    %6228 = vmatprep.subr.mxu0 0.0
    %6229 = vmatpush1.msra.mxu0 0.0
    %6230 = vmatprep.subr.mxu0 0.0
    %6231 = vmatpush1.msra.mxu0 0.0
    %6232 = vmatprep.subr.mxu0 0.0
    %6233 = vmatpush1.msra.mxu0 0.0
    %6234 = vmatprep.subr.mxu0 0.0
    %6235 = vmatpush1.msra.mxu0 0.0
    %6236 = vmatprep.subr.mxu0 0.0
    %6237 = vmatpush1.msra.mxu0 0.0
    %6238 = vmatprep.subr.mxu0 0.0
    %6239 = vmatpush1.msra.mxu0 0.0
    %6240 = vmatprep.subr.mxu0 0.0
    %6241 = vmatpush1.msra.mxu0 0.0
    %6242 = vmatprep.subr.mxu0 0.0
    %6243 = vmatpush1.msra.mxu0 0.0
    %6244 = vmatprep.subr.mxu0 0.0
    %6245 = vmatpush1.msra.mxu0 %v4754
    %6246 = vmatprep.subr.mxu0 0.0
    %6247 = vmatpush1.msra.mxu0 %v4753
    %6248 = vmatprep.subr.mxu0 0.0
    %6249 = vmatpush1.msra.mxu0 %v4752
    %6250 = vmatprep.subr.mxu0 0.0
    %6251 = vmatpush1.msra.mxu0 %v4751
    %6252 = vmatprep.subr.mxu0 0.0
    %6253 = vmatpush2.msra.mxu0 0.0
    %6254 = vmatprep.subr.mxu0 0.0
    %6255 = vmatpush2.msra.mxu0 0.0
    %6256 = vmatprep.subr.mxu0 0.0
    %6257 = vmatpush2.msra.mxu0 0.0
    %6258 = vmatprep.subr.mxu0 0.0
    %6259 = vmatpush2.msra.mxu0 0.0
    %6260 = vmatprep.subr.mxu0 0.0
    %6261 = vmatpush2.msra.mxu0 0.0
    %6262 = vmatprep.subr.mxu0 0.0
    %6263 = vmatpush2.msra.mxu0 0.0
    %6264 = vmatprep.subr.mxu0 0.0
    %6265 = vmatpush2.msra.mxu0 0.0
    %6266 = vmatprep.subr.mxu0 0.0
    %6267 = vmatpush2.msra.mxu0 0.0
    %6268 = vmatprep.subr.mxu0 0.0
    %6269 = vmatpush2.msra.mxu0 0.0
    %6270 = vmatprep.subr.mxu0 0.0
    %6271 = vmatpush2.msra.mxu0 0.0
    %6272 = vmatprep.subr.mxu0 0.0
    %6273 = vmatpush2.msra.mxu0 0.0
    %6274 = vmatprep.subr.mxu0 0.0
    %6275 = vmatpush2.msra.mxu0 0.0
    %6276 = vmatprep.subr.mxu0 0.0
    %6277 = vmatpush2.msra.mxu0 0.0
    %6278 = vmatprep.subr.mxu0 0.0
    %6279 = vmatpush2.msra.mxu0 0.0
    %6280 = vmatprep.subr.mxu0 0.0
    %6281 = vmatpush2.msra.mxu0 0.0
    %6282 = vmatprep.subr.mxu0 0.0
    %6283 = vmatpush2.msra.mxu0 0.0
    %6284 = vmatprep.mubr.f32.mxu0 0.0
    %6285 = vmatmul.mubr.f32.gmra.mxu0 %v6218
    %v6286 = vpop.f32.mrf.mxu0
    %v6287 = vadd.f32 %v5475, %v6286
    %v6288 = vpop.f32.mrf.mxu0
    %6289 = vdwg.mxu0
    %v6290 = vadd.f32 %v6125, %v6287
    %s6291 = scalar_lea.vmem [#allocation10], 64
    %v6292 = vld [vmem:[%s6291] sm:$0xff]
    %v6293 = vld [vmem:[%s6291 + $0x8] sm:$0xff]
    %v6294 = vld [vmem:[%s6291 + $0x10] sm:$0xff]
    %v6295 = vld [vmem:[%s6291 + $0x18] sm:$0xff]
    %s6296 = scalar_lea.vmem %s8, 2
    %v6297 = vld [vmem:[%s6296] sm:$0x1]
    %v6299 = vlaneseq
    %v6300 = vshrl.u32 %v6299, 7
    %v6301 = vsub.s32 0, %v6300
    %v6302 = vrot.slane %v6297, %v6301
    %v6305 = vsel %vm220, %v5549, 0
    %6307 = vmatprep.subr.mxu0 0.0
    %6308 = vmatpush1.msra.mxu0 0.0
    %6309 = vmatprep.subr.mxu0 0.0
    %6310 = vmatpush1.msra.mxu0 0.0
    %6311 = vmatprep.subr.mxu0 0.0
    %6312 = vmatpush1.msra.mxu0 0.0
    %6313 = vmatprep.subr.mxu0 0.0
    %6314 = vmatpush1.msra.mxu0 0.0
    %6315 = vmatprep.subr.mxu0 0.0
    %6316 = vmatpush1.msra.mxu0 0.0
    %6317 = vmatprep.subr.mxu0 0.0
    %6318 = vmatpush1.msra.mxu0 0.0
    %6319 = vmatprep.subr.mxu0 0.0
    %6320 = vmatpush1.msra.mxu0 0.0
    %6321 = vmatprep.subr.mxu0 0.0
    %6322 = vmatpush1.msra.mxu0 0.0
    %6323 = vmatprep.subr.mxu0 0.0
    %6324 = vmatpush1.msra.mxu0 0.0
    %6325 = vmatprep.subr.mxu0 0.0
    %6326 = vmatpush1.msra.mxu0 0.0
    %6327 = vmatprep.subr.mxu0 0.0
    %6328 = vmatpush1.msra.mxu0 0.0
    %6329 = vmatprep.subr.mxu0 0.0
    %6330 = vmatpush1.msra.mxu0 0.0
    %6331 = vmatprep.subr.mxu0 0.0
    %6332 = vmatpush1.msra.mxu0 %v6295
    %6333 = vmatprep.subr.mxu0 0.0
    %6334 = vmatpush1.msra.mxu0 %v6294
    %6335 = vmatprep.subr.mxu0 0.0
    %6336 = vmatpush1.msra.mxu0 %v6293
    %6337 = vmatprep.subr.mxu0 0.0
    %6338 = vmatpush1.msra.mxu0 %v6292
    %6339 = vmatprep.subr.mxu0 0.0
    %6340 = vmatpush2.msra.mxu0 0.0
    %6341 = vmatprep.subr.mxu0 0.0
    %6342 = vmatpush2.msra.mxu0 0.0
    %6343 = vmatprep.subr.mxu0 0.0
    %6344 = vmatpush2.msra.mxu0 0.0
    %6345 = vmatprep.subr.mxu0 0.0
    %6346 = vmatpush2.msra.mxu0 0.0
    %6347 = vmatprep.subr.mxu0 0.0
    %6348 = vmatpush2.msra.mxu0 0.0
    %6349 = vmatprep.subr.mxu0 0.0
    %6350 = vmatpush2.msra.mxu0 0.0
    %6351 = vmatprep.subr.mxu0 0.0
    %6352 = vmatpush2.msra.mxu0 0.0
    %6353 = vmatprep.subr.mxu0 0.0
    %6354 = vmatpush2.msra.mxu0 0.0
    %6355 = vmatprep.subr.mxu0 0.0
    %6356 = vmatpush2.msra.mxu0 0.0
    %6357 = vmatprep.subr.mxu0 0.0
    %6358 = vmatpush2.msra.mxu0 0.0
    %6359 = vmatprep.subr.mxu0 0.0
    %6360 = vmatpush2.msra.mxu0 0.0
    %6361 = vmatprep.subr.mxu0 0.0
    %6362 = vmatpush2.msra.mxu0 0.0
    %6363 = vmatprep.subr.mxu0 0.0
    %6364 = vmatpush2.msra.mxu0 0.0
    %6365 = vmatprep.subr.mxu0 0.0
    %6366 = vmatpush2.msra.mxu0 0.0
    %6367 = vmatprep.subr.mxu0 0.0
    %6368 = vmatpush2.msra.mxu0 0.0
    %6369 = vmatprep.subr.mxu0 0.0
    %6370 = vmatpush2.msra.mxu0 0.0
    %6371 = vmatprep.mubr.f32.mxu0 0.0
    %6372 = vmatmul.mubr.f32.gmra.mxu0 %v6305
    %v6373 = vpop.f32.mrf.mxu0
    %v6374 = vadd.f32 %v6302, %v6373
    %v6375 = vpop.f32.mrf.mxu0
    %6376 = vdwg.mxu0
    %v6378 = vsel %vm220, %v6290, 0
    %6380 = vmatprep.subr.mxu0 0.0
    %6381 = vmatpush1.msra.mxu0 0.0
    %6382 = vmatprep.subr.mxu0 0.0
    %6383 = vmatpush1.msra.mxu0 0.0
    %6384 = vmatprep.subr.mxu0 0.0
    %6385 = vmatpush1.msra.mxu0 0.0
    %6386 = vmatprep.subr.mxu0 0.0
    %6387 = vmatpush1.msra.mxu0 0.0
    %6388 = vmatprep.subr.mxu0 0.0
    %6389 = vmatpush1.msra.mxu0 0.0
    %6390 = vmatprep.subr.mxu0 0.0
    %6391 = vmatpush1.msra.mxu0 0.0
    %6392 = vmatprep.subr.mxu0 0.0
    %6393 = vmatpush1.msra.mxu0 0.0
    %6394 = vmatprep.subr.mxu0 0.0
    %6395 = vmatpush1.msra.mxu0 0.0
    %6396 = vmatprep.subr.mxu0 0.0
    %6397 = vmatpush1.msra.mxu0 0.0
    %6398 = vmatprep.subr.mxu0 0.0
    %6399 = vmatpush1.msra.mxu0 0.0
    %6400 = vmatprep.subr.mxu0 0.0
    %6401 = vmatpush1.msra.mxu0 0.0
    %6402 = vmatprep.subr.mxu0 0.0
    %6403 = vmatpush1.msra.mxu0 0.0
    %6404 = vmatprep.subr.mxu0 0.0
    %6405 = vmatpush1.msra.mxu0 %v6295
    %6406 = vmatprep.subr.mxu0 0.0
    %6407 = vmatpush1.msra.mxu0 %v6294
    %6408 = vmatprep.subr.mxu0 0.0
    %6409 = vmatpush1.msra.mxu0 %v6293
    %6410 = vmatprep.subr.mxu0 0.0
    %6411 = vmatpush1.msra.mxu0 %v6292
    %6412 = vmatprep.subr.mxu0 0.0
    %6413 = vmatpush2.msra.mxu0 0.0
    %6414 = vmatprep.subr.mxu0 0.0
    %6415 = vmatpush2.msra.mxu0 0.0
    %6416 = vmatprep.subr.mxu0 0.0
    %6417 = vmatpush2.msra.mxu0 0.0
    %6418 = vmatprep.subr.mxu0 0.0
    %6419 = vmatpush2.msra.mxu0 0.0
    %6420 = vmatprep.subr.mxu0 0.0
    %6421 = vmatpush2.msra.mxu0 0.0
    %6422 = vmatprep.subr.mxu0 0.0
    %6423 = vmatpush2.msra.mxu0 0.0
    %6424 = vmatprep.subr.mxu0 0.0
    %6425 = vmatpush2.msra.mxu0 0.0
    %6426 = vmatprep.subr.mxu0 0.0
    %6427 = vmatpush2.msra.mxu0 0.0
    %6428 = vmatprep.subr.mxu0 0.0
    %6429 = vmatpush2.msra.mxu0 0.0
    %6430 = vmatprep.subr.mxu0 0.0
    %6431 = vmatpush2.msra.mxu0 0.0
    %6432 = vmatprep.subr.mxu0 0.0
    %6433 = vmatpush2.msra.mxu0 0.0
    %6434 = vmatprep.subr.mxu0 0.0
    %6435 = vmatpush2.msra.mxu0 0.0
    %6436 = vmatprep.subr.mxu0 0.0
    %6437 = vmatpush2.msra.mxu0 0.0
    %6438 = vmatprep.subr.mxu0 0.0
    %6439 = vmatpush2.msra.mxu0 0.0
    %6440 = vmatprep.subr.mxu0 0.0
    %6441 = vmatpush2.msra.mxu0 0.0
    %6442 = vmatprep.subr.mxu0 0.0
    %6443 = vmatpush2.msra.mxu0 0.0
    %6444 = vmatprep.mubr.f32.mxu0 0.0
    %6445 = vmatmul.mubr.f32.gmra.mxu0 %v6378
    %v6446 = vpop.f32.mrf.mxu0
    %v6447 = vadd.f32 %v6302, %v6446
    %v6448 = vpop.f32.mrf.mxu0
    %6449 = vdwg.mxu0
    %s6450 = scalar_lea.vmem %s4, 128
    %v6451 = vld [vmem:[%s6450] sm:$0xff]
    %v6452 = vld [vmem:[%s6450 + $0x8] sm:$0xff]
    %v6453 = vld [vmem:[%s6450 + $0x10] sm:$0xff]
    %v6454 = vld [vmem:[%s6450 + $0x18] sm:$0xff]
    %s6455 = scalar_lea.vmem [#allocation7], 384
    %v6456 = vld [vmem:[%s6455] sm:$0xff]
    %v6457 = vld [vmem:[%s6455 + $0x8] sm:$0xff]
    %v6458 = vld [vmem:[%s6455 + $0x10] sm:$0xff]
    %v6459 = vld [vmem:[%s6455 + $0x18] sm:$0xff]
    %s6460 = scalar_lea.vmem [#allocation7], 416
    %v6461 = vld [vmem:[%s6460] sm:$0xff]
    %v6462 = vld [vmem:[%s6460 + $0x8] sm:$0xff]
    %v6463 = vld [vmem:[%s6460 + $0x10] sm:$0xff]
    %v6464 = vld [vmem:[%s6460 + $0x18] sm:$0xff]
    %s6465 = scalar_lea.vmem [#allocation7], 448
    %v6466 = vld [vmem:[%s6465] sm:$0xff]
    %v6467 = vld [vmem:[%s6465 + $0x8] sm:$0xff]
    %v6468 = vld [vmem:[%s6465 + $0x10] sm:$0xff]
    %v6469 = vld [vmem:[%s6465 + $0x18] sm:$0xff]
    %s6470 = scalar_lea.vmem [#allocation8], 64
    %v6471 = vld [vmem:[%s6470] sm:$0xff]
    %v6472 = vld [vmem:[%s6470 + $0x8] sm:$0x3]
    %v6473 = vsel %vm3118, %v6374, 0.0
    %6474 = vadd.xlane.f32.xlu0 %v6473
    %v6475 = vpop.xlane.xlu0 %6474
    %v6476 = vmul.f32 %v6475, %v227
    %v6477 = vmul.f32 %v6374, %v6374
    %v6478 = vsel %vm3118, %v6477, 0.0
    %6479 = vadd.xlane.f32.xlu0 %v6478
    %v6480 = vpop.xlane.xlu0 %6479
    %v6481 = vmul.f32 %v6480, %v227
    %v6482 = vmul.f32 %v6476, %v6476
    %v6483 = vsub.f32 %v6481, %v6482
    %v6484 = vsub.f32 %v6374, %v6476
    %v6485 = vadd.f32 %v6483, 1e-05
    %v6486 = vrsqrt.pop %v6485
    %v6487 = vmul.f32 %v6484, %v6486
    %v6488 = vlaneseq
    %v6489 = vshrl.u32 %v6488, 7
    %v6490 = vsub.s32 4, %v6489
    %v6491 = vrot.slane %v6471, %v6490
    %v6492 = vmul.f32 %v6487, %v6491
    %v6493 = vlaneseq
    %v6494 = vshrl.u32 %v6493, 7
    %v6495 = vsub.s32 5, %v6494
    %v6496 = vrot.slane %v6471, %v6495
    %v6497 = vadd.f32 %v6492, %v6496
    %v6499 = vsel %vm220, %v6497, 0
    %6501 = vmatprep.subr.mxu0 0.0
    %6502 = vmatpush1.msra.mxu0 0.0
    %6503 = vmatprep.subr.mxu0 0.0
    %6504 = vmatpush1.msra.mxu0 0.0
    %6505 = vmatprep.subr.mxu0 0.0
    %6506 = vmatpush1.msra.mxu0 0.0
    %6507 = vmatprep.subr.mxu0 0.0
    %6508 = vmatpush1.msra.mxu0 0.0
    %6509 = vmatprep.subr.mxu0 0.0
    %6510 = vmatpush1.msra.mxu0 0.0
    %6511 = vmatprep.subr.mxu0 0.0
    %6512 = vmatpush1.msra.mxu0 0.0
    %6513 = vmatprep.subr.mxu0 0.0
    %6514 = vmatpush1.msra.mxu0 0.0
    %6515 = vmatprep.subr.mxu0 0.0
    %6516 = vmatpush1.msra.mxu0 0.0
    %6517 = vmatprep.subr.mxu0 0.0
    %6518 = vmatpush1.msra.mxu0 0.0
    %6519 = vmatprep.subr.mxu0 0.0
    %6520 = vmatpush1.msra.mxu0 0.0
    %6521 = vmatprep.subr.mxu0 0.0
    %6522 = vmatpush1.msra.mxu0 0.0
    %6523 = vmatprep.subr.mxu0 0.0
    %6524 = vmatpush1.msra.mxu0 0.0
    %6525 = vmatprep.subr.mxu0 0.0
    %6526 = vmatpush1.msra.mxu0 %v6454
    %6527 = vmatprep.subr.mxu0 0.0
    %6528 = vmatpush1.msra.mxu0 %v6453
    %6529 = vmatprep.subr.mxu0 0.0
    %6530 = vmatpush1.msra.mxu0 %v6452
    %6531 = vmatprep.subr.mxu0 0.0
    %6532 = vmatpush1.msra.mxu0 %v6451
    %6533 = vmatprep.subr.mxu0 0.0
    %6534 = vmatpush2.msra.mxu0 0.0
    %6535 = vmatprep.subr.mxu0 0.0
    %6536 = vmatpush2.msra.mxu0 0.0
    %6537 = vmatprep.subr.mxu0 0.0
    %6538 = vmatpush2.msra.mxu0 0.0
    %6539 = vmatprep.subr.mxu0 0.0
    %6540 = vmatpush2.msra.mxu0 0.0
    %6541 = vmatprep.subr.mxu0 0.0
    %6542 = vmatpush2.msra.mxu0 0.0
    %6543 = vmatprep.subr.mxu0 0.0
    %6544 = vmatpush2.msra.mxu0 0.0
    %6545 = vmatprep.subr.mxu0 0.0
    %6546 = vmatpush2.msra.mxu0 0.0
    %6547 = vmatprep.subr.mxu0 0.0
    %6548 = vmatpush2.msra.mxu0 0.0
    %6549 = vmatprep.subr.mxu0 0.0
    %6550 = vmatpush2.msra.mxu0 0.0
    %6551 = vmatprep.subr.mxu0 0.0
    %6552 = vmatpush2.msra.mxu0 0.0
    %6553 = vmatprep.subr.mxu0 0.0
    %6554 = vmatpush2.msra.mxu0 0.0
    %6555 = vmatprep.subr.mxu0 0.0
    %6556 = vmatpush2.msra.mxu0 0.0
    %6557 = vmatprep.subr.mxu0 0.0
    %6558 = vmatpush2.msra.mxu0 0.0
    %6559 = vmatprep.subr.mxu0 0.0
    %6560 = vmatpush2.msra.mxu0 0.0
    %6561 = vmatprep.subr.mxu0 0.0
    %6562 = vmatpush2.msra.mxu0 0.0
    %6563 = vmatprep.subr.mxu0 0.0
    %6564 = vmatpush2.msra.mxu0 0.0
    %6565 = vmatprep.mubr.f32.mxu0 0.0
    %6566 = vmatmul.mubr.f32.gmra.mxu0 %v6499
    %v6567 = vpop.f32.mrf.mxu0
    %v6568 = vadd.f32 0.0, %v6567
    %v6569 = vpop.f32.mrf.mxu0
    %6570 = vdwg.mxu0
    %v6571 = vlaneseq
    %v6572 = vshrl.u32 %v6571, 7
    %v6573 = vsub.s32 0, %v6572
    %v6574 = vrot.slane %v6471, %v6573
    %v6575 = vadd.f32 %v6568, %v6574
    %v6576 = vlaneseq
    %v6577 = vshrl.u32 %v6576, 7
    %v6578 = vsub.s32 1, %v6577
    %v6579 = vrot.slane %v6471, %v6578
    %6581 = vrot.lane.b32.xlu0 %v6579, 32
    %v6582 = vpop.permute.xlu0 %6581
    %v6584 = vadd.f32 %v6568, %v6582
    %v6585 = vlaneseq
    %v6586 = vshrl.u32 %v6585, 7
    %v6587 = vsub.s32 2, %v6586
    %v6588 = vrot.slane %v6471, %v6587
    %6590 = vrot.lane.b32.xlu0 %v6588, 64
    %v6591 = vpop.permute.xlu0 %6590
    %v6593 = vadd.f32 %v6568, %v6591
    %6595 = vrot.lane.b32.xlu0 %v6584, 96
    %v6596 = vpop.permute.xlu0 %6595
    %v6598 = vsel %vm118, %v6575, 0
    %v6600 = vsel %vm118, %v6596, 0
    %6602 = vmatprep.subr.mxu0 0.0
    %6603 = vmatpush1.xpose.msra.mxu0 0.0
    %6604 = vmatprep.subr.mxu0 0.0
    %6605 = vmatpush1.xpose.msra.mxu0 0.0
    %6606 = vmatprep.subr.mxu0 0.0
    %6607 = vmatpush1.xpose.msra.mxu0 0.0
    %6608 = vmatprep.subr.mxu0 0.0
    %6609 = vmatpush1.xpose.msra.mxu0 0.0
    %6610 = vmatprep.subr.mxu0 0.0
    %6611 = vmatpush1.xpose.msra.mxu0 0.0
    %6612 = vmatprep.subr.mxu0 0.0
    %6613 = vmatpush1.xpose.msra.mxu0 0.0
    %6614 = vmatprep.subr.mxu0 0.0
    %6615 = vmatpush1.xpose.msra.mxu0 0.0
    %6616 = vmatprep.subr.mxu0 0.0
    %6617 = vmatpush1.xpose.msra.mxu0 0.0
    %6618 = vmatprep.subr.mxu0 0.0
    %6619 = vmatpush1.xpose.msra.mxu0 0.0
    %6620 = vmatprep.subr.mxu0 0.0
    %6621 = vmatpush1.xpose.msra.mxu0 0.0
    %6622 = vmatprep.subr.mxu0 0.0
    %6623 = vmatpush1.xpose.msra.mxu0 0.0
    %6624 = vmatprep.subr.mxu0 0.0
    %6625 = vmatpush1.xpose.msra.mxu0 0.0
    %6626 = vmatprep.subr.mxu0 0.0
    %6627 = vmatpush1.xpose.msra.mxu0 0.0
    %6628 = vmatprep.subr.mxu0 0.0
    %6629 = vmatpush1.xpose.msra.mxu0 0.0
    %6630 = vmatprep.subr.mxu0 0.0
    %6631 = vmatpush1.xpose.msra.mxu0 0.0
    %6632 = vmatprep.subr.mxu0 0.0
    %6633 = vmatpush1.xpose.msra.mxu0 %v6600
    %6634 = vmatprep.subr.mxu0 0.0
    %6635 = vmatpush2.xpose.msra.mxu0 0.0
    %6636 = vmatprep.subr.mxu0 0.0
    %6637 = vmatpush2.xpose.msra.mxu0 0.0
    %6638 = vmatprep.subr.mxu0 0.0
    %6639 = vmatpush2.xpose.msra.mxu0 0.0
    %6640 = vmatprep.subr.mxu0 0.0
    %6641 = vmatpush2.xpose.msra.mxu0 0.0
    %6642 = vmatprep.subr.mxu0 0.0
    %6643 = vmatpush2.xpose.msra.mxu0 0.0
    %6644 = vmatprep.subr.mxu0 0.0
    %6645 = vmatpush2.xpose.msra.mxu0 0.0
    %6646 = vmatprep.subr.mxu0 0.0
    %6647 = vmatpush2.xpose.msra.mxu0 0.0
    %6648 = vmatprep.subr.mxu0 0.0
    %6649 = vmatpush2.xpose.msra.mxu0 0.0
    %6650 = vmatprep.subr.mxu0 0.0
    %6651 = vmatpush2.xpose.msra.mxu0 0.0
    %6652 = vmatprep.subr.mxu0 0.0
    %6653 = vmatpush2.xpose.msra.mxu0 0.0
    %6654 = vmatprep.subr.mxu0 0.0
    %6655 = vmatpush2.xpose.msra.mxu0 0.0
    %6656 = vmatprep.subr.mxu0 0.0
    %6657 = vmatpush2.xpose.msra.mxu0 0.0
    %6658 = vmatprep.subr.mxu0 0.0
    %6659 = vmatpush2.xpose.msra.mxu0 0.0
    %6660 = vmatprep.subr.mxu0 0.0
    %6661 = vmatpush2.xpose.msra.mxu0 0.0
    %6662 = vmatprep.subr.mxu0 0.0
    %6663 = vmatpush2.xpose.msra.mxu0 0.0
    %6664 = vmatprep.subr.mxu0 0.0
    %6665 = vmatpush2.xpose.msra.mxu0 0.0
    %6666 = vmatprep.mubr.f32.mxu0 0.0
    %6667 = vmatmul.mubr.f32.gmra.mxu0 %v6598
    %v6668 = vpop.f32.mrf.mxu0
    %v6669 = vadd.f32 0.0, %v6668
    %v6670 = vpop.f32.mrf.mxu0
    %6671 = vdwg.mxu0
    %v6672 = vmul.f32 %v6669, 0.25
    %v6673 = vsel %vm4958, %v6672, -inf
    %6674 = vmax.xlane.f32.xlu0 %v6673
    %v6675 = vpop.xlane.xlu0 %6674
    %v6676 = vsub.f32 %v6672, %v6675
    %v6677 = vmul.f32 %v6676, 1.442695
    %v6678 = vpow.pop %v6677
    %v6679 = vsel %vm4958, %v6678, 0.0
    %6680 = vadd.xlane.f32.xlu0 %v6679
    %v6681 = vpop.xlane.xlu0 %6680
    %v6682 = vrcp.pop %v6681
    %v6683 = vmul.f32 %v6678, %v6682
    %6685 = vrot.lane.b32.xlu0 %v6593, 64
    %v6686 = vpop.permute.xlu0 %6685
    %v6688 = vsel %vm4973, %v6683, 0
    %v6690 = vsel %vm4977, %v6686, 0
    %6692 = vmatprep.subr.mxu0 0.0
    %6693 = vmatpush1.msra.mxu0 0.0
    %6694 = vmatprep.subr.mxu0 0.0
    %6695 = vmatpush1.msra.mxu0 0.0
    %6696 = vmatprep.subr.mxu0 0.0
    %6697 = vmatpush1.msra.mxu0 0.0
    %6698 = vmatprep.subr.mxu0 0.0
    %6699 = vmatpush1.msra.mxu0 0.0
    %6700 = vmatprep.subr.mxu0 0.0
    %6701 = vmatpush1.msra.mxu0 0.0
    %6702 = vmatprep.subr.mxu0 0.0
    %6703 = vmatpush1.msra.mxu0 0.0
    %6704 = vmatprep.subr.mxu0 0.0
    %6705 = vmatpush1.msra.mxu0 0.0
    %6706 = vmatprep.subr.mxu0 0.0
    %6707 = vmatpush1.msra.mxu0 0.0
    %6708 = vmatprep.subr.mxu0 0.0
    %6709 = vmatpush1.msra.mxu0 0.0
    %6710 = vmatprep.subr.mxu0 0.0
    %6711 = vmatpush1.msra.mxu0 0.0
    %6712 = vmatprep.subr.mxu0 0.0
    %6713 = vmatpush1.msra.mxu0 0.0
    %6714 = vmatprep.subr.mxu0 0.0
    %6715 = vmatpush1.msra.mxu0 0.0
    %6716 = vmatprep.subr.mxu0 0.0
    %6717 = vmatpush1.msra.mxu0 0.0
    %6718 = vmatprep.subr.mxu0 0.0
    %6719 = vmatpush1.msra.mxu0 0.0
    %6720 = vmatprep.subr.mxu0 0.0
    %6721 = vmatpush1.msra.mxu0 0.0
    %6722 = vmatprep.subr.mxu0 0.0
    %6723 = vmatpush1.msra.mxu0 %v6690
    %6724 = vmatprep.subr.mxu0 0.0
    %6725 = vmatpush2.msra.mxu0 0.0
    %6726 = vmatprep.subr.mxu0 0.0
    %6727 = vmatpush2.msra.mxu0 0.0
    %6728 = vmatprep.subr.mxu0 0.0
    %6729 = vmatpush2.msra.mxu0 0.0
    %6730 = vmatprep.subr.mxu0 0.0
    %6731 = vmatpush2.msra.mxu0 0.0
    %6732 = vmatprep.subr.mxu0 0.0
    %6733 = vmatpush2.msra.mxu0 0.0
    %6734 = vmatprep.subr.mxu0 0.0
    %6735 = vmatpush2.msra.mxu0 0.0
    %6736 = vmatprep.subr.mxu0 0.0
    %6737 = vmatpush2.msra.mxu0 0.0
    %6738 = vmatprep.subr.mxu0 0.0
    %6739 = vmatpush2.msra.mxu0 0.0
    %6740 = vmatprep.subr.mxu0 0.0
    %6741 = vmatpush2.msra.mxu0 0.0
    %6742 = vmatprep.subr.mxu0 0.0
    %6743 = vmatpush2.msra.mxu0 0.0
    %6744 = vmatprep.subr.mxu0 0.0
    %6745 = vmatpush2.msra.mxu0 0.0
    %6746 = vmatprep.subr.mxu0 0.0
    %6747 = vmatpush2.msra.mxu0 0.0
    %6748 = vmatprep.subr.mxu0 0.0
    %6749 = vmatpush2.msra.mxu0 0.0
    %6750 = vmatprep.subr.mxu0 0.0
    %6751 = vmatpush2.msra.mxu0 0.0
    %6752 = vmatprep.subr.mxu0 0.0
    %6753 = vmatpush2.msra.mxu0 0.0
    %6754 = vmatprep.subr.mxu0 0.0
    %6755 = vmatpush2.msra.mxu0 0.0
    %6756 = vmatprep.mubr.f32.mxu0 0.0
    %6757 = vmatmul.mubr.f32.gmra.mxu0 %v6688
    %v6758 = vpop.f32.mrf.mxu0
    %v6759 = vadd.f32 0.0, %v6758
    %v6760 = vpop.f32.mrf.mxu0
    %6761 = vdwg.mxu0
    %6762 = vrot.lane.b32.xlu0 %v6575, 112
    %v6763 = vpop.permute.xlu0 %6762
    %6764 = vrot.lane.b32.xlu0 %v6584, 80
    %v6765 = vpop.permute.xlu0 %6764
    %v6766 = vsel %vm118, %v6763, 0
    %v6768 = vsel %vm118, %v6765, 0
    %6770 = vmatprep.subr.mxu0 0.0
    %6771 = vmatpush1.xpose.msra.mxu0 0.0
    %6772 = vmatprep.subr.mxu0 0.0
    %6773 = vmatpush1.xpose.msra.mxu0 0.0
    %6774 = vmatprep.subr.mxu0 0.0
    %6775 = vmatpush1.xpose.msra.mxu0 0.0
    %6776 = vmatprep.subr.mxu0 0.0
    %6777 = vmatpush1.xpose.msra.mxu0 0.0
    %6778 = vmatprep.subr.mxu0 0.0
    %6779 = vmatpush1.xpose.msra.mxu0 0.0
    %6780 = vmatprep.subr.mxu0 0.0
    %6781 = vmatpush1.xpose.msra.mxu0 0.0
    %6782 = vmatprep.subr.mxu0 0.0
    %6783 = vmatpush1.xpose.msra.mxu0 0.0
    %6784 = vmatprep.subr.mxu0 0.0
    %6785 = vmatpush1.xpose.msra.mxu0 0.0
    %6786 = vmatprep.subr.mxu0 0.0
    %6787 = vmatpush1.xpose.msra.mxu0 0.0
    %6788 = vmatprep.subr.mxu0 0.0
    %6789 = vmatpush1.xpose.msra.mxu0 0.0
    %6790 = vmatprep.subr.mxu0 0.0
    %6791 = vmatpush1.xpose.msra.mxu0 0.0
    %6792 = vmatprep.subr.mxu0 0.0
    %6793 = vmatpush1.xpose.msra.mxu0 0.0
    %6794 = vmatprep.subr.mxu0 0.0
    %6795 = vmatpush1.xpose.msra.mxu0 0.0
    %6796 = vmatprep.subr.mxu0 0.0
    %6797 = vmatpush1.xpose.msra.mxu0 0.0
    %6798 = vmatprep.subr.mxu0 0.0
    %6799 = vmatpush1.xpose.msra.mxu0 0.0
    %6800 = vmatprep.subr.mxu0 0.0
    %6801 = vmatpush1.xpose.msra.mxu0 %v6768
    %6802 = vmatprep.subr.mxu0 0.0
    %6803 = vmatpush2.xpose.msra.mxu0 0.0
    %6804 = vmatprep.subr.mxu0 0.0
    %6805 = vmatpush2.xpose.msra.mxu0 0.0
    %6806 = vmatprep.subr.mxu0 0.0
    %6807 = vmatpush2.xpose.msra.mxu0 0.0
    %6808 = vmatprep.subr.mxu0 0.0
    %6809 = vmatpush2.xpose.msra.mxu0 0.0
    %6810 = vmatprep.subr.mxu0 0.0
    %6811 = vmatpush2.xpose.msra.mxu0 0.0
    %6812 = vmatprep.subr.mxu0 0.0
    %6813 = vmatpush2.xpose.msra.mxu0 0.0
    %6814 = vmatprep.subr.mxu0 0.0
    %6815 = vmatpush2.xpose.msra.mxu0 0.0
    %6816 = vmatprep.subr.mxu0 0.0
    %6817 = vmatpush2.xpose.msra.mxu0 0.0
    %6818 = vmatprep.subr.mxu0 0.0
    %6819 = vmatpush2.xpose.msra.mxu0 0.0
    %6820 = vmatprep.subr.mxu0 0.0
    %6821 = vmatpush2.xpose.msra.mxu0 0.0
    %6822 = vmatprep.subr.mxu0 0.0
    %6823 = vmatpush2.xpose.msra.mxu0 0.0
    %6824 = vmatprep.subr.mxu0 0.0
    %6825 = vmatpush2.xpose.msra.mxu0 0.0
    %6826 = vmatprep.subr.mxu0 0.0
    %6827 = vmatpush2.xpose.msra.mxu0 0.0
    %6828 = vmatprep.subr.mxu0 0.0
    %6829 = vmatpush2.xpose.msra.mxu0 0.0
    %6830 = vmatprep.subr.mxu0 0.0
    %6831 = vmatpush2.xpose.msra.mxu0 0.0
    %6832 = vmatprep.subr.mxu0 0.0
    %6833 = vmatpush2.xpose.msra.mxu0 0.0
    %6834 = vmatprep.mubr.f32.mxu0 0.0
    %6835 = vmatmul.mubr.f32.gmra.mxu0 %v6766
    %v6836 = vpop.f32.mrf.mxu0
    %v6837 = vadd.f32 0.0, %v6836
    %v6838 = vpop.f32.mrf.mxu0
    %6839 = vdwg.mxu0
    %v6840 = vmul.f32 %v6837, 0.25
    %v6841 = vsel %vm4958, %v6840, -inf
    %6842 = vmax.xlane.f32.xlu0 %v6841
    %v6843 = vpop.xlane.xlu0 %6842
    %v6844 = vsub.f32 %v6840, %v6843
    %v6845 = vmul.f32 %v6844, 1.442695
    %v6846 = vpow.pop %v6845
    %v6847 = vsel %vm4958, %v6846, 0.0
    %6848 = vadd.xlane.f32.xlu0 %v6847
    %v6849 = vpop.xlane.xlu0 %6848
    %v6850 = vrcp.pop %v6849
    %v6851 = vmul.f32 %v6846, %v6850
    %6852 = vrot.lane.b32.xlu0 %v6593, 48
    %v6853 = vpop.permute.xlu0 %6852
    %v6855 = vsel %vm4973, %v6851, 0
    %v6857 = vsel %vm4977, %v6853, 0
    %6859 = vmatprep.subr.mxu0 0.0
    %6860 = vmatpush1.msra.mxu0 0.0
    %6861 = vmatprep.subr.mxu0 0.0
    %6862 = vmatpush1.msra.mxu0 0.0
    %6863 = vmatprep.subr.mxu0 0.0
    %6864 = vmatpush1.msra.mxu0 0.0
    %6865 = vmatprep.subr.mxu0 0.0
    %6866 = vmatpush1.msra.mxu0 0.0
    %6867 = vmatprep.subr.mxu0 0.0
    %6868 = vmatpush1.msra.mxu0 0.0
    %6869 = vmatprep.subr.mxu0 0.0
    %6870 = vmatpush1.msra.mxu0 0.0
    %6871 = vmatprep.subr.mxu0 0.0
    %6872 = vmatpush1.msra.mxu0 0.0
    %6873 = vmatprep.subr.mxu0 0.0
    %6874 = vmatpush1.msra.mxu0 0.0
    %6875 = vmatprep.subr.mxu0 0.0
    %6876 = vmatpush1.msra.mxu0 0.0
    %6877 = vmatprep.subr.mxu0 0.0
    %6878 = vmatpush1.msra.mxu0 0.0
    %6879 = vmatprep.subr.mxu0 0.0
    %6880 = vmatpush1.msra.mxu0 0.0
    %6881 = vmatprep.subr.mxu0 0.0
    %6882 = vmatpush1.msra.mxu0 0.0
    %6883 = vmatprep.subr.mxu0 0.0
    %6884 = vmatpush1.msra.mxu0 0.0
    %6885 = vmatprep.subr.mxu0 0.0
    %6886 = vmatpush1.msra.mxu0 0.0
    %6887 = vmatprep.subr.mxu0 0.0
    %6888 = vmatpush1.msra.mxu0 0.0
    %6889 = vmatprep.subr.mxu0 0.0
    %6890 = vmatpush1.msra.mxu0 %v6857
    %6891 = vmatprep.subr.mxu0 0.0
    %6892 = vmatpush2.msra.mxu0 0.0
    %6893 = vmatprep.subr.mxu0 0.0
    %6894 = vmatpush2.msra.mxu0 0.0
    %6895 = vmatprep.subr.mxu0 0.0
    %6896 = vmatpush2.msra.mxu0 0.0
    %6897 = vmatprep.subr.mxu0 0.0
    %6898 = vmatpush2.msra.mxu0 0.0
    %6899 = vmatprep.subr.mxu0 0.0
    %6900 = vmatpush2.msra.mxu0 0.0
    %6901 = vmatprep.subr.mxu0 0.0
    %6902 = vmatpush2.msra.mxu0 0.0
    %6903 = vmatprep.subr.mxu0 0.0
    %6904 = vmatpush2.msra.mxu0 0.0
    %6905 = vmatprep.subr.mxu0 0.0
    %6906 = vmatpush2.msra.mxu0 0.0
    %6907 = vmatprep.subr.mxu0 0.0
    %6908 = vmatpush2.msra.mxu0 0.0
    %6909 = vmatprep.subr.mxu0 0.0
    %6910 = vmatpush2.msra.mxu0 0.0
    %6911 = vmatprep.subr.mxu0 0.0
    %6912 = vmatpush2.msra.mxu0 0.0
    %6913 = vmatprep.subr.mxu0 0.0
    %6914 = vmatpush2.msra.mxu0 0.0
    %6915 = vmatprep.subr.mxu0 0.0
    %6916 = vmatpush2.msra.mxu0 0.0
    %6917 = vmatprep.subr.mxu0 0.0
    %6918 = vmatpush2.msra.mxu0 0.0
    %6919 = vmatprep.subr.mxu0 0.0
    %6920 = vmatpush2.msra.mxu0 0.0
    %6921 = vmatprep.subr.mxu0 0.0
    %6922 = vmatpush2.msra.mxu0 0.0
    %6923 = vmatprep.mubr.f32.mxu0 0.0
    %6924 = vmatmul.mubr.f32.gmra.mxu0 %v6855
    %v6925 = vpop.f32.mrf.mxu0
    %v6926 = vadd.f32 0.0, %v6925
    %v6927 = vpop.f32.mrf.mxu0
    %6928 = vdwg.mxu0
    %v6930 = vsel %vm118, %v6926, 0
    %6932 = vmatprep.subr.mxu0 0.0
    %6933 = vmatpush1.msra.mxu0 0.0
    %6934 = vmatprep.subr.mxu0 0.0
    %6935 = vmatpush1.msra.mxu0 0.0
    %6936 = vmatprep.subr.mxu0 0.0
    %6937 = vmatpush1.msra.mxu0 0.0
    %6938 = vmatprep.subr.mxu0 0.0
    %6939 = vmatpush1.msra.mxu0 0.0
    %6940 = vmatprep.subr.mxu0 0.0
    %6941 = vmatpush1.msra.mxu0 0.0
    %6942 = vmatprep.subr.mxu0 0.0
    %6943 = vmatpush1.msra.mxu0 0.0
    %6944 = vmatprep.subr.mxu0 0.0
    %6945 = vmatpush1.msra.mxu0 0.0
    %6946 = vmatprep.subr.mxu0 0.0
    %6947 = vmatpush1.msra.mxu0 0.0
    %6948 = vmatprep.subr.mxu0 0.0
    %6949 = vmatpush1.msra.mxu0 0.0
    %6950 = vmatprep.subr.mxu0 0.0
    %6951 = vmatpush1.msra.mxu0 0.0
    %6952 = vmatprep.subr.mxu0 0.0
    %6953 = vmatpush1.msra.mxu0 0.0
    %6954 = vmatprep.subr.mxu0 0.0
    %6955 = vmatpush1.msra.mxu0 0.0
    %6956 = vmatprep.subr.mxu0 0.0
    %6957 = vmatpush1.msra.mxu0 0.0
    %6958 = vmatprep.subr.mxu0 0.0
    %6959 = vmatpush1.msra.mxu0 0.0
    %6960 = vmatprep.subr.mxu0 0.0
    %6961 = vmatpush1.msra.mxu0 %v6459
    %6962 = vmatprep.subr.mxu0 0.0
    %6963 = vmatpush1.msra.mxu0 %v6458
    %6964 = vmatprep.subr.mxu0 0.0
    %6965 = vmatpush2.msra.mxu0 0.0
    %6966 = vmatprep.subr.mxu0 0.0
    %6967 = vmatpush2.msra.mxu0 0.0
    %6968 = vmatprep.subr.mxu0 0.0
    %6969 = vmatpush2.msra.mxu0 0.0
    %6970 = vmatprep.subr.mxu0 0.0
    %6971 = vmatpush2.msra.mxu0 0.0
    %6972 = vmatprep.subr.mxu0 0.0
    %6973 = vmatpush2.msra.mxu0 0.0
    %6974 = vmatprep.subr.mxu0 0.0
    %6975 = vmatpush2.msra.mxu0 0.0
    %6976 = vmatprep.subr.mxu0 0.0
    %6977 = vmatpush2.msra.mxu0 0.0
    %6978 = vmatprep.subr.mxu0 0.0
    %6979 = vmatpush2.msra.mxu0 0.0
    %6980 = vmatprep.subr.mxu0 0.0
    %6981 = vmatpush2.msra.mxu0 0.0
    %6982 = vmatprep.subr.mxu0 0.0
    %6983 = vmatpush2.msra.mxu0 0.0
    %6984 = vmatprep.subr.mxu0 0.0
    %6985 = vmatpush2.msra.mxu0 0.0
    %6986 = vmatprep.subr.mxu0 0.0
    %6987 = vmatpush2.msra.mxu0 0.0
    %6988 = vmatprep.subr.mxu0 0.0
    %6989 = vmatpush2.msra.mxu0 0.0
    %6990 = vmatprep.subr.mxu0 0.0
    %6991 = vmatpush2.msra.mxu0 0.0
    %6992 = vmatprep.subr.mxu0 0.0
    %6993 = vmatpush2.msra.mxu0 0.0
    %6994 = vmatprep.subr.mxu0 0.0
    %6995 = vmatpush2.msra.mxu0 0.0
    %6996 = vmatprep.mubr.f32.mxu0 0.0
    %6997 = vmatmul.mubr.f32.gmra.mxu0 %v6930
    %v6998 = vpop.f32.mrf.mxu0
    %v6999 = vadd.f32 0.0, %v6998
    %v7000 = vpop.f32.mrf.mxu0
    %7001 = vdwg.mxu0
    %v7003 = vsel %vm118, %v6759, 0
    %7005 = vmatprep.subr.mxu0 0.0
    %7006 = vmatpush1.msra.mxu0 0.0
    %7007 = vmatprep.subr.mxu0 0.0
    %7008 = vmatpush1.msra.mxu0 0.0
    %7009 = vmatprep.subr.mxu0 0.0
    %7010 = vmatpush1.msra.mxu0 0.0
    %7011 = vmatprep.subr.mxu0 0.0
    %7012 = vmatpush1.msra.mxu0 0.0
    %7013 = vmatprep.subr.mxu0 0.0
    %7014 = vmatpush1.msra.mxu0 0.0
    %7015 = vmatprep.subr.mxu0 0.0
    %7016 = vmatpush1.msra.mxu0 0.0
    %7017 = vmatprep.subr.mxu0 0.0
    %7018 = vmatpush1.msra.mxu0 0.0
    %7019 = vmatprep.subr.mxu0 0.0
    %7020 = vmatpush1.msra.mxu0 0.0
    %7021 = vmatprep.subr.mxu0 0.0
    %7022 = vmatpush1.msra.mxu0 0.0
    %7023 = vmatprep.subr.mxu0 0.0
    %7024 = vmatpush1.msra.mxu0 0.0
    %7025 = vmatprep.subr.mxu0 0.0
    %7026 = vmatpush1.msra.mxu0 0.0
    %7027 = vmatprep.subr.mxu0 0.0
    %7028 = vmatpush1.msra.mxu0 0.0
    %7029 = vmatprep.subr.mxu0 0.0
    %7030 = vmatpush1.msra.mxu0 0.0
    %7031 = vmatprep.subr.mxu0 0.0
    %7032 = vmatpush1.msra.mxu0 0.0
    %7033 = vmatprep.subr.mxu0 0.0
    %7034 = vmatpush1.msra.mxu0 %v6457
    %7035 = vmatprep.subr.mxu0 0.0
    %7036 = vmatpush1.msra.mxu0 %v6456
    %7037 = vmatprep.subr.mxu0 0.0
    %7038 = vmatpush2.msra.mxu0 0.0
    %7039 = vmatprep.subr.mxu0 0.0
    %7040 = vmatpush2.msra.mxu0 0.0
    %7041 = vmatprep.subr.mxu0 0.0
    %7042 = vmatpush2.msra.mxu0 0.0
    %7043 = vmatprep.subr.mxu0 0.0
    %7044 = vmatpush2.msra.mxu0 0.0
    %7045 = vmatprep.subr.mxu0 0.0
    %7046 = vmatpush2.msra.mxu0 0.0
    %7047 = vmatprep.subr.mxu0 0.0
    %7048 = vmatpush2.msra.mxu0 0.0
    %7049 = vmatprep.subr.mxu0 0.0
    %7050 = vmatpush2.msra.mxu0 0.0
    %7051 = vmatprep.subr.mxu0 0.0
    %7052 = vmatpush2.msra.mxu0 0.0
    %7053 = vmatprep.subr.mxu0 0.0
    %7054 = vmatpush2.msra.mxu0 0.0
    %7055 = vmatprep.subr.mxu0 0.0
    %7056 = vmatpush2.msra.mxu0 0.0
    %7057 = vmatprep.subr.mxu0 0.0
    %7058 = vmatpush2.msra.mxu0 0.0
    %7059 = vmatprep.subr.mxu0 0.0
    %7060 = vmatpush2.msra.mxu0 0.0
    %7061 = vmatprep.subr.mxu0 0.0
    %7062 = vmatpush2.msra.mxu0 0.0
    %7063 = vmatprep.subr.mxu0 0.0
    %7064 = vmatpush2.msra.mxu0 0.0
    %7065 = vmatprep.subr.mxu0 0.0
    %7066 = vmatpush2.msra.mxu0 0.0
    %7067 = vmatprep.subr.mxu0 0.0
    %7068 = vmatpush2.msra.mxu0 0.0
    %7069 = vmatprep.mubr.f32.mxu0 0.0
    %7070 = vmatmul.mubr.f32.gmra.mxu0 %v7003
    %v7071 = vpop.f32.mrf.mxu0
    %v7072 = vadd.f32 %v6999, %v7071
    %v7073 = vpop.f32.mrf.mxu0
    %7074 = vdwg.mxu0
    %v7075 = vlaneseq
    %v7076 = vshrl.u32 %v7075, 7
    %v7077 = vsub.s32 3, %v7076
    %v7078 = vrot.slane %v6471, %v7077
    %v7079 = vadd.f32 %v7072, %v7078
    %v7080 = vadd.f32 %v6374, %v7079
    %v7081 = vsel %vm3118, %v7080, 0.0
    %7082 = vadd.xlane.f32.xlu0 %v7081
    %v7083 = vpop.xlane.xlu0 %7082
    %v7084 = vmul.f32 %v7083, %v227
    %v7085 = vmul.f32 %v7080, %v7080
    %v7086 = vsel %vm3118, %v7085, 0.0
    %7087 = vadd.xlane.f32.xlu0 %v7086
    %v7088 = vpop.xlane.xlu0 %7087
    %v7089 = vmul.f32 %v7088, %v227
    %v7090 = vmul.f32 %v7084, %v7084
    %v7091 = vsub.f32 %v7089, %v7090
    %v7092 = vsub.f32 %v7080, %v7084
    %v7093 = vadd.f32 %v7091, 1e-05
    %v7094 = vrsqrt.pop %v7093
    %v7095 = vmul.f32 %v7092, %v7094
    %v7096 = vlaneseq
    %v7097 = vshrl.u32 %v7096, 7
    %v7098 = vsub.s32 6, %v7097
    %v7099 = vrot.slane %v6471, %v7098
    %v7100 = vmul.f32 %v7095, %v7099
    %v7101 = vlaneseq
    %v7102 = vshrl.u32 %v7101, 7
    %v7103 = vsub.s32 7, %v7102
    %v7104 = vrot.slane %v6471, %v7103
    %v7105 = vadd.f32 %v7100, %v7104
    %v7106 = vlaneseq
    %v7107 = vshrl.u32 %v7106, 7
    %v7108 = vsub.s32 0, %v7107
    %v7109 = vrot.slane %v6472, %v7108
    %v7111 = vsel %vm220, %v7105, 0
    %7113 = vmatprep.subr.mxu0 0.0
    %7114 = vmatpush1.msra.mxu0 0.0
    %7115 = vmatprep.subr.mxu0 0.0
    %7116 = vmatpush1.msra.mxu0 0.0
    %7117 = vmatprep.subr.mxu0 0.0
    %7118 = vmatpush1.msra.mxu0 0.0
    %7119 = vmatprep.subr.mxu0 0.0
    %7120 = vmatpush1.msra.mxu0 0.0
    %7121 = vmatprep.subr.mxu0 0.0
    %7122 = vmatpush1.msra.mxu0 0.0
    %7123 = vmatprep.subr.mxu0 0.0
    %7124 = vmatpush1.msra.mxu0 0.0
    %7125 = vmatprep.subr.mxu0 0.0
    %7126 = vmatpush1.msra.mxu0 0.0
    %7127 = vmatprep.subr.mxu0 0.0
    %7128 = vmatpush1.msra.mxu0 0.0
    %7129 = vmatprep.subr.mxu0 0.0
    %7130 = vmatpush1.msra.mxu0 0.0
    %7131 = vmatprep.subr.mxu0 0.0
    %7132 = vmatpush1.msra.mxu0 0.0
    %7133 = vmatprep.subr.mxu0 0.0
    %7134 = vmatpush1.msra.mxu0 0.0
    %7135 = vmatprep.subr.mxu0 0.0
    %7136 = vmatpush1.msra.mxu0 0.0
    %7137 = vmatprep.subr.mxu0 0.0
    %7138 = vmatpush1.msra.mxu0 %v6464
    %7139 = vmatprep.subr.mxu0 0.0
    %7140 = vmatpush1.msra.mxu0 %v6463
    %7141 = vmatprep.subr.mxu0 0.0
    %7142 = vmatpush1.msra.mxu0 %v6462
    %7143 = vmatprep.subr.mxu0 0.0
    %7144 = vmatpush1.msra.mxu0 %v6461
    %7145 = vmatprep.subr.mxu0 0.0
    %7146 = vmatpush2.msra.mxu0 0.0
    %7147 = vmatprep.subr.mxu0 0.0
    %7148 = vmatpush2.msra.mxu0 0.0
    %7149 = vmatprep.subr.mxu0 0.0
    %7150 = vmatpush2.msra.mxu0 0.0
    %7151 = vmatprep.subr.mxu0 0.0
    %7152 = vmatpush2.msra.mxu0 0.0
    %7153 = vmatprep.subr.mxu0 0.0
    %7154 = vmatpush2.msra.mxu0 0.0
    %7155 = vmatprep.subr.mxu0 0.0
    %7156 = vmatpush2.msra.mxu0 0.0
    %7157 = vmatprep.subr.mxu0 0.0
    %7158 = vmatpush2.msra.mxu0 0.0
    %7159 = vmatprep.subr.mxu0 0.0
    %7160 = vmatpush2.msra.mxu0 0.0
    %7161 = vmatprep.subr.mxu0 0.0
    %7162 = vmatpush2.msra.mxu0 0.0
    %7163 = vmatprep.subr.mxu0 0.0
    %7164 = vmatpush2.msra.mxu0 0.0
    %7165 = vmatprep.subr.mxu0 0.0
    %7166 = vmatpush2.msra.mxu0 0.0
    %7167 = vmatprep.subr.mxu0 0.0
    %7168 = vmatpush2.msra.mxu0 0.0
    %7169 = vmatprep.subr.mxu0 0.0
    %7170 = vmatpush2.msra.mxu0 0.0
    %7171 = vmatprep.subr.mxu0 0.0
    %7172 = vmatpush2.msra.mxu0 0.0
    %7173 = vmatprep.subr.mxu0 0.0
    %7174 = vmatpush2.msra.mxu0 0.0
    %7175 = vmatprep.subr.mxu0 0.0
    %7176 = vmatpush2.msra.mxu0 0.0
    %7177 = vmatprep.mubr.f32.mxu0 0.0
    %7178 = vmatmul.mubr.f32.gmra.mxu0 %v7111
    %v7179 = vpop.f32.mrf.mxu0
    %v7180 = vadd.f32 %v7109, %v7179
    %v7181 = vpop.f32.mrf.mxu0
    %7182 = vdwg.mxu0
    %v7183 = vmax.f32 %v7180, 0.0
    %v7184 = vlaneseq
    %v7185 = vshrl.u32 %v7184, 7
    %v7186 = vsub.s32 1, %v7185
    %v7187 = vrot.slane %v6472, %v7186
    %v7189 = vsel %vm220, %v7183, 0
    %7191 = vmatprep.subr.mxu0 0.0
    %7192 = vmatpush1.msra.mxu0 0.0
    %7193 = vmatprep.subr.mxu0 0.0
    %7194 = vmatpush1.msra.mxu0 0.0
    %7195 = vmatprep.subr.mxu0 0.0
    %7196 = vmatpush1.msra.mxu0 0.0
    %7197 = vmatprep.subr.mxu0 0.0
    %7198 = vmatpush1.msra.mxu0 0.0
    %7199 = vmatprep.subr.mxu0 0.0
    %7200 = vmatpush1.msra.mxu0 0.0
    %7201 = vmatprep.subr.mxu0 0.0
    %7202 = vmatpush1.msra.mxu0 0.0
    %7203 = vmatprep.subr.mxu0 0.0
    %7204 = vmatpush1.msra.mxu0 0.0
    %7205 = vmatprep.subr.mxu0 0.0
    %7206 = vmatpush1.msra.mxu0 0.0
    %7207 = vmatprep.subr.mxu0 0.0
    %7208 = vmatpush1.msra.mxu0 0.0
    %7209 = vmatprep.subr.mxu0 0.0
    %7210 = vmatpush1.msra.mxu0 0.0
    %7211 = vmatprep.subr.mxu0 0.0
    %7212 = vmatpush1.msra.mxu0 0.0
    %7213 = vmatprep.subr.mxu0 0.0
    %7214 = vmatpush1.msra.mxu0 0.0
    %7215 = vmatprep.subr.mxu0 0.0
    %7216 = vmatpush1.msra.mxu0 %v6469
    %7217 = vmatprep.subr.mxu0 0.0
    %7218 = vmatpush1.msra.mxu0 %v6468
    %7219 = vmatprep.subr.mxu0 0.0
    %7220 = vmatpush1.msra.mxu0 %v6467
    %7221 = vmatprep.subr.mxu0 0.0
    %7222 = vmatpush1.msra.mxu0 %v6466
    %7223 = vmatprep.subr.mxu0 0.0
    %7224 = vmatpush2.msra.mxu0 0.0
    %7225 = vmatprep.subr.mxu0 0.0
    %7226 = vmatpush2.msra.mxu0 0.0
    %7227 = vmatprep.subr.mxu0 0.0
    %7228 = vmatpush2.msra.mxu0 0.0
    %7229 = vmatprep.subr.mxu0 0.0
    %7230 = vmatpush2.msra.mxu0 0.0
    %7231 = vmatprep.subr.mxu0 0.0
    %7232 = vmatpush2.msra.mxu0 0.0
    %7233 = vmatprep.subr.mxu0 0.0
    %7234 = vmatpush2.msra.mxu0 0.0
    %7235 = vmatprep.subr.mxu0 0.0
    %7236 = vmatpush2.msra.mxu0 0.0
    %7237 = vmatprep.subr.mxu0 0.0
    %7238 = vmatpush2.msra.mxu0 0.0
    %7239 = vmatprep.subr.mxu0 0.0
    %7240 = vmatpush2.msra.mxu0 0.0
    %7241 = vmatprep.subr.mxu0 0.0
    %7242 = vmatpush2.msra.mxu0 0.0
    %7243 = vmatprep.subr.mxu0 0.0
    %7244 = vmatpush2.msra.mxu0 0.0
    %7245 = vmatprep.subr.mxu0 0.0
    %7246 = vmatpush2.msra.mxu0 0.0
    %7247 = vmatprep.subr.mxu0 0.0
    %7248 = vmatpush2.msra.mxu0 0.0
    %7249 = vmatprep.subr.mxu0 0.0
    %7250 = vmatpush2.msra.mxu0 0.0
    %7251 = vmatprep.subr.mxu0 0.0
    %7252 = vmatpush2.msra.mxu0 0.0
    %7253 = vmatprep.subr.mxu0 0.0
    %7254 = vmatpush2.msra.mxu0 0.0
    %7255 = vmatprep.mubr.f32.mxu0 0.0
    %7256 = vmatmul.mubr.f32.gmra.mxu0 %v7189
    %v7257 = vpop.f32.mrf.mxu0
    %v7258 = vadd.f32 %v7187, %v7257
    %v7259 = vpop.f32.mrf.mxu0
    %7260 = vdwg.mxu0
    %v7261 = vadd.f32 %v7080, %v7258
    %v7262 = vsel %vm3118, %v6447, 0.0
    %7263 = vadd.xlane.f32.xlu0 %v7262
    %v7264 = vpop.xlane.xlu0 %7263
    %v7265 = vmul.f32 %v7264, %v227
    %v7266 = vmul.f32 %v6447, %v6447
    %v7267 = vsel %vm3118, %v7266, 0.0
    %7268 = vadd.xlane.f32.xlu0 %v7267
    %v7269 = vpop.xlane.xlu0 %7268
    %v7270 = vmul.f32 %v7269, %v227
    %v7271 = vmul.f32 %v7265, %v7265
    %v7272 = vsub.f32 %v7270, %v7271
    %v7273 = vsub.f32 %v6447, %v7265
    %v7274 = vadd.f32 %v7272, 1e-05
    %v7275 = vrsqrt.pop %v7274
    %v7276 = vmul.f32 %v7273, %v7275
    %v7277 = vmul.f32 %v7276, %v6491
    %v7278 = vadd.f32 %v7277, %v6496
    %v7280 = vsel %vm220, %v7278, 0
    %7282 = vmatprep.subr.mxu0 0.0
    %7283 = vmatpush1.msra.mxu0 0.0
    %7284 = vmatprep.subr.mxu0 0.0
    %7285 = vmatpush1.msra.mxu0 0.0
    %7286 = vmatprep.subr.mxu0 0.0
    %7287 = vmatpush1.msra.mxu0 0.0
    %7288 = vmatprep.subr.mxu0 0.0
    %7289 = vmatpush1.msra.mxu0 0.0
    %7290 = vmatprep.subr.mxu0 0.0
    %7291 = vmatpush1.msra.mxu0 0.0
    %7292 = vmatprep.subr.mxu0 0.0
    %7293 = vmatpush1.msra.mxu0 0.0
    %7294 = vmatprep.subr.mxu0 0.0
    %7295 = vmatpush1.msra.mxu0 0.0
    %7296 = vmatprep.subr.mxu0 0.0
    %7297 = vmatpush1.msra.mxu0 0.0
    %7298 = vmatprep.subr.mxu0 0.0
    %7299 = vmatpush1.msra.mxu0 0.0
    %7300 = vmatprep.subr.mxu0 0.0
    %7301 = vmatpush1.msra.mxu0 0.0
    %7302 = vmatprep.subr.mxu0 0.0
    %7303 = vmatpush1.msra.mxu0 0.0
    %7304 = vmatprep.subr.mxu0 0.0
    %7305 = vmatpush1.msra.mxu0 0.0
    %7306 = vmatprep.subr.mxu0 0.0
    %7307 = vmatpush1.msra.mxu0 %v6454
    %7308 = vmatprep.subr.mxu0 0.0
    %7309 = vmatpush1.msra.mxu0 %v6453
    %7310 = vmatprep.subr.mxu0 0.0
    %7311 = vmatpush1.msra.mxu0 %v6452
    %7312 = vmatprep.subr.mxu0 0.0
    %7313 = vmatpush1.msra.mxu0 %v6451
    %7314 = vmatprep.subr.mxu0 0.0
    %7315 = vmatpush2.msra.mxu0 0.0
    %7316 = vmatprep.subr.mxu0 0.0
    %7317 = vmatpush2.msra.mxu0 0.0
    %7318 = vmatprep.subr.mxu0 0.0
    %7319 = vmatpush2.msra.mxu0 0.0
    %7320 = vmatprep.subr.mxu0 0.0
    %7321 = vmatpush2.msra.mxu0 0.0
    %7322 = vmatprep.subr.mxu0 0.0
    %7323 = vmatpush2.msra.mxu0 0.0
    %7324 = vmatprep.subr.mxu0 0.0
    %7325 = vmatpush2.msra.mxu0 0.0
    %7326 = vmatprep.subr.mxu0 0.0
    %7327 = vmatpush2.msra.mxu0 0.0
    %7328 = vmatprep.subr.mxu0 0.0
    %7329 = vmatpush2.msra.mxu0 0.0
    %7330 = vmatprep.subr.mxu0 0.0
    %7331 = vmatpush2.msra.mxu0 0.0
    %7332 = vmatprep.subr.mxu0 0.0
    %7333 = vmatpush2.msra.mxu0 0.0
    %7334 = vmatprep.subr.mxu0 0.0
    %7335 = vmatpush2.msra.mxu0 0.0
    %7336 = vmatprep.subr.mxu0 0.0
    %7337 = vmatpush2.msra.mxu0 0.0
    %7338 = vmatprep.subr.mxu0 0.0
    %7339 = vmatpush2.msra.mxu0 0.0
    %7340 = vmatprep.subr.mxu0 0.0
    %7341 = vmatpush2.msra.mxu0 0.0
    %7342 = vmatprep.subr.mxu0 0.0
    %7343 = vmatpush2.msra.mxu0 0.0
    %7344 = vmatprep.subr.mxu0 0.0
    %7345 = vmatpush2.msra.mxu0 0.0
    %7346 = vmatprep.mubr.f32.mxu0 0.0
    %7347 = vmatmul.mubr.f32.gmra.mxu0 %v7280
    %v7348 = vpop.f32.mrf.mxu0
    %v7349 = vadd.f32 0.0, %v7348
    %v7350 = vpop.f32.mrf.mxu0
    %7351 = vdwg.mxu0
    %v7352 = vadd.f32 %v7349, %v6574
    %v7353 = vadd.f32 %v7349, %v6582
    %v7354 = vadd.f32 %v7349, %v6591
    %7356 = vrot.lane.b32.xlu0 %v7353, 96
    %v7357 = vpop.permute.xlu0 %7356
    %v7359 = vsel %vm118, %v7352, 0
    %v7361 = vsel %vm118, %v7357, 0
    %7363 = vmatprep.subr.mxu0 0.0
    %7364 = vmatpush1.xpose.msra.mxu0 0.0
    %7365 = vmatprep.subr.mxu0 0.0
    %7366 = vmatpush1.xpose.msra.mxu0 0.0
    %7367 = vmatprep.subr.mxu0 0.0
    %7368 = vmatpush1.xpose.msra.mxu0 0.0
    %7369 = vmatprep.subr.mxu0 0.0
    %7370 = vmatpush1.xpose.msra.mxu0 0.0
    %7371 = vmatprep.subr.mxu0 0.0
    %7372 = vmatpush1.xpose.msra.mxu0 0.0
    %7373 = vmatprep.subr.mxu0 0.0
    %7374 = vmatpush1.xpose.msra.mxu0 0.0
    %7375 = vmatprep.subr.mxu0 0.0
    %7376 = vmatpush1.xpose.msra.mxu0 0.0
    %7377 = vmatprep.subr.mxu0 0.0
    %7378 = vmatpush1.xpose.msra.mxu0 0.0
    %7379 = vmatprep.subr.mxu0 0.0
    %7380 = vmatpush1.xpose.msra.mxu0 0.0
    %7381 = vmatprep.subr.mxu0 0.0
    %7382 = vmatpush1.xpose.msra.mxu0 0.0
    %7383 = vmatprep.subr.mxu0 0.0
    %7384 = vmatpush1.xpose.msra.mxu0 0.0
    %7385 = vmatprep.subr.mxu0 0.0
    %7386 = vmatpush1.xpose.msra.mxu0 0.0
    %7387 = vmatprep.subr.mxu0 0.0
    %7388 = vmatpush1.xpose.msra.mxu0 0.0
    %7389 = vmatprep.subr.mxu0 0.0
    %7390 = vmatpush1.xpose.msra.mxu0 0.0
    %7391 = vmatprep.subr.mxu0 0.0
    %7392 = vmatpush1.xpose.msra.mxu0 0.0
    %7393 = vmatprep.subr.mxu0 0.0
    %7394 = vmatpush1.xpose.msra.mxu0 %v7361
    %7395 = vmatprep.subr.mxu0 0.0
    %7396 = vmatpush2.xpose.msra.mxu0 0.0
    %7397 = vmatprep.subr.mxu0 0.0
    %7398 = vmatpush2.xpose.msra.mxu0 0.0
    %7399 = vmatprep.subr.mxu0 0.0
    %7400 = vmatpush2.xpose.msra.mxu0 0.0
    %7401 = vmatprep.subr.mxu0 0.0
    %7402 = vmatpush2.xpose.msra.mxu0 0.0
    %7403 = vmatprep.subr.mxu0 0.0
    %7404 = vmatpush2.xpose.msra.mxu0 0.0
    %7405 = vmatprep.subr.mxu0 0.0
    %7406 = vmatpush2.xpose.msra.mxu0 0.0
    %7407 = vmatprep.subr.mxu0 0.0
    %7408 = vmatpush2.xpose.msra.mxu0 0.0
    %7409 = vmatprep.subr.mxu0 0.0
    %7410 = vmatpush2.xpose.msra.mxu0 0.0
    %7411 = vmatprep.subr.mxu0 0.0
    %7412 = vmatpush2.xpose.msra.mxu0 0.0
    %7413 = vmatprep.subr.mxu0 0.0
    %7414 = vmatpush2.xpose.msra.mxu0 0.0
    %7415 = vmatprep.subr.mxu0 0.0
    %7416 = vmatpush2.xpose.msra.mxu0 0.0
    %7417 = vmatprep.subr.mxu0 0.0
    %7418 = vmatpush2.xpose.msra.mxu0 0.0
    %7419 = vmatprep.subr.mxu0 0.0
    %7420 = vmatpush2.xpose.msra.mxu0 0.0
    %7421 = vmatprep.subr.mxu0 0.0
    %7422 = vmatpush2.xpose.msra.mxu0 0.0
    %7423 = vmatprep.subr.mxu0 0.0
    %7424 = vmatpush2.xpose.msra.mxu0 0.0
    %7425 = vmatprep.subr.mxu0 0.0
    %7426 = vmatpush2.xpose.msra.mxu0 0.0
    %7427 = vmatprep.mubr.f32.mxu0 0.0
    %7428 = vmatmul.mubr.f32.gmra.mxu0 %v7359
    %v7429 = vpop.f32.mrf.mxu0
    %v7430 = vadd.f32 0.0, %v7429
    %v7431 = vpop.f32.mrf.mxu0
    %7432 = vdwg.mxu0
    %v7433 = vmul.f32 %v7430, 0.25
    %v7434 = vsel %vm4958, %v7433, -inf
    %7435 = vmax.xlane.f32.xlu0 %v7434
    %v7436 = vpop.xlane.xlu0 %7435
    %v7437 = vsub.f32 %v7433, %v7436
    %v7438 = vmul.f32 %v7437, 1.442695
    %v7439 = vpow.pop %v7438
    %v7440 = vsel %vm4958, %v7439, 0.0
    %7441 = vadd.xlane.f32.xlu0 %v7440
    %v7442 = vpop.xlane.xlu0 %7441
    %v7443 = vrcp.pop %v7442
    %v7444 = vmul.f32 %v7439, %v7443
    %7446 = vrot.lane.b32.xlu0 %v7354, 64
    %v7447 = vpop.permute.xlu0 %7446
    %v7449 = vsel %vm4973, %v7444, 0
    %v7451 = vsel %vm4977, %v7447, 0
    %7453 = vmatprep.subr.mxu0 0.0
    %7454 = vmatpush1.msra.mxu0 0.0
    %7455 = vmatprep.subr.mxu0 0.0
    %7456 = vmatpush1.msra.mxu0 0.0
    %7457 = vmatprep.subr.mxu0 0.0
    %7458 = vmatpush1.msra.mxu0 0.0
    %7459 = vmatprep.subr.mxu0 0.0
    %7460 = vmatpush1.msra.mxu0 0.0
    %7461 = vmatprep.subr.mxu0 0.0
    %7462 = vmatpush1.msra.mxu0 0.0
    %7463 = vmatprep.subr.mxu0 0.0
    %7464 = vmatpush1.msra.mxu0 0.0
    %7465 = vmatprep.subr.mxu0 0.0
    %7466 = vmatpush1.msra.mxu0 0.0
    %7467 = vmatprep.subr.mxu0 0.0
    %7468 = vmatpush1.msra.mxu0 0.0
    %7469 = vmatprep.subr.mxu0 0.0
    %7470 = vmatpush1.msra.mxu0 0.0
    %7471 = vmatprep.subr.mxu0 0.0
    %7472 = vmatpush1.msra.mxu0 0.0
    %7473 = vmatprep.subr.mxu0 0.0
    %7474 = vmatpush1.msra.mxu0 0.0
    %7475 = vmatprep.subr.mxu0 0.0
    %7476 = vmatpush1.msra.mxu0 0.0
    %7477 = vmatprep.subr.mxu0 0.0
    %7478 = vmatpush1.msra.mxu0 0.0
    %7479 = vmatprep.subr.mxu0 0.0
    %7480 = vmatpush1.msra.mxu0 0.0
    %7481 = vmatprep.subr.mxu0 0.0
    %7482 = vmatpush1.msra.mxu0 0.0
    %7483 = vmatprep.subr.mxu0 0.0
    %7484 = vmatpush1.msra.mxu0 %v7451
    %7485 = vmatprep.subr.mxu0 0.0
    %7486 = vmatpush2.msra.mxu0 0.0
    %7487 = vmatprep.subr.mxu0 0.0
    %7488 = vmatpush2.msra.mxu0 0.0
    %7489 = vmatprep.subr.mxu0 0.0
    %7490 = vmatpush2.msra.mxu0 0.0
    %7491 = vmatprep.subr.mxu0 0.0
    %7492 = vmatpush2.msra.mxu0 0.0
    %7493 = vmatprep.subr.mxu0 0.0
    %7494 = vmatpush2.msra.mxu0 0.0
    %7495 = vmatprep.subr.mxu0 0.0
    %7496 = vmatpush2.msra.mxu0 0.0
    %7497 = vmatprep.subr.mxu0 0.0
    %7498 = vmatpush2.msra.mxu0 0.0
    %7499 = vmatprep.subr.mxu0 0.0
    %7500 = vmatpush2.msra.mxu0 0.0
    %7501 = vmatprep.subr.mxu0 0.0
    %7502 = vmatpush2.msra.mxu0 0.0
    %7503 = vmatprep.subr.mxu0 0.0
    %7504 = vmatpush2.msra.mxu0 0.0
    %7505 = vmatprep.subr.mxu0 0.0
    %7506 = vmatpush2.msra.mxu0 0.0
    %7507 = vmatprep.subr.mxu0 0.0
    %7508 = vmatpush2.msra.mxu0 0.0
    %7509 = vmatprep.subr.mxu0 0.0
    %7510 = vmatpush2.msra.mxu0 0.0
    %7511 = vmatprep.subr.mxu0 0.0
    %7512 = vmatpush2.msra.mxu0 0.0
    %7513 = vmatprep.subr.mxu0 0.0
    %7514 = vmatpush2.msra.mxu0 0.0
    %7515 = vmatprep.subr.mxu0 0.0
    %7516 = vmatpush2.msra.mxu0 0.0
    %7517 = vmatprep.mubr.f32.mxu0 0.0
    %7518 = vmatmul.mubr.f32.gmra.mxu0 %v7449
    %v7519 = vpop.f32.mrf.mxu0
    %v7520 = vadd.f32 0.0, %v7519
    %v7521 = vpop.f32.mrf.mxu0
    %7522 = vdwg.mxu0
    %7523 = vrot.lane.b32.xlu0 %v7352, 112
    %v7524 = vpop.permute.xlu0 %7523
    %7525 = vrot.lane.b32.xlu0 %v7353, 80
    %v7526 = vpop.permute.xlu0 %7525
    %v7527 = vsel %vm118, %v7524, 0
    %v7529 = vsel %vm118, %v7526, 0
    %7531 = vmatprep.subr.mxu0 0.0
    %7532 = vmatpush1.xpose.msra.mxu0 0.0
    %7533 = vmatprep.subr.mxu0 0.0
    %7534 = vmatpush1.xpose.msra.mxu0 0.0
    %7535 = vmatprep.subr.mxu0 0.0
    %7536 = vmatpush1.xpose.msra.mxu0 0.0
    %7537 = vmatprep.subr.mxu0 0.0
    %7538 = vmatpush1.xpose.msra.mxu0 0.0
    %7539 = vmatprep.subr.mxu0 0.0
    %7540 = vmatpush1.xpose.msra.mxu0 0.0
    %7541 = vmatprep.subr.mxu0 0.0
    %7542 = vmatpush1.xpose.msra.mxu0 0.0
    %7543 = vmatprep.subr.mxu0 0.0
    %7544 = vmatpush1.xpose.msra.mxu0 0.0
    %7545 = vmatprep.subr.mxu0 0.0
    %7546 = vmatpush1.xpose.msra.mxu0 0.0
    %7547 = vmatprep.subr.mxu0 0.0
    %7548 = vmatpush1.xpose.msra.mxu0 0.0
    %7549 = vmatprep.subr.mxu0 0.0
    %7550 = vmatpush1.xpose.msra.mxu0 0.0
    %7551 = vmatprep.subr.mxu0 0.0
    %7552 = vmatpush1.xpose.msra.mxu0 0.0
    %7553 = vmatprep.subr.mxu0 0.0
    %7554 = vmatpush1.xpose.msra.mxu0 0.0
    %7555 = vmatprep.subr.mxu0 0.0
    %7556 = vmatpush1.xpose.msra.mxu0 0.0
    %7557 = vmatprep.subr.mxu0 0.0
    %7558 = vmatpush1.xpose.msra.mxu0 0.0
    %7559 = vmatprep.subr.mxu0 0.0
    %7560 = vmatpush1.xpose.msra.mxu0 0.0
    %7561 = vmatprep.subr.mxu0 0.0
    %7562 = vmatpush1.xpose.msra.mxu0 %v7529
    %7563 = vmatprep.subr.mxu0 0.0
    %7564 = vmatpush2.xpose.msra.mxu0 0.0
    %7565 = vmatprep.subr.mxu0 0.0
    %7566 = vmatpush2.xpose.msra.mxu0 0.0
    %7567 = vmatprep.subr.mxu0 0.0
    %7568 = vmatpush2.xpose.msra.mxu0 0.0
    %7569 = vmatprep.subr.mxu0 0.0
    %7570 = vmatpush2.xpose.msra.mxu0 0.0
    %7571 = vmatprep.subr.mxu0 0.0
    %7572 = vmatpush2.xpose.msra.mxu0 0.0
    %7573 = vmatprep.subr.mxu0 0.0
    %7574 = vmatpush2.xpose.msra.mxu0 0.0
    %7575 = vmatprep.subr.mxu0 0.0
    %7576 = vmatpush2.xpose.msra.mxu0 0.0
    %7577 = vmatprep.subr.mxu0 0.0
    %7578 = vmatpush2.xpose.msra.mxu0 0.0
    %7579 = vmatprep.subr.mxu0 0.0
    %7580 = vmatpush2.xpose.msra.mxu0 0.0
    %7581 = vmatprep.subr.mxu0 0.0
    %7582 = vmatpush2.xpose.msra.mxu0 0.0
    %7583 = vmatprep.subr.mxu0 0.0
    %7584 = vmatpush2.xpose.msra.mxu0 0.0
    %7585 = vmatprep.subr.mxu0 0.0
    %7586 = vmatpush2.xpose.msra.mxu0 0.0
    %7587 = vmatprep.subr.mxu0 0.0
    %7588 = vmatpush2.xpose.msra.mxu0 0.0
    %7589 = vmatprep.subr.mxu0 0.0
    %7590 = vmatpush2.xpose.msra.mxu0 0.0
    %7591 = vmatprep.subr.mxu0 0.0
    %7592 = vmatpush2.xpose.msra.mxu0 0.0
    %7593 = vmatprep.subr.mxu0 0.0
    %7594 = vmatpush2.xpose.msra.mxu0 0.0
    %7595 = vmatprep.mubr.f32.mxu0 0.0
    %7596 = vmatmul.mubr.f32.gmra.mxu0 %v7527
    %v7597 = vpop.f32.mrf.mxu0
    %v7598 = vadd.f32 0.0, %v7597
    %v7599 = vpop.f32.mrf.mxu0
    %7600 = vdwg.mxu0
    %v7601 = vmul.f32 %v7598, 0.25
    %v7602 = vsel %vm4958, %v7601, -inf
    %7603 = vmax.xlane.f32.xlu0 %v7602
    %v7604 = vpop.xlane.xlu0 %7603
    %v7605 = vsub.f32 %v7601, %v7604
    %v7606 = vmul.f32 %v7605, 1.442695
    %v7607 = vpow.pop %v7606
    %v7608 = vsel %vm4958, %v7607, 0.0
    %7609 = vadd.xlane.f32.xlu0 %v7608
    %v7610 = vpop.xlane.xlu0 %7609
    %v7611 = vrcp.pop %v7610
    %v7612 = vmul.f32 %v7607, %v7611
    %7613 = vrot.lane.b32.xlu0 %v7354, 48
    %v7614 = vpop.permute.xlu0 %7613
    %v7616 = vsel %vm4973, %v7612, 0
    %v7618 = vsel %vm4977, %v7614, 0
    %7620 = vmatprep.subr.mxu0 0.0
    %7621 = vmatpush1.msra.mxu0 0.0
    %7622 = vmatprep.subr.mxu0 0.0
    %7623 = vmatpush1.msra.mxu0 0.0
    %7624 = vmatprep.subr.mxu0 0.0
    %7625 = vmatpush1.msra.mxu0 0.0
    %7626 = vmatprep.subr.mxu0 0.0
    %7627 = vmatpush1.msra.mxu0 0.0
    %7628 = vmatprep.subr.mxu0 0.0
    %7629 = vmatpush1.msra.mxu0 0.0
    %7630 = vmatprep.subr.mxu0 0.0
    %7631 = vmatpush1.msra.mxu0 0.0
    %7632 = vmatprep.subr.mxu0 0.0
    %7633 = vmatpush1.msra.mxu0 0.0
    %7634 = vmatprep.subr.mxu0 0.0
    %7635 = vmatpush1.msra.mxu0 0.0
    %7636 = vmatprep.subr.mxu0 0.0
    %7637 = vmatpush1.msra.mxu0 0.0
    %7638 = vmatprep.subr.mxu0 0.0
    %7639 = vmatpush1.msra.mxu0 0.0
    %7640 = vmatprep.subr.mxu0 0.0
    %7641 = vmatpush1.msra.mxu0 0.0
    %7642 = vmatprep.subr.mxu0 0.0
    %7643 = vmatpush1.msra.mxu0 0.0
    %7644 = vmatprep.subr.mxu0 0.0
    %7645 = vmatpush1.msra.mxu0 0.0
    %7646 = vmatprep.subr.mxu0 0.0
    %7647 = vmatpush1.msra.mxu0 0.0
    %7648 = vmatprep.subr.mxu0 0.0
    %7649 = vmatpush1.msra.mxu0 0.0
    %7650 = vmatprep.subr.mxu0 0.0
    %7651 = vmatpush1.msra.mxu0 %v7618
    %7652 = vmatprep.subr.mxu0 0.0
    %7653 = vmatpush2.msra.mxu0 0.0
    %7654 = vmatprep.subr.mxu0 0.0
    %7655 = vmatpush2.msra.mxu0 0.0
    %7656 = vmatprep.subr.mxu0 0.0
    %7657 = vmatpush2.msra.mxu0 0.0
    %7658 = vmatprep.subr.mxu0 0.0
    %7659 = vmatpush2.msra.mxu0 0.0
    %7660 = vmatprep.subr.mxu0 0.0
    %7661 = vmatpush2.msra.mxu0 0.0
    %7662 = vmatprep.subr.mxu0 0.0
    %7663 = vmatpush2.msra.mxu0 0.0
    %7664 = vmatprep.subr.mxu0 0.0
    %7665 = vmatpush2.msra.mxu0 0.0
    %7666 = vmatprep.subr.mxu0 0.0
    %7667 = vmatpush2.msra.mxu0 0.0
    %7668 = vmatprep.subr.mxu0 0.0
    %7669 = vmatpush2.msra.mxu0 0.0
    %7670 = vmatprep.subr.mxu0 0.0
    %7671 = vmatpush2.msra.mxu0 0.0
    %7672 = vmatprep.subr.mxu0 0.0
    %7673 = vmatpush2.msra.mxu0 0.0
    %7674 = vmatprep.subr.mxu0 0.0
    %7675 = vmatpush2.msra.mxu0 0.0
    %7676 = vmatprep.subr.mxu0 0.0
    %7677 = vmatpush2.msra.mxu0 0.0
    %7678 = vmatprep.subr.mxu0 0.0
    %7679 = vmatpush2.msra.mxu0 0.0
    %7680 = vmatprep.subr.mxu0 0.0
    %7681 = vmatpush2.msra.mxu0 0.0
    %7682 = vmatprep.subr.mxu0 0.0
    %7683 = vmatpush2.msra.mxu0 0.0
    %7684 = vmatprep.mubr.f32.mxu0 0.0
    %7685 = vmatmul.mubr.f32.gmra.mxu0 %v7616
    %v7686 = vpop.f32.mrf.mxu0
    %v7687 = vadd.f32 0.0, %v7686
    %v7688 = vpop.f32.mrf.mxu0
    %7689 = vdwg.mxu0
    %v7691 = vsel %vm118, %v7687, 0
    %7693 = vmatprep.subr.mxu0 0.0
    %7694 = vmatpush1.msra.mxu0 0.0
    %7695 = vmatprep.subr.mxu0 0.0
    %7696 = vmatpush1.msra.mxu0 0.0
    %7697 = vmatprep.subr.mxu0 0.0
    %7698 = vmatpush1.msra.mxu0 0.0
    %7699 = vmatprep.subr.mxu0 0.0
    %7700 = vmatpush1.msra.mxu0 0.0
    %7701 = vmatprep.subr.mxu0 0.0
    %7702 = vmatpush1.msra.mxu0 0.0
    %7703 = vmatprep.subr.mxu0 0.0
    %7704 = vmatpush1.msra.mxu0 0.0
    %7705 = vmatprep.subr.mxu0 0.0
    %7706 = vmatpush1.msra.mxu0 0.0
    %7707 = vmatprep.subr.mxu0 0.0
    %7708 = vmatpush1.msra.mxu0 0.0
    %7709 = vmatprep.subr.mxu0 0.0
    %7710 = vmatpush1.msra.mxu0 0.0
    %7711 = vmatprep.subr.mxu0 0.0
    %7712 = vmatpush1.msra.mxu0 0.0
    %7713 = vmatprep.subr.mxu0 0.0
    %7714 = vmatpush1.msra.mxu0 0.0
    %7715 = vmatprep.subr.mxu0 0.0
    %7716 = vmatpush1.msra.mxu0 0.0
    %7717 = vmatprep.subr.mxu0 0.0
    %7718 = vmatpush1.msra.mxu0 0.0
    %7719 = vmatprep.subr.mxu0 0.0
    %7720 = vmatpush1.msra.mxu0 0.0
    %7721 = vmatprep.subr.mxu0 0.0
    %7722 = vmatpush1.msra.mxu0 %v6459
    %7723 = vmatprep.subr.mxu0 0.0
    %7724 = vmatpush1.msra.mxu0 %v6458
    %7725 = vmatprep.subr.mxu0 0.0
    %7726 = vmatpush2.msra.mxu0 0.0
    %7727 = vmatprep.subr.mxu0 0.0
    %7728 = vmatpush2.msra.mxu0 0.0
    %7729 = vmatprep.subr.mxu0 0.0
    %7730 = vmatpush2.msra.mxu0 0.0
    %7731 = vmatprep.subr.mxu0 0.0
    %7732 = vmatpush2.msra.mxu0 0.0
    %7733 = vmatprep.subr.mxu0 0.0
    %7734 = vmatpush2.msra.mxu0 0.0
    %7735 = vmatprep.subr.mxu0 0.0
    %7736 = vmatpush2.msra.mxu0 0.0
    %7737 = vmatprep.subr.mxu0 0.0
    %7738 = vmatpush2.msra.mxu0 0.0
    %7739 = vmatprep.subr.mxu0 0.0
    %7740 = vmatpush2.msra.mxu0 0.0
    %7741 = vmatprep.subr.mxu0 0.0
    %7742 = vmatpush2.msra.mxu0 0.0
    %7743 = vmatprep.subr.mxu0 0.0
    %7744 = vmatpush2.msra.mxu0 0.0
    %7745 = vmatprep.subr.mxu0 0.0
    %7746 = vmatpush2.msra.mxu0 0.0
    %7747 = vmatprep.subr.mxu0 0.0
    %7748 = vmatpush2.msra.mxu0 0.0
    %7749 = vmatprep.subr.mxu0 0.0
    %7750 = vmatpush2.msra.mxu0 0.0
    %7751 = vmatprep.subr.mxu0 0.0
    %7752 = vmatpush2.msra.mxu0 0.0
    %7753 = vmatprep.subr.mxu0 0.0
    %7754 = vmatpush2.msra.mxu0 0.0
    %7755 = vmatprep.subr.mxu0 0.0
    %7756 = vmatpush2.msra.mxu0 0.0
    %7757 = vmatprep.mubr.f32.mxu0 0.0
    %7758 = vmatmul.mubr.f32.gmra.mxu0 %v7691
    %v7759 = vpop.f32.mrf.mxu0
    %v7760 = vadd.f32 0.0, %v7759
    %v7761 = vpop.f32.mrf.mxu0
    %7762 = vdwg.mxu0
    %v7764 = vsel %vm118, %v7520, 0
    %7766 = vmatprep.subr.mxu0 0.0
    %7767 = vmatpush1.msra.mxu0 0.0
    %7768 = vmatprep.subr.mxu0 0.0
    %7769 = vmatpush1.msra.mxu0 0.0
    %7770 = vmatprep.subr.mxu0 0.0
    %7771 = vmatpush1.msra.mxu0 0.0
    %7772 = vmatprep.subr.mxu0 0.0
    %7773 = vmatpush1.msra.mxu0 0.0
    %7774 = vmatprep.subr.mxu0 0.0
    %7775 = vmatpush1.msra.mxu0 0.0
    %7776 = vmatprep.subr.mxu0 0.0
    %7777 = vmatpush1.msra.mxu0 0.0
    %7778 = vmatprep.subr.mxu0 0.0
    %7779 = vmatpush1.msra.mxu0 0.0
    %7780 = vmatprep.subr.mxu0 0.0
    %7781 = vmatpush1.msra.mxu0 0.0
    %7782 = vmatprep.subr.mxu0 0.0
    %7783 = vmatpush1.msra.mxu0 0.0
    %7784 = vmatprep.subr.mxu0 0.0
    %7785 = vmatpush1.msra.mxu0 0.0
    %7786 = vmatprep.subr.mxu0 0.0
    %7787 = vmatpush1.msra.mxu0 0.0
    %7788 = vmatprep.subr.mxu0 0.0
    %7789 = vmatpush1.msra.mxu0 0.0
    %7790 = vmatprep.subr.mxu0 0.0
    %7791 = vmatpush1.msra.mxu0 0.0
    %7792 = vmatprep.subr.mxu0 0.0
    %7793 = vmatpush1.msra.mxu0 0.0
    %7794 = vmatprep.subr.mxu0 0.0
    %7795 = vmatpush1.msra.mxu0 %v6457
    %7796 = vmatprep.subr.mxu0 0.0
    %7797 = vmatpush1.msra.mxu0 %v6456
    %7798 = vmatprep.subr.mxu0 0.0
    %7799 = vmatpush2.msra.mxu0 0.0
    %7800 = vmatprep.subr.mxu0 0.0
    %7801 = vmatpush2.msra.mxu0 0.0
    %7802 = vmatprep.subr.mxu0 0.0
    %7803 = vmatpush2.msra.mxu0 0.0
    %7804 = vmatprep.subr.mxu0 0.0
    %7805 = vmatpush2.msra.mxu0 0.0
    %7806 = vmatprep.subr.mxu0 0.0
    %7807 = vmatpush2.msra.mxu0 0.0
    %7808 = vmatprep.subr.mxu0 0.0
    %7809 = vmatpush2.msra.mxu0 0.0
    %7810 = vmatprep.subr.mxu0 0.0
    %7811 = vmatpush2.msra.mxu0 0.0
    %7812 = vmatprep.subr.mxu0 0.0
    %7813 = vmatpush2.msra.mxu0 0.0
    %7814 = vmatprep.subr.mxu0 0.0
    %7815 = vmatpush2.msra.mxu0 0.0
    %7816 = vmatprep.subr.mxu0 0.0
    %7817 = vmatpush2.msra.mxu0 0.0
    %7818 = vmatprep.subr.mxu0 0.0
    %7819 = vmatpush2.msra.mxu0 0.0
    %7820 = vmatprep.subr.mxu0 0.0
    %7821 = vmatpush2.msra.mxu0 0.0
    %7822 = vmatprep.subr.mxu0 0.0
    %7823 = vmatpush2.msra.mxu0 0.0
    %7824 = vmatprep.subr.mxu0 0.0
    %7825 = vmatpush2.msra.mxu0 0.0
    %7826 = vmatprep.subr.mxu0 0.0
    %7827 = vmatpush2.msra.mxu0 0.0
    %7828 = vmatprep.subr.mxu0 0.0
    %7829 = vmatpush2.msra.mxu0 0.0
    %7830 = vmatprep.mubr.f32.mxu0 0.0
    %7831 = vmatmul.mubr.f32.gmra.mxu0 %v7764
    %v7832 = vpop.f32.mrf.mxu0
    %v7833 = vadd.f32 %v7760, %v7832
    %v7834 = vpop.f32.mrf.mxu0
    %7835 = vdwg.mxu0
    %v7836 = vadd.f32 %v7833, %v7078
    %v7837 = vadd.f32 %v6447, %v7836
    %v7838 = vsel %vm3118, %v7837, 0.0
    %7839 = vadd.xlane.f32.xlu0 %v7838
    %v7840 = vpop.xlane.xlu0 %7839
    %v7841 = vmul.f32 %v7840, %v227
    %v7842 = vmul.f32 %v7837, %v7837
    %v7843 = vsel %vm3118, %v7842, 0.0
    %7844 = vadd.xlane.f32.xlu0 %v7843
    %v7845 = vpop.xlane.xlu0 %7844
    %v7846 = vmul.f32 %v7845, %v227
    %v7847 = vmul.f32 %v7841, %v7841
    %v7848 = vsub.f32 %v7846, %v7847
    %v7849 = vsub.f32 %v7837, %v7841
    %v7850 = vadd.f32 %v7848, 1e-05
    %v7851 = vrsqrt.pop %v7850
    %v7852 = vmul.f32 %v7849, %v7851
    %v7853 = vmul.f32 %v7852, %v7099
    %v7854 = vadd.f32 %v7853, %v7104
    %v7856 = vsel %vm220, %v7854, 0
    %7858 = vmatprep.subr.mxu0 0.0
    %7859 = vmatpush1.msra.mxu0 0.0
    %7860 = vmatprep.subr.mxu0 0.0
    %7861 = vmatpush1.msra.mxu0 0.0
    %7862 = vmatprep.subr.mxu0 0.0
    %7863 = vmatpush1.msra.mxu0 0.0
    %7864 = vmatprep.subr.mxu0 0.0
    %7865 = vmatpush1.msra.mxu0 0.0
    %7866 = vmatprep.subr.mxu0 0.0
    %7867 = vmatpush1.msra.mxu0 0.0
    %7868 = vmatprep.subr.mxu0 0.0
    %7869 = vmatpush1.msra.mxu0 0.0
    %7870 = vmatprep.subr.mxu0 0.0
    %7871 = vmatpush1.msra.mxu0 0.0
    %7872 = vmatprep.subr.mxu0 0.0
    %7873 = vmatpush1.msra.mxu0 0.0
    %7874 = vmatprep.subr.mxu0 0.0
    %7875 = vmatpush1.msra.mxu0 0.0
    %7876 = vmatprep.subr.mxu0 0.0
    %7877 = vmatpush1.msra.mxu0 0.0
    %7878 = vmatprep.subr.mxu0 0.0
    %7879 = vmatpush1.msra.mxu0 0.0
    %7880 = vmatprep.subr.mxu0 0.0
    %7881 = vmatpush1.msra.mxu0 0.0
    %7882 = vmatprep.subr.mxu0 0.0
    %7883 = vmatpush1.msra.mxu0 %v6464
    %7884 = vmatprep.subr.mxu0 0.0
    %7885 = vmatpush1.msra.mxu0 %v6463
    %7886 = vmatprep.subr.mxu0 0.0
    %7887 = vmatpush1.msra.mxu0 %v6462
    %7888 = vmatprep.subr.mxu0 0.0
    %7889 = vmatpush1.msra.mxu0 %v6461
    %7890 = vmatprep.subr.mxu0 0.0
    %7891 = vmatpush2.msra.mxu0 0.0
    %7892 = vmatprep.subr.mxu0 0.0
    %7893 = vmatpush2.msra.mxu0 0.0
    %7894 = vmatprep.subr.mxu0 0.0
    %7895 = vmatpush2.msra.mxu0 0.0
    %7896 = vmatprep.subr.mxu0 0.0
    %7897 = vmatpush2.msra.mxu0 0.0
    %7898 = vmatprep.subr.mxu0 0.0
    %7899 = vmatpush2.msra.mxu0 0.0
    %7900 = vmatprep.subr.mxu0 0.0
    %7901 = vmatpush2.msra.mxu0 0.0
    %7902 = vmatprep.subr.mxu0 0.0
    %7903 = vmatpush2.msra.mxu0 0.0
    %7904 = vmatprep.subr.mxu0 0.0
    %7905 = vmatpush2.msra.mxu0 0.0
    %7906 = vmatprep.subr.mxu0 0.0
    %7907 = vmatpush2.msra.mxu0 0.0
    %7908 = vmatprep.subr.mxu0 0.0
    %7909 = vmatpush2.msra.mxu0 0.0
    %7910 = vmatprep.subr.mxu0 0.0
    %7911 = vmatpush2.msra.mxu0 0.0
    %7912 = vmatprep.subr.mxu0 0.0
    %7913 = vmatpush2.msra.mxu0 0.0
    %7914 = vmatprep.subr.mxu0 0.0
    %7915 = vmatpush2.msra.mxu0 0.0
    %7916 = vmatprep.subr.mxu0 0.0
    %7917 = vmatpush2.msra.mxu0 0.0
    %7918 = vmatprep.subr.mxu0 0.0
    %7919 = vmatpush2.msra.mxu0 0.0
    %7920 = vmatprep.subr.mxu0 0.0
    %7921 = vmatpush2.msra.mxu0 0.0
    %7922 = vmatprep.mubr.f32.mxu0 0.0
    %7923 = vmatmul.mubr.f32.gmra.mxu0 %v7856
    %v7924 = vpop.f32.mrf.mxu0
    %v7925 = vadd.f32 %v7109, %v7924
    %v7926 = vpop.f32.mrf.mxu0
    %7927 = vdwg.mxu0
    %v7928 = vmax.f32 %v7925, 0.0
    %v7930 = vsel %vm220, %v7928, 0
    %7932 = vmatprep.subr.mxu0 0.0
    %7933 = vmatpush1.msra.mxu0 0.0
    %7934 = vmatprep.subr.mxu0 0.0
    %7935 = vmatpush1.msra.mxu0 0.0
    %7936 = vmatprep.subr.mxu0 0.0
    %7937 = vmatpush1.msra.mxu0 0.0
    %7938 = vmatprep.subr.mxu0 0.0
    %7939 = vmatpush1.msra.mxu0 0.0
    %7940 = vmatprep.subr.mxu0 0.0
    %7941 = vmatpush1.msra.mxu0 0.0
    %7942 = vmatprep.subr.mxu0 0.0
    %7943 = vmatpush1.msra.mxu0 0.0
    %7944 = vmatprep.subr.mxu0 0.0
    %7945 = vmatpush1.msra.mxu0 0.0
    %7946 = vmatprep.subr.mxu0 0.0
    %7947 = vmatpush1.msra.mxu0 0.0
    %7948 = vmatprep.subr.mxu0 0.0
    %7949 = vmatpush1.msra.mxu0 0.0
    %7950 = vmatprep.subr.mxu0 0.0
    %7951 = vmatpush1.msra.mxu0 0.0
    %7952 = vmatprep.subr.mxu0 0.0
    %7953 = vmatpush1.msra.mxu0 0.0
    %7954 = vmatprep.subr.mxu0 0.0
    %7955 = vmatpush1.msra.mxu0 0.0
    %7956 = vmatprep.subr.mxu0 0.0
    %7957 = vmatpush1.msra.mxu0 %v6469
    %7958 = vmatprep.subr.mxu0 0.0
    %7959 = vmatpush1.msra.mxu0 %v6468
    %7960 = vmatprep.subr.mxu0 0.0
    %7961 = vmatpush1.msra.mxu0 %v6467
    %7962 = vmatprep.subr.mxu0 0.0
    %7963 = vmatpush1.msra.mxu0 %v6466
    %7964 = vmatprep.subr.mxu0 0.0
    %7965 = vmatpush2.msra.mxu0 0.0
    %7966 = vmatprep.subr.mxu0 0.0
    %7967 = vmatpush2.msra.mxu0 0.0
    %7968 = vmatprep.subr.mxu0 0.0
    %7969 = vmatpush2.msra.mxu0 0.0
    %7970 = vmatprep.subr.mxu0 0.0
    %7971 = vmatpush2.msra.mxu0 0.0
    %7972 = vmatprep.subr.mxu0 0.0
    %7973 = vmatpush2.msra.mxu0 0.0
    %7974 = vmatprep.subr.mxu0 0.0
    %7975 = vmatpush2.msra.mxu0 0.0
    %7976 = vmatprep.subr.mxu0 0.0
    %7977 = vmatpush2.msra.mxu0 0.0
    %7978 = vmatprep.subr.mxu0 0.0
    %7979 = vmatpush2.msra.mxu0 0.0
    %7980 = vmatprep.subr.mxu0 0.0
    %7981 = vmatpush2.msra.mxu0 0.0
    %7982 = vmatprep.subr.mxu0 0.0
    %7983 = vmatpush2.msra.mxu0 0.0
    %7984 = vmatprep.subr.mxu0 0.0
    %7985 = vmatpush2.msra.mxu0 0.0
    %7986 = vmatprep.subr.mxu0 0.0
    %7987 = vmatpush2.msra.mxu0 0.0
    %7988 = vmatprep.subr.mxu0 0.0
    %7989 = vmatpush2.msra.mxu0 0.0
    %7990 = vmatprep.subr.mxu0 0.0
    %7991 = vmatpush2.msra.mxu0 0.0
    %7992 = vmatprep.subr.mxu0 0.0
    %7993 = vmatpush2.msra.mxu0 0.0
    %7994 = vmatprep.subr.mxu0 0.0
    %7995 = vmatpush2.msra.mxu0 0.0
    %7996 = vmatprep.mubr.f32.mxu0 0.0
    %7997 = vmatmul.mubr.f32.gmra.mxu0 %v7930
    %v7998 = vpop.f32.mrf.mxu0
    %v7999 = vadd.f32 %v7187, %v7998
    %v8000 = vpop.f32.mrf.mxu0
    %8001 = vdwg.mxu0
    %v8002 = vadd.f32 %v7837, %v7999
    %s8003 = scalar_lea.vmem [#allocation10], 96
    %v8004 = vld [vmem:[%s8003] sm:$0xff]
    %v8005 = vld [vmem:[%s8003 + $0x8] sm:$0xff]
    %v8006 = vld [vmem:[%s8003 + $0x10] sm:$0xff]
    %v8007 = vld [vmem:[%s8003 + $0x18] sm:$0xff]
    %s8008 = scalar_lea.vmem %s8, 3
    %v8009 = vld [vmem:[%s8008] sm:$0x1]
    %v8011 = vlaneseq
    %v8012 = vshrl.u32 %v8011, 7
    %v8013 = vsub.s32 0, %v8012
    %v8014 = vrot.slane %v8009, %v8013
    %v8017 = vsel %vm220, %v7261, 0
    %8019 = vmatprep.subr.mxu0 0.0
    %8020 = vmatpush1.msra.mxu0 0.0
    %8021 = vmatprep.subr.mxu0 0.0
    %8022 = vmatpush1.msra.mxu0 0.0
    %8023 = vmatprep.subr.mxu0 0.0
    %8024 = vmatpush1.msra.mxu0 0.0
    %8025 = vmatprep.subr.mxu0 0.0
    %8026 = vmatpush1.msra.mxu0 0.0
    %8027 = vmatprep.subr.mxu0 0.0
    %8028 = vmatpush1.msra.mxu0 0.0
    %8029 = vmatprep.subr.mxu0 0.0
    %8030 = vmatpush1.msra.mxu0 0.0
    %8031 = vmatprep.subr.mxu0 0.0
    %8032 = vmatpush1.msra.mxu0 0.0
    %8033 = vmatprep.subr.mxu0 0.0
    %8034 = vmatpush1.msra.mxu0 0.0
    %8035 = vmatprep.subr.mxu0 0.0
    %8036 = vmatpush1.msra.mxu0 0.0
    %8037 = vmatprep.subr.mxu0 0.0
    %8038 = vmatpush1.msra.mxu0 0.0
    %8039 = vmatprep.subr.mxu0 0.0
    %8040 = vmatpush1.msra.mxu0 0.0
    %8041 = vmatprep.subr.mxu0 0.0
    %8042 = vmatpush1.msra.mxu0 0.0
    %8043 = vmatprep.subr.mxu0 0.0
    %8044 = vmatpush1.msra.mxu0 %v8007
    %8045 = vmatprep.subr.mxu0 0.0
    %8046 = vmatpush1.msra.mxu0 %v8006
    %8047 = vmatprep.subr.mxu0 0.0
    %8048 = vmatpush1.msra.mxu0 %v8005
    %8049 = vmatprep.subr.mxu0 0.0
    %8050 = vmatpush1.msra.mxu0 %v8004
    %8051 = vmatprep.subr.mxu0 0.0
    %8052 = vmatpush2.msra.mxu0 0.0
    %8053 = vmatprep.subr.mxu0 0.0
    %8054 = vmatpush2.msra.mxu0 0.0
    %8055 = vmatprep.subr.mxu0 0.0
    %8056 = vmatpush2.msra.mxu0 0.0
    %8057 = vmatprep.subr.mxu0 0.0
    %8058 = vmatpush2.msra.mxu0 0.0
    %8059 = vmatprep.subr.mxu0 0.0
    %8060 = vmatpush2.msra.mxu0 0.0
    %8061 = vmatprep.subr.mxu0 0.0
    %8062 = vmatpush2.msra.mxu0 0.0
    %8063 = vmatprep.subr.mxu0 0.0
    %8064 = vmatpush2.msra.mxu0 0.0
    %8065 = vmatprep.subr.mxu0 0.0
    %8066 = vmatpush2.msra.mxu0 0.0
    %8067 = vmatprep.subr.mxu0 0.0
    %8068 = vmatpush2.msra.mxu0 0.0
    %8069 = vmatprep.subr.mxu0 0.0
    %8070 = vmatpush2.msra.mxu0 0.0
    %8071 = vmatprep.subr.mxu0 0.0
    %8072 = vmatpush2.msra.mxu0 0.0
    %8073 = vmatprep.subr.mxu0 0.0
    %8074 = vmatpush2.msra.mxu0 0.0
    %8075 = vmatprep.subr.mxu0 0.0
    %8076 = vmatpush2.msra.mxu0 0.0
    %8077 = vmatprep.subr.mxu0 0.0
    %8078 = vmatpush2.msra.mxu0 0.0
    %8079 = vmatprep.subr.mxu0 0.0
    %8080 = vmatpush2.msra.mxu0 0.0
    %8081 = vmatprep.subr.mxu0 0.0
    %8082 = vmatpush2.msra.mxu0 0.0
    %8083 = vmatprep.mubr.f32.mxu0 0.0
    %8084 = vmatmul.mubr.f32.gmra.mxu0 %v8017
    %v8085 = vpop.f32.mrf.mxu0
    %v8086 = vadd.f32 %v8014, %v8085
    %v8087 = vpop.f32.mrf.mxu0
    %8088 = vdwg.mxu0
    %v8090 = vsel %vm220, %v8002, 0
    %8092 = vmatprep.subr.mxu0 0.0
    %8093 = vmatpush1.msra.mxu0 0.0
    %8094 = vmatprep.subr.mxu0 0.0
    %8095 = vmatpush1.msra.mxu0 0.0
    %8096 = vmatprep.subr.mxu0 0.0
    %8097 = vmatpush1.msra.mxu0 0.0
    %8098 = vmatprep.subr.mxu0 0.0
    %8099 = vmatpush1.msra.mxu0 0.0
    %8100 = vmatprep.subr.mxu0 0.0
    %8101 = vmatpush1.msra.mxu0 0.0
    %8102 = vmatprep.subr.mxu0 0.0
    %8103 = vmatpush1.msra.mxu0 0.0
    %8104 = vmatprep.subr.mxu0 0.0
    %8105 = vmatpush1.msra.mxu0 0.0
    %8106 = vmatprep.subr.mxu0 0.0
    %8107 = vmatpush1.msra.mxu0 0.0
    %8108 = vmatprep.subr.mxu0 0.0
    %8109 = vmatpush1.msra.mxu0 0.0
    %8110 = vmatprep.subr.mxu0 0.0
    %8111 = vmatpush1.msra.mxu0 0.0
    %8112 = vmatprep.subr.mxu0 0.0
    %8113 = vmatpush1.msra.mxu0 0.0
    %8114 = vmatprep.subr.mxu0 0.0
    %8115 = vmatpush1.msra.mxu0 0.0
    %8116 = vmatprep.subr.mxu0 0.0
    %8117 = vmatpush1.msra.mxu0 %v8007
    %8118 = vmatprep.subr.mxu0 0.0
    %8119 = vmatpush1.msra.mxu0 %v8006
    %8120 = vmatprep.subr.mxu0 0.0
    %8121 = vmatpush1.msra.mxu0 %v8005
    %8122 = vmatprep.subr.mxu0 0.0
    %8123 = vmatpush1.msra.mxu0 %v8004
    %8124 = vmatprep.subr.mxu0 0.0
    %8125 = vmatpush2.msra.mxu0 0.0
    %8126 = vmatprep.subr.mxu0 0.0
    %8127 = vmatpush2.msra.mxu0 0.0
    %8128 = vmatprep.subr.mxu0 0.0
    %8129 = vmatpush2.msra.mxu0 0.0
    %8130 = vmatprep.subr.mxu0 0.0
    %8131 = vmatpush2.msra.mxu0 0.0
    %8132 = vmatprep.subr.mxu0 0.0
    %8133 = vmatpush2.msra.mxu0 0.0
    %8134 = vmatprep.subr.mxu0 0.0
    %8135 = vmatpush2.msra.mxu0 0.0
    %8136 = vmatprep.subr.mxu0 0.0
    %8137 = vmatpush2.msra.mxu0 0.0
    %8138 = vmatprep.subr.mxu0 0.0
    %8139 = vmatpush2.msra.mxu0 0.0
    %8140 = vmatprep.subr.mxu0 0.0
    %8141 = vmatpush2.msra.mxu0 0.0
    %8142 = vmatprep.subr.mxu0 0.0
    %8143 = vmatpush2.msra.mxu0 0.0
    %8144 = vmatprep.subr.mxu0 0.0
    %8145 = vmatpush2.msra.mxu0 0.0
    %8146 = vmatprep.subr.mxu0 0.0
    %8147 = vmatpush2.msra.mxu0 0.0
    %8148 = vmatprep.subr.mxu0 0.0
    %8149 = vmatpush2.msra.mxu0 0.0
    %8150 = vmatprep.subr.mxu0 0.0
    %8151 = vmatpush2.msra.mxu0 0.0
    %8152 = vmatprep.subr.mxu0 0.0
    %8153 = vmatpush2.msra.mxu0 0.0
    %8154 = vmatprep.subr.mxu0 0.0
    %8155 = vmatpush2.msra.mxu0 0.0
    %8156 = vmatprep.mubr.f32.mxu0 0.0
    %8157 = vmatmul.mubr.f32.gmra.mxu0 %v8090
    %v8158 = vpop.f32.mrf.mxu0
    %v8159 = vadd.f32 %v8014, %v8158
    %v8160 = vpop.f32.mrf.mxu0
    %8161 = vdwg.mxu0
    %v8162 = vld [vmem:[%s10] sm:$0x1]
    %v8163 = vld [vmem:[%s9] sm:$0xff]
    %v8164 = vld [vmem:[%s9 + $0x8] sm:$0xff]
    %v8165 = vld [vmem:[%s9 + $0x10] sm:$0xff]
    %v8166 = vld [vmem:[%s9 + $0x18] sm:$0xff]
    %v8168 = vsel %vm220, %v8086, 0
    %8170 = vmatprep.subr.mxu0 0.0
    %8171 = vmatpush1.msra.mxu0 0.0
    %8172 = vmatprep.subr.mxu0 0.0
    %8173 = vmatpush1.msra.mxu0 0.0
    %8174 = vmatprep.subr.mxu0 0.0
    %8175 = vmatpush1.msra.mxu0 0.0
    %8176 = vmatprep.subr.mxu0 0.0
    %8177 = vmatpush1.msra.mxu0 0.0
    %8178 = vmatprep.subr.mxu0 0.0
    %8179 = vmatpush1.msra.mxu0 0.0
    %8180 = vmatprep.subr.mxu0 0.0
    %8181 = vmatpush1.msra.mxu0 0.0
    %8182 = vmatprep.subr.mxu0 0.0
    %8183 = vmatpush1.msra.mxu0 0.0
    %8184 = vmatprep.subr.mxu0 0.0
    %8185 = vmatpush1.msra.mxu0 0.0
    %8186 = vmatprep.subr.mxu0 0.0
    %8187 = vmatpush1.msra.mxu0 0.0
    %8188 = vmatprep.subr.mxu0 0.0
    %8189 = vmatpush1.msra.mxu0 0.0
    %8190 = vmatprep.subr.mxu0 0.0
    %8191 = vmatpush1.msra.mxu0 0.0
    %8192 = vmatprep.subr.mxu0 0.0
    %8193 = vmatpush1.msra.mxu0 0.0
    %8194 = vmatprep.subr.mxu0 0.0
    %8195 = vmatpush1.msra.mxu0 %v8166
    %8196 = vmatprep.subr.mxu0 0.0
    %8197 = vmatpush1.msra.mxu0 %v8165
    %8198 = vmatprep.subr.mxu0 0.0
    %8199 = vmatpush1.msra.mxu0 %v8164
    %8200 = vmatprep.subr.mxu0 0.0
    %8201 = vmatpush1.msra.mxu0 %v8163
    %8202 = vmatprep.subr.mxu0 0.0
    %8203 = vmatpush2.msra.mxu0 0.0
    %8204 = vmatprep.subr.mxu0 0.0
    %8205 = vmatpush2.msra.mxu0 0.0
    %8206 = vmatprep.subr.mxu0 0.0
    %8207 = vmatpush2.msra.mxu0 0.0
    %8208 = vmatprep.subr.mxu0 0.0
    %8209 = vmatpush2.msra.mxu0 0.0
    %8210 = vmatprep.subr.mxu0 0.0
    %8211 = vmatpush2.msra.mxu0 0.0
    %8212 = vmatprep.subr.mxu0 0.0
    %8213 = vmatpush2.msra.mxu0 0.0
    %8214 = vmatprep.subr.mxu0 0.0
    %8215 = vmatpush2.msra.mxu0 0.0
    %8216 = vmatprep.subr.mxu0 0.0
    %8217 = vmatpush2.msra.mxu0 0.0
    %8218 = vmatprep.subr.mxu0 0.0
    %8219 = vmatpush2.msra.mxu0 0.0
    %8220 = vmatprep.subr.mxu0 0.0
    %8221 = vmatpush2.msra.mxu0 0.0
    %8222 = vmatprep.subr.mxu0 0.0
    %8223 = vmatpush2.msra.mxu0 0.0
    %8224 = vmatprep.subr.mxu0 0.0
    %8225 = vmatpush2.msra.mxu0 0.0
    %8226 = vmatprep.subr.mxu0 0.0
    %8227 = vmatpush2.msra.mxu0 0.0
    %8228 = vmatprep.subr.mxu0 0.0
    %8229 = vmatpush2.msra.mxu0 0.0
    %8230 = vmatprep.subr.mxu0 0.0
    %8231 = vmatpush2.msra.mxu0 0.0
    %8232 = vmatprep.subr.mxu0 0.0
    %8233 = vmatpush2.msra.mxu0 0.0
    %8234 = vmatprep.mubr.f32.mxu0 0.0
    %8235 = vmatmul.mubr.f32.gmra.mxu0 %v8168
    %v8236 = vpop.f32.mrf.mxu0
    %v8237 = vadd.f32 0.0, %v8236
    %v8238 = vpop.f32.mrf.mxu0
    %8239 = vdwg.mxu0
    %v8240 = vadd.f32 %v8162, %v8237
    %s8241 = scalar_lea.vmem %s9, 32
    %v8242 = vld [vmem:[%s8241] sm:$0xff]
    %v8243 = vld [vmem:[%s8241 + $0x8] sm:$0xff]
    %v8244 = vld [vmem:[%s8241 + $0x10] sm:$0xff]
    %v8245 = vld [vmem:[%s8241 + $0x18] sm:$0xff]
    %v8246 = vrot.slane %v8086, 1
    %v8247 = vsel %vm220, %v8246, 0
    %8249 = vmatprep.subr.mxu0 0.0
    %8250 = vmatpush1.msra.mxu0 0.0
    %8251 = vmatprep.subr.mxu0 0.0
    %8252 = vmatpush1.msra.mxu0 0.0
    %8253 = vmatprep.subr.mxu0 0.0
    %8254 = vmatpush1.msra.mxu0 0.0
    %8255 = vmatprep.subr.mxu0 0.0
    %8256 = vmatpush1.msra.mxu0 0.0
    %8257 = vmatprep.subr.mxu0 0.0
    %8258 = vmatpush1.msra.mxu0 0.0
    %8259 = vmatprep.subr.mxu0 0.0
    %8260 = vmatpush1.msra.mxu0 0.0
    %8261 = vmatprep.subr.mxu0 0.0
    %8262 = vmatpush1.msra.mxu0 0.0
    %8263 = vmatprep.subr.mxu0 0.0
    %8264 = vmatpush1.msra.mxu0 0.0
    %8265 = vmatprep.subr.mxu0 0.0
    %8266 = vmatpush1.msra.mxu0 0.0
    %8267 = vmatprep.subr.mxu0 0.0
    %8268 = vmatpush1.msra.mxu0 0.0
    %8269 = vmatprep.subr.mxu0 0.0
    %8270 = vmatpush1.msra.mxu0 0.0
    %8271 = vmatprep.subr.mxu0 0.0
    %8272 = vmatpush1.msra.mxu0 0.0
    %8273 = vmatprep.subr.mxu0 0.0
    %8274 = vmatpush1.msra.mxu0 %v8245
    %8275 = vmatprep.subr.mxu0 0.0
    %8276 = vmatpush1.msra.mxu0 %v8244
    %8277 = vmatprep.subr.mxu0 0.0
    %8278 = vmatpush1.msra.mxu0 %v8243
    %8279 = vmatprep.subr.mxu0 0.0
    %8280 = vmatpush1.msra.mxu0 %v8242
    %8281 = vmatprep.subr.mxu0 0.0
    %8282 = vmatpush2.msra.mxu0 0.0
    %8283 = vmatprep.subr.mxu0 0.0
    %8284 = vmatpush2.msra.mxu0 0.0
    %8285 = vmatprep.subr.mxu0 0.0
    %8286 = vmatpush2.msra.mxu0 0.0
    %8287 = vmatprep.subr.mxu0 0.0
    %8288 = vmatpush2.msra.mxu0 0.0
    %8289 = vmatprep.subr.mxu0 0.0
    %8290 = vmatpush2.msra.mxu0 0.0
    %8291 = vmatprep.subr.mxu0 0.0
    %8292 = vmatpush2.msra.mxu0 0.0
    %8293 = vmatprep.subr.mxu0 0.0
    %8294 = vmatpush2.msra.mxu0 0.0
    %8295 = vmatprep.subr.mxu0 0.0
    %8296 = vmatpush2.msra.mxu0 0.0
    %8297 = vmatprep.subr.mxu0 0.0
    %8298 = vmatpush2.msra.mxu0 0.0
    %8299 = vmatprep.subr.mxu0 0.0
    %8300 = vmatpush2.msra.mxu0 0.0
    %8301 = vmatprep.subr.mxu0 0.0
    %8302 = vmatpush2.msra.mxu0 0.0
    %8303 = vmatprep.subr.mxu0 0.0
    %8304 = vmatpush2.msra.mxu0 0.0
    %8305 = vmatprep.subr.mxu0 0.0
    %8306 = vmatpush2.msra.mxu0 0.0
    %8307 = vmatprep.subr.mxu0 0.0
    %8308 = vmatpush2.msra.mxu0 0.0
    %8309 = vmatprep.subr.mxu0 0.0
    %8310 = vmatpush2.msra.mxu0 0.0
    %8311 = vmatprep.subr.mxu0 0.0
    %8312 = vmatpush2.msra.mxu0 0.0
    %8313 = vmatprep.mubr.f32.mxu0 0.0
    %8314 = vmatmul.mubr.f32.gmra.mxu0 %v8247
    %v8315 = vpop.f32.mrf.mxu0
    %v8316 = vadd.f32 0.0, %v8315
    %v8317 = vpop.f32.mrf.mxu0
    %8318 = vdwg.mxu0
    %v8319 = vadd.f32 %v8240, %v8316
    %s8320 = scalar_lea.vmem %s9, 64
    %v8321 = vld [vmem:[%s8320] sm:$0xff]
    %v8322 = vld [vmem:[%s8320 + $0x8] sm:$0xff]
    %v8323 = vld [vmem:[%s8320 + $0x10] sm:$0xff]
    %v8324 = vld [vmem:[%s8320 + $0x18] sm:$0xff]
    %v8325 = vrot.slane %v8086, 2
    %v8326 = vsel %vm220, %v8325, 0
    %8328 = vmatprep.subr.mxu0 0.0
    %8329 = vmatpush1.msra.mxu0 0.0
    %8330 = vmatprep.subr.mxu0 0.0
    %8331 = vmatpush1.msra.mxu0 0.0
    %8332 = vmatprep.subr.mxu0 0.0
    %8333 = vmatpush1.msra.mxu0 0.0
    %8334 = vmatprep.subr.mxu0 0.0
    %8335 = vmatpush1.msra.mxu0 0.0
    %8336 = vmatprep.subr.mxu0 0.0
    %8337 = vmatpush1.msra.mxu0 0.0
    %8338 = vmatprep.subr.mxu0 0.0
    %8339 = vmatpush1.msra.mxu0 0.0
    %8340 = vmatprep.subr.mxu0 0.0
    %8341 = vmatpush1.msra.mxu0 0.0
    %8342 = vmatprep.subr.mxu0 0.0
    %8343 = vmatpush1.msra.mxu0 0.0
    %8344 = vmatprep.subr.mxu0 0.0
    %8345 = vmatpush1.msra.mxu0 0.0
    %8346 = vmatprep.subr.mxu0 0.0
    %8347 = vmatpush1.msra.mxu0 0.0
    %8348 = vmatprep.subr.mxu0 0.0
    %8349 = vmatpush1.msra.mxu0 0.0
    %8350 = vmatprep.subr.mxu0 0.0
    %8351 = vmatpush1.msra.mxu0 0.0
    %8352 = vmatprep.subr.mxu0 0.0
    %8353 = vmatpush1.msra.mxu0 %v8324
    %8354 = vmatprep.subr.mxu0 0.0
    %8355 = vmatpush1.msra.mxu0 %v8323
    %8356 = vmatprep.subr.mxu0 0.0
    %8357 = vmatpush1.msra.mxu0 %v8322
    %8358 = vmatprep.subr.mxu0 0.0
    %8359 = vmatpush1.msra.mxu0 %v8321
    %8360 = vmatprep.subr.mxu0 0.0
    %8361 = vmatpush2.msra.mxu0 0.0
    %8362 = vmatprep.subr.mxu0 0.0
    %8363 = vmatpush2.msra.mxu0 0.0
    %8364 = vmatprep.subr.mxu0 0.0
    %8365 = vmatpush2.msra.mxu0 0.0
    %8366 = vmatprep.subr.mxu0 0.0
    %8367 = vmatpush2.msra.mxu0 0.0
    %8368 = vmatprep.subr.mxu0 0.0
    %8369 = vmatpush2.msra.mxu0 0.0
    %8370 = vmatprep.subr.mxu0 0.0
    %8371 = vmatpush2.msra.mxu0 0.0
    %8372 = vmatprep.subr.mxu0 0.0
    %8373 = vmatpush2.msra.mxu0 0.0
    %8374 = vmatprep.subr.mxu0 0.0
    %8375 = vmatpush2.msra.mxu0 0.0
    %8376 = vmatprep.subr.mxu0 0.0
    %8377 = vmatpush2.msra.mxu0 0.0
    %8378 = vmatprep.subr.mxu0 0.0
    %8379 = vmatpush2.msra.mxu0 0.0
    %8380 = vmatprep.subr.mxu0 0.0
    %8381 = vmatpush2.msra.mxu0 0.0
    %8382 = vmatprep.subr.mxu0 0.0
    %8383 = vmatpush2.msra.mxu0 0.0
    %8384 = vmatprep.subr.mxu0 0.0
    %8385 = vmatpush2.msra.mxu0 0.0
    %8386 = vmatprep.subr.mxu0 0.0
    %8387 = vmatpush2.msra.mxu0 0.0
    %8388 = vmatprep.subr.mxu0 0.0
    %8389 = vmatpush2.msra.mxu0 0.0
    %8390 = vmatprep.subr.mxu0 0.0
    %8391 = vmatpush2.msra.mxu0 0.0
    %8392 = vmatprep.mubr.f32.mxu0 0.0
    %8393 = vmatmul.mubr.f32.gmra.mxu0 %v8326
    %v8394 = vpop.f32.mrf.mxu0
    %v8395 = vadd.f32 0.0, %v8394
    %v8396 = vpop.f32.mrf.mxu0
    %8397 = vdwg.mxu0
    %v8398 = vadd.f32 %v8319, %v8395
    %s8399 = scalar_lea.vmem %s9, 96
    %v8400 = vld [vmem:[%s8399] sm:$0xff]
    %v8401 = vld [vmem:[%s8399 + $0x8] sm:$0xff]
    %v8402 = vld [vmem:[%s8399 + $0x10] sm:$0xff]
    %v8403 = vld [vmem:[%s8399 + $0x18] sm:$0xff]
    %v8404 = vrot.slane %v8086, 3
    %v8405 = vsel %vm220, %v8404, 0
    %8407 = vmatprep.subr.mxu0 0.0
    %8408 = vmatpush1.msra.mxu0 0.0
    %8409 = vmatprep.subr.mxu0 0.0
    %8410 = vmatpush1.msra.mxu0 0.0
    %8411 = vmatprep.subr.mxu0 0.0
    %8412 = vmatpush1.msra.mxu0 0.0
    %8413 = vmatprep.subr.mxu0 0.0
    %8414 = vmatpush1.msra.mxu0 0.0
    %8415 = vmatprep.subr.mxu0 0.0
    %8416 = vmatpush1.msra.mxu0 0.0
    %8417 = vmatprep.subr.mxu0 0.0
    %8418 = vmatpush1.msra.mxu0 0.0
    %8419 = vmatprep.subr.mxu0 0.0
    %8420 = vmatpush1.msra.mxu0 0.0
    %8421 = vmatprep.subr.mxu0 0.0
    %8422 = vmatpush1.msra.mxu0 0.0
    %8423 = vmatprep.subr.mxu0 0.0
    %8424 = vmatpush1.msra.mxu0 0.0
    %8425 = vmatprep.subr.mxu0 0.0
    %8426 = vmatpush1.msra.mxu0 0.0
    %8427 = vmatprep.subr.mxu0 0.0
    %8428 = vmatpush1.msra.mxu0 0.0
    %8429 = vmatprep.subr.mxu0 0.0
    %8430 = vmatpush1.msra.mxu0 0.0
    %8431 = vmatprep.subr.mxu0 0.0
    %8432 = vmatpush1.msra.mxu0 %v8403
    %8433 = vmatprep.subr.mxu0 0.0
    %8434 = vmatpush1.msra.mxu0 %v8402
    %8435 = vmatprep.subr.mxu0 0.0
    %8436 = vmatpush1.msra.mxu0 %v8401
    %8437 = vmatprep.subr.mxu0 0.0
    %8438 = vmatpush1.msra.mxu0 %v8400
    %8439 = vmatprep.subr.mxu0 0.0
    %8440 = vmatpush2.msra.mxu0 0.0
    %8441 = vmatprep.subr.mxu0 0.0
    %8442 = vmatpush2.msra.mxu0 0.0
    %8443 = vmatprep.subr.mxu0 0.0
    %8444 = vmatpush2.msra.mxu0 0.0
    %8445 = vmatprep.subr.mxu0 0.0
    %8446 = vmatpush2.msra.mxu0 0.0
    %8447 = vmatprep.subr.mxu0 0.0
    %8448 = vmatpush2.msra.mxu0 0.0
    %8449 = vmatprep.subr.mxu0 0.0
    %8450 = vmatpush2.msra.mxu0 0.0
    %8451 = vmatprep.subr.mxu0 0.0
    %8452 = vmatpush2.msra.mxu0 0.0
    %8453 = vmatprep.subr.mxu0 0.0
    %8454 = vmatpush2.msra.mxu0 0.0
    %8455 = vmatprep.subr.mxu0 0.0
    %8456 = vmatpush2.msra.mxu0 0.0
    %8457 = vmatprep.subr.mxu0 0.0
    %8458 = vmatpush2.msra.mxu0 0.0
    %8459 = vmatprep.subr.mxu0 0.0
    %8460 = vmatpush2.msra.mxu0 0.0
    %8461 = vmatprep.subr.mxu0 0.0
    %8462 = vmatpush2.msra.mxu0 0.0
    %8463 = vmatprep.subr.mxu0 0.0
    %8464 = vmatpush2.msra.mxu0 0.0
    %8465 = vmatprep.subr.mxu0 0.0
    %8466 = vmatpush2.msra.mxu0 0.0
    %8467 = vmatprep.subr.mxu0 0.0
    %8468 = vmatpush2.msra.mxu0 0.0
    %8469 = vmatprep.subr.mxu0 0.0
    %8470 = vmatpush2.msra.mxu0 0.0
    %8471 = vmatprep.mubr.f32.mxu0 0.0
    %8472 = vmatmul.mubr.f32.gmra.mxu0 %v8405
    %v8473 = vpop.f32.mrf.mxu0
    %v8474 = vadd.f32 0.0, %v8473
    %v8475 = vpop.f32.mrf.mxu0
    %8476 = vdwg.mxu0
    %v8477 = vadd.f32 %v8398, %v8474
    %vm8478 = vcmask 57344
    %8479 = vst.msk [vmem:[#allocation11] sm:$0x1] %vm8478, %v8477
    %v8480 = vld [vmem:[%s10] sm:$0x1]
    %v8481 = vld [vmem:[%s9] sm:$0xff]
    %v8482 = vld [vmem:[%s9 + $0x8] sm:$0xff]
    %v8483 = vld [vmem:[%s9 + $0x10] sm:$0xff]
    %v8484 = vld [vmem:[%s9 + $0x18] sm:$0xff]
    %v8486 = vsel %vm220, %v8159, 0
    %8488 = vmatprep.subr.mxu0 0.0
    %8489 = vmatpush1.msra.mxu0 0.0
    %8490 = vmatprep.subr.mxu0 0.0
    %8491 = vmatpush1.msra.mxu0 0.0
    %8492 = vmatprep.subr.mxu0 0.0
    %8493 = vmatpush1.msra.mxu0 0.0
    %8494 = vmatprep.subr.mxu0 0.0
    %8495 = vmatpush1.msra.mxu0 0.0
    %8496 = vmatprep.subr.mxu0 0.0
    %8497 = vmatpush1.msra.mxu0 0.0
    %8498 = vmatprep.subr.mxu0 0.0
    %8499 = vmatpush1.msra.mxu0 0.0
    %8500 = vmatprep.subr.mxu0 0.0
    %8501 = vmatpush1.msra.mxu0 0.0
    %8502 = vmatprep.subr.mxu0 0.0
    %8503 = vmatpush1.msra.mxu0 0.0
    %8504 = vmatprep.subr.mxu0 0.0
    %8505 = vmatpush1.msra.mxu0 0.0
    %8506 = vmatprep.subr.mxu0 0.0
    %8507 = vmatpush1.msra.mxu0 0.0
    %8508 = vmatprep.subr.mxu0 0.0
    %8509 = vmatpush1.msra.mxu0 0.0
    %8510 = vmatprep.subr.mxu0 0.0
    %8511 = vmatpush1.msra.mxu0 0.0
    %8512 = vmatprep.subr.mxu0 0.0
    %8513 = vmatpush1.msra.mxu0 %v8484
    %8514 = vmatprep.subr.mxu0 0.0
    %8515 = vmatpush1.msra.mxu0 %v8483
    %8516 = vmatprep.subr.mxu0 0.0
    %8517 = vmatpush1.msra.mxu0 %v8482
    %8518 = vmatprep.subr.mxu0 0.0
    %8519 = vmatpush1.msra.mxu0 %v8481
    %8520 = vmatprep.subr.mxu0 0.0
    %8521 = vmatpush2.msra.mxu0 0.0
    %8522 = vmatprep.subr.mxu0 0.0
    %8523 = vmatpush2.msra.mxu0 0.0
    %8524 = vmatprep.subr.mxu0 0.0
    %8525 = vmatpush2.msra.mxu0 0.0
    %8526 = vmatprep.subr.mxu0 0.0
    %8527 = vmatpush2.msra.mxu0 0.0
    %8528 = vmatprep.subr.mxu0 0.0
    %8529 = vmatpush2.msra.mxu0 0.0
    %8530 = vmatprep.subr.mxu0 0.0
    %8531 = vmatpush2.msra.mxu0 0.0
    %8532 = vmatprep.subr.mxu0 0.0
    %8533 = vmatpush2.msra.mxu0 0.0
    %8534 = vmatprep.subr.mxu0 0.0
    %8535 = vmatpush2.msra.mxu0 0.0
    %8536 = vmatprep.subr.mxu0 0.0
    %8537 = vmatpush2.msra.mxu0 0.0
    %8538 = vmatprep.subr.mxu0 0.0
    %8539 = vmatpush2.msra.mxu0 0.0
    %8540 = vmatprep.subr.mxu0 0.0
    %8541 = vmatpush2.msra.mxu0 0.0
    %8542 = vmatprep.subr.mxu0 0.0
    %8543 = vmatpush2.msra.mxu0 0.0
    %8544 = vmatprep.subr.mxu0 0.0
    %8545 = vmatpush2.msra.mxu0 0.0
    %8546 = vmatprep.subr.mxu0 0.0
    %8547 = vmatpush2.msra.mxu0 0.0
    %8548 = vmatprep.subr.mxu0 0.0
    %8549 = vmatpush2.msra.mxu0 0.0
    %8550 = vmatprep.subr.mxu0 0.0
    %8551 = vmatpush2.msra.mxu0 0.0
    %8552 = vmatprep.mubr.f32.mxu0 0.0
    %8553 = vmatmul.mubr.f32.gmra.mxu0 %v8486
    %v8554 = vpop.f32.mrf.mxu0
    %v8555 = vadd.f32 0.0, %v8554
    %v8556 = vpop.f32.mrf.mxu0
    %8557 = vdwg.mxu0
    %v8558 = vadd.f32 %v8480, %v8555
    %v8559 = vld [vmem:[%s8241] sm:$0xff]
    %v8560 = vld [vmem:[%s8241 + $0x8] sm:$0xff]
    %v8561 = vld [vmem:[%s8241 + $0x10] sm:$0xff]
    %v8562 = vld [vmem:[%s8241 + $0x18] sm:$0xff]
    %v8563 = vrot.slane %v8159, 1
    %v8564 = vsel %vm220, %v8563, 0
    %8566 = vmatprep.subr.mxu0 0.0
    %8567 = vmatpush1.msra.mxu0 0.0
    %8568 = vmatprep.subr.mxu0 0.0
    %8569 = vmatpush1.msra.mxu0 0.0
    %8570 = vmatprep.subr.mxu0 0.0
    %8571 = vmatpush1.msra.mxu0 0.0
    %8572 = vmatprep.subr.mxu0 0.0
    %8573 = vmatpush1.msra.mxu0 0.0
    %8574 = vmatprep.subr.mxu0 0.0
    %8575 = vmatpush1.msra.mxu0 0.0
    %8576 = vmatprep.subr.mxu0 0.0
    %8577 = vmatpush1.msra.mxu0 0.0
    %8578 = vmatprep.subr.mxu0 0.0
    %8579 = vmatpush1.msra.mxu0 0.0
    %8580 = vmatprep.subr.mxu0 0.0
    %8581 = vmatpush1.msra.mxu0 0.0
    %8582 = vmatprep.subr.mxu0 0.0
    %8583 = vmatpush1.msra.mxu0 0.0
    %8584 = vmatprep.subr.mxu0 0.0
    %8585 = vmatpush1.msra.mxu0 0.0
    %8586 = vmatprep.subr.mxu0 0.0
    %8587 = vmatpush1.msra.mxu0 0.0
    %8588 = vmatprep.subr.mxu0 0.0
    %8589 = vmatpush1.msra.mxu0 0.0
    %8590 = vmatprep.subr.mxu0 0.0
    %8591 = vmatpush1.msra.mxu0 %v8562
    %8592 = vmatprep.subr.mxu0 0.0
    %8593 = vmatpush1.msra.mxu0 %v8561
    %8594 = vmatprep.subr.mxu0 0.0
    %8595 = vmatpush1.msra.mxu0 %v8560
    %8596 = vmatprep.subr.mxu0 0.0
    %8597 = vmatpush1.msra.mxu0 %v8559
    %8598 = vmatprep.subr.mxu0 0.0
    %8599 = vmatpush2.msra.mxu0 0.0
    %8600 = vmatprep.subr.mxu0 0.0
    %8601 = vmatpush2.msra.mxu0 0.0
    %8602 = vmatprep.subr.mxu0 0.0
    %8603 = vmatpush2.msra.mxu0 0.0
    %8604 = vmatprep.subr.mxu0 0.0
    %8605 = vmatpush2.msra.mxu0 0.0
    %8606 = vmatprep.subr.mxu0 0.0
    %8607 = vmatpush2.msra.mxu0 0.0
    %8608 = vmatprep.subr.mxu0 0.0
    %8609 = vmatpush2.msra.mxu0 0.0
    %8610 = vmatprep.subr.mxu0 0.0
    %8611 = vmatpush2.msra.mxu0 0.0
    %8612 = vmatprep.subr.mxu0 0.0
    %8613 = vmatpush2.msra.mxu0 0.0
    %8614 = vmatprep.subr.mxu0 0.0
    %8615 = vmatpush2.msra.mxu0 0.0
    %8616 = vmatprep.subr.mxu0 0.0
    %8617 = vmatpush2.msra.mxu0 0.0
    %8618 = vmatprep.subr.mxu0 0.0
    %8619 = vmatpush2.msra.mxu0 0.0
    %8620 = vmatprep.subr.mxu0 0.0
    %8621 = vmatpush2.msra.mxu0 0.0
    %8622 = vmatprep.subr.mxu0 0.0
    %8623 = vmatpush2.msra.mxu0 0.0
    %8624 = vmatprep.subr.mxu0 0.0
    %8625 = vmatpush2.msra.mxu0 0.0
    %8626 = vmatprep.subr.mxu0 0.0
    %8627 = vmatpush2.msra.mxu0 0.0
    %8628 = vmatprep.subr.mxu0 0.0
    %8629 = vmatpush2.msra.mxu0 0.0
    %8630 = vmatprep.mubr.f32.mxu0 0.0
    %8631 = vmatmul.mubr.f32.gmra.mxu0 %v8564
    %v8632 = vpop.f32.mrf.mxu0
    %v8633 = vadd.f32 0.0, %v8632
    %v8634 = vpop.f32.mrf.mxu0
    %8635 = vdwg.mxu0
    %v8636 = vadd.f32 %v8558, %v8633
    %v8637 = vld [vmem:[%s8320] sm:$0xff]
    %v8638 = vld [vmem:[%s8320 + $0x8] sm:$0xff]
    %v8639 = vld [vmem:[%s8320 + $0x10] sm:$0xff]
    %v8640 = vld [vmem:[%s8320 + $0x18] sm:$0xff]
    %v8641 = vrot.slane %v8159, 2
    %v8642 = vsel %vm220, %v8641, 0
    %8644 = vmatprep.subr.mxu0 0.0
    %8645 = vmatpush1.msra.mxu0 0.0
    %8646 = vmatprep.subr.mxu0 0.0
    %8647 = vmatpush1.msra.mxu0 0.0
    %8648 = vmatprep.subr.mxu0 0.0
    %8649 = vmatpush1.msra.mxu0 0.0
    %8650 = vmatprep.subr.mxu0 0.0
    %8651 = vmatpush1.msra.mxu0 0.0
    %8652 = vmatprep.subr.mxu0 0.0
    %8653 = vmatpush1.msra.mxu0 0.0
    %8654 = vmatprep.subr.mxu0 0.0
    %8655 = vmatpush1.msra.mxu0 0.0
    %8656 = vmatprep.subr.mxu0 0.0
    %8657 = vmatpush1.msra.mxu0 0.0
    %8658 = vmatprep.subr.mxu0 0.0
    %8659 = vmatpush1.msra.mxu0 0.0
    %8660 = vmatprep.subr.mxu0 0.0
    %8661 = vmatpush1.msra.mxu0 0.0
    %8662 = vmatprep.subr.mxu0 0.0
    %8663 = vmatpush1.msra.mxu0 0.0
    %8664 = vmatprep.subr.mxu0 0.0
    %8665 = vmatpush1.msra.mxu0 0.0
    %8666 = vmatprep.subr.mxu0 0.0
    %8667 = vmatpush1.msra.mxu0 0.0
    %8668 = vmatprep.subr.mxu0 0.0
    %8669 = vmatpush1.msra.mxu0 %v8640
    %8670 = vmatprep.subr.mxu0 0.0
    %8671 = vmatpush1.msra.mxu0 %v8639
    %8672 = vmatprep.subr.mxu0 0.0
    %8673 = vmatpush1.msra.mxu0 %v8638
    %8674 = vmatprep.subr.mxu0 0.0
    %8675 = vmatpush1.msra.mxu0 %v8637
    %8676 = vmatprep.subr.mxu0 0.0
    %8677 = vmatpush2.msra.mxu0 0.0
    %8678 = vmatprep.subr.mxu0 0.0
    %8679 = vmatpush2.msra.mxu0 0.0
    %8680 = vmatprep.subr.mxu0 0.0
    %8681 = vmatpush2.msra.mxu0 0.0
    %8682 = vmatprep.subr.mxu0 0.0
    %8683 = vmatpush2.msra.mxu0 0.0
    %8684 = vmatprep.subr.mxu0 0.0
    %8685 = vmatpush2.msra.mxu0 0.0
    %8686 = vmatprep.subr.mxu0 0.0
    %8687 = vmatpush2.msra.mxu0 0.0
    %8688 = vmatprep.subr.mxu0 0.0
    %8689 = vmatpush2.msra.mxu0 0.0
    %8690 = vmatprep.subr.mxu0 0.0
    %8691 = vmatpush2.msra.mxu0 0.0
    %8692 = vmatprep.subr.mxu0 0.0
    %8693 = vmatpush2.msra.mxu0 0.0
    %8694 = vmatprep.subr.mxu0 0.0
    %8695 = vmatpush2.msra.mxu0 0.0
    %8696 = vmatprep.subr.mxu0 0.0
    %8697 = vmatpush2.msra.mxu0 0.0
    %8698 = vmatprep.subr.mxu0 0.0
    %8699 = vmatpush2.msra.mxu0 0.0
    %8700 = vmatprep.subr.mxu0 0.0
    %8701 = vmatpush2.msra.mxu0 0.0
    %8702 = vmatprep.subr.mxu0 0.0
    %8703 = vmatpush2.msra.mxu0 0.0
    %8704 = vmatprep.subr.mxu0 0.0
    %8705 = vmatpush2.msra.mxu0 0.0
    %8706 = vmatprep.subr.mxu0 0.0
    %8707 = vmatpush2.msra.mxu0 0.0
    %8708 = vmatprep.mubr.f32.mxu0 0.0
    %8709 = vmatmul.mubr.f32.gmra.mxu0 %v8642
    %v8710 = vpop.f32.mrf.mxu0
    %v8711 = vadd.f32 0.0, %v8710
    %v8712 = vpop.f32.mrf.mxu0
    %8713 = vdwg.mxu0
    %v8714 = vadd.f32 %v8636, %v8711
    %v8715 = vld [vmem:[%s8399] sm:$0xff]
    %v8716 = vld [vmem:[%s8399 + $0x8] sm:$0xff]
    %v8717 = vld [vmem:[%s8399 + $0x10] sm:$0xff]
    %v8718 = vld [vmem:[%s8399 + $0x18] sm:$0xff]
    %v8719 = vrot.slane %v8159, 3
    %v8720 = vsel %vm220, %v8719, 0
    %8722 = vmatprep.subr.mxu0 0.0
    %8723 = vmatpush1.msra.mxu0 0.0
    %8724 = vmatprep.subr.mxu0 0.0
    %8725 = vmatpush1.msra.mxu0 0.0
    %8726 = vmatprep.subr.mxu0 0.0
    %8727 = vmatpush1.msra.mxu0 0.0
    %8728 = vmatprep.subr.mxu0 0.0
    %8729 = vmatpush1.msra.mxu0 0.0
    %8730 = vmatprep.subr.mxu0 0.0
    %8731 = vmatpush1.msra.mxu0 0.0
    %8732 = vmatprep.subr.mxu0 0.0
    %8733 = vmatpush1.msra.mxu0 0.0
    %8734 = vmatprep.subr.mxu0 0.0
    %8735 = vmatpush1.msra.mxu0 0.0
    %8736 = vmatprep.subr.mxu0 0.0
    %8737 = vmatpush1.msra.mxu0 0.0
    %8738 = vmatprep.subr.mxu0 0.0
    %8739 = vmatpush1.msra.mxu0 0.0
    %8740 = vmatprep.subr.mxu0 0.0
    %8741 = vmatpush1.msra.mxu0 0.0
    %8742 = vmatprep.subr.mxu0 0.0
    %8743 = vmatpush1.msra.mxu0 0.0
    %8744 = vmatprep.subr.mxu0 0.0
    %8745 = vmatpush1.msra.mxu0 0.0
    %8746 = vmatprep.subr.mxu0 0.0
    %8747 = vmatpush1.msra.mxu0 %v8718
    %8748 = vmatprep.subr.mxu0 0.0
    %8749 = vmatpush1.msra.mxu0 %v8717
    %8750 = vmatprep.subr.mxu0 0.0
    %8751 = vmatpush1.msra.mxu0 %v8716
    %8752 = vmatprep.subr.mxu0 0.0
    %8753 = vmatpush1.msra.mxu0 %v8715
    %8754 = vmatprep.subr.mxu0 0.0
    %8755 = vmatpush2.msra.mxu0 0.0
    %8756 = vmatprep.subr.mxu0 0.0
    %8757 = vmatpush2.msra.mxu0 0.0
    %8758 = vmatprep.subr.mxu0 0.0
    %8759 = vmatpush2.msra.mxu0 0.0
    %8760 = vmatprep.subr.mxu0 0.0
    %8761 = vmatpush2.msra.mxu0 0.0
    %8762 = vmatprep.subr.mxu0 0.0
    %8763 = vmatpush2.msra.mxu0 0.0
    %8764 = vmatprep.subr.mxu0 0.0
    %8765 = vmatpush2.msra.mxu0 0.0
    %8766 = vmatprep.subr.mxu0 0.0
    %8767 = vmatpush2.msra.mxu0 0.0
    %8768 = vmatprep.subr.mxu0 0.0
    %8769 = vmatpush2.msra.mxu0 0.0
    %8770 = vmatprep.subr.mxu0 0.0
    %8771 = vmatpush2.msra.mxu0 0.0
    %8772 = vmatprep.subr.mxu0 0.0
    %8773 = vmatpush2.msra.mxu0 0.0
    %8774 = vmatprep.subr.mxu0 0.0
    %8775 = vmatpush2.msra.mxu0 0.0
    %8776 = vmatprep.subr.mxu0 0.0
    %8777 = vmatpush2.msra.mxu0 0.0
    %8778 = vmatprep.subr.mxu0 0.0
    %8779 = vmatpush2.msra.mxu0 0.0
    %8780 = vmatprep.subr.mxu0 0.0
    %8781 = vmatpush2.msra.mxu0 0.0
    %8782 = vmatprep.subr.mxu0 0.0
    %8783 = vmatpush2.msra.mxu0 0.0
    %8784 = vmatprep.subr.mxu0 0.0
    %8785 = vmatpush2.msra.mxu0 0.0
    %8786 = vmatprep.mubr.f32.mxu0 0.0
    %8787 = vmatmul.mubr.f32.gmra.mxu0 %v8720
    %v8788 = vpop.f32.mrf.mxu0
    %v8789 = vadd.f32 0.0, %v8788
    %v8790 = vpop.f32.mrf.mxu0
    %8791 = vdwg.mxu0
    %v8792 = vadd.f32 %v8714, %v8789
    %8793 = vst.msk [vmem:[#allocation11 + $0x1] sm:$0x1] %vm8478, %v8792
    // Predicated region
    $region66: #{tpu_custom_call.1} parent=1 // pred_check
      _
    $region67: #{tpu_custom_call.1} parent=1 // pred_check_branch
      %8795 = sbr.rel (0) target = $region69
    $region68: #{tpu_custom_call.1} parent=1 // pred_region
      %s8797 = ssub.s32 32, 32
      %8798 = vsyncadd [#allocation4], %s8797
      %s8800 = sshll.u32 [#allocation11], 4
      %s8801 = int_to_ptr.vmem [resolvable:$true] %s8800
      %8803 = dma.vmem_to_hbm [thread:$0]  %s8801, 32, %s11, [#allocation4]
    $region69: #{tpu_custom_call.1} parent=1 // pred_fallthru
      _
    // Predicated region
    $region70: #{tpu_custom_call.1} parent=1 // pred_check
      _
    $region71: #{tpu_custom_call.1} parent=1 // pred_check_branch
      %8805 = sbr.rel (0) target = $region73
    $region72: #{tpu_custom_call.1} parent=1 // pred_region
      %8806 = dma.done [#allocation4], 32
    $region73: #{tpu_custom_call.1} parent=1 // pred_fallthru
      _
    %8807 = vsyncpa [#allocation3], 1
    %8808 = vsyncpa [#allocation6], 1
    %8809 = vsyncpa [#allocation9], 1
    %8810 = vsyncpa [#allocation4], 1

</llo_original>
